<compile_context>
chip_gen: v6e
topology: v6e:2x2x1
jax: 0.10.0
libtpu: 0.0.40
codegen_flags: <defaults>
</compile_context>

<pallas_src>
import functools

import jax
import jax.numpy as jnp
from jax import lax
from jax.experimental import pallas as pl
from jax.experimental.pallas import tpu as pltpu


# ----------------------------------------------------------------------------
# helpers
# ----------------------------------------------------------------------------
def _round_up(x, m):
    return ((x + m - 1) // m) * m


def _pad_axis(x, axis, target):
    pad = target - x.shape[axis]
    if pad <= 0:
        return x
    widths = [(0, 0)] * x.ndim
    widths[axis] = (0, pad)
    return jnp.pad(x, widths)


def _prep_w(w, rows, cols):
    """Zero-pad a (r, c) weight to (rows, cols) and cast to bf16 (MXU operand)."""
    w = jnp.pad(w, ((0, rows - w.shape[0]), (0, cols - w.shape[1])))
    return w.astype(jnp.bfloat16)


def _prep_b(b, cols):
    """Zero-pad a (c,) bias to (1, cols) f32 (added after f32 accumulation)."""
    return jnp.pad(b, (0, cols - b.shape[0])).astype(jnp.float32).reshape(1, cols)


# ----------------------------------------------------------------------------
# fused kernel: map/obs encoder MLPs -> per-token select -> fusion MLP
#               -> masked token store + per-tile partial pool
# ----------------------------------------------------------------------------
def _scene_kernel(x_ref,
                  w1m_ref, b1m_ref, w2m_ref, b2m_ref,
                  w1o_ref, b1o_ref, w2o_ref, b2o_ref,
                  wf1_ref, bf1_ref, wf2_ref, bf2_ref,
                  fused_ref, mask_ref, psum_ref,
                  *, n_map, n_tot, tile):
    t = pl.program_id(1)

    x = x_ref[0]                                              # (tile, d_al) bf16

    # token validity: any feature non-zero AND inside the real token range
    feat = jnp.max(jnp.abs(x.astype(jnp.float32)), axis=-1, keepdims=True) > 0.0
    idx = t * tile + lax.broadcasted_iota(jnp.int32, (tile, 1), 0)
    valid = jnp.logical_and(feat, idx < n_tot)                # (tile, 1) bool
    mvec = valid.astype(jnp.float32)

    # ---- encoder MLPs, both sources (bf16 operands, f32 accumulation) ----
    h_m = jnp.maximum(
        jnp.dot(x, w1m_ref[...], preferred_element_type=jnp.float32) + b1m_ref[...],
        0.0)
    e_m = jnp.dot(h_m.astype(jnp.bfloat16), w2m_ref[...],
                  preferred_element_type=jnp.float32) + b2m_ref[...]

    h_o = jnp.maximum(
        jnp.dot(x, w1o_ref[...], preferred_element_type=jnp.float32) + b1o_ref[...],
        0.0)
    e_o = jnp.dot(h_o.astype(jnp.bfloat16), w2o_ref[...],
                  preferred_element_type=jnp.float32) + b2o_ref[...]

    # per-token source selection: global token index < n_map -> map encoder
    is_map = idx < n_map
    e = jnp.where(is_map, e_m, e_o)                           # (tile, H) f32

    # ---- fusion MLP (shared weights) ----
    g = jnp.maximum(
        jnp.dot(e.astype(jnp.bfloat16), wf1_ref[...],
                preferred_element_type=jnp.float32) + bf1_ref[...],
        0.0)
    f = jnp.dot(g.astype(jnp.bfloat16), wf2_ref[...],
                preferred_element_type=jnp.float32) + bf2_ref[...]

    fm = f * mvec                                             # zero invalid/padded
    fused_ref[0] = fm.astype(jnp.bfloat16)                    # bf16 token store
    mask_ref[0] = mvec                                        # (tile, 1) f32
    # per-tile partial sum in f32 (sublane reduce; no MXU, no bf16 rounding)
    psum_ref[0, 0] = jnp.sum(fm, axis=0, keepdims=True)       # (1, H)


# ----------------------------------------------------------------------------
# SceneEncoder forward
# ----------------------------------------------------------------------------
def scene_encoder_forward(params, batch_obs, batch_map, hidden_dim, *, tile=1024):
    B, Nm, Dm = batch_map.shape
    _, No, Do = batch_obs.shape
    n_tot = Nm + No
    d_al = _round_up(max(Dm, Do), 16)          # tiny, bf16-sublane aligned width
    h_pad = _round_up(hidden_dim, 128)
    n_pad = _round_up(max(n_tot, 1), tile)
    n_tiles = n_pad // tile

    # cheap raw-token concat at native (tiny) feature width, bf16 in HBM
    xm = _pad_axis(batch_map, 2, d_al).astype(jnp.bfloat16)
    xo = _pad_axis(batch_obs, 2, d_al).astype(jnp.bfloat16)
    x_cat = _pad_axis(jnp.concatenate([xm, xo], axis=1), 1, n_pad)   # (B,n_pad,d_al)

    enc_m, enc_o, fus = params["map"], params["obs"], params["fusion"]
    w1m = _prep_w(enc_m["w1"], d_al, h_pad); b1m = _prep_b(enc_m["b1"], h_pad)
    w2m = _prep_w(enc_m["w2"], h_pad, h_pad); b2m = _prep_b(enc_m["b2"], h_pad)
    w1o = _prep_w(enc_o["w1"], d_al, h_pad); b1o = _prep_b(enc_o["b1"], h_pad)
    w2o = _prep_w(enc_o["w2"], h_pad, h_pad); b2o = _prep_b(enc_o["b2"], h_pad)
    wf1 = _prep_w(fus["w1"], h_pad, h_pad); bf1 = _prep_b(fus["b1"], h_pad)
    wf2 = _prep_w(fus["w2"], h_pad, h_pad); bf2 = _prep_b(fus["b2"], h_pad)

    flops = 2 * B * n_pad * (2 * d_al * h_pad + 4 * h_pad * h_pad)
    bytes_accessed = (B * n_pad * d_al * 2               # x (bf16)
                      + B * n_pad * h_pad * 2            # fused tokens (bf16)
                      + B * n_pad * 4                    # mask
                      + B * n_tiles * h_pad * 4          # partial sums
                      + (2 * d_al * h_pad + 4 * h_pad * h_pad) * 2   # weights
                      + 6 * h_pad * 4)                   # biases
    cost = pl.CostEstimate(flops=int(flops), transcendentals=0,
                           bytes_accessed=int(bytes_accessed))

    wspec = pl.BlockSpec((h_pad, h_pad), lambda b, t: (0, 0))
    w1spec = pl.BlockSpec((d_al, h_pad), lambda b, t: (0, 0))
    bspec = pl.BlockSpec((1, h_pad), lambda b, t: (0, 0))

    kernel = functools.partial(_scene_kernel, n_map=Nm, n_tot=n_tot, tile=tile)

    fused, mask, psum = pl.pallas_call(
        kernel,
        out_shape=(
            jax.ShapeDtypeStruct((B, n_pad, h_pad), jnp.bfloat16),
            jax.ShapeDtypeStruct((B, n_pad, 1), jnp.float32),
            jax.ShapeDtypeStruct((B, n_tiles, 1, h_pad), jnp.float32),
        ),
        grid=(B, n_tiles),
        in_specs=[
            pl.BlockSpec((1, tile, d_al), lambda b, t: (b, t, 0)),
            w1spec, bspec, wspec, bspec,     # map encoder
            w1spec, bspec, wspec, bspec,     # obs encoder
            wspec, bspec, wspec, bspec,      # shared fusion MLP
        ],
        out_specs=(
            pl.BlockSpec((1, tile, h_pad), lambda b, t: (b, t, 0)),
            pl.BlockSpec((1, tile, 1), lambda b, t: (b, t, 0)),
            pl.BlockSpec((1, 1, 1, h_pad), lambda b, t: (b, t, 0, 0)),
        ),
        compiler_params=pltpu.CompilerParams(
            dimension_semantics=("parallel", "parallel"),
            vmem_limit_bytes=32 * 1024 * 1024),
        cost_estimate=cost,
    )(x_cat, w1m, b1m, w2m, b2m, w1o, b1o, w2o, b2o, wf1, bf1, wf2, bf2)

    # tiny epilogue (only slices / a (B, n_tiles) reduction; no activation re-pass)
    fused_tokens = fused[:, :n_tot, :hidden_dim]                    # (B, Nm+No, H) bf16
    fused_mask = mask[:, :n_tot, 0] > 0.5                           # (B, Nm+No) bool
    cnt = jnp.maximum(jnp.sum(mask[:, :, 0], axis=1), 1.0)          # (B,)
    scene_sum = jnp.sum(psum[:, :, 0, :], axis=1)[:, :hidden_dim]   # (B, H) f32
    scene_emd = scene_sum / cnt[:, None]

    return {
        "fused_tokens": fused_tokens,   # invalid tokens zeroed
        "scene_emd": scene_emd,         # (B, H) f32
        "fused_mask": fused_mask,       # (B, Nm+No) bool
    }


def init_mlp_params(key, d_in, d_hidden, d_out):
    k1, k2 = jax.random.split(key)
    scale1 = 1.0 / jnp.sqrt(jnp.float32(d_in))
    scale2 = 1.0 / jnp.sqrt(jnp.float32(d_hidden))
    return {
        "w1": jax.random.normal(k1, (d_in, d_hidden), jnp.float32) * scale1,
        "b1": jnp.zeros((d_hidden,), jnp.float32),
        "w2": jax.random.normal(k2, (d_hidden, d_out), jnp.float32) * scale2,
        "b2": jnp.zeros((d_out,), jnp.float32),
    }


# TODO(synk): the registry / config plumbing of the original module
# (registry.register_scene_encoder, MAP_TYPE / OBS_TYPE dispatch, abstract
# _config_fusion/_scene_fusion) has no Pallas equivalent; one concrete
# encoder/fusion choice is hard-coded here.


if __name__ == "__main__":
    # small deterministic shapes (hidden = 128-lane width)
    B, Nm, No = 2, 8, 8
    Dm, Do = 4, 6
    HIDDEN = 128

    key = jax.random.PRNGKey(0)
    k_map, k_obs, k_fus, k_xm, k_xo = jax.random.split(key, 5)

    params = {
        "map": init_mlp_params(k_map, Dm, HIDDEN, HIDDEN),
        "obs": init_mlp_params(k_obs, Do, HIDDEN, HIDDEN),
        "fusion": init_mlp_params(k_fus, HIDDEN, HIDDEN, HIDDEN),
    }

    batch_map = jax.random.normal(k_xm, (B, Nm, Dm), jnp.float32)
    batch_obs = jax.random.normal(k_xo, (B, No, Do), jnp.float32)
    # zero out the last obs token of batch 1 (invalid token -> masked in fusion)
    batch_obs = batch_obs.at[1, -1, :].set(0.0)

    fwd = jax.jit(functools.partial(scene_encoder_forward, hidden_dim=HIDDEN))
    result = fwd(params, batch_obs, batch_map)
    jax.block_until_ready(result)

    assert result["fused_tokens"].shape == (B, Nm + No, HIDDEN)
    assert result["scene_emd"].shape == (B, HIDDEN)
    assert result["fused_mask"].shape == (B, Nm + No)
    assert bool(jnp.all(jnp.isfinite(result["scene_emd"])))
    # invalid obs token must be zeroed in the fused token buffer and masked out
    assert float(jnp.max(jnp.abs(result["fused_tokens"][1, -1]))) == 0.0
    assert not bool(result["fused_mask"][1, -1])
    assert bool(result["fused_mask"][0, 0])
    print("KERNEL_OK")
</pallas_src>

<mosaic_0001>
module attributes {stable_mosaic.version = 11 : i64} {
  func.func @_scene_kernel(%arg0: i32, %arg1: i32, %arg2: memref<1x1024x16xbf16, #tpu.memory_space<vmem>>, %arg3: memref<16x128xbf16, #tpu.memory_space<vmem>>, %arg4: memref<1x128xf32, #tpu.memory_space<vmem>>, %arg5: memref<128x128xbf16, #tpu.memory_space<vmem>>, %arg6: memref<1x128xf32, #tpu.memory_space<vmem>>, %arg7: memref<16x128xbf16, #tpu.memory_space<vmem>>, %arg8: memref<1x128xf32, #tpu.memory_space<vmem>>, %arg9: memref<128x128xbf16, #tpu.memory_space<vmem>>, %arg10: memref<1x128xf32, #tpu.memory_space<vmem>>, %arg11: memref<128x128xbf16, #tpu.memory_space<vmem>>, %arg12: memref<1x128xf32, #tpu.memory_space<vmem>>, %arg13: memref<128x128xbf16, #tpu.memory_space<vmem>>, %arg14: memref<1x128xf32, #tpu.memory_space<vmem>>, %arg15: memref<1x1024x128xbf16, #tpu.memory_space<vmem>>, %arg16: memref<1x1024x1xf32, #tpu.memory_space<vmem>>, %arg17: memref<1x1x1x128xf32, #tpu.memory_space<vmem>>) attributes {dimension_semantics = [#tpu.dimension_semantics<parallel>, #tpu.dimension_semantics<parallel>], iteration_bounds = array<i64: 2, 1>, scalar_prefetch = 0 : i64, scratch_operands = 0 : i64, tpu.core_type = #tpu.core_type<tc>, window_params = [{transform_indices = @transform_0, window_bounds = array<i64: 1, 1024, 16>}, {pipeline_mode = #tpu.pipeline_mode<synchronous>, transform_indices = @transform_1, window_bounds = array<i64: 16, 128>}, {pipeline_mode = #tpu.pipeline_mode<synchronous>, transform_indices = @transform_2, window_bounds = array<i64: 1, 128>}, {pipeline_mode = #tpu.pipeline_mode<synchronous>, transform_indices = @transform_3, window_bounds = array<i64: 128, 128>}, {pipeline_mode = #tpu.pipeline_mode<synchronous>, transform_indices = @transform_4, window_bounds = array<i64: 1, 128>}, {pipeline_mode = #tpu.pipeline_mode<synchronous>, transform_indices = @transform_5, window_bounds = array<i64: 16, 128>}, {pipeline_mode = #tpu.pipeline_mode<synchronous>, transform_indices = @transform_6, window_bounds = array<i64: 1, 128>}, {pipeline_mode = #tpu.pipeline_mode<synchronous>, transform_indices = @transform_7, window_bounds = array<i64: 128, 128>}, {pipeline_mode = #tpu.pipeline_mode<synchronous>, transform_indices = @transform_8, window_bounds = array<i64: 1, 128>}, {pipeline_mode = #tpu.pipeline_mode<synchronous>, transform_indices = @transform_9, window_bounds = array<i64: 128, 128>}, {pipeline_mode = #tpu.pipeline_mode<synchronous>, transform_indices = @transform_10, window_bounds = array<i64: 1, 128>}, {pipeline_mode = #tpu.pipeline_mode<synchronous>, transform_indices = @transform_11, window_bounds = array<i64: 128, 128>}, {pipeline_mode = #tpu.pipeline_mode<synchronous>, transform_indices = @transform_12, window_bounds = array<i64: 1, 128>}, {transform_indices = @transform_13, window_bounds = array<i64: 1, 1024, 128>}, {transform_indices = @transform_14, window_bounds = array<i64: 1, 1024, 1>}, {transform_indices = @transform_15, window_bounds = array<i64: 1, 1, 1, 128>}]} {
    %c0 = arith.constant 0 : index
    %c0_0 = arith.constant 0 : index
    %c0_1 = arith.constant 0 : index
    %0 = vector.load %arg2[%c0, %c0_0, %c0_1] : memref<1x1024x16xbf16, #tpu.memory_space<vmem>>, vector<1x1024x16xbf16>
    %1 = vector.shape_cast %0 : vector<1x1024x16xbf16> to vector<1024x16xbf16>
    %2 = arith.extf %1 : vector<1024x16xbf16> to vector<1024x16xf32>
    %3 = math.absf %2 : vector<1024x16xf32>
    %cst = arith.constant dense<0xFF800000> : vector<1024xf32>
    %4 = vector.multi_reduction <maximumf>, %3, %cst [1] : vector<1024x16xf32> to vector<1024xf32>
    %5 = vector.shape_cast %4 : vector<1024xf32> to vector<1024x1xf32>
    %cst_2 = arith.constant 0.000000e+00 : f32
    %6 = vector.broadcast %cst_2 : f32 to vector<1024x1xf32>
    %7 = arith.cmpf ogt, %5, %6 : vector<1024x1xf32>
    %c1024_i32 = arith.constant 1024 : i32
    %8 = arith.muli %arg1, %c1024_i32 : i32
    %9 = tpu.iota {dimensions = array<i32: 0>} : vector<1024x1xi32>
    %10 = vector.broadcast %8 : i32 to vector<1024x1xi32>
    %11 = arith.addi %10, %9 : vector<1024x1xi32>
    %c16_i32 = arith.constant 16 : i32
    %12 = vector.broadcast %c16_i32 : i32 to vector<1024x1xi32>
    %13 = arith.cmpi slt, %11, %12 : vector<1024x1xi32>
    %14 = arith.andi %7, %13 : vector<1024x1xi1>
    %15 = arith.extui %14 : vector<1024x1xi1> to vector<1024x1xi32>
    %16 = arith.sitofp %15 : vector<1024x1xi32> to vector<1024x1xf32>
    %c0_3 = arith.constant 0 : index
    %c0_4 = arith.constant 0 : index
    %17 = vector.load %arg3[%c0_3, %c0_4] : memref<16x128xbf16, #tpu.memory_space<vmem>>, vector<16x128xbf16>
    %cst_5 = arith.constant dense<0.000000e+00> : vector<1024x128xf32>
    %18 = tpu.matmul %1, %17, %cst_5 {dimension_numbers = #tpu.dot_dimension_numbers<[1], [0], [0], [1], [0, 0, 1, 1], [], []>} : vector<1024x16xbf16>, vector<16x128xbf16>, vector<1024x128xf32> -> vector<1024x128xf32>
    %c0_6 = arith.constant 0 : index
    %c0_7 = arith.constant 0 : index
    %19 = vector.load %arg4[%c0_6, %c0_7] : memref<1x128xf32, #tpu.memory_space<vmem>>, vector<1x128xf32>
    %20 = vector.broadcast %19 : vector<1x128xf32> to vector<1024x128xf32>
    %21 = arith.addf %18, %20 : vector<1024x128xf32>
    %cst_8 = arith.constant 0.000000e+00 : f32
    %22 = vector.broadcast %cst_8 : f32 to vector<1024x128xf32>
    %23 = arith.maximumf %21, %22 : vector<1024x128xf32>
    %24 = arith.truncf %23 : vector<1024x128xf32> to vector<1024x128xbf16>
    %c0_9 = arith.constant 0 : index
    %c0_10 = arith.constant 0 : index
    %25 = vector.load %arg5[%c0_9, %c0_10] : memref<128x128xbf16, #tpu.memory_space<vmem>>, vector<128x128xbf16>
    %cst_11 = arith.constant dense<0.000000e+00> : vector<1024x128xf32>
    %26 = tpu.matmul %24, %25, %cst_11 {dimension_numbers = #tpu.dot_dimension_numbers<[1], [0], [0], [1], [0, 0, 1, 1], [], []>} : vector<1024x128xbf16>, vector<128x128xbf16>, vector<1024x128xf32> -> vector<1024x128xf32>
    %c0_12 = arith.constant 0 : index
    %c0_13 = arith.constant 0 : index
    %27 = vector.load %arg6[%c0_12, %c0_13] : memref<1x128xf32, #tpu.memory_space<vmem>>, vector<1x128xf32>
    %28 = vector.broadcast %27 : vector<1x128xf32> to vector<1024x128xf32>
    %29 = arith.addf %26, %28 : vector<1024x128xf32>
    %c0_14 = arith.constant 0 : index
    %c0_15 = arith.constant 0 : index
    %30 = vector.load %arg7[%c0_14, %c0_15] : memref<16x128xbf16, #tpu.memory_space<vmem>>, vector<16x128xbf16>
    %cst_16 = arith.constant dense<0.000000e+00> : vector<1024x128xf32>
    %31 = tpu.matmul %1, %30, %cst_16 {dimension_numbers = #tpu.dot_dimension_numbers<[1], [0], [0], [1], [0, 0, 1, 1], [], []>} : vector<1024x16xbf16>, vector<16x128xbf16>, vector<1024x128xf32> -> vector<1024x128xf32>
    %c0_17 = arith.constant 0 : index
    %c0_18 = arith.constant 0 : index
    %32 = vector.load %arg8[%c0_17, %c0_18] : memref<1x128xf32, #tpu.memory_space<vmem>>, vector<1x128xf32>
    %33 = vector.broadcast %32 : vector<1x128xf32> to vector<1024x128xf32>
    %34 = arith.addf %31, %33 : vector<1024x128xf32>
    %cst_19 = arith.constant 0.000000e+00 : f32
    %35 = vector.broadcast %cst_19 : f32 to vector<1024x128xf32>
    %36 = arith.maximumf %34, %35 : vector<1024x128xf32>
    %37 = arith.truncf %36 : vector<1024x128xf32> to vector<1024x128xbf16>
    %c0_20 = arith.constant 0 : index
    %c0_21 = arith.constant 0 : index
    %38 = vector.load %arg9[%c0_20, %c0_21] : memref<128x128xbf16, #tpu.memory_space<vmem>>, vector<128x128xbf16>
    %cst_22 = arith.constant dense<0.000000e+00> : vector<1024x128xf32>
    %39 = tpu.matmul %37, %38, %cst_22 {dimension_numbers = #tpu.dot_dimension_numbers<[1], [0], [0], [1], [0, 0, 1, 1], [], []>} : vector<1024x128xbf16>, vector<128x128xbf16>, vector<1024x128xf32> -> vector<1024x128xf32>
    %c0_23 = arith.constant 0 : index
    %c0_24 = arith.constant 0 : index
    %40 = vector.load %arg10[%c0_23, %c0_24] : memref<1x128xf32, #tpu.memory_space<vmem>>, vector<1x128xf32>
    %41 = vector.broadcast %40 : vector<1x128xf32> to vector<1024x128xf32>
    %42 = arith.addf %39, %41 : vector<1024x128xf32>
    %c8_i32 = arith.constant 8 : i32
    %43 = vector.broadcast %c8_i32 : i32 to vector<1024x1xi32>
    %44 = arith.cmpi slt, %11, %43 : vector<1024x1xi32>
    %45 = vector.shape_cast %44 : vector<1024x1xi1> to vector<1024x1xi1>
    %46 = vector.broadcast %45 : vector<1024x1xi1> to vector<1024x128xi1>
    %47 = arith.select %46, %29, %42 : vector<1024x128xi1>, vector<1024x128xf32>
    %48 = arith.truncf %47 : vector<1024x128xf32> to vector<1024x128xbf16>
    %c0_25 = arith.constant 0 : index
    %c0_26 = arith.constant 0 : index
    %49 = vector.load %arg11[%c0_25, %c0_26] : memref<128x128xbf16, #tpu.memory_space<vmem>>, vector<128x128xbf16>
    %cst_27 = arith.constant dense<0.000000e+00> : vector<1024x128xf32>
    %50 = tpu.matmul %48, %49, %cst_27 {dimension_numbers = #tpu.dot_dimension_numbers<[1], [0], [0], [1], [0, 0, 1, 1], [], []>} : vector<1024x128xbf16>, vector<128x128xbf16>, vector<1024x128xf32> -> vector<1024x128xf32>
    %c0_28 = arith.constant 0 : index
    %c0_29 = arith.constant 0 : index
    %51 = vector.load %arg12[%c0_28, %c0_29] : memref<1x128xf32, #tpu.memory_space<vmem>>, vector<1x128xf32>
    %52 = vector.broadcast %51 : vector<1x128xf32> to vector<1024x128xf32>
    %53 = arith.addf %50, %52 : vector<1024x128xf32>
    %cst_30 = arith.constant 0.000000e+00 : f32
    %54 = vector.broadcast %cst_30 : f32 to vector<1024x128xf32>
    %55 = arith.maximumf %53, %54 : vector<1024x128xf32>
    %56 = arith.truncf %55 : vector<1024x128xf32> to vector<1024x128xbf16>
    %c0_31 = arith.constant 0 : index
    %c0_32 = arith.constant 0 : index
    %57 = vector.load %arg13[%c0_31, %c0_32] : memref<128x128xbf16, #tpu.memory_space<vmem>>, vector<128x128xbf16>
    %cst_33 = arith.constant dense<0.000000e+00> : vector<1024x128xf32>
    %58 = tpu.matmul %56, %57, %cst_33 {dimension_numbers = #tpu.dot_dimension_numbers<[1], [0], [0], [1], [0, 0, 1, 1], [], []>} : vector<1024x128xbf16>, vector<128x128xbf16>, vector<1024x128xf32> -> vector<1024x128xf32>
    %c0_34 = arith.constant 0 : index
    %c0_35 = arith.constant 0 : index
    %59 = vector.load %arg14[%c0_34, %c0_35] : memref<1x128xf32, #tpu.memory_space<vmem>>, vector<1x128xf32>
    %60 = vector.broadcast %59 : vector<1x128xf32> to vector<1024x128xf32>
    %61 = arith.addf %58, %60 : vector<1024x128xf32>
    %62 = vector.broadcast %16 : vector<1024x1xf32> to vector<1024x128xf32>
    %63 = arith.mulf %61, %62 : vector<1024x128xf32>
    %64 = arith.truncf %63 : vector<1024x128xf32> to vector<1024x128xbf16>
    %c0_36 = arith.constant 0 : index
    %c0_37 = arith.constant 0 : index
    %c0_38 = arith.constant 0 : index
    %65 = vector.load %arg15[%c0_36, %c0_37, %c0_38] : memref<1x1024x128xbf16, #tpu.memory_space<vmem>>, vector<1x1024x128xbf16>
    %66 = vector.shape_cast %65 : vector<1x1024x128xbf16> to vector<1024x128xbf16>
    %67 = vector.shape_cast %64 : vector<1024x128xbf16> to vector<1x1024x128xbf16>
    tpu.vector_store %arg15[%c0_36, %c0_37, %c0_38], %67 {strides = array<i32>} : memref<1x1024x128xbf16, #tpu.memory_space<vmem>>, vector<1x1024x128xbf16>,
    %c0_39 = arith.constant 0 : index
    %c0_40 = arith.constant 0 : index
    %c0_41 = arith.constant 0 : index
    %68 = vector.load %arg16[%c0_39, %c0_40, %c0_41] : memref<1x1024x1xf32, #tpu.memory_space<vmem>>, vector<1x1024x1xf32>
    %69 = vector.shape_cast %68 : vector<1x1024x1xf32> to vector<1024x1xf32>
    %70 = vector.shape_cast %16 : vector<1024x1xf32> to vector<1x1024x1xf32>
    tpu.vector_store %arg16[%c0_39, %c0_40, %c0_41], %70 {strides = array<i32>} : memref<1x1024x1xf32, #tpu.memory_space<vmem>>, vector<1x1024x1xf32>,
    %cst_42 = arith.constant dense<0.000000e+00> : vector<128xf32>
    %71 = vector.multi_reduction <add>, %63, %cst_42 [0] : vector<1024x128xf32> to vector<128xf32>
    %72 = vector.shape_cast %71 : vector<128xf32> to vector<1x128xf32>
    %c0_43 = arith.constant 0 : index
    %c0_44 = arith.constant 0 : index
    %c0_45 = arith.constant 0 : index
    %c0_46 = arith.constant 0 : index
    %73 = vector.load %arg17[%c0_43, %c0_44, %c0_45, %c0_46] : memref<1x1x1x128xf32, #tpu.memory_space<vmem>>, vector<1x1x1x128xf32>
    %74 = vector.shape_cast %73 : vector<1x1x1x128xf32> to vector<1x128xf32>
    %75 = vector.shape_cast %72 : vector<1x128xf32> to vector<1x1x1x128xf32>
    tpu.vector_store %arg17[%c0_43, %c0_44, %c0_45, %c0_46], %75 {strides = array<i32>} : memref<1x1x1x128xf32, #tpu.memory_space<vmem>>, vector<1x1x1x128xf32>,
    return
  }
  func.func @transform_0(%arg0: i32, %arg1: i32) -> (i32, i32, i32) {
    %c0_i32 = arith.constant 0 : i32
    %c0_i32_0 = arith.constant 0 : i32
    return %arg0, %arg1, %c0_i32 : i32, i32, i32
  }
  func.func @transform_1(%arg0: i32, %arg1: i32) -> (i32, i32) {
    %c0_i32 = arith.constant 0 : i32
    %c0_i32_0 = arith.constant 0 : i32
    %c0_i32_1 = arith.constant 0 : i32
    return %c0_i32, %c0_i32_0 : i32, i32
  }
  func.func @transform_2(%arg0: i32, %arg1: i32) -> (i32, i32) {
    %c0_i32 = arith.constant 0 : i32
    %c0_i32_0 = arith.constant 0 : i32
    %c0_i32_1 = arith.constant 0 : i32
    return %c0_i32, %c0_i32_0 : i32, i32
  }
  func.func @transform_3(%arg0: i32, %arg1: i32) -> (i32, i32) {
    %c0_i32 = arith.constant 0 : i32
    %c0_i32_0 = arith.constant 0 : i32
    %c0_i32_1 = arith.constant 0 : i32
    return %c0_i32, %c0_i32_0 : i32, i32
  }
  func.func @transform_4(%arg0: i32, %arg1: i32) -> (i32, i32) {
    %c0_i32 = arith.constant 0 : i32
    %c0_i32_0 = arith.constant 0 : i32
    %c0_i32_1 = arith.constant 0 : i32
    return %c0_i32, %c0_i32_0 : i32, i32
  }
  func.func @transform_5(%arg0: i32, %arg1: i32) -> (i32, i32) {
    %c0_i32 = arith.constant 0 : i32
    %c0_i32_0 = arith.constant 0 : i32
    %c0_i32_1 = arith.constant 0 : i32
    return %c0_i32, %c0_i32_0 : i32, i32
  }
  func.func @transform_6(%arg0: i32, %arg1: i32) -> (i32, i32) {
    %c0_i32 = arith.constant 0 : i32
    %c0_i32_0 = arith.constant 0 : i32
    %c0_i32_1 = arith.constant 0 : i32
    return %c0_i32, %c0_i32_0 : i32, i32
  }
  func.func @transform_7(%arg0: i32, %arg1: i32) -> (i32, i32) {
    %c0_i32 = arith.constant 0 : i32
    %c0_i32_0 = arith.constant 0 : i32
    %c0_i32_1 = arith.constant 0 : i32
    return %c0_i32, %c0_i32_0 : i32, i32
  }
  func.func @transform_8(%arg0: i32, %arg1: i32) -> (i32, i32) {
    %c0_i32 = arith.constant 0 : i32
    %c0_i32_0 = arith.constant 0 : i32
    %c0_i32_1 = arith.constant 0 : i32
    return %c0_i32, %c0_i32_0 : i32, i32
  }
  func.func @transform_9(%arg0: i32, %arg1: i32) -> (i32, i32) {
    %c0_i32 = arith.constant 0 : i32
    %c0_i32_0 = arith.constant 0 : i32
    %c0_i32_1 = arith.constant 0 : i32
    return %c0_i32, %c0_i32_0 : i32, i32
  }
  func.func @transform_10(%arg0: i32, %arg1: i32) -> (i32, i32) {
    %c0_i32 = arith.constant 0 : i32
    %c0_i32_0 = arith.constant 0 : i32
    %c0_i32_1 = arith.constant 0 : i32
    return %c0_i32, %c0_i32_0 : i32, i32
  }
  func.func @transform_11(%arg0: i32, %arg1: i32) -> (i32, i32) {
    %c0_i32 = arith.constant 0 : i32
    %c0_i32_0 = arith.constant 0 : i32
    %c0_i32_1 = arith.constant 0 : i32
    return %c0_i32, %c0_i32_0 : i32, i32
  }
  func.func @transform_12(%arg0: i32, %arg1: i32) -> (i32, i32) {
    %c0_i32 = arith.constant 0 : i32
    %c0_i32_0 = arith.constant 0 : i32
    %c0_i32_1 = arith.constant 0 : i32
    return %c0_i32, %c0_i32_0 : i32, i32
  }
  func.func @transform_13(%arg0: i32, %arg1: i32) -> (i32, i32, i32) {
    %c0_i32 = arith.constant 0 : i32
    %c0_i32_0 = arith.constant 0 : i32
    return %arg0, %arg1, %c0_i32 : i32, i32, i32
  }
  func.func @transform_14(%arg0: i32, %arg1: i32) -> (i32, i32, i32) {
    %c0_i32 = arith.constant 0 : i32
    %c0_i32_0 = arith.constant 0 : i32
    return %arg0, %arg1, %c0_i32 : i32, i32, i32
  }
  func.func @transform_15(%arg0: i32, %arg1: i32) -> (i32, i32, i32, i32) {
    %c0_i32 = arith.constant 0 : i32
    %c0_i32_0 = arith.constant 0 : i32
    %c0_i32_1 = arith.constant 0 : i32
    return %arg0, %arg1, %c0_i32, %c0_i32_0 : i32, i32, i32, i32
  }
}

</mosaic_0001>

<llo_original>
// kernel: scene_encoder_forward.1
$region0: #{scene_encoder_forward.1}
  #allocation0 [shape = 'u32[]', space=smem, size = 0x4, offset = 0x4, fixed_abs, tag = 'smem constant byte address 0x4 - core index']
  #allocation1 [shape = 'u32[144,128]{1,0:T(1,128)}', space=vmem, size = 0x12000, scoped, tag = 'internal scratch']
  %s0 = inlined_call_operand.vmem [shape: bf16[2,1024,16], index: 0, kind: input, shape index: {}]
  %s1 = inlined_call_operand.vmem [shape: bf16[16,128], index: 1, kind: input, shape index: {}]
  %s2 = inlined_call_operand.vmem [shape: f32[1,128], index: 2, kind: input, shape index: {}]
  %s3 = inlined_call_operand.vmem [shape: bf16[128,128], index: 3, kind: input, shape index: {}]
  %s4 = inlined_call_operand.vmem [shape: f32[1,128], index: 4, kind: input, shape index: {}]
  %s5 = inlined_call_operand.vmem [shape: bf16[16,128], index: 5, kind: input, shape index: {}]
  %s6 = inlined_call_operand.vmem [shape: f32[1,128], index: 6, kind: input, shape index: {}]
  %s7 = inlined_call_operand.vmem [shape: bf16[128,128], index: 7, kind: input, shape index: {}]
  %s8 = inlined_call_operand.vmem [shape: f32[1,128], index: 8, kind: input, shape index: {}]
  %s9 = inlined_call_operand.vmem [shape: bf16[128,128], index: 9, kind: input, shape index: {}]
  %s10 = inlined_call_operand.vmem [shape: f32[1,128], index: 10, kind: input, shape index: {}]
  %s11 = inlined_call_operand.vmem [shape: bf16[128,128], index: 11, kind: input, shape index: {}]
  %s12 = inlined_call_operand.vmem [shape: f32[1,128], index: 12, kind: input, shape index: {}]
  %s13 = inlined_call_operand.vmem [shape: bf16[2,1024,128], index: 13, kind: output, shape index: {0}]
  %s14 = inlined_call_operand.vmem [shape: f32[2,1024,1], index: 14, kind: output, shape index: {1}]
  %s15 = inlined_call_operand.vmem [shape: f32[2,1,1,128], index: 15, kind: output, shape index: {2}]
  %16 = xla_tuple %s13, %s14, %s15
  %s17 = sld [smem:[#allocation0]]
  $region101: #{scene_encoder_forward.1} parent=0
    _
  %s19 = ssub.s32 1, %s17
  %s20 = scalar_select 0, %s19, %s17
  loop: start=0, step=1, limit=4
  $region2: #{scene_encoder_forward.1} parent=0 // loop_pre_header
    _
  $region3: #{scene_encoder_forward.1} parent=0 // loop_header
    %s22 = sphi 0, %s26
    %p23 = scmp.ge.s32.totalorder %s22, 4
    %s29 = sphi 0, %s41
    %s30 = sphi 0, %s37
    %s31 = sphi 0, %s29
    %s32 = sphi 0, %s30
    %s33 = sphi 0, %s31
    %s34 = sphi 0, %s32
    %s46 = sphi 0, %s48
    %s49 = sphi 0, %s46
    %s50 = sphi 0, %s49
    %s66 = sphi 0, %s50
    %s70 = sphi 0, %s70
    %s72 = sphi 0, %s70
    %s73 = sphi 0, %s72
    %s87 = sphi 0, %s73
    %s91 = sphi 0, %s91
    %s93 = sphi 0, %s91
    %s94 = sphi 0, %s93
    %s108 = sphi 0, %s94
    %s112 = sphi 0, %s112
    %s114 = sphi 0, %s112
    %s115 = sphi 0, %s114
    %s129 = sphi 0, %s115
    %s133 = sphi 0, %s133
    %s135 = sphi 0, %s133
    %s136 = sphi 0, %s135
    %s150 = sphi 0, %s136
    %s154 = sphi 0, %s154
    %s156 = sphi 0, %s154
    %s157 = sphi 0, %s156
    %s171 = sphi 0, %s157
    %s175 = sphi 0, %s175
    %s177 = sphi 0, %s175
    %s178 = sphi 0, %s177
    %s192 = sphi 0, %s178
    %s196 = sphi 0, %s196
    %s198 = sphi 0, %s196
    %s199 = sphi 0, %s198
    %s213 = sphi 0, %s199
    %s217 = sphi 0, %s217
    %s219 = sphi 0, %s217
    %s220 = sphi 0, %s219
    %s234 = sphi 0, %s220
    %s238 = sphi 0, %s238
    %s240 = sphi 0, %s238
    %s241 = sphi 0, %s240
    %s255 = sphi 0, %s241
    %s259 = sphi 0, %s259
    %s261 = sphi 0, %s259
    %s262 = sphi 0, %s261
    %s276 = sphi 0, %s262
    %s280 = sphi 0, %s280
    %s282 = sphi 0, %s280
    %s283 = sphi 0, %s282
    %s297 = sphi 0, %s283
    %s301 = sphi 0, %s301
    %s303 = sphi 0, %s301
    %s304 = sphi 0, %s303
    %s318 = sphi 0, %s304
    %s326 = sphi 0, %s328
    %s329 = sphi 0, %s326
    %s330 = sphi 0, %s329
    %s346 = sphi 0, %s330
    %s354 = sphi 0, %s356
    %s357 = sphi 0, %s354
    %s358 = sphi 0, %s357
    %s374 = sphi 0, %s358
    %s382 = sphi 0, %s384
    %s385 = sphi 0, %s382
    %s386 = sphi 0, %s385
    %s402 = sphi 0, %s386
  $region4: #{scene_encoder_forward.1} parent=0 // loop_header_branch
    %25 = sbr.rel (%p23) target = $region8
  $region5: #{scene_encoder_forward.1} parent=0 // loop_body
    %s27 = ssub.s32 %s22, 1
    %s28 = ssub.s32 %s22, 2
    %s35 = sadd.s32 1, %s30
    %p36 = scmp.ge.s32.totalorder %s35, 1
    %s37 = scalar_select %p36, 0, %s35
    %s38 = sadd.s32 1, %s29
    %s39 = scalar_select %p36, %s38, %s29
    %p40 = scmp.ge.s32.totalorder %s39, 2
    %s41 = scalar_select %p40, 0, %s39
    %s42 = ssub.s32 %s29, %s41
    %s43 = ssub.s32 %s30, %s37
    %s44 = sor.u32 %s42, %s43
    %p45 = scmp.eq.s32.totalorder %s44, 0
    %s47 = sadd.s32 %s46, 1
    %s48 = scalar_select %p45, %s46, %s47
    %p51 = pneg %p45
    %p52 = scmp.eq.s32.totalorder %s22, 1
    %p53 = por %p51, %p52
    %p54 = scmp.ne.s32.totalorder %s46, %s49
    %p55 = scmp.eq.s32.totalorder %s22, 0
    %p56 = por %p54, %p55
    %p57 = scmp.ne.s32.totalorder %s46, %s49
    %p58 = scmp.eq.s32.totalorder %s27, 1
    %p59 = por %p57, %p58
    %p60 = scmp.ne.s32.totalorder %s49, %s50
    %p61 = scmp.eq.s32.totalorder %s27, 0
    %p62 = por %p60, %p61
    %p63 = scmp.ne.s32.totalorder %s49, %s50
    %p64 = scmp.eq.s32.totalorder %s28, 1
    %p65 = por %p63, %p64
    %p67 = scmp.ne.s32.totalorder %s50, %s66
    %p68 = scmp.eq.s32.totalorder %s28, 0
    %p69 = por %p67, %p68
    %s71 = sadd.s32 %s70, 1
    %p74 = scmp.eq.s32.totalorder %s22, 1
    %p75 = scmp.ne.s32.totalorder %s70, %s72
    %p76 = scmp.eq.s32.totalorder %s22, 0
    %p77 = por %p75, %p76
    %p78 = scmp.ne.s32.totalorder %s70, %s72
    %p79 = scmp.eq.s32.totalorder %s27, 1
    %p80 = por %p78, %p79
    %p81 = scmp.ne.s32.totalorder %s72, %s73
    %p82 = scmp.eq.s32.totalorder %s27, 0
    %p83 = por %p81, %p82
    %p84 = scmp.ne.s32.totalorder %s72, %s73
    %p85 = scmp.eq.s32.totalorder %s28, 1
    %p86 = por %p84, %p85
    %p88 = scmp.ne.s32.totalorder %s73, %s87
    %p89 = scmp.eq.s32.totalorder %s28, 0
    %p90 = por %p88, %p89
    %s92 = sadd.s32 %s91, 1
    %p95 = scmp.eq.s32.totalorder %s22, 1
    %p96 = scmp.ne.s32.totalorder %s91, %s93
    %p97 = scmp.eq.s32.totalorder %s22, 0
    %p98 = por %p96, %p97
    %p99 = scmp.ne.s32.totalorder %s91, %s93
    %p100 = scmp.eq.s32.totalorder %s27, 1
    %p101 = por %p99, %p100
    %p102 = scmp.ne.s32.totalorder %s93, %s94
    %p103 = scmp.eq.s32.totalorder %s27, 0
    %p104 = por %p102, %p103
    %p105 = scmp.ne.s32.totalorder %s93, %s94
    %p106 = scmp.eq.s32.totalorder %s28, 1
    %p107 = por %p105, %p106
    %p109 = scmp.ne.s32.totalorder %s94, %s108
    %p110 = scmp.eq.s32.totalorder %s28, 0
    %p111 = por %p109, %p110
    %s113 = sadd.s32 %s112, 1
    %p116 = scmp.eq.s32.totalorder %s22, 1
    %p117 = scmp.ne.s32.totalorder %s112, %s114
    %p118 = scmp.eq.s32.totalorder %s22, 0
    %p119 = por %p117, %p118
    %p120 = scmp.ne.s32.totalorder %s112, %s114
    %p121 = scmp.eq.s32.totalorder %s27, 1
    %p122 = por %p120, %p121
    %p123 = scmp.ne.s32.totalorder %s114, %s115
    %p124 = scmp.eq.s32.totalorder %s27, 0
    %p125 = por %p123, %p124
    %p126 = scmp.ne.s32.totalorder %s114, %s115
    %p127 = scmp.eq.s32.totalorder %s28, 1
    %p128 = por %p126, %p127
    %p130 = scmp.ne.s32.totalorder %s115, %s129
    %p131 = scmp.eq.s32.totalorder %s28, 0
    %p132 = por %p130, %p131
    %s134 = sadd.s32 %s133, 1
    %p137 = scmp.eq.s32.totalorder %s22, 1
    %p138 = scmp.ne.s32.totalorder %s133, %s135
    %p139 = scmp.eq.s32.totalorder %s22, 0
    %p140 = por %p138, %p139
    %p141 = scmp.ne.s32.totalorder %s133, %s135
    %p142 = scmp.eq.s32.totalorder %s27, 1
    %p143 = por %p141, %p142
    %p144 = scmp.ne.s32.totalorder %s135, %s136
    %p145 = scmp.eq.s32.totalorder %s27, 0
    %p146 = por %p144, %p145
    %p147 = scmp.ne.s32.totalorder %s135, %s136
    %p148 = scmp.eq.s32.totalorder %s28, 1
    %p149 = por %p147, %p148
    %p151 = scmp.ne.s32.totalorder %s136, %s150
    %p152 = scmp.eq.s32.totalorder %s28, 0
    %p153 = por %p151, %p152
    %s155 = sadd.s32 %s154, 1
    %p158 = scmp.eq.s32.totalorder %s22, 1
    %p159 = scmp.ne.s32.totalorder %s154, %s156
    %p160 = scmp.eq.s32.totalorder %s22, 0
    %p161 = por %p159, %p160
    %p162 = scmp.ne.s32.totalorder %s154, %s156
    %p163 = scmp.eq.s32.totalorder %s27, 1
    %p164 = por %p162, %p163
    %p165 = scmp.ne.s32.totalorder %s156, %s157
    %p166 = scmp.eq.s32.totalorder %s27, 0
    %p167 = por %p165, %p166
    %p168 = scmp.ne.s32.totalorder %s156, %s157
    %p169 = scmp.eq.s32.totalorder %s28, 1
    %p170 = por %p168, %p169
    %p172 = scmp.ne.s32.totalorder %s157, %s171
    %p173 = scmp.eq.s32.totalorder %s28, 0
    %p174 = por %p172, %p173
    %s176 = sadd.s32 %s175, 1
    %p179 = scmp.eq.s32.totalorder %s22, 1
    %p180 = scmp.ne.s32.totalorder %s175, %s177
    %p181 = scmp.eq.s32.totalorder %s22, 0
    %p182 = por %p180, %p181
    %p183 = scmp.ne.s32.totalorder %s175, %s177
    %p184 = scmp.eq.s32.totalorder %s27, 1
    %p185 = por %p183, %p184
    %p186 = scmp.ne.s32.totalorder %s177, %s178
    %p187 = scmp.eq.s32.totalorder %s27, 0
    %p188 = por %p186, %p187
    %p189 = scmp.ne.s32.totalorder %s177, %s178
    %p190 = scmp.eq.s32.totalorder %s28, 1
    %p191 = por %p189, %p190
    %p193 = scmp.ne.s32.totalorder %s178, %s192
    %p194 = scmp.eq.s32.totalorder %s28, 0
    %p195 = por %p193, %p194
    %s197 = sadd.s32 %s196, 1
    %p200 = scmp.eq.s32.totalorder %s22, 1
    %p201 = scmp.ne.s32.totalorder %s196, %s198
    %p202 = scmp.eq.s32.totalorder %s22, 0
    %p203 = por %p201, %p202
    %p204 = scmp.ne.s32.totalorder %s196, %s198
    %p205 = scmp.eq.s32.totalorder %s27, 1
    %p206 = por %p204, %p205
    %p207 = scmp.ne.s32.totalorder %s198, %s199
    %p208 = scmp.eq.s32.totalorder %s27, 0
    %p209 = por %p207, %p208
    %p210 = scmp.ne.s32.totalorder %s198, %s199
    %p211 = scmp.eq.s32.totalorder %s28, 1
    %p212 = por %p210, %p211
    %p214 = scmp.ne.s32.totalorder %s199, %s213
    %p215 = scmp.eq.s32.totalorder %s28, 0
    %p216 = por %p214, %p215
    %s218 = sadd.s32 %s217, 1
    %p221 = scmp.eq.s32.totalorder %s22, 1
    %p222 = scmp.ne.s32.totalorder %s217, %s219
    %p223 = scmp.eq.s32.totalorder %s22, 0
    %p224 = por %p222, %p223
    %p225 = scmp.ne.s32.totalorder %s217, %s219
    %p226 = scmp.eq.s32.totalorder %s27, 1
    %p227 = por %p225, %p226
    %p228 = scmp.ne.s32.totalorder %s219, %s220
    %p229 = scmp.eq.s32.totalorder %s27, 0
    %p230 = por %p228, %p229
    %p231 = scmp.ne.s32.totalorder %s219, %s220
    %p232 = scmp.eq.s32.totalorder %s28, 1
    %p233 = por %p231, %p232
    %p235 = scmp.ne.s32.totalorder %s220, %s234
    %p236 = scmp.eq.s32.totalorder %s28, 0
    %p237 = por %p235, %p236
    %s239 = sadd.s32 %s238, 1
    %p242 = scmp.eq.s32.totalorder %s22, 1
    %p243 = scmp.ne.s32.totalorder %s238, %s240
    %p244 = scmp.eq.s32.totalorder %s22, 0
    %p245 = por %p243, %p244
    %p246 = scmp.ne.s32.totalorder %s238, %s240
    %p247 = scmp.eq.s32.totalorder %s27, 1
    %p248 = por %p246, %p247
    %p249 = scmp.ne.s32.totalorder %s240, %s241
    %p250 = scmp.eq.s32.totalorder %s27, 0
    %p251 = por %p249, %p250
    %p252 = scmp.ne.s32.totalorder %s240, %s241
    %p253 = scmp.eq.s32.totalorder %s28, 1
    %p254 = por %p252, %p253
    %p256 = scmp.ne.s32.totalorder %s241, %s255
    %p257 = scmp.eq.s32.totalorder %s28, 0
    %p258 = por %p256, %p257
    %s260 = sadd.s32 %s259, 1
    %p263 = scmp.eq.s32.totalorder %s22, 1
    %p264 = scmp.ne.s32.totalorder %s259, %s261
    %p265 = scmp.eq.s32.totalorder %s22, 0
    %p266 = por %p264, %p265
    %p267 = scmp.ne.s32.totalorder %s259, %s261
    %p268 = scmp.eq.s32.totalorder %s27, 1
    %p269 = por %p267, %p268
    %p270 = scmp.ne.s32.totalorder %s261, %s262
    %p271 = scmp.eq.s32.totalorder %s27, 0
    %p272 = por %p270, %p271
    %p273 = scmp.ne.s32.totalorder %s261, %s262
    %p274 = scmp.eq.s32.totalorder %s28, 1
    %p275 = por %p273, %p274
    %p277 = scmp.ne.s32.totalorder %s262, %s276
    %p278 = scmp.eq.s32.totalorder %s28, 0
    %p279 = por %p277, %p278
    %s281 = sadd.s32 %s280, 1
    %p284 = scmp.eq.s32.totalorder %s22, 1
    %p285 = scmp.ne.s32.totalorder %s280, %s282
    %p286 = scmp.eq.s32.totalorder %s22, 0
    %p287 = por %p285, %p286
    %p288 = scmp.ne.s32.totalorder %s280, %s282
    %p289 = scmp.eq.s32.totalorder %s27, 1
    %p290 = por %p288, %p289
    %p291 = scmp.ne.s32.totalorder %s282, %s283
    %p292 = scmp.eq.s32.totalorder %s27, 0
    %p293 = por %p291, %p292
    %p294 = scmp.ne.s32.totalorder %s282, %s283
    %p295 = scmp.eq.s32.totalorder %s28, 1
    %p296 = por %p294, %p295
    %p298 = scmp.ne.s32.totalorder %s283, %s297
    %p299 = scmp.eq.s32.totalorder %s28, 0
    %p300 = por %p298, %p299
    %s302 = sadd.s32 %s301, 1
    %p305 = scmp.eq.s32.totalorder %s22, 1
    %p306 = scmp.ne.s32.totalorder %s301, %s303
    %p307 = scmp.eq.s32.totalorder %s22, 0
    %p308 = por %p306, %p307
    %p309 = scmp.ne.s32.totalorder %s301, %s303
    %p310 = scmp.eq.s32.totalorder %s27, 1
    %p311 = por %p309, %p310
    %p312 = scmp.ne.s32.totalorder %s303, %s304
    %p313 = scmp.eq.s32.totalorder %s27, 0
    %p314 = por %p312, %p313
    %p315 = scmp.ne.s32.totalorder %s303, %s304
    %p316 = scmp.eq.s32.totalorder %s28, 1
    %p317 = por %p315, %p316
    %p319 = scmp.ne.s32.totalorder %s304, %s318
    %p320 = scmp.eq.s32.totalorder %s28, 0
    %p321 = por %p319, %p320
    %s322 = ssub.s32 %s29, %s41
    %s323 = ssub.s32 %s30, %s37
    %s324 = sor.u32 %s322, %s323
    %p325 = scmp.eq.s32.totalorder %s324, 0
    %s327 = sadd.s32 %s326, 1
    %s328 = scalar_select %p325, %s326, %s327
    %p331 = pneg %p325
    %p332 = scmp.eq.s32.totalorder %s22, 1
    %p333 = por %p331, %p332
    %p334 = scmp.ne.s32.totalorder %s326, %s329
    %p335 = scmp.eq.s32.totalorder %s22, 0
    %p336 = por %p334, %p335
    %p337 = scmp.ne.s32.totalorder %s326, %s329
    %p338 = scmp.eq.s32.totalorder %s27, 1
    %p339 = por %p337, %p338
    %p340 = scmp.ne.s32.totalorder %s329, %s330
    %p341 = scmp.eq.s32.totalorder %s27, 0
    %p342 = por %p340, %p341
    %p343 = scmp.ne.s32.totalorder %s329, %s330
    %p344 = scmp.eq.s32.totalorder %s28, 1
    %p345 = por %p343, %p344
    %p347 = scmp.ne.s32.totalorder %s330, %s346
    %p348 = scmp.eq.s32.totalorder %s28, 0
    %p349 = por %p347, %p348
    %s350 = ssub.s32 %s29, %s41
    %s351 = ssub.s32 %s30, %s37
    %s352 = sor.u32 %s350, %s351
    %p353 = scmp.eq.s32.totalorder %s352, 0
    %s355 = sadd.s32 %s354, 1
    %s356 = scalar_select %p353, %s354, %s355
    %p359 = pneg %p353
    %p360 = scmp.eq.s32.totalorder %s22, 1
    %p361 = por %p359, %p360
    %p362 = scmp.ne.s32.totalorder %s354, %s357
    %p363 = scmp.eq.s32.totalorder %s22, 0
    %p364 = por %p362, %p363
    %p365 = scmp.ne.s32.totalorder %s354, %s357
    %p366 = scmp.eq.s32.totalorder %s27, 1
    %p367 = por %p365, %p366
    %p368 = scmp.ne.s32.totalorder %s357, %s358
    %p369 = scmp.eq.s32.totalorder %s27, 0
    %p370 = por %p368, %p369
    %p371 = scmp.ne.s32.totalorder %s357, %s358
    %p372 = scmp.eq.s32.totalorder %s28, 1
    %p373 = por %p371, %p372
    %p375 = scmp.ne.s32.totalorder %s358, %s374
    %p376 = scmp.eq.s32.totalorder %s28, 0
    %p377 = por %p375, %p376
    %s378 = ssub.s32 %s29, %s41
    %s379 = ssub.s32 %s30, %s37
    %s380 = sor.u32 %s378, %s379
    %p381 = scmp.eq.s32.totalorder %s380, 0
    %s383 = sadd.s32 %s382, 1
    %s384 = scalar_select %p381, %s382, %s383
    %p387 = pneg %p381
    %p388 = scmp.eq.s32.totalorder %s22, 1
    %p389 = por %p387, %p388
    %p390 = scmp.ne.s32.totalorder %s382, %s385
    %p391 = scmp.eq.s32.totalorder %s22, 0
    %p392 = por %p390, %p391
    %p393 = scmp.ne.s32.totalorder %s382, %s385
    %p394 = scmp.eq.s32.totalorder %s27, 1
    %p395 = por %p393, %p394
    %p396 = scmp.ne.s32.totalorder %s385, %s386
    %p397 = scmp.eq.s32.totalorder %s27, 0
    %p398 = por %p396, %p397
    %p399 = scmp.ne.s32.totalorder %s385, %s386
    %p400 = scmp.eq.s32.totalorder %s28, 1
    %p401 = por %p399, %p400
    %p403 = scmp.ne.s32.totalorder %s386, %s402
    %p404 = scmp.eq.s32.totalorder %s28, 0
    %p405 = por %p403, %p404
    %p406 = scmp.le.s32.totalorder 1, %s22
    %p407 = scmp.lt.s32.totalorder %s22, 3
    %p408 = pnand %p406, %p407
    %p409 = pneg %p408
    // Predicated region
    $region9: #{scene_encoder_forward.1} parent=5 // pred_check
      _
    $region10: #{scene_encoder_forward.1} parent=5 // pred_check_branch
      %411 = sbr.rel (%p408) target = $region12
    $region11: #{scene_encoder_forward.1} parent=5 // pred_region
      %s412 = ssub.s32 %s22, 1
      // Predicated region
      $region13: #{scene_encoder_forward.1} parent=11 // pred_check
        %p413 = pneg %p83
      $region14: #{scene_encoder_forward.1} parent=11 // pred_check_branch
        %415 = sbr.rel (%p413) target = $region16
      $region15: #{scene_encoder_forward.1} parent=11 // pred_region
        _
      $region16: #{scene_encoder_forward.1} parent=11 // pred_fallthru
        _
      // Predicated region
      $region17: #{scene_encoder_forward.1} parent=11 // pred_check
        %p416 = pneg %p104
      $region18: #{scene_encoder_forward.1} parent=11 // pred_check_branch
        %418 = sbr.rel (%p416) target = $region20
      $region19: #{scene_encoder_forward.1} parent=11 // pred_region
        _
      $region20: #{scene_encoder_forward.1} parent=11 // pred_fallthru
        _
      // Predicated region
      $region21: #{scene_encoder_forward.1} parent=11 // pred_check
        %p419 = pneg %p125
      $region22: #{scene_encoder_forward.1} parent=11 // pred_check_branch
        %421 = sbr.rel (%p419) target = $region24
      $region23: #{scene_encoder_forward.1} parent=11 // pred_region
        _
      $region24: #{scene_encoder_forward.1} parent=11 // pred_fallthru
        _
      // Predicated region
      $region25: #{scene_encoder_forward.1} parent=11 // pred_check
        %p422 = pneg %p146
      $region26: #{scene_encoder_forward.1} parent=11 // pred_check_branch
        %424 = sbr.rel (%p422) target = $region28
      $region27: #{scene_encoder_forward.1} parent=11 // pred_region
        _
      $region28: #{scene_encoder_forward.1} parent=11 // pred_fallthru
        _
      // Predicated region
      $region29: #{scene_encoder_forward.1} parent=11 // pred_check
        %p425 = pneg %p167
      $region30: #{scene_encoder_forward.1} parent=11 // pred_check_branch
        %427 = sbr.rel (%p425) target = $region32
      $region31: #{scene_encoder_forward.1} parent=11 // pred_region
        _
      $region32: #{scene_encoder_forward.1} parent=11 // pred_fallthru
        _
      // Predicated region
      $region33: #{scene_encoder_forward.1} parent=11 // pred_check
        %p428 = pneg %p188
      $region34: #{scene_encoder_forward.1} parent=11 // pred_check_branch
        %430 = sbr.rel (%p428) target = $region36
      $region35: #{scene_encoder_forward.1} parent=11 // pred_region
        _
      $region36: #{scene_encoder_forward.1} parent=11 // pred_fallthru
        _
      // Predicated region
      $region37: #{scene_encoder_forward.1} parent=11 // pred_check
        %p431 = pneg %p209
      $region38: #{scene_encoder_forward.1} parent=11 // pred_check_branch
        %433 = sbr.rel (%p431) target = $region40
      $region39: #{scene_encoder_forward.1} parent=11 // pred_region
        _
      $region40: #{scene_encoder_forward.1} parent=11 // pred_fallthru
        _
      // Predicated region
      $region41: #{scene_encoder_forward.1} parent=11 // pred_check
        %p434 = pneg %p230
      $region42: #{scene_encoder_forward.1} parent=11 // pred_check_branch
        %436 = sbr.rel (%p434) target = $region44
      $region43: #{scene_encoder_forward.1} parent=11 // pred_region
        _
      $region44: #{scene_encoder_forward.1} parent=11 // pred_fallthru
        _
      // Predicated region
      $region45: #{scene_encoder_forward.1} parent=11 // pred_check
        %p437 = pneg %p251
      $region46: #{scene_encoder_forward.1} parent=11 // pred_check_branch
        %439 = sbr.rel (%p437) target = $region48
      $region47: #{scene_encoder_forward.1} parent=11 // pred_region
        _
      $region48: #{scene_encoder_forward.1} parent=11 // pred_fallthru
        _
      // Predicated region
      $region49: #{scene_encoder_forward.1} parent=11 // pred_check
        %p440 = pneg %p272
      $region50: #{scene_encoder_forward.1} parent=11 // pred_check_branch
        %442 = sbr.rel (%p440) target = $region52
      $region51: #{scene_encoder_forward.1} parent=11 // pred_region
        _
      $region52: #{scene_encoder_forward.1} parent=11 // pred_fallthru
        _
      // Predicated region
      $region53: #{scene_encoder_forward.1} parent=11 // pred_check
        %p443 = pneg %p293
      $region54: #{scene_encoder_forward.1} parent=11 // pred_check_branch
        %445 = sbr.rel (%p443) target = $region56
      $region55: #{scene_encoder_forward.1} parent=11 // pred_region
        _
      $region56: #{scene_encoder_forward.1} parent=11 // pred_fallthru
        _
      // Predicated region
      $region57: #{scene_encoder_forward.1} parent=11 // pred_check
        %p446 = pneg %p314
      $region58: #{scene_encoder_forward.1} parent=11 // pred_check_branch
        %448 = sbr.rel (%p446) target = $region60
      $region59: #{scene_encoder_forward.1} parent=11 // pred_region
        _
      $region60: #{scene_encoder_forward.1} parent=11 // pred_fallthru
        _
    $region12: #{scene_encoder_forward.1} parent=5 // pred_fallthru
      _
    %p449 = scmp.lt.s32.totalorder %s22, 2
    // Predicated region
    $region61: #{scene_encoder_forward.1} parent=5 // pred_check
      %p450 = pneg %p449
    $region62: #{scene_encoder_forward.1} parent=5 // pred_check_branch
      %452 = sbr.rel (%p450) target = $region64
    $region63: #{scene_encoder_forward.1} parent=5 // pred_region
      // Predicated region
      $region65: #{scene_encoder_forward.1} parent=63 // pred_check
        %p453 = pneg %p56
      $region66: #{scene_encoder_forward.1} parent=63 // pred_check_branch
        %455 = sbr.rel (%p453) target = $region68
      $region67: #{scene_encoder_forward.1} parent=63 // pred_region
        %s456 = smul.u32 128, %s30
        %p457 = scmp.lt.s32.totalorder %s29, 1
        %s458 = scalar_select %p457, %s29, 1
        %p459 = scmp.lt.s32.totalorder %s456, 127
        %s460 = scalar_select %p459, %s456, 127
        %s461 = smul.addr %s458, 128
        %s462 = sadd.s32 %s460, %s461
        %s463 = smul.addr %s462, 4
        %s464 = scalar_lea.vmem %s0, %s463
        %s465 = smul.u32 128, %s30
      $region68: #{scene_encoder_forward.1} parent=63 // pred_fallthru
        _
    $region64: #{scene_encoder_forward.1} parent=5 // pred_fallthru
      _
    %p466 = scmp.le.s32.totalorder 1, %s22
    %p467 = scmp.lt.s32.totalorder %s22, 3
    %p468 = pnand %p466, %p467
    %p469 = pneg %p468
    // Predicated region
    $region69: #{scene_encoder_forward.1} parent=5 // pred_check
      _
    $region70: #{scene_encoder_forward.1} parent=5 // pred_check_branch
      %471 = sbr.rel (%p468) target = $region72
    $region71: #{scene_encoder_forward.1} parent=5 // pred_region
      %s472 = ssub.s32 %s22, 1
      %s473 = smul.u32 128, %s32
      %p474 = scmp.lt.s32.totalorder %s31, 1
      %s475 = scalar_select %p474, %s31, 1
      %p476 = scmp.lt.s32.totalorder %s473, 127
      %s477 = scalar_select %p476, %s473, 127
      %s478 = smul.addr %s475, 128
      %s479 = sadd.s32 %s477, %s478
      %s480 = smul.addr %s479, 4
      %s481 = scalar_lea.vmem %s0, %s480
      %p482 = pneg %p62
      %p483 = pneg %p59
      %p484 = pneg %p83
      %p485 = pneg %p80
      %p486 = pneg %p104
      %p487 = pneg %p101
      %p488 = pneg %p125
      %p489 = pneg %p122
      %p490 = pneg %p146
      %p491 = pneg %p143
      %p492 = pneg %p167
      %p493 = pneg %p164
      %p494 = pneg %p188
      %p495 = pneg %p185
      %p496 = pneg %p209
      %p497 = pneg %p206
      %p498 = pneg %p230
      %p499 = pneg %p227
      %p500 = pneg %p251
      %p501 = pneg %p248
      %p502 = pneg %p272
      %p503 = pneg %p269
      %p504 = pneg %p293
      %p505 = pneg %p290
      %p506 = pneg %p314
      %p507 = pneg %p311
      %p508 = pneg %p342
      %p509 = pneg %p339
      %s510 = smul.u32 128, %s32
      %p511 = scmp.lt.s32.totalorder %s31, 1
      %s512 = scalar_select %p511, %s31, 1
      %p513 = scmp.lt.s32.totalorder %s510, 127
      %s514 = scalar_select %p513, %s510, 127
      %s515 = smul.addr %s512, 128
      %s516 = sadd.s32 %s514, %s515
      %s517 = smul.addr %s516, 4
      %s518 = scalar_lea.vmem %s13, %s517
      %p519 = pneg %p370
      %p520 = pneg %p367
      %s521 = smul.u32 128, %s32
      %p522 = scmp.lt.s32.totalorder %s31, 1
      %s523 = scalar_select %p522, %s31, 1
      %p524 = scmp.lt.s32.totalorder %s521, 127
      %s525 = scalar_select %p524, %s521, 127
      %s526 = smul.addr %s523, 128
      %s527 = sadd.s32 %s525, %s526
      %s528 = smul.addr %s527, 8
      %s529 = scalar_lea.vmem %s14, %s528
      %p530 = pneg %p398
      %p531 = pneg %p395
      %p532 = scmp.lt.s32.totalorder %s31, 1
      %s533 = scalar_select %p532, %s31, 1
      %p534 = scmp.lt.s32.totalorder %s32, 0
      %s535 = scalar_select %p534, %s32, 0
      %s536 = sadd.s32 %s535, %s533
      %s537 = scalar_lea.vmem %s15, %s536
      %s538 = smul.u32 128, %s32
      %p539 = scmp.lt.s32.totalorder %s31, 1
      %s540 = scalar_select %p539, %s31, 1
      %p541 = scmp.lt.s32.totalorder %s538, 127
      %s542 = scalar_select %p541, %s538, 127
      %s543 = smul.addr %s540, 128
      %s544 = sadd.s32 %s542, %s543
      %s545 = smul.addr %s544, 4
      %s546 = scalar_lea.vmem %s0, %s545
      %s547 = smul.u32 128, %s32
      %s548 = smul.u32 128, %s32
      %p549 = scmp.lt.s32.totalorder %s31, 1
      %s550 = scalar_select %p549, %s31, 1
      %p551 = scmp.lt.s32.totalorder %s548, 127
      %s552 = scalar_select %p551, %s548, 127
      %s553 = smul.addr %s550, 128
      %s554 = sadd.s32 %s552, %s553
      %s555 = smul.addr %s554, 4
      %s556 = scalar_lea.vmem %s13, %s555
      %s557 = smul.u32 128, %s32
      %s558 = smul.u32 128, %s32
      %p559 = scmp.lt.s32.totalorder %s31, 1
      %s560 = scalar_select %p559, %s31, 1
      %p561 = scmp.lt.s32.totalorder %s558, 127
      %s562 = scalar_select %p561, %s558, 127
      %s563 = smul.addr %s560, 128
      %s564 = sadd.s32 %s562, %s563
      %s565 = smul.addr %s564, 8
      %s566 = scalar_lea.vmem %s14, %s565
      %s567 = smul.u32 128, %s32
      %p568 = scmp.lt.s32.totalorder %s31, 1
      %s569 = scalar_select %p568, %s31, 1
      %p570 = scmp.lt.s32.totalorder %s32, 0
      %s571 = scalar_select %p570, %s32, 0
      %s572 = sadd.s32 %s571, %s569
      %s573 = scalar_lea.vmem %s15, %s572
      %v575 = vld [vmem:[%s546] sm:$0xf]
      %v576 = vld [vmem:[%s546 + $0x4] sm:$0xf]
      %v577 = vld [vmem:[%s546 + $0x8] sm:$0xf]
      %v578 = vld [vmem:[%s546 + $0xc] sm:$0xf]
      %v579 = vld [vmem:[%s546 + $0x10] sm:$0xf]
      %v580 = vld [vmem:[%s546 + $0x14] sm:$0xf]
      %v581 = vld [vmem:[%s546 + $0x18] sm:$0xf]
      %v582 = vld [vmem:[%s546 + $0x1c] sm:$0xf]
      %v583 = vld [vmem:[%s546 + $0x20] sm:$0xf]
      %v584 = vld [vmem:[%s546 + $0x24] sm:$0xf]
      %v585 = vld [vmem:[%s546 + $0x28] sm:$0xf]
      %v586 = vld [vmem:[%s546 + $0x2c] sm:$0xf]
      %v587 = vld [vmem:[%s546 + $0x30] sm:$0xf]
      %v588 = vld [vmem:[%s546 + $0x34] sm:$0xf]
      %v589 = vld [vmem:[%s546 + $0x38] sm:$0xf]
      %v590 = vld [vmem:[%s546 + $0x3c] sm:$0xf]
      %v591 = vld [vmem:[%s546 + $0x40] sm:$0xf]
      %v592 = vld [vmem:[%s546 + $0x44] sm:$0xf]
      %v593 = vld [vmem:[%s546 + $0x48] sm:$0xf]
      %v594 = vld [vmem:[%s546 + $0x4c] sm:$0xf]
      %v595 = vld [vmem:[%s546 + $0x50] sm:$0xf]
      %v596 = vld [vmem:[%s546 + $0x54] sm:$0xf]
      %v597 = vld [vmem:[%s546 + $0x58] sm:$0xf]
      %v598 = vld [vmem:[%s546 + $0x5c] sm:$0xf]
      %v599 = vld [vmem:[%s546 + $0x60] sm:$0xf]
      %v600 = vld [vmem:[%s546 + $0x64] sm:$0xf]
      %v601 = vld [vmem:[%s546 + $0x68] sm:$0xf]
      %v602 = vld [vmem:[%s546 + $0x6c] sm:$0xf]
      %v603 = vld [vmem:[%s546 + $0x70] sm:$0xf]
      %v604 = vld [vmem:[%s546 + $0x74] sm:$0xf]
      %v605 = vld [vmem:[%s546 + $0x78] sm:$0xf]
      %v606 = vld [vmem:[%s546 + $0x7c] sm:$0xf]
      %v607 = vld [vmem:[%s546 + $0x80] sm:$0xf]
      %v608 = vld [vmem:[%s546 + $0x84] sm:$0xf]
      %v609 = vld [vmem:[%s546 + $0x88] sm:$0xf]
      %v610 = vld [vmem:[%s546 + $0x8c] sm:$0xf]
      %v611 = vld [vmem:[%s546 + $0x90] sm:$0xf]
      %v612 = vld [vmem:[%s546 + $0x94] sm:$0xf]
      %v613 = vld [vmem:[%s546 + $0x98] sm:$0xf]
      %v614 = vld [vmem:[%s546 + $0x9c] sm:$0xf]
      %v615 = vld [vmem:[%s546 + $0xa0] sm:$0xf]
      %v616 = vld [vmem:[%s546 + $0xa4] sm:$0xf]
      %v617 = vld [vmem:[%s546 + $0xa8] sm:$0xf]
      %v618 = vld [vmem:[%s546 + $0xac] sm:$0xf]
      %v619 = vld [vmem:[%s546 + $0xb0] sm:$0xf]
      %v620 = vld [vmem:[%s546 + $0xb4] sm:$0xf]
      %v621 = vld [vmem:[%s546 + $0xb8] sm:$0xf]
      %v622 = vld [vmem:[%s546 + $0xbc] sm:$0xf]
      %v623 = vld [vmem:[%s546 + $0xc0] sm:$0xf]
      %v624 = vld [vmem:[%s546 + $0xc4] sm:$0xf]
      %v625 = vld [vmem:[%s546 + $0xc8] sm:$0xf]
      %v626 = vld [vmem:[%s546 + $0xcc] sm:$0xf]
      %v627 = vld [vmem:[%s546 + $0xd0] sm:$0xf]
      %v628 = vld [vmem:[%s546 + $0xd4] sm:$0xf]
      %v629 = vld [vmem:[%s546 + $0xd8] sm:$0xf]
      %v630 = vld [vmem:[%s546 + $0xdc] sm:$0xf]
      %v631 = vld [vmem:[%s546 + $0xe0] sm:$0xf]
      %v632 = vld [vmem:[%s546 + $0xe4] sm:$0xf]
      %v633 = vld [vmem:[%s546 + $0xe8] sm:$0xf]
      %v634 = vld [vmem:[%s546 + $0xec] sm:$0xf]
      %v635 = vld [vmem:[%s546 + $0xf0] sm:$0xf]
      %v636 = vld [vmem:[%s546 + $0xf4] sm:$0xf]
      %v637 = vld [vmem:[%s546 + $0xf8] sm:$0xf]
      %v638 = vld [vmem:[%s546 + $0xfc] sm:$0xf]
      %v639 = vld [vmem:[%s546 + $0x100] sm:$0xf]
      %v640 = vld [vmem:[%s546 + $0x104] sm:$0xf]
      %v641 = vld [vmem:[%s546 + $0x108] sm:$0xf]
      %v642 = vld [vmem:[%s546 + $0x10c] sm:$0xf]
      %v643 = vld [vmem:[%s546 + $0x110] sm:$0xf]
      %v644 = vld [vmem:[%s546 + $0x114] sm:$0xf]
      %v645 = vld [vmem:[%s546 + $0x118] sm:$0xf]
      %v646 = vld [vmem:[%s546 + $0x11c] sm:$0xf]
      %v647 = vld [vmem:[%s546 + $0x120] sm:$0xf]
      %v648 = vld [vmem:[%s546 + $0x124] sm:$0xf]
      %v649 = vld [vmem:[%s546 + $0x128] sm:$0xf]
      %v650 = vld [vmem:[%s546 + $0x12c] sm:$0xf]
      %v651 = vld [vmem:[%s546 + $0x130] sm:$0xf]
      %v652 = vld [vmem:[%s546 + $0x134] sm:$0xf]
      %v653 = vld [vmem:[%s546 + $0x138] sm:$0xf]
      %v654 = vld [vmem:[%s546 + $0x13c] sm:$0xf]
      %v655 = vld [vmem:[%s546 + $0x140] sm:$0xf]
      %v656 = vld [vmem:[%s546 + $0x144] sm:$0xf]
      %v657 = vld [vmem:[%s546 + $0x148] sm:$0xf]
      %v658 = vld [vmem:[%s546 + $0x14c] sm:$0xf]
      %v659 = vld [vmem:[%s546 + $0x150] sm:$0xf]
      %v660 = vld [vmem:[%s546 + $0x154] sm:$0xf]
      %v661 = vld [vmem:[%s546 + $0x158] sm:$0xf]
      %v662 = vld [vmem:[%s546 + $0x15c] sm:$0xf]
      %v663 = vld [vmem:[%s546 + $0x160] sm:$0xf]
      %v664 = vld [vmem:[%s546 + $0x164] sm:$0xf]
      %v665 = vld [vmem:[%s546 + $0x168] sm:$0xf]
      %v666 = vld [vmem:[%s546 + $0x16c] sm:$0xf]
      %v667 = vld [vmem:[%s546 + $0x170] sm:$0xf]
      %v668 = vld [vmem:[%s546 + $0x174] sm:$0xf]
      %v669 = vld [vmem:[%s546 + $0x178] sm:$0xf]
      %v670 = vld [vmem:[%s546 + $0x17c] sm:$0xf]
      %v671 = vld [vmem:[%s546 + $0x180] sm:$0xf]
      %v672 = vld [vmem:[%s546 + $0x184] sm:$0xf]
      %v673 = vld [vmem:[%s546 + $0x188] sm:$0xf]
      %v674 = vld [vmem:[%s546 + $0x18c] sm:$0xf]
      %v675 = vld [vmem:[%s546 + $0x190] sm:$0xf]
      %v676 = vld [vmem:[%s546 + $0x194] sm:$0xf]
      %v677 = vld [vmem:[%s546 + $0x198] sm:$0xf]
      %v678 = vld [vmem:[%s546 + $0x19c] sm:$0xf]
      %v679 = vld [vmem:[%s546 + $0x1a0] sm:$0xf]
      %v680 = vld [vmem:[%s546 + $0x1a4] sm:$0xf]
      %v681 = vld [vmem:[%s546 + $0x1a8] sm:$0xf]
      %v682 = vld [vmem:[%s546 + $0x1ac] sm:$0xf]
      %v683 = vld [vmem:[%s546 + $0x1b0] sm:$0xf]
      %v684 = vld [vmem:[%s546 + $0x1b4] sm:$0xf]
      %v685 = vld [vmem:[%s546 + $0x1b8] sm:$0xf]
      %v686 = vld [vmem:[%s546 + $0x1bc] sm:$0xf]
      %v687 = vld [vmem:[%s546 + $0x1c0] sm:$0xf]
      %v688 = vld [vmem:[%s546 + $0x1c4] sm:$0xf]
      %v689 = vld [vmem:[%s546 + $0x1c8] sm:$0xf]
      %v690 = vld [vmem:[%s546 + $0x1cc] sm:$0xf]
      %v691 = vld [vmem:[%s546 + $0x1d0] sm:$0xf]
      %v692 = vld [vmem:[%s546 + $0x1d4] sm:$0xf]
      %v693 = vld [vmem:[%s546 + $0x1d8] sm:$0xf]
      %v694 = vld [vmem:[%s546 + $0x1dc] sm:$0xf]
      %v695 = vld [vmem:[%s546 + $0x1e0] sm:$0xf]
      %v696 = vld [vmem:[%s546 + $0x1e4] sm:$0xf]
      %v697 = vld [vmem:[%s546 + $0x1e8] sm:$0xf]
      %v698 = vld [vmem:[%s546 + $0x1ec] sm:$0xf]
      %v699 = vld [vmem:[%s546 + $0x1f0] sm:$0xf]
      %v700 = vld [vmem:[%s546 + $0x1f4] sm:$0xf]
      %v701 = vld [vmem:[%s546 + $0x1f8] sm:$0xf]
      %v702 = vld [vmem:[%s546 + $0x1fc] sm:$0xf]
      %v703 = vunpack.c.l.bf16 %v575
      %v704 = vunpack.c.l.bf16 %v576
      %v705 = vunpack.c.l.bf16 %v577
      %v706 = vunpack.c.l.bf16 %v578
      %v707 = vunpack.c.l.bf16 %v579
      %v708 = vunpack.c.l.bf16 %v580
      %v709 = vunpack.c.l.bf16 %v581
      %v710 = vunpack.c.l.bf16 %v582
      %v711 = vunpack.c.l.bf16 %v583
      %v712 = vunpack.c.l.bf16 %v584
      %v713 = vunpack.c.l.bf16 %v585
      %v714 = vunpack.c.l.bf16 %v586
      %v715 = vunpack.c.l.bf16 %v587
      %v716 = vunpack.c.l.bf16 %v588
      %v717 = vunpack.c.l.bf16 %v589
      %v718 = vunpack.c.l.bf16 %v590
      %v719 = vunpack.c.l.bf16 %v591
      %v720 = vunpack.c.l.bf16 %v592
      %v721 = vunpack.c.l.bf16 %v593
      %v722 = vunpack.c.l.bf16 %v594
      %v723 = vunpack.c.l.bf16 %v595
      %v724 = vunpack.c.l.bf16 %v596
      %v725 = vunpack.c.l.bf16 %v597
      %v726 = vunpack.c.l.bf16 %v598
      %v727 = vunpack.c.l.bf16 %v599
      %v728 = vunpack.c.l.bf16 %v600
      %v729 = vunpack.c.l.bf16 %v601
      %v730 = vunpack.c.l.bf16 %v602
      %v731 = vunpack.c.l.bf16 %v603
      %v732 = vunpack.c.l.bf16 %v604
      %v733 = vunpack.c.l.bf16 %v605
      %v734 = vunpack.c.l.bf16 %v606
      %v735 = vunpack.c.l.bf16 %v607
      %v736 = vunpack.c.l.bf16 %v608
      %v737 = vunpack.c.l.bf16 %v609
      %v738 = vunpack.c.l.bf16 %v610
      %v739 = vunpack.c.l.bf16 %v611
      %v740 = vunpack.c.l.bf16 %v612
      %v741 = vunpack.c.l.bf16 %v613
      %v742 = vunpack.c.l.bf16 %v614
      %v743 = vunpack.c.l.bf16 %v615
      %v744 = vunpack.c.l.bf16 %v616
      %v745 = vunpack.c.l.bf16 %v617
      %v746 = vunpack.c.l.bf16 %v618
      %v747 = vunpack.c.l.bf16 %v619
      %v748 = vunpack.c.l.bf16 %v620
      %v749 = vunpack.c.l.bf16 %v621
      %v750 = vunpack.c.l.bf16 %v622
      %v751 = vunpack.c.l.bf16 %v623
      %v752 = vunpack.c.l.bf16 %v624
      %v753 = vunpack.c.l.bf16 %v625
      %v754 = vunpack.c.l.bf16 %v626
      %v755 = vunpack.c.l.bf16 %v627
      %v756 = vunpack.c.l.bf16 %v628
      %v757 = vunpack.c.l.bf16 %v629
      %v758 = vunpack.c.l.bf16 %v630
      %v759 = vunpack.c.l.bf16 %v631
      %v760 = vunpack.c.l.bf16 %v632
      %v761 = vunpack.c.l.bf16 %v633
      %v762 = vunpack.c.l.bf16 %v634
      %v763 = vunpack.c.l.bf16 %v635
      %v764 = vunpack.c.l.bf16 %v636
      %v765 = vunpack.c.l.bf16 %v637
      %v766 = vunpack.c.l.bf16 %v638
      %v767 = vunpack.c.l.bf16 %v639
      %v768 = vunpack.c.l.bf16 %v640
      %v769 = vunpack.c.l.bf16 %v641
      %v770 = vunpack.c.l.bf16 %v642
      %v771 = vunpack.c.l.bf16 %v643
      %v772 = vunpack.c.l.bf16 %v644
      %v773 = vunpack.c.l.bf16 %v645
      %v774 = vunpack.c.l.bf16 %v646
      %v775 = vunpack.c.l.bf16 %v647
      %v776 = vunpack.c.l.bf16 %v648
      %v777 = vunpack.c.l.bf16 %v649
      %v778 = vunpack.c.l.bf16 %v650
      %v779 = vunpack.c.l.bf16 %v651
      %v780 = vunpack.c.l.bf16 %v652
      %v781 = vunpack.c.l.bf16 %v653
      %v782 = vunpack.c.l.bf16 %v654
      %v783 = vunpack.c.l.bf16 %v655
      %v784 = vunpack.c.l.bf16 %v656
      %v785 = vunpack.c.l.bf16 %v657
      %v786 = vunpack.c.l.bf16 %v658
      %v787 = vunpack.c.l.bf16 %v659
      %v788 = vunpack.c.l.bf16 %v660
      %v789 = vunpack.c.l.bf16 %v661
      %v790 = vunpack.c.l.bf16 %v662
      %v791 = vunpack.c.l.bf16 %v663
      %v792 = vunpack.c.l.bf16 %v664
      %v793 = vunpack.c.l.bf16 %v665
      %v794 = vunpack.c.l.bf16 %v666
      %v795 = vunpack.c.l.bf16 %v667
      %v796 = vunpack.c.l.bf16 %v668
      %v797 = vunpack.c.l.bf16 %v669
      %v798 = vunpack.c.l.bf16 %v670
      %v799 = vunpack.c.l.bf16 %v671
      %v800 = vunpack.c.l.bf16 %v672
      %v801 = vunpack.c.l.bf16 %v673
      %v802 = vunpack.c.l.bf16 %v674
      %v803 = vunpack.c.l.bf16 %v675
      %v804 = vunpack.c.l.bf16 %v676
      %v805 = vunpack.c.l.bf16 %v677
      %v806 = vunpack.c.l.bf16 %v678
      %v807 = vunpack.c.l.bf16 %v679
      %v808 = vunpack.c.l.bf16 %v680
      %v809 = vunpack.c.l.bf16 %v681
      %v810 = vunpack.c.l.bf16 %v682
      %v811 = vunpack.c.l.bf16 %v683
      %v812 = vunpack.c.l.bf16 %v684
      %v813 = vunpack.c.l.bf16 %v685
      %v814 = vunpack.c.l.bf16 %v686
      %v815 = vunpack.c.l.bf16 %v687
      %v816 = vunpack.c.l.bf16 %v688
      %v817 = vunpack.c.l.bf16 %v689
      %v818 = vunpack.c.l.bf16 %v690
      %v819 = vunpack.c.l.bf16 %v691
      %v820 = vunpack.c.l.bf16 %v692
      %v821 = vunpack.c.l.bf16 %v693
      %v822 = vunpack.c.l.bf16 %v694
      %v823 = vunpack.c.l.bf16 %v695
      %v824 = vunpack.c.l.bf16 %v696
      %v825 = vunpack.c.l.bf16 %v697
      %v826 = vunpack.c.l.bf16 %v698
      %v827 = vunpack.c.l.bf16 %v699
      %v828 = vunpack.c.l.bf16 %v700
      %v829 = vunpack.c.l.bf16 %v701
      %v830 = vunpack.c.l.bf16 %v702
      %v831 = vand.u32 2147483647, %v703
      %v832 = vand.u32 2147483647, %v704
      %v833 = vand.u32 2147483647, %v705
      %v834 = vand.u32 2147483647, %v706
      %v835 = vand.u32 2147483647, %v707
      %v836 = vand.u32 2147483647, %v708
      %v837 = vand.u32 2147483647, %v709
      %v838 = vand.u32 2147483647, %v710
      %v839 = vand.u32 2147483647, %v711
      %v840 = vand.u32 2147483647, %v712
      %v841 = vand.u32 2147483647, %v713
      %v842 = vand.u32 2147483647, %v714
      %v843 = vand.u32 2147483647, %v715
      %v844 = vand.u32 2147483647, %v716
      %v845 = vand.u32 2147483647, %v717
      %v846 = vand.u32 2147483647, %v718
      %v847 = vand.u32 2147483647, %v719
      %v848 = vand.u32 2147483647, %v720
      %v849 = vand.u32 2147483647, %v721
      %v850 = vand.u32 2147483647, %v722
      %v851 = vand.u32 2147483647, %v723
      %v852 = vand.u32 2147483647, %v724
      %v853 = vand.u32 2147483647, %v725
      %v854 = vand.u32 2147483647, %v726
      %v855 = vand.u32 2147483647, %v727
      %v856 = vand.u32 2147483647, %v728
      %v857 = vand.u32 2147483647, %v729
      %v858 = vand.u32 2147483647, %v730
      %v859 = vand.u32 2147483647, %v731
      %v860 = vand.u32 2147483647, %v732
      %v861 = vand.u32 2147483647, %v733
      %v862 = vand.u32 2147483647, %v734
      %v863 = vand.u32 2147483647, %v735
      %v864 = vand.u32 2147483647, %v736
      %v865 = vand.u32 2147483647, %v737
      %v866 = vand.u32 2147483647, %v738
      %v867 = vand.u32 2147483647, %v739
      %v868 = vand.u32 2147483647, %v740
      %v869 = vand.u32 2147483647, %v741
      %v870 = vand.u32 2147483647, %v742
      %v871 = vand.u32 2147483647, %v743
      %v872 = vand.u32 2147483647, %v744
      %v873 = vand.u32 2147483647, %v745
      %v874 = vand.u32 2147483647, %v746
      %v875 = vand.u32 2147483647, %v747
      %v876 = vand.u32 2147483647, %v748
      %v877 = vand.u32 2147483647, %v749
      %v878 = vand.u32 2147483647, %v750
      %v879 = vand.u32 2147483647, %v751
      %v880 = vand.u32 2147483647, %v752
      %v881 = vand.u32 2147483647, %v753
      %v882 = vand.u32 2147483647, %v754
      %v883 = vand.u32 2147483647, %v755
      %v884 = vand.u32 2147483647, %v756
      %v885 = vand.u32 2147483647, %v757
      %v886 = vand.u32 2147483647, %v758
      %v887 = vand.u32 2147483647, %v759
      %v888 = vand.u32 2147483647, %v760
      %v889 = vand.u32 2147483647, %v761
      %v890 = vand.u32 2147483647, %v762
      %v891 = vand.u32 2147483647, %v763
      %v892 = vand.u32 2147483647, %v764
      %v893 = vand.u32 2147483647, %v765
      %v894 = vand.u32 2147483647, %v766
      %v895 = vand.u32 2147483647, %v767
      %v896 = vand.u32 2147483647, %v768
      %v897 = vand.u32 2147483647, %v769
      %v898 = vand.u32 2147483647, %v770
      %v899 = vand.u32 2147483647, %v771
      %v900 = vand.u32 2147483647, %v772
      %v901 = vand.u32 2147483647, %v773
      %v902 = vand.u32 2147483647, %v774
      %v903 = vand.u32 2147483647, %v775
      %v904 = vand.u32 2147483647, %v776
      %v905 = vand.u32 2147483647, %v777
      %v906 = vand.u32 2147483647, %v778
      %v907 = vand.u32 2147483647, %v779
      %v908 = vand.u32 2147483647, %v780
      %v909 = vand.u32 2147483647, %v781
      %v910 = vand.u32 2147483647, %v782
      %v911 = vand.u32 2147483647, %v783
      %v912 = vand.u32 2147483647, %v784
      %v913 = vand.u32 2147483647, %v785
      %v914 = vand.u32 2147483647, %v786
      %v915 = vand.u32 2147483647, %v787
      %v916 = vand.u32 2147483647, %v788
      %v917 = vand.u32 2147483647, %v789
      %v918 = vand.u32 2147483647, %v790
      %v919 = vand.u32 2147483647, %v791
      %v920 = vand.u32 2147483647, %v792
      %v921 = vand.u32 2147483647, %v793
      %v922 = vand.u32 2147483647, %v794
      %v923 = vand.u32 2147483647, %v795
      %v924 = vand.u32 2147483647, %v796
      %v925 = vand.u32 2147483647, %v797
      %v926 = vand.u32 2147483647, %v798
      %v927 = vand.u32 2147483647, %v799
      %v928 = vand.u32 2147483647, %v800
      %v929 = vand.u32 2147483647, %v801
      %v930 = vand.u32 2147483647, %v802
      %v931 = vand.u32 2147483647, %v803
      %v932 = vand.u32 2147483647, %v804
      %v933 = vand.u32 2147483647, %v805
      %v934 = vand.u32 2147483647, %v806
      %v935 = vand.u32 2147483647, %v807
      %v936 = vand.u32 2147483647, %v808
      %v937 = vand.u32 2147483647, %v809
      %v938 = vand.u32 2147483647, %v810
      %v939 = vand.u32 2147483647, %v811
      %v940 = vand.u32 2147483647, %v812
      %v941 = vand.u32 2147483647, %v813
      %v942 = vand.u32 2147483647, %v814
      %v943 = vand.u32 2147483647, %v815
      %v944 = vand.u32 2147483647, %v816
      %v945 = vand.u32 2147483647, %v817
      %v946 = vand.u32 2147483647, %v818
      %v947 = vand.u32 2147483647, %v819
      %v948 = vand.u32 2147483647, %v820
      %v949 = vand.u32 2147483647, %v821
      %v950 = vand.u32 2147483647, %v822
      %v951 = vand.u32 2147483647, %v823
      %v952 = vand.u32 2147483647, %v824
      %v953 = vand.u32 2147483647, %v825
      %v954 = vand.u32 2147483647, %v826
      %v955 = vand.u32 2147483647, %v827
      %v956 = vand.u32 2147483647, %v828
      %v957 = vand.u32 2147483647, %v829
      %v958 = vand.u32 2147483647, %v830
      %vm959 = vcmask 130048
      %v960 = vsel %vm959, %v831, -inf
      %961 = vmax.xlane.f32.xlu0 %v960
      %v962 = vpop.xlane.xlu0 %961
      %v963 = vsel %vm959, %v832, -inf
      %964 = vmax.xlane.f32.xlu0 %v963
      %v965 = vpop.xlane.xlu0 %964
      %v966 = vsel %vm959, %v833, -inf
      %967 = vmax.xlane.f32.xlu0 %v966
      %v968 = vpop.xlane.xlu0 %967
      %v969 = vsel %vm959, %v834, -inf
      %970 = vmax.xlane.f32.xlu0 %v969
      %v971 = vpop.xlane.xlu0 %970
      %v972 = vsel %vm959, %v835, -inf
      %973 = vmax.xlane.f32.xlu0 %v972
      %v974 = vpop.xlane.xlu0 %973
      %v975 = vsel %vm959, %v836, -inf
      %976 = vmax.xlane.f32.xlu0 %v975
      %v977 = vpop.xlane.xlu0 %976
      %v978 = vsel %vm959, %v837, -inf
      %979 = vmax.xlane.f32.xlu0 %v978
      %v980 = vpop.xlane.xlu0 %979
      %v981 = vsel %vm959, %v838, -inf
      %982 = vmax.xlane.f32.xlu0 %v981
      %v983 = vpop.xlane.xlu0 %982
      %v984 = vsel %vm959, %v839, -inf
      %985 = vmax.xlane.f32.xlu0 %v984
      %v986 = vpop.xlane.xlu0 %985
      %v987 = vsel %vm959, %v840, -inf
      %988 = vmax.xlane.f32.xlu0 %v987
      %v989 = vpop.xlane.xlu0 %988
      %v990 = vsel %vm959, %v841, -inf
      %991 = vmax.xlane.f32.xlu0 %v990
      %v992 = vpop.xlane.xlu0 %991
      %v993 = vsel %vm959, %v842, -inf
      %994 = vmax.xlane.f32.xlu0 %v993
      %v995 = vpop.xlane.xlu0 %994
      %v996 = vsel %vm959, %v843, -inf
      %997 = vmax.xlane.f32.xlu0 %v996
      %v998 = vpop.xlane.xlu0 %997
      %v999 = vsel %vm959, %v844, -inf
      %1000 = vmax.xlane.f32.xlu0 %v999
      %v1001 = vpop.xlane.xlu0 %1000
      %v1002 = vsel %vm959, %v845, -inf
      %1003 = vmax.xlane.f32.xlu0 %v1002
      %v1004 = vpop.xlane.xlu0 %1003
      %v1005 = vsel %vm959, %v846, -inf
      %1006 = vmax.xlane.f32.xlu0 %v1005
      %v1007 = vpop.xlane.xlu0 %1006
      %v1008 = vsel %vm959, %v847, -inf
      %1009 = vmax.xlane.f32.xlu0 %v1008
      %v1010 = vpop.xlane.xlu0 %1009
      %v1011 = vsel %vm959, %v848, -inf
      %1012 = vmax.xlane.f32.xlu0 %v1011
      %v1013 = vpop.xlane.xlu0 %1012
      %v1014 = vsel %vm959, %v849, -inf
      %1015 = vmax.xlane.f32.xlu0 %v1014
      %v1016 = vpop.xlane.xlu0 %1015
      %v1017 = vsel %vm959, %v850, -inf
      %1018 = vmax.xlane.f32.xlu0 %v1017
      %v1019 = vpop.xlane.xlu0 %1018
      %v1020 = vsel %vm959, %v851, -inf
      %1021 = vmax.xlane.f32.xlu0 %v1020
      %v1022 = vpop.xlane.xlu0 %1021
      %v1023 = vsel %vm959, %v852, -inf
      %1024 = vmax.xlane.f32.xlu0 %v1023
      %v1025 = vpop.xlane.xlu0 %1024
      %v1026 = vsel %vm959, %v853, -inf
      %1027 = vmax.xlane.f32.xlu0 %v1026
      %v1028 = vpop.xlane.xlu0 %1027
      %v1029 = vsel %vm959, %v854, -inf
      %1030 = vmax.xlane.f32.xlu0 %v1029
      %v1031 = vpop.xlane.xlu0 %1030
      %v1032 = vsel %vm959, %v855, -inf
      %1033 = vmax.xlane.f32.xlu0 %v1032
      %v1034 = vpop.xlane.xlu0 %1033
      %v1035 = vsel %vm959, %v856, -inf
      %1036 = vmax.xlane.f32.xlu0 %v1035
      %v1037 = vpop.xlane.xlu0 %1036
      %v1038 = vsel %vm959, %v857, -inf
      %1039 = vmax.xlane.f32.xlu0 %v1038
      %v1040 = vpop.xlane.xlu0 %1039
      %v1041 = vsel %vm959, %v858, -inf
      %1042 = vmax.xlane.f32.xlu0 %v1041
      %v1043 = vpop.xlane.xlu0 %1042
      %v1044 = vsel %vm959, %v859, -inf
      %1045 = vmax.xlane.f32.xlu0 %v1044
      %v1046 = vpop.xlane.xlu0 %1045
      %v1047 = vsel %vm959, %v860, -inf
      %1048 = vmax.xlane.f32.xlu0 %v1047
      %v1049 = vpop.xlane.xlu0 %1048
      %v1050 = vsel %vm959, %v861, -inf
      %1051 = vmax.xlane.f32.xlu0 %v1050
      %v1052 = vpop.xlane.xlu0 %1051
      %v1053 = vsel %vm959, %v862, -inf
      %1054 = vmax.xlane.f32.xlu0 %v1053
      %v1055 = vpop.xlane.xlu0 %1054
      %v1056 = vsel %vm959, %v863, -inf
      %1057 = vmax.xlane.f32.xlu0 %v1056
      %v1058 = vpop.xlane.xlu0 %1057
      %v1059 = vsel %vm959, %v864, -inf
      %1060 = vmax.xlane.f32.xlu0 %v1059
      %v1061 = vpop.xlane.xlu0 %1060
      %v1062 = vsel %vm959, %v865, -inf
      %1063 = vmax.xlane.f32.xlu0 %v1062
      %v1064 = vpop.xlane.xlu0 %1063
      %v1065 = vsel %vm959, %v866, -inf
      %1066 = vmax.xlane.f32.xlu0 %v1065
      %v1067 = vpop.xlane.xlu0 %1066
      %v1068 = vsel %vm959, %v867, -inf
      %1069 = vmax.xlane.f32.xlu0 %v1068
      %v1070 = vpop.xlane.xlu0 %1069
      %v1071 = vsel %vm959, %v868, -inf
      %1072 = vmax.xlane.f32.xlu0 %v1071
      %v1073 = vpop.xlane.xlu0 %1072
      %v1074 = vsel %vm959, %v869, -inf
      %1075 = vmax.xlane.f32.xlu0 %v1074
      %v1076 = vpop.xlane.xlu0 %1075
      %v1077 = vsel %vm959, %v870, -inf
      %1078 = vmax.xlane.f32.xlu0 %v1077
      %v1079 = vpop.xlane.xlu0 %1078
      %v1080 = vsel %vm959, %v871, -inf
      %1081 = vmax.xlane.f32.xlu0 %v1080
      %v1082 = vpop.xlane.xlu0 %1081
      %v1083 = vsel %vm959, %v872, -inf
      %1084 = vmax.xlane.f32.xlu0 %v1083
      %v1085 = vpop.xlane.xlu0 %1084
      %v1086 = vsel %vm959, %v873, -inf
      %1087 = vmax.xlane.f32.xlu0 %v1086
      %v1088 = vpop.xlane.xlu0 %1087
      %v1089 = vsel %vm959, %v874, -inf
      %1090 = vmax.xlane.f32.xlu0 %v1089
      %v1091 = vpop.xlane.xlu0 %1090
      %v1092 = vsel %vm959, %v875, -inf
      %1093 = vmax.xlane.f32.xlu0 %v1092
      %v1094 = vpop.xlane.xlu0 %1093
      %v1095 = vsel %vm959, %v876, -inf
      %1096 = vmax.xlane.f32.xlu0 %v1095
      %v1097 = vpop.xlane.xlu0 %1096
      %v1098 = vsel %vm959, %v877, -inf
      %1099 = vmax.xlane.f32.xlu0 %v1098
      %v1100 = vpop.xlane.xlu0 %1099
      %v1101 = vsel %vm959, %v878, -inf
      %1102 = vmax.xlane.f32.xlu0 %v1101
      %v1103 = vpop.xlane.xlu0 %1102
      %v1104 = vsel %vm959, %v879, -inf
      %1105 = vmax.xlane.f32.xlu0 %v1104
      %v1106 = vpop.xlane.xlu0 %1105
      %v1107 = vsel %vm959, %v880, -inf
      %1108 = vmax.xlane.f32.xlu0 %v1107
      %v1109 = vpop.xlane.xlu0 %1108
      %v1110 = vsel %vm959, %v881, -inf
      %1111 = vmax.xlane.f32.xlu0 %v1110
      %v1112 = vpop.xlane.xlu0 %1111
      %v1113 = vsel %vm959, %v882, -inf
      %1114 = vmax.xlane.f32.xlu0 %v1113
      %v1115 = vpop.xlane.xlu0 %1114
      %v1116 = vsel %vm959, %v883, -inf
      %1117 = vmax.xlane.f32.xlu0 %v1116
      %v1118 = vpop.xlane.xlu0 %1117
      %v1119 = vsel %vm959, %v884, -inf
      %1120 = vmax.xlane.f32.xlu0 %v1119
      %v1121 = vpop.xlane.xlu0 %1120
      %v1122 = vsel %vm959, %v885, -inf
      %1123 = vmax.xlane.f32.xlu0 %v1122
      %v1124 = vpop.xlane.xlu0 %1123
      %v1125 = vsel %vm959, %v886, -inf
      %1126 = vmax.xlane.f32.xlu0 %v1125
      %v1127 = vpop.xlane.xlu0 %1126
      %v1128 = vsel %vm959, %v887, -inf
      %1129 = vmax.xlane.f32.xlu0 %v1128
      %v1130 = vpop.xlane.xlu0 %1129
      %v1131 = vsel %vm959, %v888, -inf
      %1132 = vmax.xlane.f32.xlu0 %v1131
      %v1133 = vpop.xlane.xlu0 %1132
      %v1134 = vsel %vm959, %v889, -inf
      %1135 = vmax.xlane.f32.xlu0 %v1134
      %v1136 = vpop.xlane.xlu0 %1135
      %v1137 = vsel %vm959, %v890, -inf
      %1138 = vmax.xlane.f32.xlu0 %v1137
      %v1139 = vpop.xlane.xlu0 %1138
      %v1140 = vsel %vm959, %v891, -inf
      %1141 = vmax.xlane.f32.xlu0 %v1140
      %v1142 = vpop.xlane.xlu0 %1141
      %v1143 = vsel %vm959, %v892, -inf
      %1144 = vmax.xlane.f32.xlu0 %v1143
      %v1145 = vpop.xlane.xlu0 %1144
      %v1146 = vsel %vm959, %v893, -inf
      %1147 = vmax.xlane.f32.xlu0 %v1146
      %v1148 = vpop.xlane.xlu0 %1147
      %v1149 = vsel %vm959, %v894, -inf
      %1150 = vmax.xlane.f32.xlu0 %v1149
      %v1151 = vpop.xlane.xlu0 %1150
      %v1152 = vsel %vm959, %v895, -inf
      %1153 = vmax.xlane.f32.xlu0 %v1152
      %v1154 = vpop.xlane.xlu0 %1153
      %v1155 = vsel %vm959, %v896, -inf
      %1156 = vmax.xlane.f32.xlu0 %v1155
      %v1157 = vpop.xlane.xlu0 %1156
      %v1158 = vsel %vm959, %v897, -inf
      %1159 = vmax.xlane.f32.xlu0 %v1158
      %v1160 = vpop.xlane.xlu0 %1159
      %v1161 = vsel %vm959, %v898, -inf
      %1162 = vmax.xlane.f32.xlu0 %v1161
      %v1163 = vpop.xlane.xlu0 %1162
      %v1164 = vsel %vm959, %v899, -inf
      %1165 = vmax.xlane.f32.xlu0 %v1164
      %v1166 = vpop.xlane.xlu0 %1165
      %v1167 = vsel %vm959, %v900, -inf
      %1168 = vmax.xlane.f32.xlu0 %v1167
      %v1169 = vpop.xlane.xlu0 %1168
      %v1170 = vsel %vm959, %v901, -inf
      %1171 = vmax.xlane.f32.xlu0 %v1170
      %v1172 = vpop.xlane.xlu0 %1171
      %v1173 = vsel %vm959, %v902, -inf
      %1174 = vmax.xlane.f32.xlu0 %v1173
      %v1175 = vpop.xlane.xlu0 %1174
      %v1176 = vsel %vm959, %v903, -inf
      %1177 = vmax.xlane.f32.xlu0 %v1176
      %v1178 = vpop.xlane.xlu0 %1177
      %v1179 = vsel %vm959, %v904, -inf
      %1180 = vmax.xlane.f32.xlu0 %v1179
      %v1181 = vpop.xlane.xlu0 %1180
      %v1182 = vsel %vm959, %v905, -inf
      %1183 = vmax.xlane.f32.xlu0 %v1182
      %v1184 = vpop.xlane.xlu0 %1183
      %v1185 = vsel %vm959, %v906, -inf
      %1186 = vmax.xlane.f32.xlu0 %v1185
      %v1187 = vpop.xlane.xlu0 %1186
      %v1188 = vsel %vm959, %v907, -inf
      %1189 = vmax.xlane.f32.xlu0 %v1188
      %v1190 = vpop.xlane.xlu0 %1189
      %v1191 = vsel %vm959, %v908, -inf
      %1192 = vmax.xlane.f32.xlu0 %v1191
      %v1193 = vpop.xlane.xlu0 %1192
      %v1194 = vsel %vm959, %v909, -inf
      %1195 = vmax.xlane.f32.xlu0 %v1194
      %v1196 = vpop.xlane.xlu0 %1195
      %v1197 = vsel %vm959, %v910, -inf
      %1198 = vmax.xlane.f32.xlu0 %v1197
      %v1199 = vpop.xlane.xlu0 %1198
      %v1200 = vsel %vm959, %v911, -inf
      %1201 = vmax.xlane.f32.xlu0 %v1200
      %v1202 = vpop.xlane.xlu0 %1201
      %v1203 = vsel %vm959, %v912, -inf
      %1204 = vmax.xlane.f32.xlu0 %v1203
      %v1205 = vpop.xlane.xlu0 %1204
      %v1206 = vsel %vm959, %v913, -inf
      %1207 = vmax.xlane.f32.xlu0 %v1206
      %v1208 = vpop.xlane.xlu0 %1207
      %v1209 = vsel %vm959, %v914, -inf
      %1210 = vmax.xlane.f32.xlu0 %v1209
      %v1211 = vpop.xlane.xlu0 %1210
      %v1212 = vsel %vm959, %v915, -inf
      %1213 = vmax.xlane.f32.xlu0 %v1212
      %v1214 = vpop.xlane.xlu0 %1213
      %v1215 = vsel %vm959, %v916, -inf
      %1216 = vmax.xlane.f32.xlu0 %v1215
      %v1217 = vpop.xlane.xlu0 %1216
      %v1218 = vsel %vm959, %v917, -inf
      %1219 = vmax.xlane.f32.xlu0 %v1218
      %v1220 = vpop.xlane.xlu0 %1219
      %v1221 = vsel %vm959, %v918, -inf
      %1222 = vmax.xlane.f32.xlu0 %v1221
      %v1223 = vpop.xlane.xlu0 %1222
      %v1224 = vsel %vm959, %v919, -inf
      %1225 = vmax.xlane.f32.xlu0 %v1224
      %v1226 = vpop.xlane.xlu0 %1225
      %v1227 = vsel %vm959, %v920, -inf
      %1228 = vmax.xlane.f32.xlu0 %v1227
      %v1229 = vpop.xlane.xlu0 %1228
      %v1230 = vsel %vm959, %v921, -inf
      %1231 = vmax.xlane.f32.xlu0 %v1230
      %v1232 = vpop.xlane.xlu0 %1231
      %v1233 = vsel %vm959, %v922, -inf
      %1234 = vmax.xlane.f32.xlu0 %v1233
      %v1235 = vpop.xlane.xlu0 %1234
      %v1236 = vsel %vm959, %v923, -inf
      %1237 = vmax.xlane.f32.xlu0 %v1236
      %v1238 = vpop.xlane.xlu0 %1237
      %v1239 = vsel %vm959, %v924, -inf
      %1240 = vmax.xlane.f32.xlu0 %v1239
      %v1241 = vpop.xlane.xlu0 %1240
      %v1242 = vsel %vm959, %v925, -inf
      %1243 = vmax.xlane.f32.xlu0 %v1242
      %v1244 = vpop.xlane.xlu0 %1243
      %v1245 = vsel %vm959, %v926, -inf
      %1246 = vmax.xlane.f32.xlu0 %v1245
      %v1247 = vpop.xlane.xlu0 %1246
      %v1248 = vsel %vm959, %v927, -inf
      %1249 = vmax.xlane.f32.xlu0 %v1248
      %v1250 = vpop.xlane.xlu0 %1249
      %v1251 = vsel %vm959, %v928, -inf
      %1252 = vmax.xlane.f32.xlu0 %v1251
      %v1253 = vpop.xlane.xlu0 %1252
      %v1254 = vsel %vm959, %v929, -inf
      %1255 = vmax.xlane.f32.xlu0 %v1254
      %v1256 = vpop.xlane.xlu0 %1255
      %v1257 = vsel %vm959, %v930, -inf
      %1258 = vmax.xlane.f32.xlu0 %v1257
      %v1259 = vpop.xlane.xlu0 %1258
      %v1260 = vsel %vm959, %v931, -inf
      %1261 = vmax.xlane.f32.xlu0 %v1260
      %v1262 = vpop.xlane.xlu0 %1261
      %v1263 = vsel %vm959, %v932, -inf
      %1264 = vmax.xlane.f32.xlu0 %v1263
      %v1265 = vpop.xlane.xlu0 %1264
      %v1266 = vsel %vm959, %v933, -inf
      %1267 = vmax.xlane.f32.xlu0 %v1266
      %v1268 = vpop.xlane.xlu0 %1267
      %v1269 = vsel %vm959, %v934, -inf
      %1270 = vmax.xlane.f32.xlu0 %v1269
      %v1271 = vpop.xlane.xlu0 %1270
      %v1272 = vsel %vm959, %v935, -inf
      %1273 = vmax.xlane.f32.xlu0 %v1272
      %v1274 = vpop.xlane.xlu0 %1273
      %v1275 = vsel %vm959, %v936, -inf
      %1276 = vmax.xlane.f32.xlu0 %v1275
      %v1277 = vpop.xlane.xlu0 %1276
      %v1278 = vsel %vm959, %v937, -inf
      %1279 = vmax.xlane.f32.xlu0 %v1278
      %v1280 = vpop.xlane.xlu0 %1279
      %v1281 = vsel %vm959, %v938, -inf
      %1282 = vmax.xlane.f32.xlu0 %v1281
      %v1283 = vpop.xlane.xlu0 %1282
      %v1284 = vsel %vm959, %v939, -inf
      %1285 = vmax.xlane.f32.xlu0 %v1284
      %v1286 = vpop.xlane.xlu0 %1285
      %v1287 = vsel %vm959, %v940, -inf
      %1288 = vmax.xlane.f32.xlu0 %v1287
      %v1289 = vpop.xlane.xlu0 %1288
      %v1290 = vsel %vm959, %v941, -inf
      %1291 = vmax.xlane.f32.xlu0 %v1290
      %v1292 = vpop.xlane.xlu0 %1291
      %v1293 = vsel %vm959, %v942, -inf
      %1294 = vmax.xlane.f32.xlu0 %v1293
      %v1295 = vpop.xlane.xlu0 %1294
      %v1296 = vsel %vm959, %v943, -inf
      %1297 = vmax.xlane.f32.xlu0 %v1296
      %v1298 = vpop.xlane.xlu0 %1297
      %v1299 = vsel %vm959, %v944, -inf
      %1300 = vmax.xlane.f32.xlu0 %v1299
      %v1301 = vpop.xlane.xlu0 %1300
      %v1302 = vsel %vm959, %v945, -inf
      %1303 = vmax.xlane.f32.xlu0 %v1302
      %v1304 = vpop.xlane.xlu0 %1303
      %v1305 = vsel %vm959, %v946, -inf
      %1306 = vmax.xlane.f32.xlu0 %v1305
      %v1307 = vpop.xlane.xlu0 %1306
      %v1308 = vsel %vm959, %v947, -inf
      %1309 = vmax.xlane.f32.xlu0 %v1308
      %v1310 = vpop.xlane.xlu0 %1309
      %v1311 = vsel %vm959, %v948, -inf
      %1312 = vmax.xlane.f32.xlu0 %v1311
      %v1313 = vpop.xlane.xlu0 %1312
      %v1314 = vsel %vm959, %v949, -inf
      %1315 = vmax.xlane.f32.xlu0 %v1314
      %v1316 = vpop.xlane.xlu0 %1315
      %v1317 = vsel %vm959, %v950, -inf
      %1318 = vmax.xlane.f32.xlu0 %v1317
      %v1319 = vpop.xlane.xlu0 %1318
      %v1320 = vsel %vm959, %v951, -inf
      %1321 = vmax.xlane.f32.xlu0 %v1320
      %v1322 = vpop.xlane.xlu0 %1321
      %v1323 = vsel %vm959, %v952, -inf
      %1324 = vmax.xlane.f32.xlu0 %v1323
      %v1325 = vpop.xlane.xlu0 %1324
      %v1326 = vsel %vm959, %v953, -inf
      %1327 = vmax.xlane.f32.xlu0 %v1326
      %v1328 = vpop.xlane.xlu0 %1327
      %v1329 = vsel %vm959, %v954, -inf
      %1330 = vmax.xlane.f32.xlu0 %v1329
      %v1331 = vpop.xlane.xlu0 %1330
      %v1332 = vsel %vm959, %v955, -inf
      %1333 = vmax.xlane.f32.xlu0 %v1332
      %v1334 = vpop.xlane.xlu0 %1333
      %v1335 = vsel %vm959, %v956, -inf
      %1336 = vmax.xlane.f32.xlu0 %v1335
      %v1337 = vpop.xlane.xlu0 %1336
      %v1338 = vsel %vm959, %v957, -inf
      %1339 = vmax.xlane.f32.xlu0 %v1338
      %v1340 = vpop.xlane.xlu0 %1339
      %v1341 = vsel %vm959, %v958, -inf
      %1342 = vmax.xlane.f32.xlu0 %v1341
      %v1343 = vpop.xlane.xlu0 %1342
      %vm1344 = vcmp.gt.f32.partialorder %v962, 0.0
      %vm1345 = vcmp.gt.f32.partialorder %v965, 0.0
      %vm1346 = vcmp.gt.f32.partialorder %v968, 0.0
      %vm1347 = vcmp.gt.f32.partialorder %v971, 0.0
      %vm1348 = vcmp.gt.f32.partialorder %v974, 0.0
      %vm1349 = vcmp.gt.f32.partialorder %v977, 0.0
      %vm1350 = vcmp.gt.f32.partialorder %v980, 0.0
      %vm1351 = vcmp.gt.f32.partialorder %v983, 0.0
      %vm1352 = vcmp.gt.f32.partialorder %v986, 0.0
      %vm1353 = vcmp.gt.f32.partialorder %v989, 0.0
      %vm1354 = vcmp.gt.f32.partialorder %v992, 0.0
      %vm1355 = vcmp.gt.f32.partialorder %v995, 0.0
      %vm1356 = vcmp.gt.f32.partialorder %v998, 0.0
      %vm1357 = vcmp.gt.f32.partialorder %v1001, 0.0
      %vm1358 = vcmp.gt.f32.partialorder %v1004, 0.0
      %vm1359 = vcmp.gt.f32.partialorder %v1007, 0.0
      %vm1360 = vcmp.gt.f32.partialorder %v1010, 0.0
      %vm1361 = vcmp.gt.f32.partialorder %v1013, 0.0
      %vm1362 = vcmp.gt.f32.partialorder %v1016, 0.0
      %vm1363 = vcmp.gt.f32.partialorder %v1019, 0.0
      %vm1364 = vcmp.gt.f32.partialorder %v1022, 0.0
      %vm1365 = vcmp.gt.f32.partialorder %v1025, 0.0
      %vm1366 = vcmp.gt.f32.partialorder %v1028, 0.0
      %vm1367 = vcmp.gt.f32.partialorder %v1031, 0.0
      %vm1368 = vcmp.gt.f32.partialorder %v1034, 0.0
      %vm1369 = vcmp.gt.f32.partialorder %v1037, 0.0
      %vm1370 = vcmp.gt.f32.partialorder %v1040, 0.0
      %vm1371 = vcmp.gt.f32.partialorder %v1043, 0.0
      %vm1372 = vcmp.gt.f32.partialorder %v1046, 0.0
      %vm1373 = vcmp.gt.f32.partialorder %v1049, 0.0
      %vm1374 = vcmp.gt.f32.partialorder %v1052, 0.0
      %vm1375 = vcmp.gt.f32.partialorder %v1055, 0.0
      %vm1376 = vcmp.gt.f32.partialorder %v1058, 0.0
      %vm1377 = vcmp.gt.f32.partialorder %v1061, 0.0
      %vm1378 = vcmp.gt.f32.partialorder %v1064, 0.0
      %vm1379 = vcmp.gt.f32.partialorder %v1067, 0.0
      %vm1380 = vcmp.gt.f32.partialorder %v1070, 0.0
      %vm1381 = vcmp.gt.f32.partialorder %v1073, 0.0
      %vm1382 = vcmp.gt.f32.partialorder %v1076, 0.0
      %vm1383 = vcmp.gt.f32.partialorder %v1079, 0.0
      %vm1384 = vcmp.gt.f32.partialorder %v1082, 0.0
      %vm1385 = vcmp.gt.f32.partialorder %v1085, 0.0
      %vm1386 = vcmp.gt.f32.partialorder %v1088, 0.0
      %vm1387 = vcmp.gt.f32.partialorder %v1091, 0.0
      %vm1388 = vcmp.gt.f32.partialorder %v1094, 0.0
      %vm1389 = vcmp.gt.f32.partialorder %v1097, 0.0
      %vm1390 = vcmp.gt.f32.partialorder %v1100, 0.0
      %vm1391 = vcmp.gt.f32.partialorder %v1103, 0.0
      %vm1392 = vcmp.gt.f32.partialorder %v1106, 0.0
      %vm1393 = vcmp.gt.f32.partialorder %v1109, 0.0
      %vm1394 = vcmp.gt.f32.partialorder %v1112, 0.0
      %vm1395 = vcmp.gt.f32.partialorder %v1115, 0.0
      %vm1396 = vcmp.gt.f32.partialorder %v1118, 0.0
      %vm1397 = vcmp.gt.f32.partialorder %v1121, 0.0
      %vm1398 = vcmp.gt.f32.partialorder %v1124, 0.0
      %vm1399 = vcmp.gt.f32.partialorder %v1127, 0.0
      %vm1400 = vcmp.gt.f32.partialorder %v1130, 0.0
      %vm1401 = vcmp.gt.f32.partialorder %v1133, 0.0
      %vm1402 = vcmp.gt.f32.partialorder %v1136, 0.0
      %vm1403 = vcmp.gt.f32.partialorder %v1139, 0.0
      %vm1404 = vcmp.gt.f32.partialorder %v1142, 0.0
      %vm1405 = vcmp.gt.f32.partialorder %v1145, 0.0
      %vm1406 = vcmp.gt.f32.partialorder %v1148, 0.0
      %vm1407 = vcmp.gt.f32.partialorder %v1151, 0.0
      %vm1408 = vcmp.gt.f32.partialorder %v1154, 0.0
      %vm1409 = vcmp.gt.f32.partialorder %v1157, 0.0
      %vm1410 = vcmp.gt.f32.partialorder %v1160, 0.0
      %vm1411 = vcmp.gt.f32.partialorder %v1163, 0.0
      %vm1412 = vcmp.gt.f32.partialorder %v1166, 0.0
      %vm1413 = vcmp.gt.f32.partialorder %v1169, 0.0
      %vm1414 = vcmp.gt.f32.partialorder %v1172, 0.0
      %vm1415 = vcmp.gt.f32.partialorder %v1175, 0.0
      %vm1416 = vcmp.gt.f32.partialorder %v1178, 0.0
      %vm1417 = vcmp.gt.f32.partialorder %v1181, 0.0
      %vm1418 = vcmp.gt.f32.partialorder %v1184, 0.0
      %vm1419 = vcmp.gt.f32.partialorder %v1187, 0.0
      %vm1420 = vcmp.gt.f32.partialorder %v1190, 0.0
      %vm1421 = vcmp.gt.f32.partialorder %v1193, 0.0
      %vm1422 = vcmp.gt.f32.partialorder %v1196, 0.0
      %vm1423 = vcmp.gt.f32.partialorder %v1199, 0.0
      %vm1424 = vcmp.gt.f32.partialorder %v1202, 0.0
      %vm1425 = vcmp.gt.f32.partialorder %v1205, 0.0
      %vm1426 = vcmp.gt.f32.partialorder %v1208, 0.0
      %vm1427 = vcmp.gt.f32.partialorder %v1211, 0.0
      %vm1428 = vcmp.gt.f32.partialorder %v1214, 0.0
      %vm1429 = vcmp.gt.f32.partialorder %v1217, 0.0
      %vm1430 = vcmp.gt.f32.partialorder %v1220, 0.0
      %vm1431 = vcmp.gt.f32.partialorder %v1223, 0.0
      %vm1432 = vcmp.gt.f32.partialorder %v1226, 0.0
      %vm1433 = vcmp.gt.f32.partialorder %v1229, 0.0
      %vm1434 = vcmp.gt.f32.partialorder %v1232, 0.0
      %vm1435 = vcmp.gt.f32.partialorder %v1235, 0.0
      %vm1436 = vcmp.gt.f32.partialorder %v1238, 0.0
      %vm1437 = vcmp.gt.f32.partialorder %v1241, 0.0
      %vm1438 = vcmp.gt.f32.partialorder %v1244, 0.0
      %vm1439 = vcmp.gt.f32.partialorder %v1247, 0.0
      %vm1440 = vcmp.gt.f32.partialorder %v1250, 0.0
      %vm1441 = vcmp.gt.f32.partialorder %v1253, 0.0
      %vm1442 = vcmp.gt.f32.partialorder %v1256, 0.0
      %vm1443 = vcmp.gt.f32.partialorder %v1259, 0.0
      %vm1444 = vcmp.gt.f32.partialorder %v1262, 0.0
      %vm1445 = vcmp.gt.f32.partialorder %v1265, 0.0
      %vm1446 = vcmp.gt.f32.partialorder %v1268, 0.0
      %vm1447 = vcmp.gt.f32.partialorder %v1271, 0.0
      %vm1448 = vcmp.gt.f32.partialorder %v1274, 0.0
      %vm1449 = vcmp.gt.f32.partialorder %v1277, 0.0
      %vm1450 = vcmp.gt.f32.partialorder %v1280, 0.0
      %vm1451 = vcmp.gt.f32.partialorder %v1283, 0.0
      %vm1452 = vcmp.gt.f32.partialorder %v1286, 0.0
      %vm1453 = vcmp.gt.f32.partialorder %v1289, 0.0
      %vm1454 = vcmp.gt.f32.partialorder %v1292, 0.0
      %vm1455 = vcmp.gt.f32.partialorder %v1295, 0.0
      %vm1456 = vcmp.gt.f32.partialorder %v1298, 0.0
      %vm1457 = vcmp.gt.f32.partialorder %v1301, 0.0
      %vm1458 = vcmp.gt.f32.partialorder %v1304, 0.0
      %vm1459 = vcmp.gt.f32.partialorder %v1307, 0.0
      %vm1460 = vcmp.gt.f32.partialorder %v1310, 0.0
      %vm1461 = vcmp.gt.f32.partialorder %v1313, 0.0
      %vm1462 = vcmp.gt.f32.partialorder %v1316, 0.0
      %vm1463 = vcmp.gt.f32.partialorder %v1319, 0.0
      %vm1464 = vcmp.gt.f32.partialorder %v1322, 0.0
      %vm1465 = vcmp.gt.f32.partialorder %v1325, 0.0
      %vm1466 = vcmp.gt.f32.partialorder %v1328, 0.0
      %vm1467 = vcmp.gt.f32.partialorder %v1331, 0.0
      %vm1468 = vcmp.gt.f32.partialorder %v1334, 0.0
      %vm1469 = vcmp.gt.f32.partialorder %v1337, 0.0
      %vm1470 = vcmp.gt.f32.partialorder %v1340, 0.0
      %vm1471 = vcmp.gt.f32.partialorder %v1343, 0.0
      %s1472 = smul.u32 %s32, 1024
      %v1473 = vlaneseq
      %v1474 = vshrl.u32 %v1473, 7
      %v1475 = vadd.s32 %v1474, 8
      %v1476 = vadd.s32 %v1474, 16
      %v1477 = vadd.s32 %v1474, 24
      %v1478 = vadd.s32 %v1474, 32
      %v1479 = vadd.s32 %v1474, 40
      %v1480 = vadd.s32 %v1474, 48
      %v1481 = vadd.s32 %v1474, 56
      %v1482 = vadd.s32 %v1474, 64
      %v1483 = vadd.s32 %v1474, 72
      %v1484 = vadd.s32 %v1474, 80
      %v1485 = vadd.s32 %v1474, 88
      %v1486 = vadd.s32 %v1474, 96
      %v1487 = vadd.s32 %v1474, 104
      %v1488 = vadd.s32 %v1474, 112
      %v1489 = vadd.s32 %v1474, 120
      %v1490 = vadd.s32 %v1474, 128
      %v1491 = vadd.s32 %v1474, 136
      %v1492 = vadd.s32 %v1474, 144
      %v1493 = vadd.s32 %v1474, 152
      %v1494 = vadd.s32 %v1474, 160
      %v1495 = vadd.s32 %v1474, 168
      %v1496 = vadd.s32 %v1474, 176
      %v1497 = vadd.s32 %v1474, 184
      %v1498 = vadd.s32 %v1474, 192
      %v1499 = vadd.s32 %v1474, 200
      %v1500 = vadd.s32 %v1474, 208
      %v1501 = vadd.s32 %v1474, 216
      %v1502 = vadd.s32 %v1474, 224
      %v1503 = vadd.s32 %v1474, 232
      %v1504 = vadd.s32 %v1474, 240
      %v1505 = vadd.s32 %v1474, 248
      %v1506 = vadd.s32 %v1474, 256
      %v1507 = vadd.s32 %v1474, 264
      %v1508 = vadd.s32 %v1474, 272
      %v1509 = vadd.s32 %v1474, 280
      %v1510 = vadd.s32 %v1474, 288
      %v1511 = vadd.s32 %v1474, 296
      %v1512 = vadd.s32 %v1474, 304
      %v1513 = vadd.s32 %v1474, 312
      %v1514 = vadd.s32 %v1474, 320
      %v1515 = vadd.s32 %v1474, 328
      %v1516 = vadd.s32 %v1474, 336
      %v1517 = vadd.s32 %v1474, 344
      %v1518 = vadd.s32 %v1474, 352
      %v1519 = vadd.s32 %v1474, 360
      %v1520 = vadd.s32 %v1474, 368
      %v1521 = vadd.s32 %v1474, 376
      %v1522 = vadd.s32 %v1474, 384
      %v1523 = vadd.s32 %v1474, 392
      %v1524 = vadd.s32 %v1474, 400
      %v1525 = vadd.s32 %v1474, 408
      %v1526 = vadd.s32 %v1474, 416
      %v1527 = vadd.s32 %v1474, 424
      %v1528 = vadd.s32 %v1474, 432
      %v1529 = vadd.s32 %v1474, 440
      %v1530 = vadd.s32 %v1474, 448
      %v1531 = vadd.s32 %v1474, 456
      %v1532 = vadd.s32 %v1474, 464
      %v1533 = vadd.s32 %v1474, 472
      %v1534 = vadd.s32 %v1474, 480
      %v1535 = vadd.s32 %v1474, 488
      %v1536 = vadd.s32 %v1474, 496
      %v1537 = vadd.s32 %v1474, 504
      %v1538 = vadd.s32 %v1474, 512
      %v1539 = vadd.s32 %v1474, 520
      %v1540 = vadd.s32 %v1474, 528
      %v1541 = vadd.s32 %v1474, 536
      %v1542 = vadd.s32 %v1474, 544
      %v1543 = vadd.s32 %v1474, 552
      %v1544 = vadd.s32 %v1474, 560
      %v1545 = vadd.s32 %v1474, 568
      %v1546 = vadd.s32 %v1474, 576
      %v1547 = vadd.s32 %v1474, 584
      %v1548 = vadd.s32 %v1474, 592
      %v1549 = vadd.s32 %v1474, 600
      %v1550 = vadd.s32 %v1474, 608
      %v1551 = vadd.s32 %v1474, 616
      %v1552 = vadd.s32 %v1474, 624
      %v1553 = vadd.s32 %v1474, 632
      %v1554 = vadd.s32 %v1474, 640
      %v1555 = vadd.s32 %v1474, 648
      %v1556 = vadd.s32 %v1474, 656
      %v1557 = vadd.s32 %v1474, 664
      %v1558 = vadd.s32 %v1474, 672
      %v1559 = vadd.s32 %v1474, 680
      %v1560 = vadd.s32 %v1474, 688
      %v1561 = vadd.s32 %v1474, 696
      %v1562 = vadd.s32 %v1474, 704
      %v1563 = vadd.s32 %v1474, 712
      %v1564 = vadd.s32 %v1474, 720
      %v1565 = vadd.s32 %v1474, 728
      %v1566 = vadd.s32 %v1474, 736
      %v1567 = vadd.s32 %v1474, 744
      %v1568 = vadd.s32 %v1474, 752
      %v1569 = vadd.s32 %v1474, 760
      %v1570 = vadd.s32 %v1474, 768
      %v1571 = vadd.s32 %v1474, 776
      %v1572 = vadd.s32 %v1474, 784
      %v1573 = vadd.s32 %v1474, 792
      %v1574 = vadd.s32 %v1474, 800
      %v1575 = vadd.s32 %v1474, 808
      %v1576 = vadd.s32 %v1474, 816
      %v1577 = vadd.s32 %v1474, 824
      %v1578 = vadd.s32 %v1474, 832
      %v1579 = vadd.s32 %v1474, 840
      %v1580 = vadd.s32 %v1474, 848
      %v1581 = vadd.s32 %v1474, 856
      %v1582 = vadd.s32 %v1474, 864
      %v1583 = vadd.s32 %v1474, 872
      %v1584 = vadd.s32 %v1474, 880
      %v1585 = vadd.s32 %v1474, 888
      %v1586 = vadd.s32 %v1474, 896
      %v1587 = vadd.s32 %v1474, 904
      %v1588 = vadd.s32 %v1474, 912
      %v1589 = vadd.s32 %v1474, 920
      %v1590 = vadd.s32 %v1474, 928
      %v1591 = vadd.s32 %v1474, 936
      %v1592 = vadd.s32 %v1474, 944
      %v1593 = vadd.s32 %v1474, 952
      %v1594 = vadd.s32 %v1474, 960
      %v1595 = vadd.s32 %v1474, 968
      %v1596 = vadd.s32 %v1474, 976
      %v1597 = vadd.s32 %v1474, 984
      %v1598 = vadd.s32 %v1474, 992
      %v1599 = vadd.s32 %v1474, 1000
      %v1600 = vadd.s32 %v1474, 1008
      %v1601 = vadd.s32 %v1474, 1016
      %v1602 = vstv %s1472
      %v1603 = vadd.s32 %v1602, %v1474
      %v1604 = vadd.s32 %v1602, %v1475
      %v1605 = vadd.s32 %v1602, %v1476
      %v1606 = vadd.s32 %v1602, %v1477
      %v1607 = vadd.s32 %v1602, %v1478
      %v1608 = vadd.s32 %v1602, %v1479
      %v1609 = vadd.s32 %v1602, %v1480
      %v1610 = vadd.s32 %v1602, %v1481
      %v1611 = vadd.s32 %v1602, %v1482
      %v1612 = vadd.s32 %v1602, %v1483
      %v1613 = vadd.s32 %v1602, %v1484
      %v1614 = vadd.s32 %v1602, %v1485
      %v1615 = vadd.s32 %v1602, %v1486
      %v1616 = vadd.s32 %v1602, %v1487
      %v1617 = vadd.s32 %v1602, %v1488
      %v1618 = vadd.s32 %v1602, %v1489
      %v1619 = vadd.s32 %v1602, %v1490
      %v1620 = vadd.s32 %v1602, %v1491
      %v1621 = vadd.s32 %v1602, %v1492
      %v1622 = vadd.s32 %v1602, %v1493
      %v1623 = vadd.s32 %v1602, %v1494
      %v1624 = vadd.s32 %v1602, %v1495
      %v1625 = vadd.s32 %v1602, %v1496
      %v1626 = vadd.s32 %v1602, %v1497
      %v1627 = vadd.s32 %v1602, %v1498
      %v1628 = vadd.s32 %v1602, %v1499
      %v1629 = vadd.s32 %v1602, %v1500
      %v1630 = vadd.s32 %v1602, %v1501
      %v1631 = vadd.s32 %v1602, %v1502
      %v1632 = vadd.s32 %v1602, %v1503
      %v1633 = vadd.s32 %v1602, %v1504
      %v1634 = vadd.s32 %v1602, %v1505
      %v1635 = vadd.s32 %v1602, %v1506
      %v1636 = vadd.s32 %v1602, %v1507
      %v1637 = vadd.s32 %v1602, %v1508
      %v1638 = vadd.s32 %v1602, %v1509
      %v1639 = vadd.s32 %v1602, %v1510
      %v1640 = vadd.s32 %v1602, %v1511
      %v1641 = vadd.s32 %v1602, %v1512
      %v1642 = vadd.s32 %v1602, %v1513
      %v1643 = vadd.s32 %v1602, %v1514
      %v1644 = vadd.s32 %v1602, %v1515
      %v1645 = vadd.s32 %v1602, %v1516
      %v1646 = vadd.s32 %v1602, %v1517
      %v1647 = vadd.s32 %v1602, %v1518
      %v1648 = vadd.s32 %v1602, %v1519
      %v1649 = vadd.s32 %v1602, %v1520
      %v1650 = vadd.s32 %v1602, %v1521
      %v1651 = vadd.s32 %v1602, %v1522
      %v1652 = vadd.s32 %v1602, %v1523
      %v1653 = vadd.s32 %v1602, %v1524
      %v1654 = vadd.s32 %v1602, %v1525
      %v1655 = vadd.s32 %v1602, %v1526
      %v1656 = vadd.s32 %v1602, %v1527
      %v1657 = vadd.s32 %v1602, %v1528
      %v1658 = vadd.s32 %v1602, %v1529
      %v1659 = vadd.s32 %v1602, %v1530
      %v1660 = vadd.s32 %v1602, %v1531
      %v1661 = vadd.s32 %v1602, %v1532
      %v1662 = vadd.s32 %v1602, %v1533
      %v1663 = vadd.s32 %v1602, %v1534
      %v1664 = vadd.s32 %v1602, %v1535
      %v1665 = vadd.s32 %v1602, %v1536
      %v1666 = vadd.s32 %v1602, %v1537
      %v1667 = vadd.s32 %v1602, %v1538
      %v1668 = vadd.s32 %v1602, %v1539
      %v1669 = vadd.s32 %v1602, %v1540
      %v1670 = vadd.s32 %v1602, %v1541
      %v1671 = vadd.s32 %v1602, %v1542
      %v1672 = vadd.s32 %v1602, %v1543
      %v1673 = vadd.s32 %v1602, %v1544
      %v1674 = vadd.s32 %v1602, %v1545
      %v1675 = vadd.s32 %v1602, %v1546
      %v1676 = vadd.s32 %v1602, %v1547
      %v1677 = vadd.s32 %v1602, %v1548
      %v1678 = vadd.s32 %v1602, %v1549
      %v1679 = vadd.s32 %v1602, %v1550
      %v1680 = vadd.s32 %v1602, %v1551
      %v1681 = vadd.s32 %v1602, %v1552
      %v1682 = vadd.s32 %v1602, %v1553
      %v1683 = vadd.s32 %v1602, %v1554
      %v1684 = vadd.s32 %v1602, %v1555
      %v1685 = vadd.s32 %v1602, %v1556
      %v1686 = vadd.s32 %v1602, %v1557
      %v1687 = vadd.s32 %v1602, %v1558
      %v1688 = vadd.s32 %v1602, %v1559
      %v1689 = vadd.s32 %v1602, %v1560
      %v1690 = vadd.s32 %v1602, %v1561
      %v1691 = vadd.s32 %v1602, %v1562
      %v1692 = vadd.s32 %v1602, %v1563
      %v1693 = vadd.s32 %v1602, %v1564
      %v1694 = vadd.s32 %v1602, %v1565
      %v1695 = vadd.s32 %v1602, %v1566
      %v1696 = vadd.s32 %v1602, %v1567
      %v1697 = vadd.s32 %v1602, %v1568
      %v1698 = vadd.s32 %v1602, %v1569
      %v1699 = vadd.s32 %v1602, %v1570
      %v1700 = vadd.s32 %v1602, %v1571
      %v1701 = vadd.s32 %v1602, %v1572
      %v1702 = vadd.s32 %v1602, %v1573
      %v1703 = vadd.s32 %v1602, %v1574
      %v1704 = vadd.s32 %v1602, %v1575
      %v1705 = vadd.s32 %v1602, %v1576
      %v1706 = vadd.s32 %v1602, %v1577
      %v1707 = vadd.s32 %v1602, %v1578
      %v1708 = vadd.s32 %v1602, %v1579
      %v1709 = vadd.s32 %v1602, %v1580
      %v1710 = vadd.s32 %v1602, %v1581
      %v1711 = vadd.s32 %v1602, %v1582
      %v1712 = vadd.s32 %v1602, %v1583
      %v1713 = vadd.s32 %v1602, %v1584
      %v1714 = vadd.s32 %v1602, %v1585
      %v1715 = vadd.s32 %v1602, %v1586
      %v1716 = vadd.s32 %v1602, %v1587
      %v1717 = vadd.s32 %v1602, %v1588
      %v1718 = vadd.s32 %v1602, %v1589
      %v1719 = vadd.s32 %v1602, %v1590
      %v1720 = vadd.s32 %v1602, %v1591
      %v1721 = vadd.s32 %v1602, %v1592
      %v1722 = vadd.s32 %v1602, %v1593
      %v1723 = vadd.s32 %v1602, %v1594
      %v1724 = vadd.s32 %v1602, %v1595
      %v1725 = vadd.s32 %v1602, %v1596
      %v1726 = vadd.s32 %v1602, %v1597
      %v1727 = vadd.s32 %v1602, %v1598
      %v1728 = vadd.s32 %v1602, %v1599
      %v1729 = vadd.s32 %v1602, %v1600
      %v1730 = vadd.s32 %v1602, %v1601
      %vm1731 = vcmp.lt.s32.totalorder %v1603, 16
      %vm1732 = vcmp.lt.s32.totalorder %v1604, 16
      %vm1733 = vcmp.lt.s32.totalorder %v1605, 16
      %vm1734 = vcmp.lt.s32.totalorder %v1606, 16
      %vm1735 = vcmp.lt.s32.totalorder %v1607, 16
      %vm1736 = vcmp.lt.s32.totalorder %v1608, 16
      %vm1737 = vcmp.lt.s32.totalorder %v1609, 16
      %vm1738 = vcmp.lt.s32.totalorder %v1610, 16
      %vm1739 = vcmp.lt.s32.totalorder %v1611, 16
      %vm1740 = vcmp.lt.s32.totalorder %v1612, 16
      %vm1741 = vcmp.lt.s32.totalorder %v1613, 16
      %vm1742 = vcmp.lt.s32.totalorder %v1614, 16
      %vm1743 = vcmp.lt.s32.totalorder %v1615, 16
      %vm1744 = vcmp.lt.s32.totalorder %v1616, 16
      %vm1745 = vcmp.lt.s32.totalorder %v1617, 16
      %vm1746 = vcmp.lt.s32.totalorder %v1618, 16
      %vm1747 = vcmp.lt.s32.totalorder %v1619, 16
      %vm1748 = vcmp.lt.s32.totalorder %v1620, 16
      %vm1749 = vcmp.lt.s32.totalorder %v1621, 16
      %vm1750 = vcmp.lt.s32.totalorder %v1622, 16
      %vm1751 = vcmp.lt.s32.totalorder %v1623, 16
      %vm1752 = vcmp.lt.s32.totalorder %v1624, 16
      %vm1753 = vcmp.lt.s32.totalorder %v1625, 16
      %vm1754 = vcmp.lt.s32.totalorder %v1626, 16
      %vm1755 = vcmp.lt.s32.totalorder %v1627, 16
      %vm1756 = vcmp.lt.s32.totalorder %v1628, 16
      %vm1757 = vcmp.lt.s32.totalorder %v1629, 16
      %vm1758 = vcmp.lt.s32.totalorder %v1630, 16
      %vm1759 = vcmp.lt.s32.totalorder %v1631, 16
      %vm1760 = vcmp.lt.s32.totalorder %v1632, 16
      %vm1761 = vcmp.lt.s32.totalorder %v1633, 16
      %vm1762 = vcmp.lt.s32.totalorder %v1634, 16
      %vm1763 = vcmp.lt.s32.totalorder %v1635, 16
      %vm1764 = vcmp.lt.s32.totalorder %v1636, 16
      %vm1765 = vcmp.lt.s32.totalorder %v1637, 16
      %vm1766 = vcmp.lt.s32.totalorder %v1638, 16
      %vm1767 = vcmp.lt.s32.totalorder %v1639, 16
      %vm1768 = vcmp.lt.s32.totalorder %v1640, 16
      %vm1769 = vcmp.lt.s32.totalorder %v1641, 16
      %vm1770 = vcmp.lt.s32.totalorder %v1642, 16
      %vm1771 = vcmp.lt.s32.totalorder %v1643, 16
      %vm1772 = vcmp.lt.s32.totalorder %v1644, 16
      %vm1773 = vcmp.lt.s32.totalorder %v1645, 16
      %vm1774 = vcmp.lt.s32.totalorder %v1646, 16
      %vm1775 = vcmp.lt.s32.totalorder %v1647, 16
      %vm1776 = vcmp.lt.s32.totalorder %v1648, 16
      %vm1777 = vcmp.lt.s32.totalorder %v1649, 16
      %vm1778 = vcmp.lt.s32.totalorder %v1650, 16
      %vm1779 = vcmp.lt.s32.totalorder %v1651, 16
      %vm1780 = vcmp.lt.s32.totalorder %v1652, 16
      %vm1781 = vcmp.lt.s32.totalorder %v1653, 16
      %vm1782 = vcmp.lt.s32.totalorder %v1654, 16
      %vm1783 = vcmp.lt.s32.totalorder %v1655, 16
      %vm1784 = vcmp.lt.s32.totalorder %v1656, 16
      %vm1785 = vcmp.lt.s32.totalorder %v1657, 16
      %vm1786 = vcmp.lt.s32.totalorder %v1658, 16
      %vm1787 = vcmp.lt.s32.totalorder %v1659, 16
      %vm1788 = vcmp.lt.s32.totalorder %v1660, 16
      %vm1789 = vcmp.lt.s32.totalorder %v1661, 16
      %vm1790 = vcmp.lt.s32.totalorder %v1662, 16
      %vm1791 = vcmp.lt.s32.totalorder %v1663, 16
      %vm1792 = vcmp.lt.s32.totalorder %v1664, 16
      %vm1793 = vcmp.lt.s32.totalorder %v1665, 16
      %vm1794 = vcmp.lt.s32.totalorder %v1666, 16
      %vm1795 = vcmp.lt.s32.totalorder %v1667, 16
      %vm1796 = vcmp.lt.s32.totalorder %v1668, 16
      %vm1797 = vcmp.lt.s32.totalorder %v1669, 16
      %vm1798 = vcmp.lt.s32.totalorder %v1670, 16
      %vm1799 = vcmp.lt.s32.totalorder %v1671, 16
      %vm1800 = vcmp.lt.s32.totalorder %v1672, 16
      %vm1801 = vcmp.lt.s32.totalorder %v1673, 16
      %vm1802 = vcmp.lt.s32.totalorder %v1674, 16
      %vm1803 = vcmp.lt.s32.totalorder %v1675, 16
      %vm1804 = vcmp.lt.s32.totalorder %v1676, 16
      %vm1805 = vcmp.lt.s32.totalorder %v1677, 16
      %vm1806 = vcmp.lt.s32.totalorder %v1678, 16
      %vm1807 = vcmp.lt.s32.totalorder %v1679, 16
      %vm1808 = vcmp.lt.s32.totalorder %v1680, 16
      %vm1809 = vcmp.lt.s32.totalorder %v1681, 16
      %vm1810 = vcmp.lt.s32.totalorder %v1682, 16
      %vm1811 = vcmp.lt.s32.totalorder %v1683, 16
      %vm1812 = vcmp.lt.s32.totalorder %v1684, 16
      %vm1813 = vcmp.lt.s32.totalorder %v1685, 16
      %vm1814 = vcmp.lt.s32.totalorder %v1686, 16
      %vm1815 = vcmp.lt.s32.totalorder %v1687, 16
      %vm1816 = vcmp.lt.s32.totalorder %v1688, 16
      %vm1817 = vcmp.lt.s32.totalorder %v1689, 16
      %vm1818 = vcmp.lt.s32.totalorder %v1690, 16
      %vm1819 = vcmp.lt.s32.totalorder %v1691, 16
      %vm1820 = vcmp.lt.s32.totalorder %v1692, 16
      %vm1821 = vcmp.lt.s32.totalorder %v1693, 16
      %vm1822 = vcmp.lt.s32.totalorder %v1694, 16
      %vm1823 = vcmp.lt.s32.totalorder %v1695, 16
      %vm1824 = vcmp.lt.s32.totalorder %v1696, 16
      %vm1825 = vcmp.lt.s32.totalorder %v1697, 16
      %vm1826 = vcmp.lt.s32.totalorder %v1698, 16
      %vm1827 = vcmp.lt.s32.totalorder %v1699, 16
      %vm1828 = vcmp.lt.s32.totalorder %v1700, 16
      %vm1829 = vcmp.lt.s32.totalorder %v1701, 16
      %vm1830 = vcmp.lt.s32.totalorder %v1702, 16
      %vm1831 = vcmp.lt.s32.totalorder %v1703, 16
      %vm1832 = vcmp.lt.s32.totalorder %v1704, 16
      %vm1833 = vcmp.lt.s32.totalorder %v1705, 16
      %vm1834 = vcmp.lt.s32.totalorder %v1706, 16
      %vm1835 = vcmp.lt.s32.totalorder %v1707, 16
      %vm1836 = vcmp.lt.s32.totalorder %v1708, 16
      %vm1837 = vcmp.lt.s32.totalorder %v1709, 16
      %vm1838 = vcmp.lt.s32.totalorder %v1710, 16
      %vm1839 = vcmp.lt.s32.totalorder %v1711, 16
      %vm1840 = vcmp.lt.s32.totalorder %v1712, 16
      %vm1841 = vcmp.lt.s32.totalorder %v1713, 16
      %vm1842 = vcmp.lt.s32.totalorder %v1714, 16
      %vm1843 = vcmp.lt.s32.totalorder %v1715, 16
      %vm1844 = vcmp.lt.s32.totalorder %v1716, 16
      %vm1845 = vcmp.lt.s32.totalorder %v1717, 16
      %vm1846 = vcmp.lt.s32.totalorder %v1718, 16
      %vm1847 = vcmp.lt.s32.totalorder %v1719, 16
      %vm1848 = vcmp.lt.s32.totalorder %v1720, 16
      %vm1849 = vcmp.lt.s32.totalorder %v1721, 16
      %vm1850 = vcmp.lt.s32.totalorder %v1722, 16
      %vm1851 = vcmp.lt.s32.totalorder %v1723, 16
      %vm1852 = vcmp.lt.s32.totalorder %v1724, 16
      %vm1853 = vcmp.lt.s32.totalorder %v1725, 16
      %vm1854 = vcmp.lt.s32.totalorder %v1726, 16
      %vm1855 = vcmp.lt.s32.totalorder %v1727, 16
      %vm1856 = vcmp.lt.s32.totalorder %v1728, 16
      %vm1857 = vcmp.lt.s32.totalorder %v1729, 16
      %vm1858 = vcmp.lt.s32.totalorder %v1730, 16
      %vm1859 = vmand %vm1344, %vm1731
      %vm1860 = vmand %vm1345, %vm1732
      %vm1861 = vmand %vm1346, %vm1733
      %vm1862 = vmand %vm1347, %vm1734
      %vm1863 = vmand %vm1348, %vm1735
      %vm1864 = vmand %vm1349, %vm1736
      %vm1865 = vmand %vm1350, %vm1737
      %vm1866 = vmand %vm1351, %vm1738
      %vm1867 = vmand %vm1352, %vm1739
      %vm1868 = vmand %vm1353, %vm1740
      %vm1869 = vmand %vm1354, %vm1741
      %vm1870 = vmand %vm1355, %vm1742
      %vm1871 = vmand %vm1356, %vm1743
      %vm1872 = vmand %vm1357, %vm1744
      %vm1873 = vmand %vm1358, %vm1745
      %vm1874 = vmand %vm1359, %vm1746
      %vm1875 = vmand %vm1360, %vm1747
      %vm1876 = vmand %vm1361, %vm1748
      %vm1877 = vmand %vm1362, %vm1749
      %vm1878 = vmand %vm1363, %vm1750
      %vm1879 = vmand %vm1364, %vm1751
      %vm1880 = vmand %vm1365, %vm1752
      %vm1881 = vmand %vm1366, %vm1753
      %vm1882 = vmand %vm1367, %vm1754
      %vm1883 = vmand %vm1368, %vm1755
      %vm1884 = vmand %vm1369, %vm1756
      %vm1885 = vmand %vm1370, %vm1757
      %vm1886 = vmand %vm1371, %vm1758
      %vm1887 = vmand %vm1372, %vm1759
      %vm1888 = vmand %vm1373, %vm1760
      %vm1889 = vmand %vm1374, %vm1761
      %vm1890 = vmand %vm1375, %vm1762
      %vm1891 = vmand %vm1376, %vm1763
      %vm1892 = vmand %vm1377, %vm1764
      %vm1893 = vmand %vm1378, %vm1765
      %vm1894 = vmand %vm1379, %vm1766
      %vm1895 = vmand %vm1380, %vm1767
      %vm1896 = vmand %vm1381, %vm1768
      %vm1897 = vmand %vm1382, %vm1769
      %vm1898 = vmand %vm1383, %vm1770
      %vm1899 = vmand %vm1384, %vm1771
      %vm1900 = vmand %vm1385, %vm1772
      %vm1901 = vmand %vm1386, %vm1773
      %vm1902 = vmand %vm1387, %vm1774
      %vm1903 = vmand %vm1388, %vm1775
      %vm1904 = vmand %vm1389, %vm1776
      %vm1905 = vmand %vm1390, %vm1777
      %vm1906 = vmand %vm1391, %vm1778
      %vm1907 = vmand %vm1392, %vm1779
      %vm1908 = vmand %vm1393, %vm1780
      %vm1909 = vmand %vm1394, %vm1781
      %vm1910 = vmand %vm1395, %vm1782
      %vm1911 = vmand %vm1396, %vm1783
      %vm1912 = vmand %vm1397, %vm1784
      %vm1913 = vmand %vm1398, %vm1785
      %vm1914 = vmand %vm1399, %vm1786
      %vm1915 = vmand %vm1400, %vm1787
      %vm1916 = vmand %vm1401, %vm1788
      %vm1917 = vmand %vm1402, %vm1789
      %vm1918 = vmand %vm1403, %vm1790
      %vm1919 = vmand %vm1404, %vm1791
      %vm1920 = vmand %vm1405, %vm1792
      %vm1921 = vmand %vm1406, %vm1793
      %vm1922 = vmand %vm1407, %vm1794
      %vm1923 = vmand %vm1408, %vm1795
      %vm1924 = vmand %vm1409, %vm1796
      %vm1925 = vmand %vm1410, %vm1797
      %vm1926 = vmand %vm1411, %vm1798
      %vm1927 = vmand %vm1412, %vm1799
      %vm1928 = vmand %vm1413, %vm1800
      %vm1929 = vmand %vm1414, %vm1801
      %vm1930 = vmand %vm1415, %vm1802
      %vm1931 = vmand %vm1416, %vm1803
      %vm1932 = vmand %vm1417, %vm1804
      %vm1933 = vmand %vm1418, %vm1805
      %vm1934 = vmand %vm1419, %vm1806
      %vm1935 = vmand %vm1420, %vm1807
      %vm1936 = vmand %vm1421, %vm1808
      %vm1937 = vmand %vm1422, %vm1809
      %vm1938 = vmand %vm1423, %vm1810
      %vm1939 = vmand %vm1424, %vm1811
      %vm1940 = vmand %vm1425, %vm1812
      %vm1941 = vmand %vm1426, %vm1813
      %vm1942 = vmand %vm1427, %vm1814
      %vm1943 = vmand %vm1428, %vm1815
      %vm1944 = vmand %vm1429, %vm1816
      %vm1945 = vmand %vm1430, %vm1817
      %vm1946 = vmand %vm1431, %vm1818
      %vm1947 = vmand %vm1432, %vm1819
      %vm1948 = vmand %vm1433, %vm1820
      %vm1949 = vmand %vm1434, %vm1821
      %vm1950 = vmand %vm1435, %vm1822
      %vm1951 = vmand %vm1436, %vm1823
      %vm1952 = vmand %vm1437, %vm1824
      %vm1953 = vmand %vm1438, %vm1825
      %vm1954 = vmand %vm1439, %vm1826
      %vm1955 = vmand %vm1440, %vm1827
      %vm1956 = vmand %vm1441, %vm1828
      %vm1957 = vmand %vm1442, %vm1829
      %vm1958 = vmand %vm1443, %vm1830
      %vm1959 = vmand %vm1444, %vm1831
      %vm1960 = vmand %vm1445, %vm1832
      %vm1961 = vmand %vm1446, %vm1833
      %vm1962 = vmand %vm1447, %vm1834
      %vm1963 = vmand %vm1448, %vm1835
      %vm1964 = vmand %vm1449, %vm1836
      %vm1965 = vmand %vm1450, %vm1837
      %vm1966 = vmand %vm1451, %vm1838
      %vm1967 = vmand %vm1452, %vm1839
      %vm1968 = vmand %vm1453, %vm1840
      %vm1969 = vmand %vm1454, %vm1841
      %vm1970 = vmand %vm1455, %vm1842
      %vm1971 = vmand %vm1456, %vm1843
      %vm1972 = vmand %vm1457, %vm1844
      %vm1973 = vmand %vm1458, %vm1845
      %vm1974 = vmand %vm1459, %vm1846
      %vm1975 = vmand %vm1460, %vm1847
      %vm1976 = vmand %vm1461, %vm1848
      %vm1977 = vmand %vm1462, %vm1849
      %vm1978 = vmand %vm1463, %vm1850
      %vm1979 = vmand %vm1464, %vm1851
      %vm1980 = vmand %vm1465, %vm1852
      %vm1981 = vmand %vm1466, %vm1853
      %vm1982 = vmand %vm1467, %vm1854
      %vm1983 = vmand %vm1468, %vm1855
      %vm1984 = vmand %vm1469, %vm1856
      %vm1985 = vmand %vm1470, %vm1857
      %vm1986 = vmand %vm1471, %vm1858
      %v1987 = vsel %vm1859, 1, 0
      %v1988 = vsel %vm1860, 1, 0
      %v1989 = vsel %vm1861, 1, 0
      %v1990 = vsel %vm1862, 1, 0
      %v1991 = vsel %vm1863, 1, 0
      %v1992 = vsel %vm1864, 1, 0
      %v1993 = vsel %vm1865, 1, 0
      %v1994 = vsel %vm1866, 1, 0
      %v1995 = vsel %vm1867, 1, 0
      %v1996 = vsel %vm1868, 1, 0
      %v1997 = vsel %vm1869, 1, 0
      %v1998 = vsel %vm1870, 1, 0
      %v1999 = vsel %vm1871, 1, 0
      %v2000 = vsel %vm1872, 1, 0
      %v2001 = vsel %vm1873, 1, 0
      %v2002 = vsel %vm1874, 1, 0
      %v2003 = vsel %vm1875, 1, 0
      %v2004 = vsel %vm1876, 1, 0
      %v2005 = vsel %vm1877, 1, 0
      %v2006 = vsel %vm1878, 1, 0
      %v2007 = vsel %vm1879, 1, 0
      %v2008 = vsel %vm1880, 1, 0
      %v2009 = vsel %vm1881, 1, 0
      %v2010 = vsel %vm1882, 1, 0
      %v2011 = vsel %vm1883, 1, 0
      %v2012 = vsel %vm1884, 1, 0
      %v2013 = vsel %vm1885, 1, 0
      %v2014 = vsel %vm1886, 1, 0
      %v2015 = vsel %vm1887, 1, 0
      %v2016 = vsel %vm1888, 1, 0
      %v2017 = vsel %vm1889, 1, 0
      %v2018 = vsel %vm1890, 1, 0
      %v2019 = vsel %vm1891, 1, 0
      %v2020 = vsel %vm1892, 1, 0
      %v2021 = vsel %vm1893, 1, 0
      %v2022 = vsel %vm1894, 1, 0
      %v2023 = vsel %vm1895, 1, 0
      %v2024 = vsel %vm1896, 1, 0
      %v2025 = vsel %vm1897, 1, 0
      %v2026 = vsel %vm1898, 1, 0
      %v2027 = vsel %vm1899, 1, 0
      %v2028 = vsel %vm1900, 1, 0
      %v2029 = vsel %vm1901, 1, 0
      %v2030 = vsel %vm1902, 1, 0
      %v2031 = vsel %vm1903, 1, 0
      %v2032 = vsel %vm1904, 1, 0
      %v2033 = vsel %vm1905, 1, 0
      %v2034 = vsel %vm1906, 1, 0
      %v2035 = vsel %vm1907, 1, 0
      %v2036 = vsel %vm1908, 1, 0
      %v2037 = vsel %vm1909, 1, 0
      %v2038 = vsel %vm1910, 1, 0
      %v2039 = vsel %vm1911, 1, 0
      %v2040 = vsel %vm1912, 1, 0
      %v2041 = vsel %vm1913, 1, 0
      %v2042 = vsel %vm1914, 1, 0
      %v2043 = vsel %vm1915, 1, 0
      %v2044 = vsel %vm1916, 1, 0
      %v2045 = vsel %vm1917, 1, 0
      %v2046 = vsel %vm1918, 1, 0
      %v2047 = vsel %vm1919, 1, 0
      %v2048 = vsel %vm1920, 1, 0
      %v2049 = vsel %vm1921, 1, 0
      %v2050 = vsel %vm1922, 1, 0
      %v2051 = vsel %vm1923, 1, 0
      %v2052 = vsel %vm1924, 1, 0
      %v2053 = vsel %vm1925, 1, 0
      %v2054 = vsel %vm1926, 1, 0
      %v2055 = vsel %vm1927, 1, 0
      %v2056 = vsel %vm1928, 1, 0
      %v2057 = vsel %vm1929, 1, 0
      %v2058 = vsel %vm1930, 1, 0
      %v2059 = vsel %vm1931, 1, 0
      %v2060 = vsel %vm1932, 1, 0
      %v2061 = vsel %vm1933, 1, 0
      %v2062 = vsel %vm1934, 1, 0
      %v2063 = vsel %vm1935, 1, 0
      %v2064 = vsel %vm1936, 1, 0
      %v2065 = vsel %vm1937, 1, 0
      %v2066 = vsel %vm1938, 1, 0
      %v2067 = vsel %vm1939, 1, 0
      %v2068 = vsel %vm1940, 1, 0
      %v2069 = vsel %vm1941, 1, 0
      %v2070 = vsel %vm1942, 1, 0
      %v2071 = vsel %vm1943, 1, 0
      %v2072 = vsel %vm1944, 1, 0
      %v2073 = vsel %vm1945, 1, 0
      %v2074 = vsel %vm1946, 1, 0
      %v2075 = vsel %vm1947, 1, 0
      %v2076 = vsel %vm1948, 1, 0
      %v2077 = vsel %vm1949, 1, 0
      %v2078 = vsel %vm1950, 1, 0
      %v2079 = vsel %vm1951, 1, 0
      %v2080 = vsel %vm1952, 1, 0
      %v2081 = vsel %vm1953, 1, 0
      %v2082 = vsel %vm1954, 1, 0
      %v2083 = vsel %vm1955, 1, 0
      %v2084 = vsel %vm1956, 1, 0
      %v2085 = vsel %vm1957, 1, 0
      %v2086 = vsel %vm1958, 1, 0
      %v2087 = vsel %vm1959, 1, 0
      %v2088 = vsel %vm1960, 1, 0
      %v2089 = vsel %vm1961, 1, 0
      %v2090 = vsel %vm1962, 1, 0
      %v2091 = vsel %vm1963, 1, 0
      %v2092 = vsel %vm1964, 1, 0
      %v2093 = vsel %vm1965, 1, 0
      %v2094 = vsel %vm1966, 1, 0
      %v2095 = vsel %vm1967, 1, 0
      %v2096 = vsel %vm1968, 1, 0
      %v2097 = vsel %vm1969, 1, 0
      %v2098 = vsel %vm1970, 1, 0
      %v2099 = vsel %vm1971, 1, 0
      %v2100 = vsel %vm1972, 1, 0
      %v2101 = vsel %vm1973, 1, 0
      %v2102 = vsel %vm1974, 1, 0
      %v2103 = vsel %vm1975, 1, 0
      %v2104 = vsel %vm1976, 1, 0
      %v2105 = vsel %vm1977, 1, 0
      %v2106 = vsel %vm1978, 1, 0
      %v2107 = vsel %vm1979, 1, 0
      %v2108 = vsel %vm1980, 1, 0
      %v2109 = vsel %vm1981, 1, 0
      %v2110 = vsel %vm1982, 1, 0
      %v2111 = vsel %vm1983, 1, 0
      %v2112 = vsel %vm1984, 1, 0
      %v2113 = vsel %vm1985, 1, 0
      %v2114 = vsel %vm1986, 1, 0
      %v2115 = vcvt.s32.f32 %v1987
      %v2116 = vcvt.s32.f32 %v1988
      %v2117 = vcvt.s32.f32 %v1989
      %v2118 = vcvt.s32.f32 %v1990
      %v2119 = vcvt.s32.f32 %v1991
      %v2120 = vcvt.s32.f32 %v1992
      %v2121 = vcvt.s32.f32 %v1993
      %v2122 = vcvt.s32.f32 %v1994
      %v2123 = vcvt.s32.f32 %v1995
      %v2124 = vcvt.s32.f32 %v1996
      %v2125 = vcvt.s32.f32 %v1997
      %v2126 = vcvt.s32.f32 %v1998
      %v2127 = vcvt.s32.f32 %v1999
      %v2128 = vcvt.s32.f32 %v2000
      %v2129 = vcvt.s32.f32 %v2001
      %v2130 = vcvt.s32.f32 %v2002
      %v2131 = vcvt.s32.f32 %v2003
      %v2132 = vcvt.s32.f32 %v2004
      %v2133 = vcvt.s32.f32 %v2005
      %v2134 = vcvt.s32.f32 %v2006
      %v2135 = vcvt.s32.f32 %v2007
      %v2136 = vcvt.s32.f32 %v2008
      %v2137 = vcvt.s32.f32 %v2009
      %v2138 = vcvt.s32.f32 %v2010
      %v2139 = vcvt.s32.f32 %v2011
      %v2140 = vcvt.s32.f32 %v2012
      %v2141 = vcvt.s32.f32 %v2013
      %v2142 = vcvt.s32.f32 %v2014
      %v2143 = vcvt.s32.f32 %v2015
      %v2144 = vcvt.s32.f32 %v2016
      %v2145 = vcvt.s32.f32 %v2017
      %v2146 = vcvt.s32.f32 %v2018
      %v2147 = vcvt.s32.f32 %v2019
      %v2148 = vcvt.s32.f32 %v2020
      %v2149 = vcvt.s32.f32 %v2021
      %v2150 = vcvt.s32.f32 %v2022
      %v2151 = vcvt.s32.f32 %v2023
      %v2152 = vcvt.s32.f32 %v2024
      %v2153 = vcvt.s32.f32 %v2025
      %v2154 = vcvt.s32.f32 %v2026
      %v2155 = vcvt.s32.f32 %v2027
      %v2156 = vcvt.s32.f32 %v2028
      %v2157 = vcvt.s32.f32 %v2029
      %v2158 = vcvt.s32.f32 %v2030
      %v2159 = vcvt.s32.f32 %v2031
      %v2160 = vcvt.s32.f32 %v2032
      %v2161 = vcvt.s32.f32 %v2033
      %v2162 = vcvt.s32.f32 %v2034
      %v2163 = vcvt.s32.f32 %v2035
      %v2164 = vcvt.s32.f32 %v2036
      %v2165 = vcvt.s32.f32 %v2037
      %v2166 = vcvt.s32.f32 %v2038
      %v2167 = vcvt.s32.f32 %v2039
      %v2168 = vcvt.s32.f32 %v2040
      %v2169 = vcvt.s32.f32 %v2041
      %v2170 = vcvt.s32.f32 %v2042
      %v2171 = vcvt.s32.f32 %v2043
      %v2172 = vcvt.s32.f32 %v2044
      %v2173 = vcvt.s32.f32 %v2045
      %v2174 = vcvt.s32.f32 %v2046
      %v2175 = vcvt.s32.f32 %v2047
      %v2176 = vcvt.s32.f32 %v2048
      %v2177 = vcvt.s32.f32 %v2049
      %v2178 = vcvt.s32.f32 %v2050
      %v2179 = vcvt.s32.f32 %v2051
      %v2180 = vcvt.s32.f32 %v2052
      %v2181 = vcvt.s32.f32 %v2053
      %v2182 = vcvt.s32.f32 %v2054
      %v2183 = vcvt.s32.f32 %v2055
      %v2184 = vcvt.s32.f32 %v2056
      %v2185 = vcvt.s32.f32 %v2057
      %v2186 = vcvt.s32.f32 %v2058
      %v2187 = vcvt.s32.f32 %v2059
      %v2188 = vcvt.s32.f32 %v2060
      %v2189 = vcvt.s32.f32 %v2061
      %v2190 = vcvt.s32.f32 %v2062
      %v2191 = vcvt.s32.f32 %v2063
      %v2192 = vcvt.s32.f32 %v2064
      %v2193 = vcvt.s32.f32 %v2065
      %v2194 = vcvt.s32.f32 %v2066
      %v2195 = vcvt.s32.f32 %v2067
      %v2196 = vcvt.s32.f32 %v2068
      %v2197 = vcvt.s32.f32 %v2069
      %v2198 = vcvt.s32.f32 %v2070
      %v2199 = vcvt.s32.f32 %v2071
      %v2200 = vcvt.s32.f32 %v2072
      %v2201 = vcvt.s32.f32 %v2073
      %v2202 = vcvt.s32.f32 %v2074
      %v2203 = vcvt.s32.f32 %v2075
      %v2204 = vcvt.s32.f32 %v2076
      %v2205 = vcvt.s32.f32 %v2077
      %v2206 = vcvt.s32.f32 %v2078
      %v2207 = vcvt.s32.f32 %v2079
      %v2208 = vcvt.s32.f32 %v2080
      %v2209 = vcvt.s32.f32 %v2081
      %v2210 = vcvt.s32.f32 %v2082
      %v2211 = vcvt.s32.f32 %v2083
      %v2212 = vcvt.s32.f32 %v2084
      %v2213 = vcvt.s32.f32 %v2085
      %v2214 = vcvt.s32.f32 %v2086
      %v2215 = vcvt.s32.f32 %v2087
      %v2216 = vcvt.s32.f32 %v2088
      %v2217 = vcvt.s32.f32 %v2089
      %v2218 = vcvt.s32.f32 %v2090
      %v2219 = vcvt.s32.f32 %v2091
      %v2220 = vcvt.s32.f32 %v2092
      %v2221 = vcvt.s32.f32 %v2093
      %v2222 = vcvt.s32.f32 %v2094
      %v2223 = vcvt.s32.f32 %v2095
      %v2224 = vcvt.s32.f32 %v2096
      %v2225 = vcvt.s32.f32 %v2097
      %v2226 = vcvt.s32.f32 %v2098
      %v2227 = vcvt.s32.f32 %v2099
      %v2228 = vcvt.s32.f32 %v2100
      %v2229 = vcvt.s32.f32 %v2101
      %v2230 = vcvt.s32.f32 %v2102
      %v2231 = vcvt.s32.f32 %v2103
      %v2232 = vcvt.s32.f32 %v2104
      %v2233 = vcvt.s32.f32 %v2105
      %v2234 = vcvt.s32.f32 %v2106
      %v2235 = vcvt.s32.f32 %v2107
      %v2236 = vcvt.s32.f32 %v2108
      %v2237 = vcvt.s32.f32 %v2109
      %v2238 = vcvt.s32.f32 %v2110
      %v2239 = vcvt.s32.f32 %v2111
      %v2240 = vcvt.s32.f32 %v2112
      %v2241 = vcvt.s32.f32 %v2113
      %v2242 = vcvt.s32.f32 %v2114
      %v2243 = vld [vmem:[%s1] sm:$0xf]
      %v2244 = vld [vmem:[%s1 + $0x4] sm:$0xf]
      %v2245 = vld [vmem:[%s2] sm:$0x1]
      %v2247 = vlaneseq
      %v2248 = vshrl.u32 %v2247, 7
      %v2249 = vsub.s32 0, %v2248
      %v2250 = vrot.slane %v2245, %v2249
      %v2380 = vunpack.c.l.b16 %v575
      %v2381 = vunpack.c.l.b16 %v576
      %v2382 = vunpack.c.l.b16 %v577
      %v2383 = vunpack.c.l.b16 %v578
      %v2384 = vunpack.c.l.b16 %v579
      %v2385 = vunpack.c.l.b16 %v580
      %v2386 = vunpack.c.l.b16 %v581
      %v2387 = vunpack.c.l.b16 %v582
      %v2388 = vunpack.c.l.b16 %v583
      %v2389 = vunpack.c.l.b16 %v584
      %v2390 = vunpack.c.l.b16 %v585
      %v2391 = vunpack.c.l.b16 %v586
      %v2392 = vunpack.c.l.b16 %v587
      %v2393 = vunpack.c.l.b16 %v588
      %v2394 = vunpack.c.l.b16 %v589
      %v2395 = vunpack.c.l.b16 %v590
      %v2396 = vunpack.c.l.b16 %v591
      %v2397 = vunpack.c.l.b16 %v592
      %v2398 = vunpack.c.l.b16 %v593
      %v2399 = vunpack.c.l.b16 %v594
      %v2400 = vunpack.c.l.b16 %v595
      %v2401 = vunpack.c.l.b16 %v596
      %v2402 = vunpack.c.l.b16 %v597
      %v2403 = vunpack.c.l.b16 %v598
      %v2404 = vunpack.c.l.b16 %v599
      %v2405 = vunpack.c.l.b16 %v600
      %v2406 = vunpack.c.l.b16 %v601
      %v2407 = vunpack.c.l.b16 %v602
      %v2408 = vunpack.c.l.b16 %v603
      %v2409 = vunpack.c.l.b16 %v604
      %v2410 = vunpack.c.l.b16 %v605
      %v2411 = vunpack.c.l.b16 %v606
      %v2412 = vunpack.c.l.b16 %v607
      %v2413 = vunpack.c.l.b16 %v608
      %v2414 = vunpack.c.l.b16 %v609
      %v2415 = vunpack.c.l.b16 %v610
      %v2416 = vunpack.c.l.b16 %v611
      %v2417 = vunpack.c.l.b16 %v612
      %v2418 = vunpack.c.l.b16 %v613
      %v2419 = vunpack.c.l.b16 %v614
      %v2420 = vunpack.c.l.b16 %v615
      %v2421 = vunpack.c.l.b16 %v616
      %v2422 = vunpack.c.l.b16 %v617
      %v2423 = vunpack.c.l.b16 %v618
      %v2424 = vunpack.c.l.b16 %v619
      %v2425 = vunpack.c.l.b16 %v620
      %v2426 = vunpack.c.l.b16 %v621
      %v2427 = vunpack.c.l.b16 %v622
      %v2428 = vunpack.c.l.b16 %v623
      %v2429 = vunpack.c.l.b16 %v624
      %v2430 = vunpack.c.l.b16 %v625
      %v2431 = vunpack.c.l.b16 %v626
      %v2432 = vunpack.c.l.b16 %v627
      %v2433 = vunpack.c.l.b16 %v628
      %v2434 = vunpack.c.l.b16 %v629
      %v2435 = vunpack.c.l.b16 %v630
      %v2436 = vunpack.c.l.b16 %v631
      %v2437 = vunpack.c.l.b16 %v632
      %v2438 = vunpack.c.l.b16 %v633
      %v2439 = vunpack.c.l.b16 %v634
      %v2440 = vunpack.c.l.b16 %v635
      %v2441 = vunpack.c.l.b16 %v636
      %v2442 = vunpack.c.l.b16 %v637
      %v2443 = vunpack.c.l.b16 %v638
      %v2444 = vunpack.c.l.b16 %v639
      %v2445 = vunpack.c.l.b16 %v640
      %v2446 = vunpack.c.l.b16 %v641
      %v2447 = vunpack.c.l.b16 %v642
      %v2448 = vunpack.c.l.b16 %v643
      %v2449 = vunpack.c.l.b16 %v644
      %v2450 = vunpack.c.l.b16 %v645
      %v2451 = vunpack.c.l.b16 %v646
      %v2452 = vunpack.c.l.b16 %v647
      %v2453 = vunpack.c.l.b16 %v648
      %v2454 = vunpack.c.l.b16 %v649
      %v2455 = vunpack.c.l.b16 %v650
      %v2456 = vunpack.c.l.b16 %v651
      %v2457 = vunpack.c.l.b16 %v652
      %v2458 = vunpack.c.l.b16 %v653
      %v2459 = vunpack.c.l.b16 %v654
      %v2460 = vunpack.c.l.b16 %v655
      %v2461 = vunpack.c.l.b16 %v656
      %v2462 = vunpack.c.l.b16 %v657
      %v2463 = vunpack.c.l.b16 %v658
      %v2464 = vunpack.c.l.b16 %v659
      %v2465 = vunpack.c.l.b16 %v660
      %v2466 = vunpack.c.l.b16 %v661
      %v2467 = vunpack.c.l.b16 %v662
      %v2468 = vunpack.c.l.b16 %v663
      %v2469 = vunpack.c.l.b16 %v664
      %v2470 = vunpack.c.l.b16 %v665
      %v2471 = vunpack.c.l.b16 %v666
      %v2472 = vunpack.c.l.b16 %v667
      %v2473 = vunpack.c.l.b16 %v668
      %v2474 = vunpack.c.l.b16 %v669
      %v2475 = vunpack.c.l.b16 %v670
      %v2476 = vunpack.c.l.b16 %v671
      %v2477 = vunpack.c.l.b16 %v672
      %v2478 = vunpack.c.l.b16 %v673
      %v2479 = vunpack.c.l.b16 %v674
      %v2480 = vunpack.c.l.b16 %v675
      %v2481 = vunpack.c.l.b16 %v676
      %v2482 = vunpack.c.l.b16 %v677
      %v2483 = vunpack.c.l.b16 %v678
      %v2484 = vunpack.c.l.b16 %v679
      %v2485 = vunpack.c.l.b16 %v680
      %v2486 = vunpack.c.l.b16 %v681
      %v2487 = vunpack.c.l.b16 %v682
      %v2488 = vunpack.c.l.b16 %v683
      %v2489 = vunpack.c.l.b16 %v684
      %v2490 = vunpack.c.l.b16 %v685
      %v2491 = vunpack.c.l.b16 %v686
      %v2492 = vunpack.c.l.b16 %v687
      %v2493 = vunpack.c.l.b16 %v688
      %v2494 = vunpack.c.l.b16 %v689
      %v2495 = vunpack.c.l.b16 %v690
      %v2496 = vunpack.c.l.b16 %v691
      %v2497 = vunpack.c.l.b16 %v692
      %v2498 = vunpack.c.l.b16 %v693
      %v2499 = vunpack.c.l.b16 %v694
      %v2500 = vunpack.c.l.b16 %v695
      %v2501 = vunpack.c.l.b16 %v696
      %v2502 = vunpack.c.l.b16 %v697
      %v2503 = vunpack.c.l.b16 %v698
      %v2504 = vunpack.c.l.b16 %v699
      %v2505 = vunpack.c.l.b16 %v700
      %v2506 = vunpack.c.l.b16 %v701
      %v2507 = vunpack.c.l.b16 %v702
      %v2508 = vpack.c.b16 %v2381, %v2380
      %v2509 = vpack.c.b16 %v2383, %v2382
      %v2510 = vpack.c.b16 %v2385, %v2384
      %v2511 = vpack.c.b16 %v2387, %v2386
      %v2512 = vpack.c.b16 %v2389, %v2388
      %v2513 = vpack.c.b16 %v2391, %v2390
      %v2514 = vpack.c.b16 %v2393, %v2392
      %v2515 = vpack.c.b16 %v2395, %v2394
      %v2516 = vpack.c.b16 %v2397, %v2396
      %v2517 = vpack.c.b16 %v2399, %v2398
      %v2518 = vpack.c.b16 %v2401, %v2400
      %v2519 = vpack.c.b16 %v2403, %v2402
      %v2520 = vpack.c.b16 %v2405, %v2404
      %v2521 = vpack.c.b16 %v2407, %v2406
      %v2522 = vpack.c.b16 %v2409, %v2408
      %v2523 = vpack.c.b16 %v2411, %v2410
      %v2524 = vpack.c.b16 %v2413, %v2412
      %v2525 = vpack.c.b16 %v2415, %v2414
      %v2526 = vpack.c.b16 %v2417, %v2416
      %v2527 = vpack.c.b16 %v2419, %v2418
      %v2528 = vpack.c.b16 %v2421, %v2420
      %v2529 = vpack.c.b16 %v2423, %v2422
      %v2530 = vpack.c.b16 %v2425, %v2424
      %v2531 = vpack.c.b16 %v2427, %v2426
      %v2532 = vpack.c.b16 %v2429, %v2428
      %v2533 = vpack.c.b16 %v2431, %v2430
      %v2534 = vpack.c.b16 %v2433, %v2432
      %v2535 = vpack.c.b16 %v2435, %v2434
      %v2536 = vpack.c.b16 %v2437, %v2436
      %v2537 = vpack.c.b16 %v2439, %v2438
      %v2538 = vpack.c.b16 %v2441, %v2440
      %v2539 = vpack.c.b16 %v2443, %v2442
      %v2540 = vpack.c.b16 %v2445, %v2444
      %v2541 = vpack.c.b16 %v2447, %v2446
      %v2542 = vpack.c.b16 %v2449, %v2448
      %v2543 = vpack.c.b16 %v2451, %v2450
      %v2544 = vpack.c.b16 %v2453, %v2452
      %v2545 = vpack.c.b16 %v2455, %v2454
      %v2546 = vpack.c.b16 %v2457, %v2456
      %v2547 = vpack.c.b16 %v2459, %v2458
      %v2548 = vpack.c.b16 %v2461, %v2460
      %v2549 = vpack.c.b16 %v2463, %v2462
      %v2550 = vpack.c.b16 %v2465, %v2464
      %v2551 = vpack.c.b16 %v2467, %v2466
      %v2552 = vpack.c.b16 %v2469, %v2468
      %v2553 = vpack.c.b16 %v2471, %v2470
      %v2554 = vpack.c.b16 %v2473, %v2472
      %v2555 = vpack.c.b16 %v2475, %v2474
      %v2556 = vpack.c.b16 %v2477, %v2476
      %v2557 = vpack.c.b16 %v2479, %v2478
      %v2558 = vpack.c.b16 %v2481, %v2480
      %v2559 = vpack.c.b16 %v2483, %v2482
      %v2560 = vpack.c.b16 %v2485, %v2484
      %v2561 = vpack.c.b16 %v2487, %v2486
      %v2562 = vpack.c.b16 %v2489, %v2488
      %v2563 = vpack.c.b16 %v2491, %v2490
      %v2564 = vpack.c.b16 %v2493, %v2492
      %v2565 = vpack.c.b16 %v2495, %v2494
      %v2566 = vpack.c.b16 %v2497, %v2496
      %v2567 = vpack.c.b16 %v2499, %v2498
      %v2568 = vpack.c.b16 %v2501, %v2500
      %v2569 = vpack.c.b16 %v2503, %v2502
      %v2570 = vpack.c.b16 %v2505, %v2504
      %v2571 = vpack.c.b16 %v2507, %v2506
      %v2574 = vunpack.c.l.b16 %v2243
      %v2575 = vunpack.c.l.b16 %v2244
      %v2576 = vpack.c.b16 %v2575, %v2574
      %v2579 = vsel %vm959, %v2508, 0
      %v2582 = vsel %vm959, %v2509, 0
      %v2585 = vsel %vm959, %v2510, 0
      %v2588 = vsel %vm959, %v2511, 0
      %v2591 = vsel %vm959, %v2512, 0
      %v2594 = vsel %vm959, %v2513, 0
      %v2597 = vsel %vm959, %v2514, 0
      %v2600 = vsel %vm959, %v2515, 0
      %v2603 = vsel %vm959, %v2516, 0
      %v2606 = vsel %vm959, %v2517, 0
      %v2609 = vsel %vm959, %v2518, 0
      %v2612 = vsel %vm959, %v2519, 0
      %v2615 = vsel %vm959, %v2520, 0
      %v2618 = vsel %vm959, %v2521, 0
      %v2621 = vsel %vm959, %v2522, 0
      %v2624 = vsel %vm959, %v2523, 0
      %v2627 = vsel %vm959, %v2524, 0
      %v2630 = vsel %vm959, %v2525, 0
      %v2633 = vsel %vm959, %v2526, 0
      %v2636 = vsel %vm959, %v2527, 0
      %v2639 = vsel %vm959, %v2528, 0
      %v2642 = vsel %vm959, %v2529, 0
      %v2645 = vsel %vm959, %v2530, 0
      %v2648 = vsel %vm959, %v2531, 0
      %v2651 = vsel %vm959, %v2532, 0
      %v2654 = vsel %vm959, %v2533, 0
      %v2657 = vsel %vm959, %v2534, 0
      %v2660 = vsel %vm959, %v2535, 0
      %v2663 = vsel %vm959, %v2536, 0
      %v2666 = vsel %vm959, %v2537, 0
      %v2669 = vsel %vm959, %v2538, 0
      %v2672 = vsel %vm959, %v2539, 0
      %v2675 = vsel %vm959, %v2540, 0
      %v2678 = vsel %vm959, %v2541, 0
      %v2681 = vsel %vm959, %v2542, 0
      %v2684 = vsel %vm959, %v2543, 0
      %v2687 = vsel %vm959, %v2544, 0
      %v2690 = vsel %vm959, %v2545, 0
      %v2693 = vsel %vm959, %v2546, 0
      %v2696 = vsel %vm959, %v2547, 0
      %v2699 = vsel %vm959, %v2548, 0
      %v2702 = vsel %vm959, %v2549, 0
      %v2705 = vsel %vm959, %v2550, 0
      %v2708 = vsel %vm959, %v2551, 0
      %v2711 = vsel %vm959, %v2552, 0
      %v2714 = vsel %vm959, %v2553, 0
      %v2717 = vsel %vm959, %v2554, 0
      %v2720 = vsel %vm959, %v2555, 0
      %v2723 = vsel %vm959, %v2556, 0
      %v2726 = vsel %vm959, %v2557, 0
      %v2729 = vsel %vm959, %v2558, 0
      %v2732 = vsel %vm959, %v2559, 0
      %v2735 = vsel %vm959, %v2560, 0
      %v2738 = vsel %vm959, %v2561, 0
      %v2741 = vsel %vm959, %v2562, 0
      %v2744 = vsel %vm959, %v2563, 0
      %v2747 = vsel %vm959, %v2564, 0
      %v2750 = vsel %vm959, %v2565, 0
      %v2753 = vsel %vm959, %v2566, 0
      %v2756 = vsel %vm959, %v2567, 0
      %v2759 = vsel %vm959, %v2568, 0
      %v2762 = vsel %vm959, %v2569, 0
      %v2765 = vsel %vm959, %v2570, 0
      %v2768 = vsel %vm959, %v2571, 0
      %2770 = vmatprep.subr.bf16.mxu0 0
      %2771 = vmatpush1.bf16.msra.mxu0 0
      %2772 = vmatprep.subr.bf16.mxu0 0
      %2773 = vmatpush1.bf16.msra.mxu0 0
      %2774 = vmatprep.subr.bf16.mxu0 0
      %2775 = vmatpush1.bf16.msra.mxu0 0
      %2776 = vmatprep.subr.bf16.mxu0 0
      %2777 = vmatpush1.bf16.msra.mxu0 0
      %2778 = vmatprep.subr.bf16.mxu0 0
      %2779 = vmatpush1.bf16.msra.mxu0 0
      %2780 = vmatprep.subr.bf16.mxu0 0
      %2781 = vmatpush1.bf16.msra.mxu0 0
      %2782 = vmatprep.subr.bf16.mxu0 0
      %2783 = vmatpush1.bf16.msra.mxu0 0
      %2784 = vmatprep.subr.bf16.mxu0 0
      %2785 = vmatpush1.bf16.msra.mxu0 %v2576
      %2786 = vmatprep.subr.bf16.mxu0 0
      %2787 = vmatpush2.bf16.msra.mxu0 0
      %2788 = vmatprep.subr.bf16.mxu0 0
      %2789 = vmatpush2.bf16.msra.mxu0 0
      %2790 = vmatprep.subr.bf16.mxu0 0
      %2791 = vmatpush2.bf16.msra.mxu0 0
      %2792 = vmatprep.subr.bf16.mxu0 0
      %2793 = vmatpush2.bf16.msra.mxu0 0
      %2794 = vmatprep.subr.bf16.mxu0 0
      %2795 = vmatpush2.bf16.msra.mxu0 0
      %2796 = vmatprep.subr.bf16.mxu0 0
      %2797 = vmatpush2.bf16.msra.mxu0 0
      %2798 = vmatprep.subr.bf16.mxu0 0
      %2799 = vmatpush2.bf16.msra.mxu0 0
      %2800 = vmatprep.subr.bf16.mxu0 0
      %2801 = vmatpush2.bf16.msra.mxu0 0
      %2802 = vmatprep.mubr.bf16.mxu0 0
      %2803 = vmatmul.mubr.bf16.gmra.mxu0 %v2579
      %v2804 = vpop.f32.mrf.mxu0
      %v2805 = vadd.f32 %v2250, %v2804
      %v2806 = vpop.f32.mrf.mxu0
      %v2807 = vpop.f32.mrf.mxu0
      %v2808 = vadd.f32 %v2250, %v2807
      %v2809 = vpop.f32.mrf.mxu0
      %2810 = vmatprep.mubr.bf16.mxu0 0
      %2811 = vmatmul.mubr.bf16.gmra.mxu0 %v2582
      %v2812 = vpop.f32.mrf.mxu0
      %v2813 = vadd.f32 %v2250, %v2812
      %v2814 = vpop.f32.mrf.mxu0
      %v2815 = vpop.f32.mrf.mxu0
      %v2816 = vadd.f32 %v2250, %v2815
      %v2817 = vpop.f32.mrf.mxu0
      %2818 = vmatprep.mubr.bf16.mxu0 0
      %2819 = vmatmul.mubr.bf16.gmra.mxu0 %v2585
      %v2820 = vpop.f32.mrf.mxu0
      %v2821 = vadd.f32 %v2250, %v2820
      %v2822 = vpop.f32.mrf.mxu0
      %v2823 = vpop.f32.mrf.mxu0
      %v2824 = vadd.f32 %v2250, %v2823
      %v2825 = vpop.f32.mrf.mxu0
      %2826 = vmatprep.mubr.bf16.mxu0 0
      %2827 = vmatmul.mubr.bf16.gmra.mxu0 %v2588
      %v2828 = vpop.f32.mrf.mxu0
      %v2829 = vadd.f32 %v2250, %v2828
      %v2830 = vpop.f32.mrf.mxu0
      %v2831 = vpop.f32.mrf.mxu0
      %v2832 = vadd.f32 %v2250, %v2831
      %v2833 = vpop.f32.mrf.mxu0
      %2834 = vmatprep.mubr.bf16.mxu0 0
      %2835 = vmatmul.mubr.bf16.gmra.mxu0 %v2591
      %v2836 = vpop.f32.mrf.mxu0
      %v2837 = vadd.f32 %v2250, %v2836
      %v2838 = vpop.f32.mrf.mxu0
      %v2839 = vpop.f32.mrf.mxu0
      %v2840 = vadd.f32 %v2250, %v2839
      %v2841 = vpop.f32.mrf.mxu0
      %2842 = vmatprep.mubr.bf16.mxu0 0
      %2843 = vmatmul.mubr.bf16.gmra.mxu0 %v2594
      %v2844 = vpop.f32.mrf.mxu0
      %v2845 = vadd.f32 %v2250, %v2844
      %v2846 = vpop.f32.mrf.mxu0
      %v2847 = vpop.f32.mrf.mxu0
      %v2848 = vadd.f32 %v2250, %v2847
      %v2849 = vpop.f32.mrf.mxu0
      %2850 = vmatprep.mubr.bf16.mxu0 0
      %2851 = vmatmul.mubr.bf16.gmra.mxu0 %v2597
      %v2852 = vpop.f32.mrf.mxu0
      %v2853 = vadd.f32 %v2250, %v2852
      %v2854 = vpop.f32.mrf.mxu0
      %v2855 = vpop.f32.mrf.mxu0
      %v2856 = vadd.f32 %v2250, %v2855
      %v2857 = vpop.f32.mrf.mxu0
      %2858 = vmatprep.mubr.bf16.mxu0 0
      %2859 = vmatmul.mubr.bf16.gmra.mxu0 %v2600
      %v2860 = vpop.f32.mrf.mxu0
      %v2861 = vadd.f32 %v2250, %v2860
      %v2862 = vpop.f32.mrf.mxu0
      %v2863 = vpop.f32.mrf.mxu0
      %v2864 = vadd.f32 %v2250, %v2863
      %v2865 = vpop.f32.mrf.mxu0
      %2866 = vmatprep.mubr.bf16.mxu0 0
      %2867 = vmatmul.mubr.bf16.gmra.mxu0 %v2603
      %v2868 = vpop.f32.mrf.mxu0
      %v2869 = vadd.f32 %v2250, %v2868
      %v2870 = vpop.f32.mrf.mxu0
      %v2871 = vpop.f32.mrf.mxu0
      %v2872 = vadd.f32 %v2250, %v2871
      %v2873 = vpop.f32.mrf.mxu0
      %2874 = vmatprep.mubr.bf16.mxu0 0
      %2875 = vmatmul.mubr.bf16.gmra.mxu0 %v2606
      %v2876 = vpop.f32.mrf.mxu0
      %v2877 = vadd.f32 %v2250, %v2876
      %v2878 = vpop.f32.mrf.mxu0
      %v2879 = vpop.f32.mrf.mxu0
      %v2880 = vadd.f32 %v2250, %v2879
      %v2881 = vpop.f32.mrf.mxu0
      %2882 = vmatprep.mubr.bf16.mxu0 0
      %2883 = vmatmul.mubr.bf16.gmra.mxu0 %v2609
      %v2884 = vpop.f32.mrf.mxu0
      %v2885 = vadd.f32 %v2250, %v2884
      %v2886 = vpop.f32.mrf.mxu0
      %v2887 = vpop.f32.mrf.mxu0
      %v2888 = vadd.f32 %v2250, %v2887
      %v2889 = vpop.f32.mrf.mxu0
      %2890 = vmatprep.mubr.bf16.mxu0 0
      %2891 = vmatmul.mubr.bf16.gmra.mxu0 %v2612
      %v2892 = vpop.f32.mrf.mxu0
      %v2893 = vadd.f32 %v2250, %v2892
      %v2894 = vpop.f32.mrf.mxu0
      %v2895 = vpop.f32.mrf.mxu0
      %v2896 = vadd.f32 %v2250, %v2895
      %v2897 = vpop.f32.mrf.mxu0
      %2898 = vmatprep.mubr.bf16.mxu0 0
      %2899 = vmatmul.mubr.bf16.gmra.mxu0 %v2615
      %v2900 = vpop.f32.mrf.mxu0
      %v2901 = vadd.f32 %v2250, %v2900
      %v2902 = vpop.f32.mrf.mxu0
      %v2903 = vpop.f32.mrf.mxu0
      %v2904 = vadd.f32 %v2250, %v2903
      %v2905 = vpop.f32.mrf.mxu0
      %2906 = vmatprep.mubr.bf16.mxu0 0
      %2907 = vmatmul.mubr.bf16.gmra.mxu0 %v2618
      %v2908 = vpop.f32.mrf.mxu0
      %v2909 = vadd.f32 %v2250, %v2908
      %v2910 = vpop.f32.mrf.mxu0
      %v2911 = vpop.f32.mrf.mxu0
      %v2912 = vadd.f32 %v2250, %v2911
      %v2913 = vpop.f32.mrf.mxu0
      %2914 = vmatprep.mubr.bf16.mxu0 0
      %2915 = vmatmul.mubr.bf16.gmra.mxu0 %v2621
      %v2916 = vpop.f32.mrf.mxu0
      %v2917 = vadd.f32 %v2250, %v2916
      %v2918 = vpop.f32.mrf.mxu0
      %v2919 = vpop.f32.mrf.mxu0
      %v2920 = vadd.f32 %v2250, %v2919
      %v2921 = vpop.f32.mrf.mxu0
      %2922 = vmatprep.mubr.bf16.mxu0 0
      %2923 = vmatmul.mubr.bf16.gmra.mxu0 %v2624
      %v2924 = vpop.f32.mrf.mxu0
      %v2925 = vadd.f32 %v2250, %v2924
      %v2926 = vpop.f32.mrf.mxu0
      %v2927 = vpop.f32.mrf.mxu0
      %v2928 = vadd.f32 %v2250, %v2927
      %v2929 = vpop.f32.mrf.mxu0
      %2930 = vmatprep.mubr.bf16.mxu0 0
      %2931 = vmatmul.mubr.bf16.gmra.mxu0 %v2627
      %v2932 = vpop.f32.mrf.mxu0
      %v2933 = vadd.f32 %v2250, %v2932
      %v2934 = vpop.f32.mrf.mxu0
      %v2935 = vpop.f32.mrf.mxu0
      %v2936 = vadd.f32 %v2250, %v2935
      %v2937 = vpop.f32.mrf.mxu0
      %2938 = vmatprep.mubr.bf16.mxu0 0
      %2939 = vmatmul.mubr.bf16.gmra.mxu0 %v2630
      %v2940 = vpop.f32.mrf.mxu0
      %v2941 = vadd.f32 %v2250, %v2940
      %v2942 = vpop.f32.mrf.mxu0
      %v2943 = vpop.f32.mrf.mxu0
      %v2944 = vadd.f32 %v2250, %v2943
      %v2945 = vpop.f32.mrf.mxu0
      %2946 = vmatprep.mubr.bf16.mxu0 0
      %2947 = vmatmul.mubr.bf16.gmra.mxu0 %v2633
      %v2948 = vpop.f32.mrf.mxu0
      %v2949 = vadd.f32 %v2250, %v2948
      %v2950 = vpop.f32.mrf.mxu0
      %v2951 = vpop.f32.mrf.mxu0
      %v2952 = vadd.f32 %v2250, %v2951
      %v2953 = vpop.f32.mrf.mxu0
      %2954 = vmatprep.mubr.bf16.mxu0 0
      %2955 = vmatmul.mubr.bf16.gmra.mxu0 %v2636
      %v2956 = vpop.f32.mrf.mxu0
      %v2957 = vadd.f32 %v2250, %v2956
      %v2958 = vpop.f32.mrf.mxu0
      %v2959 = vpop.f32.mrf.mxu0
      %v2960 = vadd.f32 %v2250, %v2959
      %v2961 = vpop.f32.mrf.mxu0
      %2962 = vmatprep.mubr.bf16.mxu0 0
      %2963 = vmatmul.mubr.bf16.gmra.mxu0 %v2639
      %v2964 = vpop.f32.mrf.mxu0
      %v2965 = vadd.f32 %v2250, %v2964
      %v2966 = vpop.f32.mrf.mxu0
      %v2967 = vpop.f32.mrf.mxu0
      %v2968 = vadd.f32 %v2250, %v2967
      %v2969 = vpop.f32.mrf.mxu0
      %2970 = vmatprep.mubr.bf16.mxu0 0
      %2971 = vmatmul.mubr.bf16.gmra.mxu0 %v2642
      %v2972 = vpop.f32.mrf.mxu0
      %v2973 = vadd.f32 %v2250, %v2972
      %v2974 = vpop.f32.mrf.mxu0
      %v2975 = vpop.f32.mrf.mxu0
      %v2976 = vadd.f32 %v2250, %v2975
      %v2977 = vpop.f32.mrf.mxu0
      %2978 = vmatprep.mubr.bf16.mxu0 0
      %2979 = vmatmul.mubr.bf16.gmra.mxu0 %v2645
      %v2980 = vpop.f32.mrf.mxu0
      %v2981 = vadd.f32 %v2250, %v2980
      %v2982 = vpop.f32.mrf.mxu0
      %v2983 = vpop.f32.mrf.mxu0
      %v2984 = vadd.f32 %v2250, %v2983
      %v2985 = vpop.f32.mrf.mxu0
      %2986 = vmatprep.mubr.bf16.mxu0 0
      %2987 = vmatmul.mubr.bf16.gmra.mxu0 %v2648
      %v2988 = vpop.f32.mrf.mxu0
      %v2989 = vadd.f32 %v2250, %v2988
      %v2990 = vpop.f32.mrf.mxu0
      %v2991 = vpop.f32.mrf.mxu0
      %v2992 = vadd.f32 %v2250, %v2991
      %v2993 = vpop.f32.mrf.mxu0
      %2994 = vmatprep.mubr.bf16.mxu0 0
      %2995 = vmatmul.mubr.bf16.gmra.mxu0 %v2651
      %v2996 = vpop.f32.mrf.mxu0
      %v2997 = vadd.f32 %v2250, %v2996
      %v2998 = vpop.f32.mrf.mxu0
      %v2999 = vpop.f32.mrf.mxu0
      %v3000 = vadd.f32 %v2250, %v2999
      %v3001 = vpop.f32.mrf.mxu0
      %3002 = vmatprep.mubr.bf16.mxu0 0
      %3003 = vmatmul.mubr.bf16.gmra.mxu0 %v2654
      %v3004 = vpop.f32.mrf.mxu0
      %v3005 = vadd.f32 %v2250, %v3004
      %v3006 = vpop.f32.mrf.mxu0
      %v3007 = vpop.f32.mrf.mxu0
      %v3008 = vadd.f32 %v2250, %v3007
      %v3009 = vpop.f32.mrf.mxu0
      %3010 = vmatprep.mubr.bf16.mxu0 0
      %3011 = vmatmul.mubr.bf16.gmra.mxu0 %v2657
      %v3012 = vpop.f32.mrf.mxu0
      %v3013 = vadd.f32 %v2250, %v3012
      %v3014 = vpop.f32.mrf.mxu0
      %v3015 = vpop.f32.mrf.mxu0
      %v3016 = vadd.f32 %v2250, %v3015
      %v3017 = vpop.f32.mrf.mxu0
      %3018 = vmatprep.mubr.bf16.mxu0 0
      %3019 = vmatmul.mubr.bf16.gmra.mxu0 %v2660
      %v3020 = vpop.f32.mrf.mxu0
      %v3021 = vadd.f32 %v2250, %v3020
      %v3022 = vpop.f32.mrf.mxu0
      %v3023 = vpop.f32.mrf.mxu0
      %v3024 = vadd.f32 %v2250, %v3023
      %v3025 = vpop.f32.mrf.mxu0
      %3026 = vmatprep.mubr.bf16.mxu0 0
      %3027 = vmatmul.mubr.bf16.gmra.mxu0 %v2663
      %v3028 = vpop.f32.mrf.mxu0
      %v3029 = vadd.f32 %v2250, %v3028
      %v3030 = vpop.f32.mrf.mxu0
      %v3031 = vpop.f32.mrf.mxu0
      %v3032 = vadd.f32 %v2250, %v3031
      %v3033 = vpop.f32.mrf.mxu0
      %3034 = vmatprep.mubr.bf16.mxu0 0
      %3035 = vmatmul.mubr.bf16.gmra.mxu0 %v2666
      %v3036 = vpop.f32.mrf.mxu0
      %v3037 = vadd.f32 %v2250, %v3036
      %v3038 = vpop.f32.mrf.mxu0
      %v3039 = vpop.f32.mrf.mxu0
      %v3040 = vadd.f32 %v2250, %v3039
      %v3041 = vpop.f32.mrf.mxu0
      %3042 = vmatprep.mubr.bf16.mxu0 0
      %3043 = vmatmul.mubr.bf16.gmra.mxu0 %v2669
      %v3044 = vpop.f32.mrf.mxu0
      %v3045 = vadd.f32 %v2250, %v3044
      %v3046 = vpop.f32.mrf.mxu0
      %v3047 = vpop.f32.mrf.mxu0
      %v3048 = vadd.f32 %v2250, %v3047
      %v3049 = vpop.f32.mrf.mxu0
      %3050 = vmatprep.mubr.bf16.mxu0 0
      %3051 = vmatmul.mubr.bf16.gmra.mxu0 %v2672
      %v3052 = vpop.f32.mrf.mxu0
      %v3053 = vadd.f32 %v2250, %v3052
      %v3054 = vpop.f32.mrf.mxu0
      %v3055 = vpop.f32.mrf.mxu0
      %v3056 = vadd.f32 %v2250, %v3055
      %v3057 = vpop.f32.mrf.mxu0
      %3058 = vmatprep.mubr.bf16.mxu0 0
      %3059 = vmatmul.mubr.bf16.gmra.mxu0 %v2675
      %v3060 = vpop.f32.mrf.mxu0
      %v3061 = vadd.f32 %v2250, %v3060
      %v3062 = vpop.f32.mrf.mxu0
      %v3063 = vpop.f32.mrf.mxu0
      %v3064 = vadd.f32 %v2250, %v3063
      %v3065 = vpop.f32.mrf.mxu0
      %3066 = vmatprep.mubr.bf16.mxu0 0
      %3067 = vmatmul.mubr.bf16.gmra.mxu0 %v2678
      %v3068 = vpop.f32.mrf.mxu0
      %v3069 = vadd.f32 %v2250, %v3068
      %v3070 = vpop.f32.mrf.mxu0
      %v3071 = vpop.f32.mrf.mxu0
      %v3072 = vadd.f32 %v2250, %v3071
      %v3073 = vpop.f32.mrf.mxu0
      %3074 = vmatprep.mubr.bf16.mxu0 0
      %3075 = vmatmul.mubr.bf16.gmra.mxu0 %v2681
      %v3076 = vpop.f32.mrf.mxu0
      %v3077 = vadd.f32 %v2250, %v3076
      %v3078 = vpop.f32.mrf.mxu0
      %v3079 = vpop.f32.mrf.mxu0
      %v3080 = vadd.f32 %v2250, %v3079
      %v3081 = vpop.f32.mrf.mxu0
      %3082 = vmatprep.mubr.bf16.mxu0 0
      %3083 = vmatmul.mubr.bf16.gmra.mxu0 %v2684
      %v3084 = vpop.f32.mrf.mxu0
      %v3085 = vadd.f32 %v2250, %v3084
      %v3086 = vpop.f32.mrf.mxu0
      %v3087 = vpop.f32.mrf.mxu0
      %v3088 = vadd.f32 %v2250, %v3087
      %v3089 = vpop.f32.mrf.mxu0
      %3090 = vmatprep.mubr.bf16.mxu0 0
      %3091 = vmatmul.mubr.bf16.gmra.mxu0 %v2687
      %v3092 = vpop.f32.mrf.mxu0
      %v3093 = vadd.f32 %v2250, %v3092
      %v3094 = vpop.f32.mrf.mxu0
      %v3095 = vpop.f32.mrf.mxu0
      %v3096 = vadd.f32 %v2250, %v3095
      %v3097 = vpop.f32.mrf.mxu0
      %3098 = vmatprep.mubr.bf16.mxu0 0
      %3099 = vmatmul.mubr.bf16.gmra.mxu0 %v2690
      %v3100 = vpop.f32.mrf.mxu0
      %v3101 = vadd.f32 %v2250, %v3100
      %v3102 = vpop.f32.mrf.mxu0
      %v3103 = vpop.f32.mrf.mxu0
      %v3104 = vadd.f32 %v2250, %v3103
      %v3105 = vpop.f32.mrf.mxu0
      %3106 = vmatprep.mubr.bf16.mxu0 0
      %3107 = vmatmul.mubr.bf16.gmra.mxu0 %v2693
      %v3108 = vpop.f32.mrf.mxu0
      %v3109 = vadd.f32 %v2250, %v3108
      %v3110 = vpop.f32.mrf.mxu0
      %v3111 = vpop.f32.mrf.mxu0
      %v3112 = vadd.f32 %v2250, %v3111
      %v3113 = vpop.f32.mrf.mxu0
      %3114 = vmatprep.mubr.bf16.mxu0 0
      %3115 = vmatmul.mubr.bf16.gmra.mxu0 %v2696
      %v3116 = vpop.f32.mrf.mxu0
      %v3117 = vadd.f32 %v2250, %v3116
      %v3118 = vpop.f32.mrf.mxu0
      %v3119 = vpop.f32.mrf.mxu0
      %v3120 = vadd.f32 %v2250, %v3119
      %v3121 = vpop.f32.mrf.mxu0
      %3122 = vmatprep.mubr.bf16.mxu0 0
      %3123 = vmatmul.mubr.bf16.gmra.mxu0 %v2699
      %v3124 = vpop.f32.mrf.mxu0
      %v3125 = vadd.f32 %v2250, %v3124
      %v3126 = vpop.f32.mrf.mxu0
      %v3127 = vpop.f32.mrf.mxu0
      %v3128 = vadd.f32 %v2250, %v3127
      %v3129 = vpop.f32.mrf.mxu0
      %3130 = vmatprep.mubr.bf16.mxu0 0
      %3131 = vmatmul.mubr.bf16.gmra.mxu0 %v2702
      %v3132 = vpop.f32.mrf.mxu0
      %v3133 = vadd.f32 %v2250, %v3132
      %v3134 = vpop.f32.mrf.mxu0
      %v3135 = vpop.f32.mrf.mxu0
      %v3136 = vadd.f32 %v2250, %v3135
      %v3137 = vpop.f32.mrf.mxu0
      %3138 = vmatprep.mubr.bf16.mxu0 0
      %3139 = vmatmul.mubr.bf16.gmra.mxu0 %v2705
      %v3140 = vpop.f32.mrf.mxu0
      %v3141 = vadd.f32 %v2250, %v3140
      %v3142 = vpop.f32.mrf.mxu0
      %v3143 = vpop.f32.mrf.mxu0
      %v3144 = vadd.f32 %v2250, %v3143
      %v3145 = vpop.f32.mrf.mxu0
      %3146 = vmatprep.mubr.bf16.mxu0 0
      %3147 = vmatmul.mubr.bf16.gmra.mxu0 %v2708
      %v3148 = vpop.f32.mrf.mxu0
      %v3149 = vadd.f32 %v2250, %v3148
      %v3150 = vpop.f32.mrf.mxu0
      %v3151 = vpop.f32.mrf.mxu0
      %v3152 = vadd.f32 %v2250, %v3151
      %v3153 = vpop.f32.mrf.mxu0
      %3154 = vmatprep.mubr.bf16.mxu0 0
      %3155 = vmatmul.mubr.bf16.gmra.mxu0 %v2711
      %v3156 = vpop.f32.mrf.mxu0
      %v3157 = vadd.f32 %v2250, %v3156
      %v3158 = vpop.f32.mrf.mxu0
      %v3159 = vpop.f32.mrf.mxu0
      %v3160 = vadd.f32 %v2250, %v3159
      %v3161 = vpop.f32.mrf.mxu0
      %3162 = vmatprep.mubr.bf16.mxu0 0
      %3163 = vmatmul.mubr.bf16.gmra.mxu0 %v2714
      %v3164 = vpop.f32.mrf.mxu0
      %v3165 = vadd.f32 %v2250, %v3164
      %v3166 = vpop.f32.mrf.mxu0
      %v3167 = vpop.f32.mrf.mxu0
      %v3168 = vadd.f32 %v2250, %v3167
      %v3169 = vpop.f32.mrf.mxu0
      %3170 = vmatprep.mubr.bf16.mxu0 0
      %3171 = vmatmul.mubr.bf16.gmra.mxu0 %v2717
      %v3172 = vpop.f32.mrf.mxu0
      %v3173 = vadd.f32 %v2250, %v3172
      %v3174 = vpop.f32.mrf.mxu0
      %v3175 = vpop.f32.mrf.mxu0
      %v3176 = vadd.f32 %v2250, %v3175
      %v3177 = vpop.f32.mrf.mxu0
      %3178 = vmatprep.mubr.bf16.mxu0 0
      %3179 = vmatmul.mubr.bf16.gmra.mxu0 %v2720
      %v3180 = vpop.f32.mrf.mxu0
      %v3181 = vadd.f32 %v2250, %v3180
      %v3182 = vpop.f32.mrf.mxu0
      %v3183 = vpop.f32.mrf.mxu0
      %v3184 = vadd.f32 %v2250, %v3183
      %v3185 = vpop.f32.mrf.mxu0
      %3186 = vmatprep.mubr.bf16.mxu0 0
      %3187 = vmatmul.mubr.bf16.gmra.mxu0 %v2723
      %v3188 = vpop.f32.mrf.mxu0
      %v3189 = vadd.f32 %v2250, %v3188
      %v3190 = vpop.f32.mrf.mxu0
      %v3191 = vpop.f32.mrf.mxu0
      %v3192 = vadd.f32 %v2250, %v3191
      %v3193 = vpop.f32.mrf.mxu0
      %3194 = vmatprep.mubr.bf16.mxu0 0
      %3195 = vmatmul.mubr.bf16.gmra.mxu0 %v2726
      %v3196 = vpop.f32.mrf.mxu0
      %v3197 = vadd.f32 %v2250, %v3196
      %v3198 = vpop.f32.mrf.mxu0
      %v3199 = vpop.f32.mrf.mxu0
      %v3200 = vadd.f32 %v2250, %v3199
      %v3201 = vpop.f32.mrf.mxu0
      %3202 = vmatprep.mubr.bf16.mxu0 0
      %3203 = vmatmul.mubr.bf16.gmra.mxu0 %v2729
      %v3204 = vpop.f32.mrf.mxu0
      %v3205 = vadd.f32 %v2250, %v3204
      %v3206 = vpop.f32.mrf.mxu0
      %v3207 = vpop.f32.mrf.mxu0
      %v3208 = vadd.f32 %v2250, %v3207
      %v3209 = vpop.f32.mrf.mxu0
      %3210 = vmatprep.mubr.bf16.mxu0 0
      %3211 = vmatmul.mubr.bf16.gmra.mxu0 %v2732
      %v3212 = vpop.f32.mrf.mxu0
      %v3213 = vadd.f32 %v2250, %v3212
      %v3214 = vpop.f32.mrf.mxu0
      %v3215 = vpop.f32.mrf.mxu0
      %v3216 = vadd.f32 %v2250, %v3215
      %v3217 = vpop.f32.mrf.mxu0
      %3218 = vmatprep.mubr.bf16.mxu0 0
      %3219 = vmatmul.mubr.bf16.gmra.mxu0 %v2735
      %v3220 = vpop.f32.mrf.mxu0
      %v3221 = vadd.f32 %v2250, %v3220
      %v3222 = vpop.f32.mrf.mxu0
      %v3223 = vpop.f32.mrf.mxu0
      %v3224 = vadd.f32 %v2250, %v3223
      %v3225 = vpop.f32.mrf.mxu0
      %3226 = vmatprep.mubr.bf16.mxu0 0
      %3227 = vmatmul.mubr.bf16.gmra.mxu0 %v2738
      %v3228 = vpop.f32.mrf.mxu0
      %v3229 = vadd.f32 %v2250, %v3228
      %v3230 = vpop.f32.mrf.mxu0
      %v3231 = vpop.f32.mrf.mxu0
      %v3232 = vadd.f32 %v2250, %v3231
      %v3233 = vpop.f32.mrf.mxu0
      %3234 = vmatprep.mubr.bf16.mxu0 0
      %3235 = vmatmul.mubr.bf16.gmra.mxu0 %v2741
      %v3236 = vpop.f32.mrf.mxu0
      %v3237 = vadd.f32 %v2250, %v3236
      %v3238 = vpop.f32.mrf.mxu0
      %v3239 = vpop.f32.mrf.mxu0
      %v3240 = vadd.f32 %v2250, %v3239
      %v3241 = vpop.f32.mrf.mxu0
      %3242 = vmatprep.mubr.bf16.mxu0 0
      %3243 = vmatmul.mubr.bf16.gmra.mxu0 %v2744
      %v3244 = vpop.f32.mrf.mxu0
      %v3245 = vadd.f32 %v2250, %v3244
      %v3246 = vpop.f32.mrf.mxu0
      %v3247 = vpop.f32.mrf.mxu0
      %v3248 = vadd.f32 %v2250, %v3247
      %v3249 = vpop.f32.mrf.mxu0
      %3250 = vmatprep.mubr.bf16.mxu0 0
      %3251 = vmatmul.mubr.bf16.gmra.mxu0 %v2747
      %v3252 = vpop.f32.mrf.mxu0
      %v3253 = vadd.f32 %v2250, %v3252
      %v3254 = vpop.f32.mrf.mxu0
      %v3255 = vpop.f32.mrf.mxu0
      %v3256 = vadd.f32 %v2250, %v3255
      %v3257 = vpop.f32.mrf.mxu0
      %3258 = vmatprep.mubr.bf16.mxu0 0
      %3259 = vmatmul.mubr.bf16.gmra.mxu0 %v2750
      %v3260 = vpop.f32.mrf.mxu0
      %v3261 = vadd.f32 %v2250, %v3260
      %v3262 = vpop.f32.mrf.mxu0
      %v3263 = vpop.f32.mrf.mxu0
      %v3264 = vadd.f32 %v2250, %v3263
      %v3265 = vpop.f32.mrf.mxu0
      %3266 = vmatprep.mubr.bf16.mxu0 0
      %3267 = vmatmul.mubr.bf16.gmra.mxu0 %v2753
      %v3268 = vpop.f32.mrf.mxu0
      %v3269 = vadd.f32 %v2250, %v3268
      %v3270 = vpop.f32.mrf.mxu0
      %v3271 = vpop.f32.mrf.mxu0
      %v3272 = vadd.f32 %v2250, %v3271
      %v3273 = vpop.f32.mrf.mxu0
      %3274 = vmatprep.mubr.bf16.mxu0 0
      %3275 = vmatmul.mubr.bf16.gmra.mxu0 %v2756
      %v3276 = vpop.f32.mrf.mxu0
      %v3277 = vadd.f32 %v2250, %v3276
      %v3278 = vpop.f32.mrf.mxu0
      %v3279 = vpop.f32.mrf.mxu0
      %v3280 = vadd.f32 %v2250, %v3279
      %v3281 = vpop.f32.mrf.mxu0
      %3282 = vmatprep.mubr.bf16.mxu0 0
      %3283 = vmatmul.mubr.bf16.gmra.mxu0 %v2759
      %v3284 = vpop.f32.mrf.mxu0
      %v3285 = vadd.f32 %v2250, %v3284
      %v3286 = vpop.f32.mrf.mxu0
      %v3287 = vpop.f32.mrf.mxu0
      %v3288 = vadd.f32 %v2250, %v3287
      %v3289 = vpop.f32.mrf.mxu0
      %3290 = vmatprep.mubr.bf16.mxu0 0
      %3291 = vmatmul.mubr.bf16.gmra.mxu0 %v2762
      %v3292 = vpop.f32.mrf.mxu0
      %v3293 = vadd.f32 %v2250, %v3292
      %v3294 = vpop.f32.mrf.mxu0
      %v3295 = vpop.f32.mrf.mxu0
      %v3296 = vadd.f32 %v2250, %v3295
      %v3297 = vpop.f32.mrf.mxu0
      %3298 = vmatprep.mubr.bf16.mxu0 0
      %3299 = vmatmul.mubr.bf16.gmra.mxu0 %v2765
      %v3300 = vpop.f32.mrf.mxu0
      %v3301 = vadd.f32 %v2250, %v3300
      %v3302 = vpop.f32.mrf.mxu0
      %v3303 = vpop.f32.mrf.mxu0
      %v3304 = vadd.f32 %v2250, %v3303
      %v3305 = vpop.f32.mrf.mxu0
      %3306 = vmatprep.mubr.bf16.mxu0 0
      %3307 = vmatmul.mubr.bf16.gmra.mxu0 %v2768
      %v3308 = vpop.f32.mrf.mxu0
      %v3309 = vadd.f32 %v2250, %v3308
      %v3310 = vpop.f32.mrf.mxu0
      %v3311 = vpop.f32.mrf.mxu0
      %v3312 = vadd.f32 %v2250, %v3311
      %v3313 = vpop.f32.mrf.mxu0
      %3314 = vdwg.mxu0
      %v3315 = vmax.f32 %v2805, 0.0
      %v3316 = vmax.f32 %v2808, 0.0
      %v3317 = vmax.f32 %v2813, 0.0
      %v3318 = vmax.f32 %v2816, 0.0
      %v3319 = vmax.f32 %v2821, 0.0
      %v3320 = vmax.f32 %v2824, 0.0
      %v3321 = vmax.f32 %v2829, 0.0
      %v3322 = vmax.f32 %v2832, 0.0
      %v3323 = vmax.f32 %v2837, 0.0
      %v3324 = vmax.f32 %v2840, 0.0
      %v3325 = vmax.f32 %v2845, 0.0
      %v3326 = vmax.f32 %v2848, 0.0
      %v3327 = vmax.f32 %v2853, 0.0
      %v3328 = vmax.f32 %v2856, 0.0
      %v3329 = vmax.f32 %v2861, 0.0
      %v3330 = vmax.f32 %v2864, 0.0
      %v3331 = vmax.f32 %v2869, 0.0
      %v3332 = vmax.f32 %v2872, 0.0
      %v3333 = vmax.f32 %v2877, 0.0
      %v3334 = vmax.f32 %v2880, 0.0
      %v3335 = vmax.f32 %v2885, 0.0
      %v3336 = vmax.f32 %v2888, 0.0
      %v3337 = vmax.f32 %v2893, 0.0
      %v3338 = vmax.f32 %v2896, 0.0
      %v3339 = vmax.f32 %v2901, 0.0
      %v3340 = vmax.f32 %v2904, 0.0
      %v3341 = vmax.f32 %v2909, 0.0
      %v3342 = vmax.f32 %v2912, 0.0
      %v3343 = vmax.f32 %v2917, 0.0
      %v3344 = vmax.f32 %v2920, 0.0
      %v3345 = vmax.f32 %v2925, 0.0
      %v3346 = vmax.f32 %v2928, 0.0
      %v3347 = vmax.f32 %v2933, 0.0
      %v3348 = vmax.f32 %v2936, 0.0
      %v3349 = vmax.f32 %v2941, 0.0
      %v3350 = vmax.f32 %v2944, 0.0
      %v3351 = vmax.f32 %v2949, 0.0
      %v3352 = vmax.f32 %v2952, 0.0
      %v3353 = vmax.f32 %v2957, 0.0
      %v3354 = vmax.f32 %v2960, 0.0
      %v3355 = vmax.f32 %v2965, 0.0
      %v3356 = vmax.f32 %v2968, 0.0
      %v3357 = vmax.f32 %v2973, 0.0
      %v3358 = vmax.f32 %v2976, 0.0
      %v3359 = vmax.f32 %v2981, 0.0
      %v3360 = vmax.f32 %v2984, 0.0
      %v3361 = vmax.f32 %v2989, 0.0
      %v3362 = vmax.f32 %v2992, 0.0
      %v3363 = vmax.f32 %v2997, 0.0
      %v3364 = vmax.f32 %v3000, 0.0
      %v3365 = vmax.f32 %v3005, 0.0
      %v3366 = vmax.f32 %v3008, 0.0
      %v3367 = vmax.f32 %v3013, 0.0
      %v3368 = vmax.f32 %v3016, 0.0
      %v3369 = vmax.f32 %v3021, 0.0
      %v3370 = vmax.f32 %v3024, 0.0
      %v3371 = vmax.f32 %v3029, 0.0
      %v3372 = vmax.f32 %v3032, 0.0
      %v3373 = vmax.f32 %v3037, 0.0
      %v3374 = vmax.f32 %v3040, 0.0
      %v3375 = vmax.f32 %v3045, 0.0
      %v3376 = vmax.f32 %v3048, 0.0
      %v3377 = vmax.f32 %v3053, 0.0
      %v3378 = vmax.f32 %v3056, 0.0
      %v3379 = vmax.f32 %v3061, 0.0
      %v3380 = vmax.f32 %v3064, 0.0
      %v3381 = vmax.f32 %v3069, 0.0
      %v3382 = vmax.f32 %v3072, 0.0
      %v3383 = vmax.f32 %v3077, 0.0
      %v3384 = vmax.f32 %v3080, 0.0
      %v3385 = vmax.f32 %v3085, 0.0
      %v3386 = vmax.f32 %v3088, 0.0
      %v3387 = vmax.f32 %v3093, 0.0
      %v3388 = vmax.f32 %v3096, 0.0
      %v3389 = vmax.f32 %v3101, 0.0
      %v3390 = vmax.f32 %v3104, 0.0
      %v3391 = vmax.f32 %v3109, 0.0
      %v3392 = vmax.f32 %v3112, 0.0
      %v3393 = vmax.f32 %v3117, 0.0
      %v3394 = vmax.f32 %v3120, 0.0
      %v3395 = vmax.f32 %v3125, 0.0
      %v3396 = vmax.f32 %v3128, 0.0
      %v3397 = vmax.f32 %v3133, 0.0
      %v3398 = vmax.f32 %v3136, 0.0
      %v3399 = vmax.f32 %v3141, 0.0
      %v3400 = vmax.f32 %v3144, 0.0
      %v3401 = vmax.f32 %v3149, 0.0
      %v3402 = vmax.f32 %v3152, 0.0
      %v3403 = vmax.f32 %v3157, 0.0
      %v3404 = vmax.f32 %v3160, 0.0
      %v3405 = vmax.f32 %v3165, 0.0
      %v3406 = vmax.f32 %v3168, 0.0
      %v3407 = vmax.f32 %v3173, 0.0
      %v3408 = vmax.f32 %v3176, 0.0
      %v3409 = vmax.f32 %v3181, 0.0
      %v3410 = vmax.f32 %v3184, 0.0
      %v3411 = vmax.f32 %v3189, 0.0
      %v3412 = vmax.f32 %v3192, 0.0
      %v3413 = vmax.f32 %v3197, 0.0
      %v3414 = vmax.f32 %v3200, 0.0
      %v3415 = vmax.f32 %v3205, 0.0
      %v3416 = vmax.f32 %v3208, 0.0
      %v3417 = vmax.f32 %v3213, 0.0
      %v3418 = vmax.f32 %v3216, 0.0
      %v3419 = vmax.f32 %v3221, 0.0
      %v3420 = vmax.f32 %v3224, 0.0
      %v3421 = vmax.f32 %v3229, 0.0
      %v3422 = vmax.f32 %v3232, 0.0
      %v3423 = vmax.f32 %v3237, 0.0
      %v3424 = vmax.f32 %v3240, 0.0
      %v3425 = vmax.f32 %v3245, 0.0
      %v3426 = vmax.f32 %v3248, 0.0
      %v3427 = vmax.f32 %v3253, 0.0
      %v3428 = vmax.f32 %v3256, 0.0
      %v3429 = vmax.f32 %v3261, 0.0
      %v3430 = vmax.f32 %v3264, 0.0
      %v3431 = vmax.f32 %v3269, 0.0
      %v3432 = vmax.f32 %v3272, 0.0
      %v3433 = vmax.f32 %v3277, 0.0
      %v3434 = vmax.f32 %v3280, 0.0
      %v3435 = vmax.f32 %v3285, 0.0
      %v3436 = vmax.f32 %v3288, 0.0
      %v3437 = vmax.f32 %v3293, 0.0
      %v3438 = vmax.f32 %v3296, 0.0
      %v3439 = vmax.f32 %v3301, 0.0
      %v3440 = vmax.f32 %v3304, 0.0
      %v3441 = vmax.f32 %v3309, 0.0
      %v3442 = vmax.f32 %v3312, 0.0
      %v3443 = vpack.c.bf16 %v3316, %v3315
      %v3444 = vpack.c.bf16 %v3318, %v3317
      %v3445 = vpack.c.bf16 %v3320, %v3319
      %v3446 = vpack.c.bf16 %v3322, %v3321
      %v3447 = vpack.c.bf16 %v3324, %v3323
      %v3448 = vpack.c.bf16 %v3326, %v3325
      %v3449 = vpack.c.bf16 %v3328, %v3327
      %v3450 = vpack.c.bf16 %v3330, %v3329
      %v3451 = vpack.c.bf16 %v3332, %v3331
      %v3452 = vpack.c.bf16 %v3334, %v3333
      %v3453 = vpack.c.bf16 %v3336, %v3335
      %v3454 = vpack.c.bf16 %v3338, %v3337
      %v3455 = vpack.c.bf16 %v3340, %v3339
      %v3456 = vpack.c.bf16 %v3342, %v3341
      %v3457 = vpack.c.bf16 %v3344, %v3343
      %v3458 = vpack.c.bf16 %v3346, %v3345
      %v3459 = vpack.c.bf16 %v3348, %v3347
      %v3460 = vpack.c.bf16 %v3350, %v3349
      %v3461 = vpack.c.bf16 %v3352, %v3351
      %v3462 = vpack.c.bf16 %v3354, %v3353
      %v3463 = vpack.c.bf16 %v3356, %v3355
      %v3464 = vpack.c.bf16 %v3358, %v3357
      %v3465 = vpack.c.bf16 %v3360, %v3359
      %v3466 = vpack.c.bf16 %v3362, %v3361
      %v3467 = vpack.c.bf16 %v3364, %v3363
      %v3468 = vpack.c.bf16 %v3366, %v3365
      %v3469 = vpack.c.bf16 %v3368, %v3367
      %v3470 = vpack.c.bf16 %v3370, %v3369
      %v3471 = vpack.c.bf16 %v3372, %v3371
      %v3472 = vpack.c.bf16 %v3374, %v3373
      %v3473 = vpack.c.bf16 %v3376, %v3375
      %v3474 = vpack.c.bf16 %v3378, %v3377
      %v3475 = vpack.c.bf16 %v3380, %v3379
      %v3476 = vpack.c.bf16 %v3382, %v3381
      %v3477 = vpack.c.bf16 %v3384, %v3383
      %v3478 = vpack.c.bf16 %v3386, %v3385
      %v3479 = vpack.c.bf16 %v3388, %v3387
      %v3480 = vpack.c.bf16 %v3390, %v3389
      %v3481 = vpack.c.bf16 %v3392, %v3391
      %v3482 = vpack.c.bf16 %v3394, %v3393
      %v3483 = vpack.c.bf16 %v3396, %v3395
      %v3484 = vpack.c.bf16 %v3398, %v3397
      %v3485 = vpack.c.bf16 %v3400, %v3399
      %v3486 = vpack.c.bf16 %v3402, %v3401
      %v3487 = vpack.c.bf16 %v3404, %v3403
      %v3488 = vpack.c.bf16 %v3406, %v3405
      %v3489 = vpack.c.bf16 %v3408, %v3407
      %v3490 = vpack.c.bf16 %v3410, %v3409
      %v3491 = vpack.c.bf16 %v3412, %v3411
      %v3492 = vpack.c.bf16 %v3414, %v3413
      %v3493 = vpack.c.bf16 %v3416, %v3415
      %v3494 = vpack.c.bf16 %v3418, %v3417
      %v3495 = vpack.c.bf16 %v3420, %v3419
      %v3496 = vpack.c.bf16 %v3422, %v3421
      %v3497 = vpack.c.bf16 %v3424, %v3423
      %v3498 = vpack.c.bf16 %v3426, %v3425
      %v3499 = vpack.c.bf16 %v3428, %v3427
      %v3500 = vpack.c.bf16 %v3430, %v3429
      %v3501 = vpack.c.bf16 %v3432, %v3431
      %v3502 = vpack.c.bf16 %v3434, %v3433
      %v3503 = vpack.c.bf16 %v3436, %v3435
      %v3504 = vpack.c.bf16 %v3438, %v3437
      %v3505 = vpack.c.bf16 %v3440, %v3439
      %v3506 = vpack.c.bf16 %v3442, %v3441
      %v3507 = vld [vmem:[%s3] sm:$0xf]
      %v3508 = vld [vmem:[%s3 + $0x4] sm:$0xf]
      %v3509 = vld [vmem:[%s3 + $0x8] sm:$0xf]
      %v3510 = vld [vmem:[%s3 + $0xc] sm:$0xf]
      %v3511 = vld [vmem:[%s3 + $0x10] sm:$0xf]
      %v3512 = vld [vmem:[%s3 + $0x14] sm:$0xf]
      %v3513 = vld [vmem:[%s3 + $0x18] sm:$0xf]
      %v3514 = vld [vmem:[%s3 + $0x1c] sm:$0xf]
      %v3515 = vld [vmem:[%s3 + $0x20] sm:$0xf]
      %v3516 = vld [vmem:[%s3 + $0x24] sm:$0xf]
      %v3517 = vld [vmem:[%s3 + $0x28] sm:$0xf]
      %v3518 = vld [vmem:[%s3 + $0x2c] sm:$0xf]
      %v3519 = vld [vmem:[%s3 + $0x30] sm:$0xf]
      %v3520 = vld [vmem:[%s3 + $0x34] sm:$0xf]
      %v3521 = vld [vmem:[%s3 + $0x38] sm:$0xf]
      %v3522 = vld [vmem:[%s3 + $0x3c] sm:$0xf]
      %v3523 = vld [vmem:[%s4] sm:$0x1]
      %v3525 = vlaneseq
      %v3526 = vshrl.u32 %v3525, 7
      %v3527 = vsub.s32 0, %v3526
      %v3528 = vrot.slane %v3523, %v3527
      %v3546 = vunpack.c.l.b16 %v3507
      %v3547 = vunpack.c.l.b16 %v3508
      %v3548 = vunpack.c.l.b16 %v3509
      %v3549 = vunpack.c.l.b16 %v3510
      %v3550 = vunpack.c.l.b16 %v3511
      %v3551 = vunpack.c.l.b16 %v3512
      %v3552 = vunpack.c.l.b16 %v3513
      %v3553 = vunpack.c.l.b16 %v3514
      %v3554 = vunpack.c.l.b16 %v3515
      %v3555 = vunpack.c.l.b16 %v3516
      %v3556 = vunpack.c.l.b16 %v3517
      %v3557 = vunpack.c.l.b16 %v3518
      %v3558 = vunpack.c.l.b16 %v3519
      %v3559 = vunpack.c.l.b16 %v3520
      %v3560 = vunpack.c.l.b16 %v3521
      %v3561 = vunpack.c.l.b16 %v3522
      %v3562 = vpack.c.b16 %v3547, %v3546
      %v3563 = vpack.c.b16 %v3549, %v3548
      %v3564 = vpack.c.b16 %v3551, %v3550
      %v3565 = vpack.c.b16 %v3553, %v3552
      %v3566 = vpack.c.b16 %v3555, %v3554
      %v3567 = vpack.c.b16 %v3557, %v3556
      %v3568 = vpack.c.b16 %v3559, %v3558
      %v3569 = vpack.c.b16 %v3561, %v3560
      %3578 = vmatprep.subr.bf16.mxu0 0
      %3579 = vmatpush1.bf16.msra.mxu0 %v3569
      %3580 = vmatprep.subr.bf16.mxu0 0
      %3581 = vmatpush1.bf16.msra.mxu0 %v3568
      %3582 = vmatprep.subr.bf16.mxu0 0
      %3583 = vmatpush1.bf16.msra.mxu0 %v3567
      %3584 = vmatprep.subr.bf16.mxu0 0
      %3585 = vmatpush1.bf16.msra.mxu0 %v3566
      %3586 = vmatprep.subr.bf16.mxu0 0
      %3587 = vmatpush1.bf16.msra.mxu0 %v3565
      %3588 = vmatprep.subr.bf16.mxu0 0
      %3589 = vmatpush1.bf16.msra.mxu0 %v3564
      %3590 = vmatprep.subr.bf16.mxu0 0
      %3591 = vmatpush1.bf16.msra.mxu0 %v3563
      %3592 = vmatprep.subr.bf16.mxu0 0
      %3593 = vmatpush1.bf16.msra.mxu0 %v3562
      %3594 = vmatprep.subr.bf16.mxu0 0
      %3595 = vmatpush2.bf16.msra.mxu0 0
      %3596 = vmatprep.subr.bf16.mxu0 0
      %3597 = vmatpush2.bf16.msra.mxu0 0
      %3598 = vmatprep.subr.bf16.mxu0 0
      %3599 = vmatpush2.bf16.msra.mxu0 0
      %3600 = vmatprep.subr.bf16.mxu0 0
      %3601 = vmatpush2.bf16.msra.mxu0 0
      %3602 = vmatprep.subr.bf16.mxu0 0
      %3603 = vmatpush2.bf16.msra.mxu0 0
      %3604 = vmatprep.subr.bf16.mxu0 0
      %3605 = vmatpush2.bf16.msra.mxu0 0
      %3606 = vmatprep.subr.bf16.mxu0 0
      %3607 = vmatpush2.bf16.msra.mxu0 0
      %3608 = vmatprep.subr.bf16.mxu0 0
      %3609 = vmatpush2.bf16.msra.mxu0 0
      %3610 = vmatprep.mubr.bf16.mxu0 0
      %3611 = vmatmul.mubr.bf16.gmra.mxu0 %v3443
      %v3612 = vpop.f32.mrf.mxu0
      %v3613 = vadd.f32 %v3528, %v3612
      %v3614 = vpop.f32.mrf.mxu0
      %v3615 = vpop.f32.mrf.mxu0
      %v3616 = vadd.f32 %v3528, %v3615
      %v3617 = vpop.f32.mrf.mxu0
      %3618 = vmatprep.mubr.bf16.mxu0 0
      %3619 = vmatmul.mubr.bf16.gmra.mxu0 %v3444
      %v3620 = vpop.f32.mrf.mxu0
      %v3621 = vadd.f32 %v3528, %v3620
      %v3622 = vpop.f32.mrf.mxu0
      %v3623 = vpop.f32.mrf.mxu0
      %v3624 = vadd.f32 %v3528, %v3623
      %v3625 = vpop.f32.mrf.mxu0
      %3626 = vmatprep.mubr.bf16.mxu0 0
      %3627 = vmatmul.mubr.bf16.gmra.mxu0 %v3445
      %v3628 = vpop.f32.mrf.mxu0
      %v3629 = vadd.f32 %v3528, %v3628
      %v3630 = vpop.f32.mrf.mxu0
      %v3631 = vpop.f32.mrf.mxu0
      %v3632 = vadd.f32 %v3528, %v3631
      %v3633 = vpop.f32.mrf.mxu0
      %3634 = vmatprep.mubr.bf16.mxu0 0
      %3635 = vmatmul.mubr.bf16.gmra.mxu0 %v3446
      %v3636 = vpop.f32.mrf.mxu0
      %v3637 = vadd.f32 %v3528, %v3636
      %v3638 = vpop.f32.mrf.mxu0
      %v3639 = vpop.f32.mrf.mxu0
      %v3640 = vadd.f32 %v3528, %v3639
      %v3641 = vpop.f32.mrf.mxu0
      %3642 = vmatprep.mubr.bf16.mxu0 0
      %3643 = vmatmul.mubr.bf16.gmra.mxu0 %v3447
      %v3644 = vpop.f32.mrf.mxu0
      %v3645 = vadd.f32 %v3528, %v3644
      %v3646 = vpop.f32.mrf.mxu0
      %v3647 = vpop.f32.mrf.mxu0
      %v3648 = vadd.f32 %v3528, %v3647
      %v3649 = vpop.f32.mrf.mxu0
      %3650 = vmatprep.mubr.bf16.mxu0 0
      %3651 = vmatmul.mubr.bf16.gmra.mxu0 %v3448
      %v3652 = vpop.f32.mrf.mxu0
      %v3653 = vadd.f32 %v3528, %v3652
      %v3654 = vpop.f32.mrf.mxu0
      %v3655 = vpop.f32.mrf.mxu0
      %v3656 = vadd.f32 %v3528, %v3655
      %v3657 = vpop.f32.mrf.mxu0
      %3658 = vmatprep.mubr.bf16.mxu0 0
      %3659 = vmatmul.mubr.bf16.gmra.mxu0 %v3449
      %v3660 = vpop.f32.mrf.mxu0
      %v3661 = vadd.f32 %v3528, %v3660
      %v3662 = vpop.f32.mrf.mxu0
      %v3663 = vpop.f32.mrf.mxu0
      %v3664 = vadd.f32 %v3528, %v3663
      %v3665 = vpop.f32.mrf.mxu0
      %3666 = vmatprep.mubr.bf16.mxu0 0
      %3667 = vmatmul.mubr.bf16.gmra.mxu0 %v3450
      %v3668 = vpop.f32.mrf.mxu0
      %v3669 = vadd.f32 %v3528, %v3668
      %v3670 = vpop.f32.mrf.mxu0
      %v3671 = vpop.f32.mrf.mxu0
      %v3672 = vadd.f32 %v3528, %v3671
      %v3673 = vpop.f32.mrf.mxu0
      %3674 = vmatprep.mubr.bf16.mxu0 0
      %3675 = vmatmul.mubr.bf16.gmra.mxu0 %v3451
      %v3676 = vpop.f32.mrf.mxu0
      %v3677 = vadd.f32 %v3528, %v3676
      %v3678 = vpop.f32.mrf.mxu0
      %v3679 = vpop.f32.mrf.mxu0
      %v3680 = vadd.f32 %v3528, %v3679
      %v3681 = vpop.f32.mrf.mxu0
      %3682 = vmatprep.mubr.bf16.mxu0 0
      %3683 = vmatmul.mubr.bf16.gmra.mxu0 %v3452
      %v3684 = vpop.f32.mrf.mxu0
      %v3685 = vadd.f32 %v3528, %v3684
      %v3686 = vpop.f32.mrf.mxu0
      %v3687 = vpop.f32.mrf.mxu0
      %v3688 = vadd.f32 %v3528, %v3687
      %v3689 = vpop.f32.mrf.mxu0
      %3690 = vmatprep.mubr.bf16.mxu0 0
      %3691 = vmatmul.mubr.bf16.gmra.mxu0 %v3453
      %v3692 = vpop.f32.mrf.mxu0
      %v3693 = vadd.f32 %v3528, %v3692
      %v3694 = vpop.f32.mrf.mxu0
      %v3695 = vpop.f32.mrf.mxu0
      %v3696 = vadd.f32 %v3528, %v3695
      %v3697 = vpop.f32.mrf.mxu0
      %3698 = vmatprep.mubr.bf16.mxu0 0
      %3699 = vmatmul.mubr.bf16.gmra.mxu0 %v3454
      %v3700 = vpop.f32.mrf.mxu0
      %v3701 = vadd.f32 %v3528, %v3700
      %v3702 = vpop.f32.mrf.mxu0
      %v3703 = vpop.f32.mrf.mxu0
      %v3704 = vadd.f32 %v3528, %v3703
      %v3705 = vpop.f32.mrf.mxu0
      %3706 = vmatprep.mubr.bf16.mxu0 0
      %3707 = vmatmul.mubr.bf16.gmra.mxu0 %v3455
      %v3708 = vpop.f32.mrf.mxu0
      %v3709 = vadd.f32 %v3528, %v3708
      %v3710 = vpop.f32.mrf.mxu0
      %v3711 = vpop.f32.mrf.mxu0
      %v3712 = vadd.f32 %v3528, %v3711
      %v3713 = vpop.f32.mrf.mxu0
      %3714 = vmatprep.mubr.bf16.mxu0 0
      %3715 = vmatmul.mubr.bf16.gmra.mxu0 %v3456
      %v3716 = vpop.f32.mrf.mxu0
      %v3717 = vadd.f32 %v3528, %v3716
      %v3718 = vpop.f32.mrf.mxu0
      %v3719 = vpop.f32.mrf.mxu0
      %v3720 = vadd.f32 %v3528, %v3719
      %v3721 = vpop.f32.mrf.mxu0
      %3722 = vmatprep.mubr.bf16.mxu0 0
      %3723 = vmatmul.mubr.bf16.gmra.mxu0 %v3457
      %v3724 = vpop.f32.mrf.mxu0
      %v3725 = vadd.f32 %v3528, %v3724
      %v3726 = vpop.f32.mrf.mxu0
      %v3727 = vpop.f32.mrf.mxu0
      %v3728 = vadd.f32 %v3528, %v3727
      %v3729 = vpop.f32.mrf.mxu0
      %3730 = vmatprep.mubr.bf16.mxu0 0
      %3731 = vmatmul.mubr.bf16.gmra.mxu0 %v3458
      %v3732 = vpop.f32.mrf.mxu0
      %v3733 = vadd.f32 %v3528, %v3732
      %v3734 = vpop.f32.mrf.mxu0
      %v3735 = vpop.f32.mrf.mxu0
      %v3736 = vadd.f32 %v3528, %v3735
      %v3737 = vpop.f32.mrf.mxu0
      %3738 = vmatprep.mubr.bf16.mxu0 0
      %3739 = vmatmul.mubr.bf16.gmra.mxu0 %v3459
      %v3740 = vpop.f32.mrf.mxu0
      %v3741 = vadd.f32 %v3528, %v3740
      %v3742 = vpop.f32.mrf.mxu0
      %v3743 = vpop.f32.mrf.mxu0
      %v3744 = vadd.f32 %v3528, %v3743
      %v3745 = vpop.f32.mrf.mxu0
      %3746 = vmatprep.mubr.bf16.mxu0 0
      %3747 = vmatmul.mubr.bf16.gmra.mxu0 %v3460
      %v3748 = vpop.f32.mrf.mxu0
      %v3749 = vadd.f32 %v3528, %v3748
      %v3750 = vpop.f32.mrf.mxu0
      %v3751 = vpop.f32.mrf.mxu0
      %v3752 = vadd.f32 %v3528, %v3751
      %v3753 = vpop.f32.mrf.mxu0
      %3754 = vmatprep.mubr.bf16.mxu0 0
      %3755 = vmatmul.mubr.bf16.gmra.mxu0 %v3461
      %v3756 = vpop.f32.mrf.mxu0
      %v3757 = vadd.f32 %v3528, %v3756
      %v3758 = vpop.f32.mrf.mxu0
      %v3759 = vpop.f32.mrf.mxu0
      %v3760 = vadd.f32 %v3528, %v3759
      %v3761 = vpop.f32.mrf.mxu0
      %3762 = vmatprep.mubr.bf16.mxu0 0
      %3763 = vmatmul.mubr.bf16.gmra.mxu0 %v3462
      %v3764 = vpop.f32.mrf.mxu0
      %v3765 = vadd.f32 %v3528, %v3764
      %v3766 = vpop.f32.mrf.mxu0
      %v3767 = vpop.f32.mrf.mxu0
      %v3768 = vadd.f32 %v3528, %v3767
      %v3769 = vpop.f32.mrf.mxu0
      %3770 = vmatprep.mubr.bf16.mxu0 0
      %3771 = vmatmul.mubr.bf16.gmra.mxu0 %v3463
      %v3772 = vpop.f32.mrf.mxu0
      %v3773 = vadd.f32 %v3528, %v3772
      %v3774 = vpop.f32.mrf.mxu0
      %v3775 = vpop.f32.mrf.mxu0
      %v3776 = vadd.f32 %v3528, %v3775
      %v3777 = vpop.f32.mrf.mxu0
      %3778 = vmatprep.mubr.bf16.mxu0 0
      %3779 = vmatmul.mubr.bf16.gmra.mxu0 %v3464
      %v3780 = vpop.f32.mrf.mxu0
      %v3781 = vadd.f32 %v3528, %v3780
      %v3782 = vpop.f32.mrf.mxu0
      %v3783 = vpop.f32.mrf.mxu0
      %v3784 = vadd.f32 %v3528, %v3783
      %v3785 = vpop.f32.mrf.mxu0
      %3786 = vmatprep.mubr.bf16.mxu0 0
      %3787 = vmatmul.mubr.bf16.gmra.mxu0 %v3465
      %v3788 = vpop.f32.mrf.mxu0
      %v3789 = vadd.f32 %v3528, %v3788
      %v3790 = vpop.f32.mrf.mxu0
      %v3791 = vpop.f32.mrf.mxu0
      %v3792 = vadd.f32 %v3528, %v3791
      %v3793 = vpop.f32.mrf.mxu0
      %3794 = vmatprep.mubr.bf16.mxu0 0
      %3795 = vmatmul.mubr.bf16.gmra.mxu0 %v3466
      %v3796 = vpop.f32.mrf.mxu0
      %v3797 = vadd.f32 %v3528, %v3796
      %v3798 = vpop.f32.mrf.mxu0
      %v3799 = vpop.f32.mrf.mxu0
      %v3800 = vadd.f32 %v3528, %v3799
      %v3801 = vpop.f32.mrf.mxu0
      %3802 = vmatprep.mubr.bf16.mxu0 0
      %3803 = vmatmul.mubr.bf16.gmra.mxu0 %v3467
      %v3804 = vpop.f32.mrf.mxu0
      %v3805 = vadd.f32 %v3528, %v3804
      %v3806 = vpop.f32.mrf.mxu0
      %v3807 = vpop.f32.mrf.mxu0
      %v3808 = vadd.f32 %v3528, %v3807
      %v3809 = vpop.f32.mrf.mxu0
      %3810 = vmatprep.mubr.bf16.mxu0 0
      %3811 = vmatmul.mubr.bf16.gmra.mxu0 %v3468
      %v3812 = vpop.f32.mrf.mxu0
      %v3813 = vadd.f32 %v3528, %v3812
      %v3814 = vpop.f32.mrf.mxu0
      %v3815 = vpop.f32.mrf.mxu0
      %v3816 = vadd.f32 %v3528, %v3815
      %v3817 = vpop.f32.mrf.mxu0
      %3818 = vmatprep.mubr.bf16.mxu0 0
      %3819 = vmatmul.mubr.bf16.gmra.mxu0 %v3469
      %v3820 = vpop.f32.mrf.mxu0
      %v3821 = vadd.f32 %v3528, %v3820
      %v3822 = vpop.f32.mrf.mxu0
      %v3823 = vpop.f32.mrf.mxu0
      %v3824 = vadd.f32 %v3528, %v3823
      %v3825 = vpop.f32.mrf.mxu0
      %3826 = vmatprep.mubr.bf16.mxu0 0
      %3827 = vmatmul.mubr.bf16.gmra.mxu0 %v3470
      %v3828 = vpop.f32.mrf.mxu0
      %v3829 = vadd.f32 %v3528, %v3828
      %v3830 = vpop.f32.mrf.mxu0
      %v3831 = vpop.f32.mrf.mxu0
      %v3832 = vadd.f32 %v3528, %v3831
      %v3833 = vpop.f32.mrf.mxu0
      %3834 = vmatprep.mubr.bf16.mxu0 0
      %3835 = vmatmul.mubr.bf16.gmra.mxu0 %v3471
      %v3836 = vpop.f32.mrf.mxu0
      %v3837 = vadd.f32 %v3528, %v3836
      %v3838 = vpop.f32.mrf.mxu0
      %v3839 = vpop.f32.mrf.mxu0
      %v3840 = vadd.f32 %v3528, %v3839
      %v3841 = vpop.f32.mrf.mxu0
      %3842 = vmatprep.mubr.bf16.mxu0 0
      %3843 = vmatmul.mubr.bf16.gmra.mxu0 %v3472
      %v3844 = vpop.f32.mrf.mxu0
      %v3845 = vadd.f32 %v3528, %v3844
      %v3846 = vpop.f32.mrf.mxu0
      %v3847 = vpop.f32.mrf.mxu0
      %v3848 = vadd.f32 %v3528, %v3847
      %v3849 = vpop.f32.mrf.mxu0
      %3850 = vmatprep.mubr.bf16.mxu0 0
      %3851 = vmatmul.mubr.bf16.gmra.mxu0 %v3473
      %v3852 = vpop.f32.mrf.mxu0
      %v3853 = vadd.f32 %v3528, %v3852
      %v3854 = vpop.f32.mrf.mxu0
      %v3855 = vpop.f32.mrf.mxu0
      %v3856 = vadd.f32 %v3528, %v3855
      %v3857 = vpop.f32.mrf.mxu0
      %3858 = vmatprep.mubr.bf16.mxu0 0
      %3859 = vmatmul.mubr.bf16.gmra.mxu0 %v3474
      %v3860 = vpop.f32.mrf.mxu0
      %v3861 = vadd.f32 %v3528, %v3860
      %v3862 = vpop.f32.mrf.mxu0
      %v3863 = vpop.f32.mrf.mxu0
      %v3864 = vadd.f32 %v3528, %v3863
      %v3865 = vpop.f32.mrf.mxu0
      %3866 = vmatprep.mubr.bf16.mxu0 0
      %3867 = vmatmul.mubr.bf16.gmra.mxu0 %v3475
      %v3868 = vpop.f32.mrf.mxu0
      %v3869 = vadd.f32 %v3528, %v3868
      %v3870 = vpop.f32.mrf.mxu0
      %v3871 = vpop.f32.mrf.mxu0
      %v3872 = vadd.f32 %v3528, %v3871
      %v3873 = vpop.f32.mrf.mxu0
      %3874 = vmatprep.mubr.bf16.mxu0 0
      %3875 = vmatmul.mubr.bf16.gmra.mxu0 %v3476
      %v3876 = vpop.f32.mrf.mxu0
      %v3877 = vadd.f32 %v3528, %v3876
      %v3878 = vpop.f32.mrf.mxu0
      %v3879 = vpop.f32.mrf.mxu0
      %v3880 = vadd.f32 %v3528, %v3879
      %v3881 = vpop.f32.mrf.mxu0
      %3882 = vmatprep.mubr.bf16.mxu0 0
      %3883 = vmatmul.mubr.bf16.gmra.mxu0 %v3477
      %v3884 = vpop.f32.mrf.mxu0
      %v3885 = vadd.f32 %v3528, %v3884
      %v3886 = vpop.f32.mrf.mxu0
      %v3887 = vpop.f32.mrf.mxu0
      %v3888 = vadd.f32 %v3528, %v3887
      %v3889 = vpop.f32.mrf.mxu0
      %3890 = vmatprep.mubr.bf16.mxu0 0
      %3891 = vmatmul.mubr.bf16.gmra.mxu0 %v3478
      %v3892 = vpop.f32.mrf.mxu0
      %v3893 = vadd.f32 %v3528, %v3892
      %v3894 = vpop.f32.mrf.mxu0
      %v3895 = vpop.f32.mrf.mxu0
      %v3896 = vadd.f32 %v3528, %v3895
      %v3897 = vpop.f32.mrf.mxu0
      %3898 = vmatprep.mubr.bf16.mxu0 0
      %3899 = vmatmul.mubr.bf16.gmra.mxu0 %v3479
      %v3900 = vpop.f32.mrf.mxu0
      %v3901 = vadd.f32 %v3528, %v3900
      %v3902 = vpop.f32.mrf.mxu0
      %v3903 = vpop.f32.mrf.mxu0
      %v3904 = vadd.f32 %v3528, %v3903
      %v3905 = vpop.f32.mrf.mxu0
      %3906 = vmatprep.mubr.bf16.mxu0 0
      %3907 = vmatmul.mubr.bf16.gmra.mxu0 %v3480
      %v3908 = vpop.f32.mrf.mxu0
      %v3909 = vadd.f32 %v3528, %v3908
      %v3910 = vpop.f32.mrf.mxu0
      %v3911 = vpop.f32.mrf.mxu0
      %v3912 = vadd.f32 %v3528, %v3911
      %v3913 = vpop.f32.mrf.mxu0
      %3914 = vmatprep.mubr.bf16.mxu0 0
      %3915 = vmatmul.mubr.bf16.gmra.mxu0 %v3481
      %v3916 = vpop.f32.mrf.mxu0
      %v3917 = vadd.f32 %v3528, %v3916
      %v3918 = vpop.f32.mrf.mxu0
      %v3919 = vpop.f32.mrf.mxu0
      %v3920 = vadd.f32 %v3528, %v3919
      %v3921 = vpop.f32.mrf.mxu0
      %3922 = vmatprep.mubr.bf16.mxu0 0
      %3923 = vmatmul.mubr.bf16.gmra.mxu0 %v3482
      %v3924 = vpop.f32.mrf.mxu0
      %v3925 = vadd.f32 %v3528, %v3924
      %v3926 = vpop.f32.mrf.mxu0
      %v3927 = vpop.f32.mrf.mxu0
      %v3928 = vadd.f32 %v3528, %v3927
      %v3929 = vpop.f32.mrf.mxu0
      %3930 = vmatprep.mubr.bf16.mxu0 0
      %3931 = vmatmul.mubr.bf16.gmra.mxu0 %v3483
      %v3932 = vpop.f32.mrf.mxu0
      %v3933 = vadd.f32 %v3528, %v3932
      %v3934 = vpop.f32.mrf.mxu0
      %v3935 = vpop.f32.mrf.mxu0
      %v3936 = vadd.f32 %v3528, %v3935
      %v3937 = vpop.f32.mrf.mxu0
      %3938 = vmatprep.mubr.bf16.mxu0 0
      %3939 = vmatmul.mubr.bf16.gmra.mxu0 %v3484
      %v3940 = vpop.f32.mrf.mxu0
      %v3941 = vadd.f32 %v3528, %v3940
      %v3942 = vpop.f32.mrf.mxu0
      %v3943 = vpop.f32.mrf.mxu0
      %v3944 = vadd.f32 %v3528, %v3943
      %v3945 = vpop.f32.mrf.mxu0
      %3946 = vmatprep.mubr.bf16.mxu0 0
      %3947 = vmatmul.mubr.bf16.gmra.mxu0 %v3485
      %v3948 = vpop.f32.mrf.mxu0
      %v3949 = vadd.f32 %v3528, %v3948
      %v3950 = vpop.f32.mrf.mxu0
      %v3951 = vpop.f32.mrf.mxu0
      %v3952 = vadd.f32 %v3528, %v3951
      %v3953 = vpop.f32.mrf.mxu0
      %3954 = vmatprep.mubr.bf16.mxu0 0
      %3955 = vmatmul.mubr.bf16.gmra.mxu0 %v3486
      %v3956 = vpop.f32.mrf.mxu0
      %v3957 = vadd.f32 %v3528, %v3956
      %v3958 = vpop.f32.mrf.mxu0
      %v3959 = vpop.f32.mrf.mxu0
      %v3960 = vadd.f32 %v3528, %v3959
      %v3961 = vpop.f32.mrf.mxu0
      %3962 = vmatprep.mubr.bf16.mxu0 0
      %3963 = vmatmul.mubr.bf16.gmra.mxu0 %v3487
      %v3964 = vpop.f32.mrf.mxu0
      %v3965 = vadd.f32 %v3528, %v3964
      %v3966 = vpop.f32.mrf.mxu0
      %v3967 = vpop.f32.mrf.mxu0
      %v3968 = vadd.f32 %v3528, %v3967
      %v3969 = vpop.f32.mrf.mxu0
      %3970 = vmatprep.mubr.bf16.mxu0 0
      %3971 = vmatmul.mubr.bf16.gmra.mxu0 %v3488
      %v3972 = vpop.f32.mrf.mxu0
      %v3973 = vadd.f32 %v3528, %v3972
      %v3974 = vpop.f32.mrf.mxu0
      %v3975 = vpop.f32.mrf.mxu0
      %v3976 = vadd.f32 %v3528, %v3975
      %v3977 = vpop.f32.mrf.mxu0
      %3978 = vmatprep.mubr.bf16.mxu0 0
      %3979 = vmatmul.mubr.bf16.gmra.mxu0 %v3489
      %v3980 = vpop.f32.mrf.mxu0
      %v3981 = vadd.f32 %v3528, %v3980
      %v3982 = vpop.f32.mrf.mxu0
      %v3983 = vpop.f32.mrf.mxu0
      %v3984 = vadd.f32 %v3528, %v3983
      %v3985 = vpop.f32.mrf.mxu0
      %3986 = vmatprep.mubr.bf16.mxu0 0
      %3987 = vmatmul.mubr.bf16.gmra.mxu0 %v3490
      %v3988 = vpop.f32.mrf.mxu0
      %v3989 = vadd.f32 %v3528, %v3988
      %v3990 = vpop.f32.mrf.mxu0
      %v3991 = vpop.f32.mrf.mxu0
      %v3992 = vadd.f32 %v3528, %v3991
      %v3993 = vpop.f32.mrf.mxu0
      %3994 = vmatprep.mubr.bf16.mxu0 0
      %3995 = vmatmul.mubr.bf16.gmra.mxu0 %v3491
      %v3996 = vpop.f32.mrf.mxu0
      %v3997 = vadd.f32 %v3528, %v3996
      %v3998 = vpop.f32.mrf.mxu0
      %v3999 = vpop.f32.mrf.mxu0
      %v4000 = vadd.f32 %v3528, %v3999
      %v4001 = vpop.f32.mrf.mxu0
      %4002 = vmatprep.mubr.bf16.mxu0 0
      %4003 = vmatmul.mubr.bf16.gmra.mxu0 %v3492
      %v4004 = vpop.f32.mrf.mxu0
      %v4005 = vadd.f32 %v3528, %v4004
      %v4006 = vpop.f32.mrf.mxu0
      %v4007 = vpop.f32.mrf.mxu0
      %v4008 = vadd.f32 %v3528, %v4007
      %v4009 = vpop.f32.mrf.mxu0
      %4010 = vmatprep.mubr.bf16.mxu0 0
      %4011 = vmatmul.mubr.bf16.gmra.mxu0 %v3493
      %v4012 = vpop.f32.mrf.mxu0
      %v4013 = vadd.f32 %v3528, %v4012
      %v4014 = vpop.f32.mrf.mxu0
      %v4015 = vpop.f32.mrf.mxu0
      %v4016 = vadd.f32 %v3528, %v4015
      %v4017 = vpop.f32.mrf.mxu0
      %4018 = vmatprep.mubr.bf16.mxu0 0
      %4019 = vmatmul.mubr.bf16.gmra.mxu0 %v3494
      %v4020 = vpop.f32.mrf.mxu0
      %v4021 = vadd.f32 %v3528, %v4020
      %v4022 = vpop.f32.mrf.mxu0
      %v4023 = vpop.f32.mrf.mxu0
      %v4024 = vadd.f32 %v3528, %v4023
      %v4025 = vpop.f32.mrf.mxu0
      %4026 = vmatprep.mubr.bf16.mxu0 0
      %4027 = vmatmul.mubr.bf16.gmra.mxu0 %v3495
      %v4028 = vpop.f32.mrf.mxu0
      %v4029 = vadd.f32 %v3528, %v4028
      %v4030 = vpop.f32.mrf.mxu0
      %v4031 = vpop.f32.mrf.mxu0
      %v4032 = vadd.f32 %v3528, %v4031
      %v4033 = vpop.f32.mrf.mxu0
      %4034 = vmatprep.mubr.bf16.mxu0 0
      %4035 = vmatmul.mubr.bf16.gmra.mxu0 %v3496
      %v4036 = vpop.f32.mrf.mxu0
      %v4037 = vadd.f32 %v3528, %v4036
      %v4038 = vpop.f32.mrf.mxu0
      %v4039 = vpop.f32.mrf.mxu0
      %v4040 = vadd.f32 %v3528, %v4039
      %v4041 = vpop.f32.mrf.mxu0
      %4042 = vmatprep.mubr.bf16.mxu0 0
      %4043 = vmatmul.mubr.bf16.gmra.mxu0 %v3497
      %v4044 = vpop.f32.mrf.mxu0
      %v4045 = vadd.f32 %v3528, %v4044
      %v4046 = vpop.f32.mrf.mxu0
      %v4047 = vpop.f32.mrf.mxu0
      %v4048 = vadd.f32 %v3528, %v4047
      %v4049 = vpop.f32.mrf.mxu0
      %4050 = vmatprep.mubr.bf16.mxu0 0
      %4051 = vmatmul.mubr.bf16.gmra.mxu0 %v3498
      %v4052 = vpop.f32.mrf.mxu0
      %v4053 = vadd.f32 %v3528, %v4052
      %v4054 = vpop.f32.mrf.mxu0
      %v4055 = vpop.f32.mrf.mxu0
      %v4056 = vadd.f32 %v3528, %v4055
      %v4057 = vpop.f32.mrf.mxu0
      %4058 = vmatprep.mubr.bf16.mxu0 0
      %4059 = vmatmul.mubr.bf16.gmra.mxu0 %v3499
      %v4060 = vpop.f32.mrf.mxu0
      %v4061 = vadd.f32 %v3528, %v4060
      %v4062 = vpop.f32.mrf.mxu0
      %v4063 = vpop.f32.mrf.mxu0
      %v4064 = vadd.f32 %v3528, %v4063
      %v4065 = vpop.f32.mrf.mxu0
      %4066 = vmatprep.mubr.bf16.mxu0 0
      %4067 = vmatmul.mubr.bf16.gmra.mxu0 %v3500
      %v4068 = vpop.f32.mrf.mxu0
      %v4069 = vadd.f32 %v3528, %v4068
      %v4070 = vpop.f32.mrf.mxu0
      %v4071 = vpop.f32.mrf.mxu0
      %v4072 = vadd.f32 %v3528, %v4071
      %v4073 = vpop.f32.mrf.mxu0
      %4074 = vmatprep.mubr.bf16.mxu0 0
      %4075 = vmatmul.mubr.bf16.gmra.mxu0 %v3501
      %v4076 = vpop.f32.mrf.mxu0
      %v4077 = vadd.f32 %v3528, %v4076
      %v4078 = vpop.f32.mrf.mxu0
      %v4079 = vpop.f32.mrf.mxu0
      %v4080 = vadd.f32 %v3528, %v4079
      %v4081 = vpop.f32.mrf.mxu0
      %4082 = vmatprep.mubr.bf16.mxu0 0
      %4083 = vmatmul.mubr.bf16.gmra.mxu0 %v3502
      %v4084 = vpop.f32.mrf.mxu0
      %v4085 = vadd.f32 %v3528, %v4084
      %v4086 = vpop.f32.mrf.mxu0
      %v4087 = vpop.f32.mrf.mxu0
      %v4088 = vadd.f32 %v3528, %v4087
      %v4089 = vpop.f32.mrf.mxu0
      %4090 = vmatprep.mubr.bf16.mxu0 0
      %4091 = vmatmul.mubr.bf16.gmra.mxu0 %v3503
      %v4092 = vpop.f32.mrf.mxu0
      %v4093 = vadd.f32 %v3528, %v4092
      %v4094 = vpop.f32.mrf.mxu0
      %v4095 = vpop.f32.mrf.mxu0
      %v4096 = vadd.f32 %v3528, %v4095
      %v4097 = vpop.f32.mrf.mxu0
      %4098 = vmatprep.mubr.bf16.mxu0 0
      %4099 = vmatmul.mubr.bf16.gmra.mxu0 %v3504
      %v4100 = vpop.f32.mrf.mxu0
      %v4101 = vadd.f32 %v3528, %v4100
      %v4102 = vpop.f32.mrf.mxu0
      %v4103 = vpop.f32.mrf.mxu0
      %v4104 = vadd.f32 %v3528, %v4103
      %v4105 = vpop.f32.mrf.mxu0
      %4106 = vmatprep.mubr.bf16.mxu0 0
      %4107 = vmatmul.mubr.bf16.gmra.mxu0 %v3505
      %v4108 = vpop.f32.mrf.mxu0
      %v4109 = vadd.f32 %v3528, %v4108
      %v4110 = vpop.f32.mrf.mxu0
      %v4111 = vpop.f32.mrf.mxu0
      %v4112 = vadd.f32 %v3528, %v4111
      %v4113 = vpop.f32.mrf.mxu0
      %4114 = vmatprep.mubr.bf16.mxu0 0
      %4115 = vmatmul.mubr.bf16.gmra.mxu0 %v3506
      %v4116 = vpop.f32.mrf.mxu0
      %v4117 = vadd.f32 %v3528, %v4116
      %v4118 = vpop.f32.mrf.mxu0
      %v4119 = vpop.f32.mrf.mxu0
      %v4120 = vadd.f32 %v3528, %v4119
      %v4121 = vpop.f32.mrf.mxu0
      %4122 = vdwg.mxu0
      %v4123 = vld [vmem:[%s5] sm:$0xf]
      %v4124 = vld [vmem:[%s5 + $0x4] sm:$0xf]
      %v4125 = vld [vmem:[%s6] sm:$0x1]
      %v4127 = vlaneseq
      %v4128 = vshrl.u32 %v4127, 7
      %v4129 = vsub.s32 0, %v4128
      %v4130 = vrot.slane %v4125, %v4129
      %v4134 = vunpack.c.l.b16 %v4123
      %v4135 = vunpack.c.l.b16 %v4124
      %v4136 = vpack.c.b16 %v4135, %v4134
      %4138 = vmatprep.subr.bf16.mxu0 0
      %4139 = vmatpush1.bf16.msra.mxu0 0
      %4140 = vmatprep.subr.bf16.mxu0 0
      %4141 = vmatpush1.bf16.msra.mxu0 0
      %4142 = vmatprep.subr.bf16.mxu0 0
      %4143 = vmatpush1.bf16.msra.mxu0 0
      %4144 = vmatprep.subr.bf16.mxu0 0
      %4145 = vmatpush1.bf16.msra.mxu0 0
      %4146 = vmatprep.subr.bf16.mxu0 0
      %4147 = vmatpush1.bf16.msra.mxu0 0
      %4148 = vmatprep.subr.bf16.mxu0 0
      %4149 = vmatpush1.bf16.msra.mxu0 0
      %4150 = vmatprep.subr.bf16.mxu0 0
      %4151 = vmatpush1.bf16.msra.mxu0 0
      %4152 = vmatprep.subr.bf16.mxu0 0
      %4153 = vmatpush1.bf16.msra.mxu0 %v4136
      %4154 = vmatprep.subr.bf16.mxu0 0
      %4155 = vmatpush2.bf16.msra.mxu0 0
      %4156 = vmatprep.subr.bf16.mxu0 0
      %4157 = vmatpush2.bf16.msra.mxu0 0
      %4158 = vmatprep.subr.bf16.mxu0 0
      %4159 = vmatpush2.bf16.msra.mxu0 0
      %4160 = vmatprep.subr.bf16.mxu0 0
      %4161 = vmatpush2.bf16.msra.mxu0 0
      %4162 = vmatprep.subr.bf16.mxu0 0
      %4163 = vmatpush2.bf16.msra.mxu0 0
      %4164 = vmatprep.subr.bf16.mxu0 0
      %4165 = vmatpush2.bf16.msra.mxu0 0
      %4166 = vmatprep.subr.bf16.mxu0 0
      %4167 = vmatpush2.bf16.msra.mxu0 0
      %4168 = vmatprep.subr.bf16.mxu0 0
      %4169 = vmatpush2.bf16.msra.mxu0 0
      %4170 = vmatprep.mubr.bf16.mxu0 0
      %4171 = vmatmul.mubr.bf16.gmra.mxu0 %v2579
      %v4172 = vpop.f32.mrf.mxu0
      %v4173 = vadd.f32 %v4130, %v4172
      %v4174 = vpop.f32.mrf.mxu0
      %v4175 = vpop.f32.mrf.mxu0
      %v4176 = vadd.f32 %v4130, %v4175
      %v4177 = vpop.f32.mrf.mxu0
      %4178 = vmatprep.mubr.bf16.mxu0 0
      %4179 = vmatmul.mubr.bf16.gmra.mxu0 %v2582
      %v4180 = vpop.f32.mrf.mxu0
      %v4181 = vadd.f32 %v4130, %v4180
      %v4182 = vpop.f32.mrf.mxu0
      %v4183 = vpop.f32.mrf.mxu0
      %v4184 = vadd.f32 %v4130, %v4183
      %v4185 = vpop.f32.mrf.mxu0
      %4186 = vmatprep.mubr.bf16.mxu0 0
      %4187 = vmatmul.mubr.bf16.gmra.mxu0 %v2585
      %v4188 = vpop.f32.mrf.mxu0
      %v4189 = vadd.f32 %v4130, %v4188
      %v4190 = vpop.f32.mrf.mxu0
      %v4191 = vpop.f32.mrf.mxu0
      %v4192 = vadd.f32 %v4130, %v4191
      %v4193 = vpop.f32.mrf.mxu0
      %4194 = vmatprep.mubr.bf16.mxu0 0
      %4195 = vmatmul.mubr.bf16.gmra.mxu0 %v2588
      %v4196 = vpop.f32.mrf.mxu0
      %v4197 = vadd.f32 %v4130, %v4196
      %v4198 = vpop.f32.mrf.mxu0
      %v4199 = vpop.f32.mrf.mxu0
      %v4200 = vadd.f32 %v4130, %v4199
      %v4201 = vpop.f32.mrf.mxu0
      %4202 = vmatprep.mubr.bf16.mxu0 0
      %4203 = vmatmul.mubr.bf16.gmra.mxu0 %v2591
      %v4204 = vpop.f32.mrf.mxu0
      %v4205 = vadd.f32 %v4130, %v4204
      %v4206 = vpop.f32.mrf.mxu0
      %v4207 = vpop.f32.mrf.mxu0
      %v4208 = vadd.f32 %v4130, %v4207
      %v4209 = vpop.f32.mrf.mxu0
      %4210 = vmatprep.mubr.bf16.mxu0 0
      %4211 = vmatmul.mubr.bf16.gmra.mxu0 %v2594
      %v4212 = vpop.f32.mrf.mxu0
      %v4213 = vadd.f32 %v4130, %v4212
      %v4214 = vpop.f32.mrf.mxu0
      %v4215 = vpop.f32.mrf.mxu0
      %v4216 = vadd.f32 %v4130, %v4215
      %v4217 = vpop.f32.mrf.mxu0
      %4218 = vmatprep.mubr.bf16.mxu0 0
      %4219 = vmatmul.mubr.bf16.gmra.mxu0 %v2597
      %v4220 = vpop.f32.mrf.mxu0
      %v4221 = vadd.f32 %v4130, %v4220
      %v4222 = vpop.f32.mrf.mxu0
      %v4223 = vpop.f32.mrf.mxu0
      %v4224 = vadd.f32 %v4130, %v4223
      %v4225 = vpop.f32.mrf.mxu0
      %4226 = vmatprep.mubr.bf16.mxu0 0
      %4227 = vmatmul.mubr.bf16.gmra.mxu0 %v2600
      %v4228 = vpop.f32.mrf.mxu0
      %v4229 = vadd.f32 %v4130, %v4228
      %v4230 = vpop.f32.mrf.mxu0
      %v4231 = vpop.f32.mrf.mxu0
      %v4232 = vadd.f32 %v4130, %v4231
      %v4233 = vpop.f32.mrf.mxu0
      %4234 = vmatprep.mubr.bf16.mxu0 0
      %4235 = vmatmul.mubr.bf16.gmra.mxu0 %v2603
      %v4236 = vpop.f32.mrf.mxu0
      %v4237 = vadd.f32 %v4130, %v4236
      %v4238 = vpop.f32.mrf.mxu0
      %v4239 = vpop.f32.mrf.mxu0
      %v4240 = vadd.f32 %v4130, %v4239
      %v4241 = vpop.f32.mrf.mxu0
      %4242 = vmatprep.mubr.bf16.mxu0 0
      %4243 = vmatmul.mubr.bf16.gmra.mxu0 %v2606
      %v4244 = vpop.f32.mrf.mxu0
      %v4245 = vadd.f32 %v4130, %v4244
      %v4246 = vpop.f32.mrf.mxu0
      %v4247 = vpop.f32.mrf.mxu0
      %v4248 = vadd.f32 %v4130, %v4247
      %v4249 = vpop.f32.mrf.mxu0
      %4250 = vmatprep.mubr.bf16.mxu0 0
      %4251 = vmatmul.mubr.bf16.gmra.mxu0 %v2609
      %v4252 = vpop.f32.mrf.mxu0
      %v4253 = vadd.f32 %v4130, %v4252
      %v4254 = vpop.f32.mrf.mxu0
      %v4255 = vpop.f32.mrf.mxu0
      %v4256 = vadd.f32 %v4130, %v4255
      %v4257 = vpop.f32.mrf.mxu0
      %4258 = vmatprep.mubr.bf16.mxu0 0
      %4259 = vmatmul.mubr.bf16.gmra.mxu0 %v2612
      %v4260 = vpop.f32.mrf.mxu0
      %v4261 = vadd.f32 %v4130, %v4260
      %v4262 = vpop.f32.mrf.mxu0
      %v4263 = vpop.f32.mrf.mxu0
      %v4264 = vadd.f32 %v4130, %v4263
      %v4265 = vpop.f32.mrf.mxu0
      %4266 = vmatprep.mubr.bf16.mxu0 0
      %4267 = vmatmul.mubr.bf16.gmra.mxu0 %v2615
      %v4268 = vpop.f32.mrf.mxu0
      %v4269 = vadd.f32 %v4130, %v4268
      %v4270 = vpop.f32.mrf.mxu0
      %v4271 = vpop.f32.mrf.mxu0
      %v4272 = vadd.f32 %v4130, %v4271
      %v4273 = vpop.f32.mrf.mxu0
      %4274 = vmatprep.mubr.bf16.mxu0 0
      %4275 = vmatmul.mubr.bf16.gmra.mxu0 %v2618
      %v4276 = vpop.f32.mrf.mxu0
      %v4277 = vadd.f32 %v4130, %v4276
      %v4278 = vpop.f32.mrf.mxu0
      %v4279 = vpop.f32.mrf.mxu0
      %v4280 = vadd.f32 %v4130, %v4279
      %v4281 = vpop.f32.mrf.mxu0
      %4282 = vmatprep.mubr.bf16.mxu0 0
      %4283 = vmatmul.mubr.bf16.gmra.mxu0 %v2621
      %v4284 = vpop.f32.mrf.mxu0
      %v4285 = vadd.f32 %v4130, %v4284
      %v4286 = vpop.f32.mrf.mxu0
      %v4287 = vpop.f32.mrf.mxu0
      %v4288 = vadd.f32 %v4130, %v4287
      %v4289 = vpop.f32.mrf.mxu0
      %4290 = vmatprep.mubr.bf16.mxu0 0
      %4291 = vmatmul.mubr.bf16.gmra.mxu0 %v2624
      %v4292 = vpop.f32.mrf.mxu0
      %v4293 = vadd.f32 %v4130, %v4292
      %v4294 = vpop.f32.mrf.mxu0
      %v4295 = vpop.f32.mrf.mxu0
      %v4296 = vadd.f32 %v4130, %v4295
      %v4297 = vpop.f32.mrf.mxu0
      %4298 = vmatprep.mubr.bf16.mxu0 0
      %4299 = vmatmul.mubr.bf16.gmra.mxu0 %v2627
      %v4300 = vpop.f32.mrf.mxu0
      %v4301 = vadd.f32 %v4130, %v4300
      %v4302 = vpop.f32.mrf.mxu0
      %v4303 = vpop.f32.mrf.mxu0
      %v4304 = vadd.f32 %v4130, %v4303
      %v4305 = vpop.f32.mrf.mxu0
      %4306 = vmatprep.mubr.bf16.mxu0 0
      %4307 = vmatmul.mubr.bf16.gmra.mxu0 %v2630
      %v4308 = vpop.f32.mrf.mxu0
      %v4309 = vadd.f32 %v4130, %v4308
      %v4310 = vpop.f32.mrf.mxu0
      %v4311 = vpop.f32.mrf.mxu0
      %v4312 = vadd.f32 %v4130, %v4311
      %v4313 = vpop.f32.mrf.mxu0
      %4314 = vmatprep.mubr.bf16.mxu0 0
      %4315 = vmatmul.mubr.bf16.gmra.mxu0 %v2633
      %v4316 = vpop.f32.mrf.mxu0
      %v4317 = vadd.f32 %v4130, %v4316
      %v4318 = vpop.f32.mrf.mxu0
      %v4319 = vpop.f32.mrf.mxu0
      %v4320 = vadd.f32 %v4130, %v4319
      %v4321 = vpop.f32.mrf.mxu0
      %4322 = vmatprep.mubr.bf16.mxu0 0
      %4323 = vmatmul.mubr.bf16.gmra.mxu0 %v2636
      %v4324 = vpop.f32.mrf.mxu0
      %v4325 = vadd.f32 %v4130, %v4324
      %v4326 = vpop.f32.mrf.mxu0
      %v4327 = vpop.f32.mrf.mxu0
      %v4328 = vadd.f32 %v4130, %v4327
      %v4329 = vpop.f32.mrf.mxu0
      %4330 = vmatprep.mubr.bf16.mxu0 0
      %4331 = vmatmul.mubr.bf16.gmra.mxu0 %v2639
      %v4332 = vpop.f32.mrf.mxu0
      %v4333 = vadd.f32 %v4130, %v4332
      %v4334 = vpop.f32.mrf.mxu0
      %v4335 = vpop.f32.mrf.mxu0
      %v4336 = vadd.f32 %v4130, %v4335
      %v4337 = vpop.f32.mrf.mxu0
      %4338 = vmatprep.mubr.bf16.mxu0 0
      %4339 = vmatmul.mubr.bf16.gmra.mxu0 %v2642
      %v4340 = vpop.f32.mrf.mxu0
      %v4341 = vadd.f32 %v4130, %v4340
      %v4342 = vpop.f32.mrf.mxu0
      %v4343 = vpop.f32.mrf.mxu0
      %v4344 = vadd.f32 %v4130, %v4343
      %v4345 = vpop.f32.mrf.mxu0
      %4346 = vmatprep.mubr.bf16.mxu0 0
      %4347 = vmatmul.mubr.bf16.gmra.mxu0 %v2645
      %v4348 = vpop.f32.mrf.mxu0
      %v4349 = vadd.f32 %v4130, %v4348
      %v4350 = vpop.f32.mrf.mxu0
      %v4351 = vpop.f32.mrf.mxu0
      %v4352 = vadd.f32 %v4130, %v4351
      %v4353 = vpop.f32.mrf.mxu0
      %4354 = vmatprep.mubr.bf16.mxu0 0
      %4355 = vmatmul.mubr.bf16.gmra.mxu0 %v2648
      %v4356 = vpop.f32.mrf.mxu0
      %v4357 = vadd.f32 %v4130, %v4356
      %v4358 = vpop.f32.mrf.mxu0
      %v4359 = vpop.f32.mrf.mxu0
      %v4360 = vadd.f32 %v4130, %v4359
      %v4361 = vpop.f32.mrf.mxu0
      %4362 = vmatprep.mubr.bf16.mxu0 0
      %4363 = vmatmul.mubr.bf16.gmra.mxu0 %v2651
      %v4364 = vpop.f32.mrf.mxu0
      %v4365 = vadd.f32 %v4130, %v4364
      %v4366 = vpop.f32.mrf.mxu0
      %v4367 = vpop.f32.mrf.mxu0
      %v4368 = vadd.f32 %v4130, %v4367
      %v4369 = vpop.f32.mrf.mxu0
      %4370 = vmatprep.mubr.bf16.mxu0 0
      %4371 = vmatmul.mubr.bf16.gmra.mxu0 %v2654
      %v4372 = vpop.f32.mrf.mxu0
      %v4373 = vadd.f32 %v4130, %v4372
      %v4374 = vpop.f32.mrf.mxu0
      %v4375 = vpop.f32.mrf.mxu0
      %v4376 = vadd.f32 %v4130, %v4375
      %v4377 = vpop.f32.mrf.mxu0
      %4378 = vmatprep.mubr.bf16.mxu0 0
      %4379 = vmatmul.mubr.bf16.gmra.mxu0 %v2657
      %v4380 = vpop.f32.mrf.mxu0
      %v4381 = vadd.f32 %v4130, %v4380
      %v4382 = vpop.f32.mrf.mxu0
      %v4383 = vpop.f32.mrf.mxu0
      %v4384 = vadd.f32 %v4130, %v4383
      %v4385 = vpop.f32.mrf.mxu0
      %4386 = vmatprep.mubr.bf16.mxu0 0
      %4387 = vmatmul.mubr.bf16.gmra.mxu0 %v2660
      %v4388 = vpop.f32.mrf.mxu0
      %v4389 = vadd.f32 %v4130, %v4388
      %v4390 = vpop.f32.mrf.mxu0
      %v4391 = vpop.f32.mrf.mxu0
      %v4392 = vadd.f32 %v4130, %v4391
      %v4393 = vpop.f32.mrf.mxu0
      %4394 = vmatprep.mubr.bf16.mxu0 0
      %4395 = vmatmul.mubr.bf16.gmra.mxu0 %v2663
      %v4396 = vpop.f32.mrf.mxu0
      %v4397 = vadd.f32 %v4130, %v4396
      %v4398 = vpop.f32.mrf.mxu0
      %v4399 = vpop.f32.mrf.mxu0
      %v4400 = vadd.f32 %v4130, %v4399
      %v4401 = vpop.f32.mrf.mxu0
      %4402 = vmatprep.mubr.bf16.mxu0 0
      %4403 = vmatmul.mubr.bf16.gmra.mxu0 %v2666
      %v4404 = vpop.f32.mrf.mxu0
      %v4405 = vadd.f32 %v4130, %v4404
      %v4406 = vpop.f32.mrf.mxu0
      %v4407 = vpop.f32.mrf.mxu0
      %v4408 = vadd.f32 %v4130, %v4407
      %v4409 = vpop.f32.mrf.mxu0
      %4410 = vmatprep.mubr.bf16.mxu0 0
      %4411 = vmatmul.mubr.bf16.gmra.mxu0 %v2669
      %v4412 = vpop.f32.mrf.mxu0
      %v4413 = vadd.f32 %v4130, %v4412
      %v4414 = vpop.f32.mrf.mxu0
      %v4415 = vpop.f32.mrf.mxu0
      %v4416 = vadd.f32 %v4130, %v4415
      %v4417 = vpop.f32.mrf.mxu0
      %4418 = vmatprep.mubr.bf16.mxu0 0
      %4419 = vmatmul.mubr.bf16.gmra.mxu0 %v2672
      %v4420 = vpop.f32.mrf.mxu0
      %v4421 = vadd.f32 %v4130, %v4420
      %v4422 = vpop.f32.mrf.mxu0
      %v4423 = vpop.f32.mrf.mxu0
      %v4424 = vadd.f32 %v4130, %v4423
      %v4425 = vpop.f32.mrf.mxu0
      %4426 = vmatprep.mubr.bf16.mxu0 0
      %4427 = vmatmul.mubr.bf16.gmra.mxu0 %v2675
      %v4428 = vpop.f32.mrf.mxu0
      %v4429 = vadd.f32 %v4130, %v4428
      %v4430 = vpop.f32.mrf.mxu0
      %v4431 = vpop.f32.mrf.mxu0
      %v4432 = vadd.f32 %v4130, %v4431
      %v4433 = vpop.f32.mrf.mxu0
      %4434 = vmatprep.mubr.bf16.mxu0 0
      %4435 = vmatmul.mubr.bf16.gmra.mxu0 %v2678
      %v4436 = vpop.f32.mrf.mxu0
      %v4437 = vadd.f32 %v4130, %v4436
      %v4438 = vpop.f32.mrf.mxu0
      %v4439 = vpop.f32.mrf.mxu0
      %v4440 = vadd.f32 %v4130, %v4439
      %v4441 = vpop.f32.mrf.mxu0
      %4442 = vmatprep.mubr.bf16.mxu0 0
      %4443 = vmatmul.mubr.bf16.gmra.mxu0 %v2681
      %v4444 = vpop.f32.mrf.mxu0
      %v4445 = vadd.f32 %v4130, %v4444
      %v4446 = vpop.f32.mrf.mxu0
      %v4447 = vpop.f32.mrf.mxu0
      %v4448 = vadd.f32 %v4130, %v4447
      %v4449 = vpop.f32.mrf.mxu0
      %4450 = vmatprep.mubr.bf16.mxu0 0
      %4451 = vmatmul.mubr.bf16.gmra.mxu0 %v2684
      %v4452 = vpop.f32.mrf.mxu0
      %v4453 = vadd.f32 %v4130, %v4452
      %v4454 = vpop.f32.mrf.mxu0
      %v4455 = vpop.f32.mrf.mxu0
      %v4456 = vadd.f32 %v4130, %v4455
      %v4457 = vpop.f32.mrf.mxu0
      %4458 = vmatprep.mubr.bf16.mxu0 0
      %4459 = vmatmul.mubr.bf16.gmra.mxu0 %v2687
      %v4460 = vpop.f32.mrf.mxu0
      %v4461 = vadd.f32 %v4130, %v4460
      %v4462 = vpop.f32.mrf.mxu0
      %v4463 = vpop.f32.mrf.mxu0
      %v4464 = vadd.f32 %v4130, %v4463
      %v4465 = vpop.f32.mrf.mxu0
      %4466 = vmatprep.mubr.bf16.mxu0 0
      %4467 = vmatmul.mubr.bf16.gmra.mxu0 %v2690
      %v4468 = vpop.f32.mrf.mxu0
      %v4469 = vadd.f32 %v4130, %v4468
      %v4470 = vpop.f32.mrf.mxu0
      %v4471 = vpop.f32.mrf.mxu0
      %v4472 = vadd.f32 %v4130, %v4471
      %v4473 = vpop.f32.mrf.mxu0
      %4474 = vmatprep.mubr.bf16.mxu0 0
      %4475 = vmatmul.mubr.bf16.gmra.mxu0 %v2693
      %v4476 = vpop.f32.mrf.mxu0
      %v4477 = vadd.f32 %v4130, %v4476
      %v4478 = vpop.f32.mrf.mxu0
      %v4479 = vpop.f32.mrf.mxu0
      %v4480 = vadd.f32 %v4130, %v4479
      %v4481 = vpop.f32.mrf.mxu0
      %4482 = vmatprep.mubr.bf16.mxu0 0
      %4483 = vmatmul.mubr.bf16.gmra.mxu0 %v2696
      %v4484 = vpop.f32.mrf.mxu0
      %v4485 = vadd.f32 %v4130, %v4484
      %v4486 = vpop.f32.mrf.mxu0
      %v4487 = vpop.f32.mrf.mxu0
      %v4488 = vadd.f32 %v4130, %v4487
      %v4489 = vpop.f32.mrf.mxu0
      %4490 = vmatprep.mubr.bf16.mxu0 0
      %4491 = vmatmul.mubr.bf16.gmra.mxu0 %v2699
      %v4492 = vpop.f32.mrf.mxu0
      %v4493 = vadd.f32 %v4130, %v4492
      %v4494 = vpop.f32.mrf.mxu0
      %v4495 = vpop.f32.mrf.mxu0
      %v4496 = vadd.f32 %v4130, %v4495
      %v4497 = vpop.f32.mrf.mxu0
      %4498 = vmatprep.mubr.bf16.mxu0 0
      %4499 = vmatmul.mubr.bf16.gmra.mxu0 %v2702
      %v4500 = vpop.f32.mrf.mxu0
      %v4501 = vadd.f32 %v4130, %v4500
      %v4502 = vpop.f32.mrf.mxu0
      %v4503 = vpop.f32.mrf.mxu0
      %v4504 = vadd.f32 %v4130, %v4503
      %v4505 = vpop.f32.mrf.mxu0
      %4506 = vmatprep.mubr.bf16.mxu0 0
      %4507 = vmatmul.mubr.bf16.gmra.mxu0 %v2705
      %v4508 = vpop.f32.mrf.mxu0
      %v4509 = vadd.f32 %v4130, %v4508
      %v4510 = vpop.f32.mrf.mxu0
      %v4511 = vpop.f32.mrf.mxu0
      %v4512 = vadd.f32 %v4130, %v4511
      %v4513 = vpop.f32.mrf.mxu0
      %4514 = vmatprep.mubr.bf16.mxu0 0
      %4515 = vmatmul.mubr.bf16.gmra.mxu0 %v2708
      %v4516 = vpop.f32.mrf.mxu0
      %v4517 = vadd.f32 %v4130, %v4516
      %v4518 = vpop.f32.mrf.mxu0
      %v4519 = vpop.f32.mrf.mxu0
      %v4520 = vadd.f32 %v4130, %v4519
      %v4521 = vpop.f32.mrf.mxu0
      %4522 = vmatprep.mubr.bf16.mxu0 0
      %4523 = vmatmul.mubr.bf16.gmra.mxu0 %v2711
      %v4524 = vpop.f32.mrf.mxu0
      %v4525 = vadd.f32 %v4130, %v4524
      %v4526 = vpop.f32.mrf.mxu0
      %v4527 = vpop.f32.mrf.mxu0
      %v4528 = vadd.f32 %v4130, %v4527
      %v4529 = vpop.f32.mrf.mxu0
      %4530 = vmatprep.mubr.bf16.mxu0 0
      %4531 = vmatmul.mubr.bf16.gmra.mxu0 %v2714
      %v4532 = vpop.f32.mrf.mxu0
      %v4533 = vadd.f32 %v4130, %v4532
      %v4534 = vpop.f32.mrf.mxu0
      %v4535 = vpop.f32.mrf.mxu0
      %v4536 = vadd.f32 %v4130, %v4535
      %v4537 = vpop.f32.mrf.mxu0
      %4538 = vmatprep.mubr.bf16.mxu0 0
      %4539 = vmatmul.mubr.bf16.gmra.mxu0 %v2717
      %v4540 = vpop.f32.mrf.mxu0
      %v4541 = vadd.f32 %v4130, %v4540
      %v4542 = vpop.f32.mrf.mxu0
      %v4543 = vpop.f32.mrf.mxu0
      %v4544 = vadd.f32 %v4130, %v4543
      %v4545 = vpop.f32.mrf.mxu0
      %4546 = vmatprep.mubr.bf16.mxu0 0
      %4547 = vmatmul.mubr.bf16.gmra.mxu0 %v2720
      %v4548 = vpop.f32.mrf.mxu0
      %v4549 = vadd.f32 %v4130, %v4548
      %v4550 = vpop.f32.mrf.mxu0
      %v4551 = vpop.f32.mrf.mxu0
      %v4552 = vadd.f32 %v4130, %v4551
      %v4553 = vpop.f32.mrf.mxu0
      %4554 = vmatprep.mubr.bf16.mxu0 0
      %4555 = vmatmul.mubr.bf16.gmra.mxu0 %v2723
      %v4556 = vpop.f32.mrf.mxu0
      %v4557 = vadd.f32 %v4130, %v4556
      %v4558 = vpop.f32.mrf.mxu0
      %v4559 = vpop.f32.mrf.mxu0
      %v4560 = vadd.f32 %v4130, %v4559
      %v4561 = vpop.f32.mrf.mxu0
      %4562 = vmatprep.mubr.bf16.mxu0 0
      %4563 = vmatmul.mubr.bf16.gmra.mxu0 %v2726
      %v4564 = vpop.f32.mrf.mxu0
      %v4565 = vadd.f32 %v4130, %v4564
      %v4566 = vpop.f32.mrf.mxu0
      %v4567 = vpop.f32.mrf.mxu0
      %v4568 = vadd.f32 %v4130, %v4567
      %v4569 = vpop.f32.mrf.mxu0
      %4570 = vmatprep.mubr.bf16.mxu0 0
      %4571 = vmatmul.mubr.bf16.gmra.mxu0 %v2729
      %v4572 = vpop.f32.mrf.mxu0
      %v4573 = vadd.f32 %v4130, %v4572
      %v4574 = vpop.f32.mrf.mxu0
      %v4575 = vpop.f32.mrf.mxu0
      %v4576 = vadd.f32 %v4130, %v4575
      %v4577 = vpop.f32.mrf.mxu0
      %4578 = vmatprep.mubr.bf16.mxu0 0
      %4579 = vmatmul.mubr.bf16.gmra.mxu0 %v2732
      %v4580 = vpop.f32.mrf.mxu0
      %v4581 = vadd.f32 %v4130, %v4580
      %v4582 = vpop.f32.mrf.mxu0
      %v4583 = vpop.f32.mrf.mxu0
      %v4584 = vadd.f32 %v4130, %v4583
      %v4585 = vpop.f32.mrf.mxu0
      %4586 = vmatprep.mubr.bf16.mxu0 0
      %4587 = vmatmul.mubr.bf16.gmra.mxu0 %v2735
      %v4588 = vpop.f32.mrf.mxu0
      %v4589 = vadd.f32 %v4130, %v4588
      %v4590 = vpop.f32.mrf.mxu0
      %v4591 = vpop.f32.mrf.mxu0
      %v4592 = vadd.f32 %v4130, %v4591
      %v4593 = vpop.f32.mrf.mxu0
      %4594 = vmatprep.mubr.bf16.mxu0 0
      %4595 = vmatmul.mubr.bf16.gmra.mxu0 %v2738
      %v4596 = vpop.f32.mrf.mxu0
      %v4597 = vadd.f32 %v4130, %v4596
      %v4598 = vpop.f32.mrf.mxu0
      %v4599 = vpop.f32.mrf.mxu0
      %v4600 = vadd.f32 %v4130, %v4599
      %v4601 = vpop.f32.mrf.mxu0
      %4602 = vmatprep.mubr.bf16.mxu0 0
      %4603 = vmatmul.mubr.bf16.gmra.mxu0 %v2741
      %v4604 = vpop.f32.mrf.mxu0
      %v4605 = vadd.f32 %v4130, %v4604
      %v4606 = vpop.f32.mrf.mxu0
      %v4607 = vpop.f32.mrf.mxu0
      %v4608 = vadd.f32 %v4130, %v4607
      %v4609 = vpop.f32.mrf.mxu0
      %4610 = vmatprep.mubr.bf16.mxu0 0
      %4611 = vmatmul.mubr.bf16.gmra.mxu0 %v2744
      %v4612 = vpop.f32.mrf.mxu0
      %v4613 = vadd.f32 %v4130, %v4612
      %v4614 = vpop.f32.mrf.mxu0
      %v4615 = vpop.f32.mrf.mxu0
      %v4616 = vadd.f32 %v4130, %v4615
      %v4617 = vpop.f32.mrf.mxu0
      %4618 = vmatprep.mubr.bf16.mxu0 0
      %4619 = vmatmul.mubr.bf16.gmra.mxu0 %v2747
      %v4620 = vpop.f32.mrf.mxu0
      %v4621 = vadd.f32 %v4130, %v4620
      %v4622 = vpop.f32.mrf.mxu0
      %v4623 = vpop.f32.mrf.mxu0
      %v4624 = vadd.f32 %v4130, %v4623
      %v4625 = vpop.f32.mrf.mxu0
      %4626 = vmatprep.mubr.bf16.mxu0 0
      %4627 = vmatmul.mubr.bf16.gmra.mxu0 %v2750
      %v4628 = vpop.f32.mrf.mxu0
      %v4629 = vadd.f32 %v4130, %v4628
      %v4630 = vpop.f32.mrf.mxu0
      %v4631 = vpop.f32.mrf.mxu0
      %v4632 = vadd.f32 %v4130, %v4631
      %v4633 = vpop.f32.mrf.mxu0
      %4634 = vmatprep.mubr.bf16.mxu0 0
      %4635 = vmatmul.mubr.bf16.gmra.mxu0 %v2753
      %v4636 = vpop.f32.mrf.mxu0
      %v4637 = vadd.f32 %v4130, %v4636
      %v4638 = vpop.f32.mrf.mxu0
      %v4639 = vpop.f32.mrf.mxu0
      %v4640 = vadd.f32 %v4130, %v4639
      %v4641 = vpop.f32.mrf.mxu0
      %4642 = vmatprep.mubr.bf16.mxu0 0
      %4643 = vmatmul.mubr.bf16.gmra.mxu0 %v2756
      %v4644 = vpop.f32.mrf.mxu0
      %v4645 = vadd.f32 %v4130, %v4644
      %v4646 = vpop.f32.mrf.mxu0
      %v4647 = vpop.f32.mrf.mxu0
      %v4648 = vadd.f32 %v4130, %v4647
      %v4649 = vpop.f32.mrf.mxu0
      %4650 = vmatprep.mubr.bf16.mxu0 0
      %4651 = vmatmul.mubr.bf16.gmra.mxu0 %v2759
      %v4652 = vpop.f32.mrf.mxu0
      %v4653 = vadd.f32 %v4130, %v4652
      %v4654 = vpop.f32.mrf.mxu0
      %v4655 = vpop.f32.mrf.mxu0
      %v4656 = vadd.f32 %v4130, %v4655
      %v4657 = vpop.f32.mrf.mxu0
      %4658 = vmatprep.mubr.bf16.mxu0 0
      %4659 = vmatmul.mubr.bf16.gmra.mxu0 %v2762
      %v4660 = vpop.f32.mrf.mxu0
      %v4661 = vadd.f32 %v4130, %v4660
      %v4662 = vpop.f32.mrf.mxu0
      %v4663 = vpop.f32.mrf.mxu0
      %v4664 = vadd.f32 %v4130, %v4663
      %v4665 = vpop.f32.mrf.mxu0
      %4666 = vmatprep.mubr.bf16.mxu0 0
      %4667 = vmatmul.mubr.bf16.gmra.mxu0 %v2765
      %v4668 = vpop.f32.mrf.mxu0
      %v4669 = vadd.f32 %v4130, %v4668
      %v4670 = vpop.f32.mrf.mxu0
      %v4671 = vpop.f32.mrf.mxu0
      %v4672 = vadd.f32 %v4130, %v4671
      %v4673 = vpop.f32.mrf.mxu0
      %4674 = vmatprep.mubr.bf16.mxu0 0
      %4675 = vmatmul.mubr.bf16.gmra.mxu0 %v2768
      %v4676 = vpop.f32.mrf.mxu0
      %v4677 = vadd.f32 %v4130, %v4676
      %v4678 = vpop.f32.mrf.mxu0
      %v4679 = vpop.f32.mrf.mxu0
      %v4680 = vadd.f32 %v4130, %v4679
      %v4681 = vpop.f32.mrf.mxu0
      %4682 = vdwg.mxu0
      %v4683 = vmax.f32 %v4173, 0.0
      %v4684 = vmax.f32 %v4176, 0.0
      %v4685 = vmax.f32 %v4181, 0.0
      %v4686 = vmax.f32 %v4184, 0.0
      %v4687 = vmax.f32 %v4189, 0.0
      %v4688 = vmax.f32 %v4192, 0.0
      %v4689 = vmax.f32 %v4197, 0.0
      %v4690 = vmax.f32 %v4200, 0.0
      %v4691 = vmax.f32 %v4205, 0.0
      %v4692 = vmax.f32 %v4208, 0.0
      %v4693 = vmax.f32 %v4213, 0.0
      %v4694 = vmax.f32 %v4216, 0.0
      %v4695 = vmax.f32 %v4221, 0.0
      %v4696 = vmax.f32 %v4224, 0.0
      %v4697 = vmax.f32 %v4229, 0.0
      %v4698 = vmax.f32 %v4232, 0.0
      %v4699 = vmax.f32 %v4237, 0.0
      %v4700 = vmax.f32 %v4240, 0.0
      %v4701 = vmax.f32 %v4245, 0.0
      %v4702 = vmax.f32 %v4248, 0.0
      %v4703 = vmax.f32 %v4253, 0.0
      %v4704 = vmax.f32 %v4256, 0.0
      %v4705 = vmax.f32 %v4261, 0.0
      %v4706 = vmax.f32 %v4264, 0.0
      %v4707 = vmax.f32 %v4269, 0.0
      %v4708 = vmax.f32 %v4272, 0.0
      %v4709 = vmax.f32 %v4277, 0.0
      %v4710 = vmax.f32 %v4280, 0.0
      %v4711 = vmax.f32 %v4285, 0.0
      %v4712 = vmax.f32 %v4288, 0.0
      %v4713 = vmax.f32 %v4293, 0.0
      %v4714 = vmax.f32 %v4296, 0.0
      %v4715 = vmax.f32 %v4301, 0.0
      %v4716 = vmax.f32 %v4304, 0.0
      %v4717 = vmax.f32 %v4309, 0.0
      %v4718 = vmax.f32 %v4312, 0.0
      %v4719 = vmax.f32 %v4317, 0.0
      %v4720 = vmax.f32 %v4320, 0.0
      %v4721 = vmax.f32 %v4325, 0.0
      %v4722 = vmax.f32 %v4328, 0.0
      %v4723 = vmax.f32 %v4333, 0.0
      %v4724 = vmax.f32 %v4336, 0.0
      %v4725 = vmax.f32 %v4341, 0.0
      %v4726 = vmax.f32 %v4344, 0.0
      %v4727 = vmax.f32 %v4349, 0.0
      %v4728 = vmax.f32 %v4352, 0.0
      %v4729 = vmax.f32 %v4357, 0.0
      %v4730 = vmax.f32 %v4360, 0.0
      %v4731 = vmax.f32 %v4365, 0.0
      %v4732 = vmax.f32 %v4368, 0.0
      %v4733 = vmax.f32 %v4373, 0.0
      %v4734 = vmax.f32 %v4376, 0.0
      %v4735 = vmax.f32 %v4381, 0.0
      %v4736 = vmax.f32 %v4384, 0.0
      %v4737 = vmax.f32 %v4389, 0.0
      %v4738 = vmax.f32 %v4392, 0.0
      %v4739 = vmax.f32 %v4397, 0.0
      %v4740 = vmax.f32 %v4400, 0.0
      %v4741 = vmax.f32 %v4405, 0.0
      %v4742 = vmax.f32 %v4408, 0.0
      %v4743 = vmax.f32 %v4413, 0.0
      %v4744 = vmax.f32 %v4416, 0.0
      %v4745 = vmax.f32 %v4421, 0.0
      %v4746 = vmax.f32 %v4424, 0.0
      %v4747 = vmax.f32 %v4429, 0.0
      %v4748 = vmax.f32 %v4432, 0.0
      %v4749 = vmax.f32 %v4437, 0.0
      %v4750 = vmax.f32 %v4440, 0.0
      %v4751 = vmax.f32 %v4445, 0.0
      %v4752 = vmax.f32 %v4448, 0.0
      %v4753 = vmax.f32 %v4453, 0.0
      %v4754 = vmax.f32 %v4456, 0.0
      %v4755 = vmax.f32 %v4461, 0.0
      %v4756 = vmax.f32 %v4464, 0.0
      %v4757 = vmax.f32 %v4469, 0.0
      %v4758 = vmax.f32 %v4472, 0.0
      %v4759 = vmax.f32 %v4477, 0.0
      %v4760 = vmax.f32 %v4480, 0.0
      %v4761 = vmax.f32 %v4485, 0.0
      %v4762 = vmax.f32 %v4488, 0.0
      %v4763 = vmax.f32 %v4493, 0.0
      %v4764 = vmax.f32 %v4496, 0.0
      %v4765 = vmax.f32 %v4501, 0.0
      %v4766 = vmax.f32 %v4504, 0.0
      %v4767 = vmax.f32 %v4509, 0.0
      %v4768 = vmax.f32 %v4512, 0.0
      %v4769 = vmax.f32 %v4517, 0.0
      %v4770 = vmax.f32 %v4520, 0.0
      %v4771 = vmax.f32 %v4525, 0.0
      %v4772 = vmax.f32 %v4528, 0.0
      %v4773 = vmax.f32 %v4533, 0.0
      %v4774 = vmax.f32 %v4536, 0.0
      %v4775 = vmax.f32 %v4541, 0.0
      %v4776 = vmax.f32 %v4544, 0.0
      %v4777 = vmax.f32 %v4549, 0.0
      %v4778 = vmax.f32 %v4552, 0.0
      %v4779 = vmax.f32 %v4557, 0.0
      %v4780 = vmax.f32 %v4560, 0.0
      %v4781 = vmax.f32 %v4565, 0.0
      %v4782 = vmax.f32 %v4568, 0.0
      %v4783 = vmax.f32 %v4573, 0.0
      %v4784 = vmax.f32 %v4576, 0.0
      %v4785 = vmax.f32 %v4581, 0.0
      %v4786 = vmax.f32 %v4584, 0.0
      %v4787 = vmax.f32 %v4589, 0.0
      %v4788 = vmax.f32 %v4592, 0.0
      %v4789 = vmax.f32 %v4597, 0.0
      %v4790 = vmax.f32 %v4600, 0.0
      %v4791 = vmax.f32 %v4605, 0.0
      %v4792 = vmax.f32 %v4608, 0.0
      %v4793 = vmax.f32 %v4613, 0.0
      %v4794 = vmax.f32 %v4616, 0.0
      %v4795 = vmax.f32 %v4621, 0.0
      %v4796 = vmax.f32 %v4624, 0.0
      %v4797 = vmax.f32 %v4629, 0.0
      %v4798 = vmax.f32 %v4632, 0.0
      %v4799 = vmax.f32 %v4637, 0.0
      %v4800 = vmax.f32 %v4640, 0.0
      %v4801 = vmax.f32 %v4645, 0.0
      %v4802 = vmax.f32 %v4648, 0.0
      %v4803 = vmax.f32 %v4653, 0.0
      %v4804 = vmax.f32 %v4656, 0.0
      %v4805 = vmax.f32 %v4661, 0.0
      %v4806 = vmax.f32 %v4664, 0.0
      %v4807 = vmax.f32 %v4669, 0.0
      %v4808 = vmax.f32 %v4672, 0.0
      %v4809 = vmax.f32 %v4677, 0.0
      %v4810 = vmax.f32 %v4680, 0.0
      %v4811 = vpack.c.bf16 %v4684, %v4683
      %v4812 = vpack.c.bf16 %v4686, %v4685
      %v4813 = vpack.c.bf16 %v4688, %v4687
      %v4814 = vpack.c.bf16 %v4690, %v4689
      %v4815 = vpack.c.bf16 %v4692, %v4691
      %v4816 = vpack.c.bf16 %v4694, %v4693
      %v4817 = vpack.c.bf16 %v4696, %v4695
      %v4818 = vpack.c.bf16 %v4698, %v4697
      %v4819 = vpack.c.bf16 %v4700, %v4699
      %v4820 = vpack.c.bf16 %v4702, %v4701
      %v4821 = vpack.c.bf16 %v4704, %v4703
      %v4822 = vpack.c.bf16 %v4706, %v4705
      %v4823 = vpack.c.bf16 %v4708, %v4707
      %v4824 = vpack.c.bf16 %v4710, %v4709
      %v4825 = vpack.c.bf16 %v4712, %v4711
      %v4826 = vpack.c.bf16 %v4714, %v4713
      %v4827 = vpack.c.bf16 %v4716, %v4715
      %v4828 = vpack.c.bf16 %v4718, %v4717
      %v4829 = vpack.c.bf16 %v4720, %v4719
      %v4830 = vpack.c.bf16 %v4722, %v4721
      %v4831 = vpack.c.bf16 %v4724, %v4723
      %v4832 = vpack.c.bf16 %v4726, %v4725
      %v4833 = vpack.c.bf16 %v4728, %v4727
      %v4834 = vpack.c.bf16 %v4730, %v4729
      %v4835 = vpack.c.bf16 %v4732, %v4731
      %v4836 = vpack.c.bf16 %v4734, %v4733
      %v4837 = vpack.c.bf16 %v4736, %v4735
      %v4838 = vpack.c.bf16 %v4738, %v4737
      %v4839 = vpack.c.bf16 %v4740, %v4739
      %v4840 = vpack.c.bf16 %v4742, %v4741
      %v4841 = vpack.c.bf16 %v4744, %v4743
      %v4842 = vpack.c.bf16 %v4746, %v4745
      %v4843 = vpack.c.bf16 %v4748, %v4747
      %v4844 = vpack.c.bf16 %v4750, %v4749
      %v4845 = vpack.c.bf16 %v4752, %v4751
      %v4846 = vpack.c.bf16 %v4754, %v4753
      %v4847 = vpack.c.bf16 %v4756, %v4755
      %v4848 = vpack.c.bf16 %v4758, %v4757
      %v4849 = vpack.c.bf16 %v4760, %v4759
      %v4850 = vpack.c.bf16 %v4762, %v4761
      %v4851 = vpack.c.bf16 %v4764, %v4763
      %v4852 = vpack.c.bf16 %v4766, %v4765
      %v4853 = vpack.c.bf16 %v4768, %v4767
      %v4854 = vpack.c.bf16 %v4770, %v4769
      %v4855 = vpack.c.bf16 %v4772, %v4771
      %v4856 = vpack.c.bf16 %v4774, %v4773
      %v4857 = vpack.c.bf16 %v4776, %v4775
      %v4858 = vpack.c.bf16 %v4778, %v4777
      %v4859 = vpack.c.bf16 %v4780, %v4779
      %v4860 = vpack.c.bf16 %v4782, %v4781
      %v4861 = vpack.c.bf16 %v4784, %v4783
      %v4862 = vpack.c.bf16 %v4786, %v4785
      %v4863 = vpack.c.bf16 %v4788, %v4787
      %v4864 = vpack.c.bf16 %v4790, %v4789
      %v4865 = vpack.c.bf16 %v4792, %v4791
      %v4866 = vpack.c.bf16 %v4794, %v4793
      %v4867 = vpack.c.bf16 %v4796, %v4795
      %v4868 = vpack.c.bf16 %v4798, %v4797
      %v4869 = vpack.c.bf16 %v4800, %v4799
      %v4870 = vpack.c.bf16 %v4802, %v4801
      %v4871 = vpack.c.bf16 %v4804, %v4803
      %v4872 = vpack.c.bf16 %v4806, %v4805
      %v4873 = vpack.c.bf16 %v4808, %v4807
      %v4874 = vpack.c.bf16 %v4810, %v4809
      %v4875 = vld [vmem:[%s7] sm:$0xf]
      %v4876 = vld [vmem:[%s7 + $0x4] sm:$0xf]
      %v4877 = vld [vmem:[%s7 + $0x8] sm:$0xf]
      %v4878 = vld [vmem:[%s7 + $0xc] sm:$0xf]
      %v4879 = vld [vmem:[%s7 + $0x10] sm:$0xf]
      %v4880 = vld [vmem:[%s7 + $0x14] sm:$0xf]
      %v4881 = vld [vmem:[%s7 + $0x18] sm:$0xf]
      %v4882 = vld [vmem:[%s7 + $0x1c] sm:$0xf]
      %v4883 = vld [vmem:[%s7 + $0x20] sm:$0xf]
      %v4884 = vld [vmem:[%s7 + $0x24] sm:$0xf]
      %v4885 = vld [vmem:[%s7 + $0x28] sm:$0xf]
      %v4886 = vld [vmem:[%s7 + $0x2c] sm:$0xf]
      %v4887 = vld [vmem:[%s7 + $0x30] sm:$0xf]
      %v4888 = vld [vmem:[%s7 + $0x34] sm:$0xf]
      %v4889 = vld [vmem:[%s7 + $0x38] sm:$0xf]
      %v4890 = vld [vmem:[%s7 + $0x3c] sm:$0xf]
      %v4891 = vld [vmem:[%s8] sm:$0x1]
      %v4893 = vlaneseq
      %v4894 = vshrl.u32 %v4893, 7
      %v4895 = vsub.s32 0, %v4894
      %v4896 = vrot.slane %v4891, %v4895
      %v4914 = vunpack.c.l.b16 %v4875
      %v4915 = vunpack.c.l.b16 %v4876
      %v4916 = vunpack.c.l.b16 %v4877
      %v4917 = vunpack.c.l.b16 %v4878
      %v4918 = vunpack.c.l.b16 %v4879
      %v4919 = vunpack.c.l.b16 %v4880
      %v4920 = vunpack.c.l.b16 %v4881
      %v4921 = vunpack.c.l.b16 %v4882
      %v4922 = vunpack.c.l.b16 %v4883
      %v4923 = vunpack.c.l.b16 %v4884
      %v4924 = vunpack.c.l.b16 %v4885
      %v4925 = vunpack.c.l.b16 %v4886
      %v4926 = vunpack.c.l.b16 %v4887
      %v4927 = vunpack.c.l.b16 %v4888
      %v4928 = vunpack.c.l.b16 %v4889
      %v4929 = vunpack.c.l.b16 %v4890
      %v4930 = vpack.c.b16 %v4915, %v4914
      %v4931 = vpack.c.b16 %v4917, %v4916
      %v4932 = vpack.c.b16 %v4919, %v4918
      %v4933 = vpack.c.b16 %v4921, %v4920
      %v4934 = vpack.c.b16 %v4923, %v4922
      %v4935 = vpack.c.b16 %v4925, %v4924
      %v4936 = vpack.c.b16 %v4927, %v4926
      %v4937 = vpack.c.b16 %v4929, %v4928
      %4946 = vmatprep.subr.bf16.mxu0 0
      %4947 = vmatpush1.bf16.msra.mxu0 %v4937
      %4948 = vmatprep.subr.bf16.mxu0 0
      %4949 = vmatpush1.bf16.msra.mxu0 %v4936
      %4950 = vmatprep.subr.bf16.mxu0 0
      %4951 = vmatpush1.bf16.msra.mxu0 %v4935
      %4952 = vmatprep.subr.bf16.mxu0 0
      %4953 = vmatpush1.bf16.msra.mxu0 %v4934
      %4954 = vmatprep.subr.bf16.mxu0 0
      %4955 = vmatpush1.bf16.msra.mxu0 %v4933
      %4956 = vmatprep.subr.bf16.mxu0 0
      %4957 = vmatpush1.bf16.msra.mxu0 %v4932
      %4958 = vmatprep.subr.bf16.mxu0 0
      %4959 = vmatpush1.bf16.msra.mxu0 %v4931
      %4960 = vmatprep.subr.bf16.mxu0 0
      %4961 = vmatpush1.bf16.msra.mxu0 %v4930
      %4962 = vmatprep.subr.bf16.mxu0 0
      %4963 = vmatpush2.bf16.msra.mxu0 0
      %4964 = vmatprep.subr.bf16.mxu0 0
      %4965 = vmatpush2.bf16.msra.mxu0 0
      %4966 = vmatprep.subr.bf16.mxu0 0
      %4967 = vmatpush2.bf16.msra.mxu0 0
      %4968 = vmatprep.subr.bf16.mxu0 0
      %4969 = vmatpush2.bf16.msra.mxu0 0
      %4970 = vmatprep.subr.bf16.mxu0 0
      %4971 = vmatpush2.bf16.msra.mxu0 0
      %4972 = vmatprep.subr.bf16.mxu0 0
      %4973 = vmatpush2.bf16.msra.mxu0 0
      %4974 = vmatprep.subr.bf16.mxu0 0
      %4975 = vmatpush2.bf16.msra.mxu0 0
      %4976 = vmatprep.subr.bf16.mxu0 0
      %4977 = vmatpush2.bf16.msra.mxu0 0
      %4978 = vmatprep.mubr.bf16.mxu0 0
      %4979 = vmatmul.mubr.bf16.gmra.mxu0 %v4811
      %v4980 = vpop.f32.mrf.mxu0
      %v4981 = vadd.f32 %v4896, %v4980
      %v4982 = vpop.f32.mrf.mxu0
      %v4983 = vpop.f32.mrf.mxu0
      %v4984 = vadd.f32 %v4896, %v4983
      %v4985 = vpop.f32.mrf.mxu0
      %4986 = vmatprep.mubr.bf16.mxu0 0
      %4987 = vmatmul.mubr.bf16.gmra.mxu0 %v4812
      %v4988 = vpop.f32.mrf.mxu0
      %v4989 = vadd.f32 %v4896, %v4988
      %v4990 = vpop.f32.mrf.mxu0
      %v4991 = vpop.f32.mrf.mxu0
      %v4992 = vadd.f32 %v4896, %v4991
      %v4993 = vpop.f32.mrf.mxu0
      %4994 = vmatprep.mubr.bf16.mxu0 0
      %4995 = vmatmul.mubr.bf16.gmra.mxu0 %v4813
      %v4996 = vpop.f32.mrf.mxu0
      %v4997 = vadd.f32 %v4896, %v4996
      %v4998 = vpop.f32.mrf.mxu0
      %v4999 = vpop.f32.mrf.mxu0
      %v5000 = vadd.f32 %v4896, %v4999
      %v5001 = vpop.f32.mrf.mxu0
      %5002 = vmatprep.mubr.bf16.mxu0 0
      %5003 = vmatmul.mubr.bf16.gmra.mxu0 %v4814
      %v5004 = vpop.f32.mrf.mxu0
      %v5005 = vadd.f32 %v4896, %v5004
      %v5006 = vpop.f32.mrf.mxu0
      %v5007 = vpop.f32.mrf.mxu0
      %v5008 = vadd.f32 %v4896, %v5007
      %v5009 = vpop.f32.mrf.mxu0
      %5010 = vmatprep.mubr.bf16.mxu0 0
      %5011 = vmatmul.mubr.bf16.gmra.mxu0 %v4815
      %v5012 = vpop.f32.mrf.mxu0
      %v5013 = vadd.f32 %v4896, %v5012
      %v5014 = vpop.f32.mrf.mxu0
      %v5015 = vpop.f32.mrf.mxu0
      %v5016 = vadd.f32 %v4896, %v5015
      %v5017 = vpop.f32.mrf.mxu0
      %5018 = vmatprep.mubr.bf16.mxu0 0
      %5019 = vmatmul.mubr.bf16.gmra.mxu0 %v4816
      %v5020 = vpop.f32.mrf.mxu0
      %v5021 = vadd.f32 %v4896, %v5020
      %v5022 = vpop.f32.mrf.mxu0
      %v5023 = vpop.f32.mrf.mxu0
      %v5024 = vadd.f32 %v4896, %v5023
      %v5025 = vpop.f32.mrf.mxu0
      %5026 = vmatprep.mubr.bf16.mxu0 0
      %5027 = vmatmul.mubr.bf16.gmra.mxu0 %v4817
      %v5028 = vpop.f32.mrf.mxu0
      %v5029 = vadd.f32 %v4896, %v5028
      %v5030 = vpop.f32.mrf.mxu0
      %v5031 = vpop.f32.mrf.mxu0
      %v5032 = vadd.f32 %v4896, %v5031
      %v5033 = vpop.f32.mrf.mxu0
      %5034 = vmatprep.mubr.bf16.mxu0 0
      %5035 = vmatmul.mubr.bf16.gmra.mxu0 %v4818
      %v5036 = vpop.f32.mrf.mxu0
      %v5037 = vadd.f32 %v4896, %v5036
      %v5038 = vpop.f32.mrf.mxu0
      %v5039 = vpop.f32.mrf.mxu0
      %v5040 = vadd.f32 %v4896, %v5039
      %v5041 = vpop.f32.mrf.mxu0
      %5042 = vmatprep.mubr.bf16.mxu0 0
      %5043 = vmatmul.mubr.bf16.gmra.mxu0 %v4819
      %v5044 = vpop.f32.mrf.mxu0
      %v5045 = vadd.f32 %v4896, %v5044
      %v5046 = vpop.f32.mrf.mxu0
      %v5047 = vpop.f32.mrf.mxu0
      %v5048 = vadd.f32 %v4896, %v5047
      %v5049 = vpop.f32.mrf.mxu0
      %5050 = vmatprep.mubr.bf16.mxu0 0
      %5051 = vmatmul.mubr.bf16.gmra.mxu0 %v4820
      %v5052 = vpop.f32.mrf.mxu0
      %v5053 = vadd.f32 %v4896, %v5052
      %v5054 = vpop.f32.mrf.mxu0
      %v5055 = vpop.f32.mrf.mxu0
      %v5056 = vadd.f32 %v4896, %v5055
      %v5057 = vpop.f32.mrf.mxu0
      %5058 = vmatprep.mubr.bf16.mxu0 0
      %5059 = vmatmul.mubr.bf16.gmra.mxu0 %v4821
      %v5060 = vpop.f32.mrf.mxu0
      %v5061 = vadd.f32 %v4896, %v5060
      %v5062 = vpop.f32.mrf.mxu0
      %v5063 = vpop.f32.mrf.mxu0
      %v5064 = vadd.f32 %v4896, %v5063
      %v5065 = vpop.f32.mrf.mxu0
      %5066 = vmatprep.mubr.bf16.mxu0 0
      %5067 = vmatmul.mubr.bf16.gmra.mxu0 %v4822
      %v5068 = vpop.f32.mrf.mxu0
      %v5069 = vadd.f32 %v4896, %v5068
      %v5070 = vpop.f32.mrf.mxu0
      %v5071 = vpop.f32.mrf.mxu0
      %v5072 = vadd.f32 %v4896, %v5071
      %v5073 = vpop.f32.mrf.mxu0
      %5074 = vmatprep.mubr.bf16.mxu0 0
      %5075 = vmatmul.mubr.bf16.gmra.mxu0 %v4823
      %v5076 = vpop.f32.mrf.mxu0
      %v5077 = vadd.f32 %v4896, %v5076
      %v5078 = vpop.f32.mrf.mxu0
      %v5079 = vpop.f32.mrf.mxu0
      %v5080 = vadd.f32 %v4896, %v5079
      %v5081 = vpop.f32.mrf.mxu0
      %5082 = vmatprep.mubr.bf16.mxu0 0
      %5083 = vmatmul.mubr.bf16.gmra.mxu0 %v4824
      %v5084 = vpop.f32.mrf.mxu0
      %v5085 = vadd.f32 %v4896, %v5084
      %v5086 = vpop.f32.mrf.mxu0
      %v5087 = vpop.f32.mrf.mxu0
      %v5088 = vadd.f32 %v4896, %v5087
      %v5089 = vpop.f32.mrf.mxu0
      %5090 = vmatprep.mubr.bf16.mxu0 0
      %5091 = vmatmul.mubr.bf16.gmra.mxu0 %v4825
      %v5092 = vpop.f32.mrf.mxu0
      %v5093 = vadd.f32 %v4896, %v5092
      %v5094 = vpop.f32.mrf.mxu0
      %v5095 = vpop.f32.mrf.mxu0
      %v5096 = vadd.f32 %v4896, %v5095
      %v5097 = vpop.f32.mrf.mxu0
      %5098 = vmatprep.mubr.bf16.mxu0 0
      %5099 = vmatmul.mubr.bf16.gmra.mxu0 %v4826
      %v5100 = vpop.f32.mrf.mxu0
      %v5101 = vadd.f32 %v4896, %v5100
      %v5102 = vpop.f32.mrf.mxu0
      %v5103 = vpop.f32.mrf.mxu0
      %v5104 = vadd.f32 %v4896, %v5103
      %v5105 = vpop.f32.mrf.mxu0
      %5106 = vmatprep.mubr.bf16.mxu0 0
      %5107 = vmatmul.mubr.bf16.gmra.mxu0 %v4827
      %v5108 = vpop.f32.mrf.mxu0
      %v5109 = vadd.f32 %v4896, %v5108
      %v5110 = vpop.f32.mrf.mxu0
      %v5111 = vpop.f32.mrf.mxu0
      %v5112 = vadd.f32 %v4896, %v5111
      %v5113 = vpop.f32.mrf.mxu0
      %5114 = vmatprep.mubr.bf16.mxu0 0
      %5115 = vmatmul.mubr.bf16.gmra.mxu0 %v4828
      %v5116 = vpop.f32.mrf.mxu0
      %v5117 = vadd.f32 %v4896, %v5116
      %v5118 = vpop.f32.mrf.mxu0
      %v5119 = vpop.f32.mrf.mxu0
      %v5120 = vadd.f32 %v4896, %v5119
      %v5121 = vpop.f32.mrf.mxu0
      %5122 = vmatprep.mubr.bf16.mxu0 0
      %5123 = vmatmul.mubr.bf16.gmra.mxu0 %v4829
      %v5124 = vpop.f32.mrf.mxu0
      %v5125 = vadd.f32 %v4896, %v5124
      %v5126 = vpop.f32.mrf.mxu0
      %v5127 = vpop.f32.mrf.mxu0
      %v5128 = vadd.f32 %v4896, %v5127
      %v5129 = vpop.f32.mrf.mxu0
      %5130 = vmatprep.mubr.bf16.mxu0 0
      %5131 = vmatmul.mubr.bf16.gmra.mxu0 %v4830
      %v5132 = vpop.f32.mrf.mxu0
      %v5133 = vadd.f32 %v4896, %v5132
      %v5134 = vpop.f32.mrf.mxu0
      %v5135 = vpop.f32.mrf.mxu0
      %v5136 = vadd.f32 %v4896, %v5135
      %v5137 = vpop.f32.mrf.mxu0
      %5138 = vmatprep.mubr.bf16.mxu0 0
      %5139 = vmatmul.mubr.bf16.gmra.mxu0 %v4831
      %v5140 = vpop.f32.mrf.mxu0
      %v5141 = vadd.f32 %v4896, %v5140
      %v5142 = vpop.f32.mrf.mxu0
      %v5143 = vpop.f32.mrf.mxu0
      %v5144 = vadd.f32 %v4896, %v5143
      %v5145 = vpop.f32.mrf.mxu0
      %5146 = vmatprep.mubr.bf16.mxu0 0
      %5147 = vmatmul.mubr.bf16.gmra.mxu0 %v4832
      %v5148 = vpop.f32.mrf.mxu0
      %v5149 = vadd.f32 %v4896, %v5148
      %v5150 = vpop.f32.mrf.mxu0
      %v5151 = vpop.f32.mrf.mxu0
      %v5152 = vadd.f32 %v4896, %v5151
      %v5153 = vpop.f32.mrf.mxu0
      %5154 = vmatprep.mubr.bf16.mxu0 0
      %5155 = vmatmul.mubr.bf16.gmra.mxu0 %v4833
      %v5156 = vpop.f32.mrf.mxu0
      %v5157 = vadd.f32 %v4896, %v5156
      %v5158 = vpop.f32.mrf.mxu0
      %v5159 = vpop.f32.mrf.mxu0
      %v5160 = vadd.f32 %v4896, %v5159
      %v5161 = vpop.f32.mrf.mxu0
      %5162 = vmatprep.mubr.bf16.mxu0 0
      %5163 = vmatmul.mubr.bf16.gmra.mxu0 %v4834
      %v5164 = vpop.f32.mrf.mxu0
      %v5165 = vadd.f32 %v4896, %v5164
      %v5166 = vpop.f32.mrf.mxu0
      %v5167 = vpop.f32.mrf.mxu0
      %v5168 = vadd.f32 %v4896, %v5167
      %v5169 = vpop.f32.mrf.mxu0
      %5170 = vmatprep.mubr.bf16.mxu0 0
      %5171 = vmatmul.mubr.bf16.gmra.mxu0 %v4835
      %v5172 = vpop.f32.mrf.mxu0
      %v5173 = vadd.f32 %v4896, %v5172
      %v5174 = vpop.f32.mrf.mxu0
      %v5175 = vpop.f32.mrf.mxu0
      %v5176 = vadd.f32 %v4896, %v5175
      %v5177 = vpop.f32.mrf.mxu0
      %5178 = vmatprep.mubr.bf16.mxu0 0
      %5179 = vmatmul.mubr.bf16.gmra.mxu0 %v4836
      %v5180 = vpop.f32.mrf.mxu0
      %v5181 = vadd.f32 %v4896, %v5180
      %v5182 = vpop.f32.mrf.mxu0
      %v5183 = vpop.f32.mrf.mxu0
      %v5184 = vadd.f32 %v4896, %v5183
      %v5185 = vpop.f32.mrf.mxu0
      %5186 = vmatprep.mubr.bf16.mxu0 0
      %5187 = vmatmul.mubr.bf16.gmra.mxu0 %v4837
      %v5188 = vpop.f32.mrf.mxu0
      %v5189 = vadd.f32 %v4896, %v5188
      %v5190 = vpop.f32.mrf.mxu0
      %v5191 = vpop.f32.mrf.mxu0
      %v5192 = vadd.f32 %v4896, %v5191
      %v5193 = vpop.f32.mrf.mxu0
      %5194 = vmatprep.mubr.bf16.mxu0 0
      %5195 = vmatmul.mubr.bf16.gmra.mxu0 %v4838
      %v5196 = vpop.f32.mrf.mxu0
      %v5197 = vadd.f32 %v4896, %v5196
      %v5198 = vpop.f32.mrf.mxu0
      %v5199 = vpop.f32.mrf.mxu0
      %v5200 = vadd.f32 %v4896, %v5199
      %v5201 = vpop.f32.mrf.mxu0
      %5202 = vmatprep.mubr.bf16.mxu0 0
      %5203 = vmatmul.mubr.bf16.gmra.mxu0 %v4839
      %v5204 = vpop.f32.mrf.mxu0
      %v5205 = vadd.f32 %v4896, %v5204
      %v5206 = vpop.f32.mrf.mxu0
      %v5207 = vpop.f32.mrf.mxu0
      %v5208 = vadd.f32 %v4896, %v5207
      %v5209 = vpop.f32.mrf.mxu0
      %5210 = vmatprep.mubr.bf16.mxu0 0
      %5211 = vmatmul.mubr.bf16.gmra.mxu0 %v4840
      %v5212 = vpop.f32.mrf.mxu0
      %v5213 = vadd.f32 %v4896, %v5212
      %v5214 = vpop.f32.mrf.mxu0
      %v5215 = vpop.f32.mrf.mxu0
      %v5216 = vadd.f32 %v4896, %v5215
      %v5217 = vpop.f32.mrf.mxu0
      %5218 = vmatprep.mubr.bf16.mxu0 0
      %5219 = vmatmul.mubr.bf16.gmra.mxu0 %v4841
      %v5220 = vpop.f32.mrf.mxu0
      %v5221 = vadd.f32 %v4896, %v5220
      %v5222 = vpop.f32.mrf.mxu0
      %v5223 = vpop.f32.mrf.mxu0
      %v5224 = vadd.f32 %v4896, %v5223
      %v5225 = vpop.f32.mrf.mxu0
      %5226 = vmatprep.mubr.bf16.mxu0 0
      %5227 = vmatmul.mubr.bf16.gmra.mxu0 %v4842
      %v5228 = vpop.f32.mrf.mxu0
      %v5229 = vadd.f32 %v4896, %v5228
      %v5230 = vpop.f32.mrf.mxu0
      %v5231 = vpop.f32.mrf.mxu0
      %v5232 = vadd.f32 %v4896, %v5231
      %v5233 = vpop.f32.mrf.mxu0
      %5234 = vmatprep.mubr.bf16.mxu0 0
      %5235 = vmatmul.mubr.bf16.gmra.mxu0 %v4843
      %v5236 = vpop.f32.mrf.mxu0
      %v5237 = vadd.f32 %v4896, %v5236
      %v5238 = vpop.f32.mrf.mxu0
      %v5239 = vpop.f32.mrf.mxu0
      %v5240 = vadd.f32 %v4896, %v5239
      %v5241 = vpop.f32.mrf.mxu0
      %5242 = vmatprep.mubr.bf16.mxu0 0
      %5243 = vmatmul.mubr.bf16.gmra.mxu0 %v4844
      %v5244 = vpop.f32.mrf.mxu0
      %v5245 = vadd.f32 %v4896, %v5244
      %v5246 = vpop.f32.mrf.mxu0
      %v5247 = vpop.f32.mrf.mxu0
      %v5248 = vadd.f32 %v4896, %v5247
      %v5249 = vpop.f32.mrf.mxu0
      %5250 = vmatprep.mubr.bf16.mxu0 0
      %5251 = vmatmul.mubr.bf16.gmra.mxu0 %v4845
      %v5252 = vpop.f32.mrf.mxu0
      %v5253 = vadd.f32 %v4896, %v5252
      %v5254 = vpop.f32.mrf.mxu0
      %v5255 = vpop.f32.mrf.mxu0
      %v5256 = vadd.f32 %v4896, %v5255
      %v5257 = vpop.f32.mrf.mxu0
      %5258 = vmatprep.mubr.bf16.mxu0 0
      %5259 = vmatmul.mubr.bf16.gmra.mxu0 %v4846
      %v5260 = vpop.f32.mrf.mxu0
      %v5261 = vadd.f32 %v4896, %v5260
      %v5262 = vpop.f32.mrf.mxu0
      %v5263 = vpop.f32.mrf.mxu0
      %v5264 = vadd.f32 %v4896, %v5263
      %v5265 = vpop.f32.mrf.mxu0
      %5266 = vmatprep.mubr.bf16.mxu0 0
      %5267 = vmatmul.mubr.bf16.gmra.mxu0 %v4847
      %v5268 = vpop.f32.mrf.mxu0
      %v5269 = vadd.f32 %v4896, %v5268
      %v5270 = vpop.f32.mrf.mxu0
      %v5271 = vpop.f32.mrf.mxu0
      %v5272 = vadd.f32 %v4896, %v5271
      %v5273 = vpop.f32.mrf.mxu0
      %5274 = vmatprep.mubr.bf16.mxu0 0
      %5275 = vmatmul.mubr.bf16.gmra.mxu0 %v4848
      %v5276 = vpop.f32.mrf.mxu0
      %v5277 = vadd.f32 %v4896, %v5276
      %v5278 = vpop.f32.mrf.mxu0
      %v5279 = vpop.f32.mrf.mxu0
      %v5280 = vadd.f32 %v4896, %v5279
      %v5281 = vpop.f32.mrf.mxu0
      %5282 = vmatprep.mubr.bf16.mxu0 0
      %5283 = vmatmul.mubr.bf16.gmra.mxu0 %v4849
      %v5284 = vpop.f32.mrf.mxu0
      %v5285 = vadd.f32 %v4896, %v5284
      %v5286 = vpop.f32.mrf.mxu0
      %v5287 = vpop.f32.mrf.mxu0
      %v5288 = vadd.f32 %v4896, %v5287
      %v5289 = vpop.f32.mrf.mxu0
      %5290 = vmatprep.mubr.bf16.mxu0 0
      %5291 = vmatmul.mubr.bf16.gmra.mxu0 %v4850
      %v5292 = vpop.f32.mrf.mxu0
      %v5293 = vadd.f32 %v4896, %v5292
      %v5294 = vpop.f32.mrf.mxu0
      %v5295 = vpop.f32.mrf.mxu0
      %v5296 = vadd.f32 %v4896, %v5295
      %v5297 = vpop.f32.mrf.mxu0
      %5298 = vmatprep.mubr.bf16.mxu0 0
      %5299 = vmatmul.mubr.bf16.gmra.mxu0 %v4851
      %v5300 = vpop.f32.mrf.mxu0
      %v5301 = vadd.f32 %v4896, %v5300
      %v5302 = vpop.f32.mrf.mxu0
      %v5303 = vpop.f32.mrf.mxu0
      %v5304 = vadd.f32 %v4896, %v5303
      %v5305 = vpop.f32.mrf.mxu0
      %5306 = vmatprep.mubr.bf16.mxu0 0
      %5307 = vmatmul.mubr.bf16.gmra.mxu0 %v4852
      %v5308 = vpop.f32.mrf.mxu0
      %v5309 = vadd.f32 %v4896, %v5308
      %v5310 = vpop.f32.mrf.mxu0
      %v5311 = vpop.f32.mrf.mxu0
      %v5312 = vadd.f32 %v4896, %v5311
      %v5313 = vpop.f32.mrf.mxu0
      %5314 = vmatprep.mubr.bf16.mxu0 0
      %5315 = vmatmul.mubr.bf16.gmra.mxu0 %v4853
      %v5316 = vpop.f32.mrf.mxu0
      %v5317 = vadd.f32 %v4896, %v5316
      %v5318 = vpop.f32.mrf.mxu0
      %v5319 = vpop.f32.mrf.mxu0
      %v5320 = vadd.f32 %v4896, %v5319
      %v5321 = vpop.f32.mrf.mxu0
      %5322 = vmatprep.mubr.bf16.mxu0 0
      %5323 = vmatmul.mubr.bf16.gmra.mxu0 %v4854
      %v5324 = vpop.f32.mrf.mxu0
      %v5325 = vadd.f32 %v4896, %v5324
      %v5326 = vpop.f32.mrf.mxu0
      %v5327 = vpop.f32.mrf.mxu0
      %v5328 = vadd.f32 %v4896, %v5327
      %v5329 = vpop.f32.mrf.mxu0
      %5330 = vmatprep.mubr.bf16.mxu0 0
      %5331 = vmatmul.mubr.bf16.gmra.mxu0 %v4855
      %v5332 = vpop.f32.mrf.mxu0
      %v5333 = vadd.f32 %v4896, %v5332
      %v5334 = vpop.f32.mrf.mxu0
      %v5335 = vpop.f32.mrf.mxu0
      %v5336 = vadd.f32 %v4896, %v5335
      %v5337 = vpop.f32.mrf.mxu0
      %5338 = vmatprep.mubr.bf16.mxu0 0
      %5339 = vmatmul.mubr.bf16.gmra.mxu0 %v4856
      %v5340 = vpop.f32.mrf.mxu0
      %v5341 = vadd.f32 %v4896, %v5340
      %v5342 = vpop.f32.mrf.mxu0
      %v5343 = vpop.f32.mrf.mxu0
      %v5344 = vadd.f32 %v4896, %v5343
      %v5345 = vpop.f32.mrf.mxu0
      %5346 = vmatprep.mubr.bf16.mxu0 0
      %5347 = vmatmul.mubr.bf16.gmra.mxu0 %v4857
      %v5348 = vpop.f32.mrf.mxu0
      %v5349 = vadd.f32 %v4896, %v5348
      %v5350 = vpop.f32.mrf.mxu0
      %v5351 = vpop.f32.mrf.mxu0
      %v5352 = vadd.f32 %v4896, %v5351
      %v5353 = vpop.f32.mrf.mxu0
      %5354 = vmatprep.mubr.bf16.mxu0 0
      %5355 = vmatmul.mubr.bf16.gmra.mxu0 %v4858
      %v5356 = vpop.f32.mrf.mxu0
      %v5357 = vadd.f32 %v4896, %v5356
      %v5358 = vpop.f32.mrf.mxu0
      %v5359 = vpop.f32.mrf.mxu0
      %v5360 = vadd.f32 %v4896, %v5359
      %v5361 = vpop.f32.mrf.mxu0
      %5362 = vmatprep.mubr.bf16.mxu0 0
      %5363 = vmatmul.mubr.bf16.gmra.mxu0 %v4859
      %v5364 = vpop.f32.mrf.mxu0
      %v5365 = vadd.f32 %v4896, %v5364
      %v5366 = vpop.f32.mrf.mxu0
      %v5367 = vpop.f32.mrf.mxu0
      %v5368 = vadd.f32 %v4896, %v5367
      %v5369 = vpop.f32.mrf.mxu0
      %5370 = vmatprep.mubr.bf16.mxu0 0
      %5371 = vmatmul.mubr.bf16.gmra.mxu0 %v4860
      %v5372 = vpop.f32.mrf.mxu0
      %v5373 = vadd.f32 %v4896, %v5372
      %v5374 = vpop.f32.mrf.mxu0
      %v5375 = vpop.f32.mrf.mxu0
      %v5376 = vadd.f32 %v4896, %v5375
      %v5377 = vpop.f32.mrf.mxu0
      %5378 = vmatprep.mubr.bf16.mxu0 0
      %5379 = vmatmul.mubr.bf16.gmra.mxu0 %v4861
      %v5380 = vpop.f32.mrf.mxu0
      %v5381 = vadd.f32 %v4896, %v5380
      %v5382 = vpop.f32.mrf.mxu0
      %v5383 = vpop.f32.mrf.mxu0
      %v5384 = vadd.f32 %v4896, %v5383
      %v5385 = vpop.f32.mrf.mxu0
      %5386 = vmatprep.mubr.bf16.mxu0 0
      %5387 = vmatmul.mubr.bf16.gmra.mxu0 %v4862
      %v5388 = vpop.f32.mrf.mxu0
      %v5389 = vadd.f32 %v4896, %v5388
      %v5390 = vpop.f32.mrf.mxu0
      %v5391 = vpop.f32.mrf.mxu0
      %v5392 = vadd.f32 %v4896, %v5391
      %v5393 = vpop.f32.mrf.mxu0
      %5394 = vmatprep.mubr.bf16.mxu0 0
      %5395 = vmatmul.mubr.bf16.gmra.mxu0 %v4863
      %v5396 = vpop.f32.mrf.mxu0
      %v5397 = vadd.f32 %v4896, %v5396
      %v5398 = vpop.f32.mrf.mxu0
      %v5399 = vpop.f32.mrf.mxu0
      %v5400 = vadd.f32 %v4896, %v5399
      %v5401 = vpop.f32.mrf.mxu0
      %5402 = vmatprep.mubr.bf16.mxu0 0
      %5403 = vmatmul.mubr.bf16.gmra.mxu0 %v4864
      %v5404 = vpop.f32.mrf.mxu0
      %v5405 = vadd.f32 %v4896, %v5404
      %v5406 = vpop.f32.mrf.mxu0
      %v5407 = vpop.f32.mrf.mxu0
      %v5408 = vadd.f32 %v4896, %v5407
      %v5409 = vpop.f32.mrf.mxu0
      %5410 = vmatprep.mubr.bf16.mxu0 0
      %5411 = vmatmul.mubr.bf16.gmra.mxu0 %v4865
      %v5412 = vpop.f32.mrf.mxu0
      %v5413 = vadd.f32 %v4896, %v5412
      %v5414 = vpop.f32.mrf.mxu0
      %v5415 = vpop.f32.mrf.mxu0
      %v5416 = vadd.f32 %v4896, %v5415
      %v5417 = vpop.f32.mrf.mxu0
      %5418 = vmatprep.mubr.bf16.mxu0 0
      %5419 = vmatmul.mubr.bf16.gmra.mxu0 %v4866
      %v5420 = vpop.f32.mrf.mxu0
      %v5421 = vadd.f32 %v4896, %v5420
      %v5422 = vpop.f32.mrf.mxu0
      %v5423 = vpop.f32.mrf.mxu0
      %v5424 = vadd.f32 %v4896, %v5423
      %v5425 = vpop.f32.mrf.mxu0
      %5426 = vmatprep.mubr.bf16.mxu0 0
      %5427 = vmatmul.mubr.bf16.gmra.mxu0 %v4867
      %v5428 = vpop.f32.mrf.mxu0
      %v5429 = vadd.f32 %v4896, %v5428
      %v5430 = vpop.f32.mrf.mxu0
      %v5431 = vpop.f32.mrf.mxu0
      %v5432 = vadd.f32 %v4896, %v5431
      %v5433 = vpop.f32.mrf.mxu0
      %5434 = vmatprep.mubr.bf16.mxu0 0
      %5435 = vmatmul.mubr.bf16.gmra.mxu0 %v4868
      %v5436 = vpop.f32.mrf.mxu0
      %v5437 = vadd.f32 %v4896, %v5436
      %v5438 = vpop.f32.mrf.mxu0
      %v5439 = vpop.f32.mrf.mxu0
      %v5440 = vadd.f32 %v4896, %v5439
      %v5441 = vpop.f32.mrf.mxu0
      %5442 = vmatprep.mubr.bf16.mxu0 0
      %5443 = vmatmul.mubr.bf16.gmra.mxu0 %v4869
      %v5444 = vpop.f32.mrf.mxu0
      %v5445 = vadd.f32 %v4896, %v5444
      %v5446 = vpop.f32.mrf.mxu0
      %v5447 = vpop.f32.mrf.mxu0
      %v5448 = vadd.f32 %v4896, %v5447
      %v5449 = vpop.f32.mrf.mxu0
      %5450 = vmatprep.mubr.bf16.mxu0 0
      %5451 = vmatmul.mubr.bf16.gmra.mxu0 %v4870
      %v5452 = vpop.f32.mrf.mxu0
      %v5453 = vadd.f32 %v4896, %v5452
      %v5454 = vpop.f32.mrf.mxu0
      %v5455 = vpop.f32.mrf.mxu0
      %v5456 = vadd.f32 %v4896, %v5455
      %v5457 = vpop.f32.mrf.mxu0
      %5458 = vmatprep.mubr.bf16.mxu0 0
      %5459 = vmatmul.mubr.bf16.gmra.mxu0 %v4871
      %v5460 = vpop.f32.mrf.mxu0
      %v5461 = vadd.f32 %v4896, %v5460
      %v5462 = vpop.f32.mrf.mxu0
      %v5463 = vpop.f32.mrf.mxu0
      %v5464 = vadd.f32 %v4896, %v5463
      %v5465 = vpop.f32.mrf.mxu0
      %5466 = vmatprep.mubr.bf16.mxu0 0
      %5467 = vmatmul.mubr.bf16.gmra.mxu0 %v4872
      %v5468 = vpop.f32.mrf.mxu0
      %v5469 = vadd.f32 %v4896, %v5468
      %v5470 = vpop.f32.mrf.mxu0
      %v5471 = vpop.f32.mrf.mxu0
      %v5472 = vadd.f32 %v4896, %v5471
      %v5473 = vpop.f32.mrf.mxu0
      %5474 = vmatprep.mubr.bf16.mxu0 0
      %5475 = vmatmul.mubr.bf16.gmra.mxu0 %v4873
      %v5476 = vpop.f32.mrf.mxu0
      %v5477 = vadd.f32 %v4896, %v5476
      %v5478 = vpop.f32.mrf.mxu0
      %v5479 = vpop.f32.mrf.mxu0
      %v5480 = vadd.f32 %v4896, %v5479
      %v5481 = vpop.f32.mrf.mxu0
      %5482 = vmatprep.mubr.bf16.mxu0 0
      %5483 = vmatmul.mubr.bf16.gmra.mxu0 %v4874
      %v5484 = vpop.f32.mrf.mxu0
      %v5485 = vadd.f32 %v4896, %v5484
      %v5486 = vpop.f32.mrf.mxu0
      %v5487 = vpop.f32.mrf.mxu0
      %v5488 = vadd.f32 %v4896, %v5487
      %v5489 = vpop.f32.mrf.mxu0
      %5490 = vdwg.mxu0
      %vm5491 = vcmp.lt.s32.totalorder %v1603, 8
      %vm5492 = vcmp.lt.s32.totalorder %v1604, 8
      %vm5493 = vcmp.lt.s32.totalorder %v1605, 8
      %vm5494 = vcmp.lt.s32.totalorder %v1606, 8
      %vm5495 = vcmp.lt.s32.totalorder %v1607, 8
      %vm5496 = vcmp.lt.s32.totalorder %v1608, 8
      %vm5497 = vcmp.lt.s32.totalorder %v1609, 8
      %vm5498 = vcmp.lt.s32.totalorder %v1610, 8
      %vm5499 = vcmp.lt.s32.totalorder %v1611, 8
      %vm5500 = vcmp.lt.s32.totalorder %v1612, 8
      %vm5501 = vcmp.lt.s32.totalorder %v1613, 8
      %vm5502 = vcmp.lt.s32.totalorder %v1614, 8
      %vm5503 = vcmp.lt.s32.totalorder %v1615, 8
      %vm5504 = vcmp.lt.s32.totalorder %v1616, 8
      %vm5505 = vcmp.lt.s32.totalorder %v1617, 8
      %vm5506 = vcmp.lt.s32.totalorder %v1618, 8
      %vm5507 = vcmp.lt.s32.totalorder %v1619, 8
      %vm5508 = vcmp.lt.s32.totalorder %v1620, 8
      %vm5509 = vcmp.lt.s32.totalorder %v1621, 8
      %vm5510 = vcmp.lt.s32.totalorder %v1622, 8
      %vm5511 = vcmp.lt.s32.totalorder %v1623, 8
      %vm5512 = vcmp.lt.s32.totalorder %v1624, 8
      %vm5513 = vcmp.lt.s32.totalorder %v1625, 8
      %vm5514 = vcmp.lt.s32.totalorder %v1626, 8
      %vm5515 = vcmp.lt.s32.totalorder %v1627, 8
      %vm5516 = vcmp.lt.s32.totalorder %v1628, 8
      %vm5517 = vcmp.lt.s32.totalorder %v1629, 8
      %vm5518 = vcmp.lt.s32.totalorder %v1630, 8
      %vm5519 = vcmp.lt.s32.totalorder %v1631, 8
      %vm5520 = vcmp.lt.s32.totalorder %v1632, 8
      %vm5521 = vcmp.lt.s32.totalorder %v1633, 8
      %vm5522 = vcmp.lt.s32.totalorder %v1634, 8
      %vm5523 = vcmp.lt.s32.totalorder %v1635, 8
      %vm5524 = vcmp.lt.s32.totalorder %v1636, 8
      %vm5525 = vcmp.lt.s32.totalorder %v1637, 8
      %vm5526 = vcmp.lt.s32.totalorder %v1638, 8
      %vm5527 = vcmp.lt.s32.totalorder %v1639, 8
      %vm5528 = vcmp.lt.s32.totalorder %v1640, 8
      %vm5529 = vcmp.lt.s32.totalorder %v1641, 8
      %vm5530 = vcmp.lt.s32.totalorder %v1642, 8
      %vm5531 = vcmp.lt.s32.totalorder %v1643, 8
      %vm5532 = vcmp.lt.s32.totalorder %v1644, 8
      %vm5533 = vcmp.lt.s32.totalorder %v1645, 8
      %vm5534 = vcmp.lt.s32.totalorder %v1646, 8
      %vm5535 = vcmp.lt.s32.totalorder %v1647, 8
      %vm5536 = vcmp.lt.s32.totalorder %v1648, 8
      %vm5537 = vcmp.lt.s32.totalorder %v1649, 8
      %vm5538 = vcmp.lt.s32.totalorder %v1650, 8
      %vm5539 = vcmp.lt.s32.totalorder %v1651, 8
      %vm5540 = vcmp.lt.s32.totalorder %v1652, 8
      %vm5541 = vcmp.lt.s32.totalorder %v1653, 8
      %vm5542 = vcmp.lt.s32.totalorder %v1654, 8
      %vm5543 = vcmp.lt.s32.totalorder %v1655, 8
      %vm5544 = vcmp.lt.s32.totalorder %v1656, 8
      %vm5545 = vcmp.lt.s32.totalorder %v1657, 8
      %vm5546 = vcmp.lt.s32.totalorder %v1658, 8
      %vm5547 = vcmp.lt.s32.totalorder %v1659, 8
      %vm5548 = vcmp.lt.s32.totalorder %v1660, 8
      %vm5549 = vcmp.lt.s32.totalorder %v1661, 8
      %vm5550 = vcmp.lt.s32.totalorder %v1662, 8
      %vm5551 = vcmp.lt.s32.totalorder %v1663, 8
      %vm5552 = vcmp.lt.s32.totalorder %v1664, 8
      %vm5553 = vcmp.lt.s32.totalorder %v1665, 8
      %vm5554 = vcmp.lt.s32.totalorder %v1666, 8
      %vm5555 = vcmp.lt.s32.totalorder %v1667, 8
      %vm5556 = vcmp.lt.s32.totalorder %v1668, 8
      %vm5557 = vcmp.lt.s32.totalorder %v1669, 8
      %vm5558 = vcmp.lt.s32.totalorder %v1670, 8
      %vm5559 = vcmp.lt.s32.totalorder %v1671, 8
      %vm5560 = vcmp.lt.s32.totalorder %v1672, 8
      %vm5561 = vcmp.lt.s32.totalorder %v1673, 8
      %vm5562 = vcmp.lt.s32.totalorder %v1674, 8
      %vm5563 = vcmp.lt.s32.totalorder %v1675, 8
      %vm5564 = vcmp.lt.s32.totalorder %v1676, 8
      %vm5565 = vcmp.lt.s32.totalorder %v1677, 8
      %vm5566 = vcmp.lt.s32.totalorder %v1678, 8
      %vm5567 = vcmp.lt.s32.totalorder %v1679, 8
      %vm5568 = vcmp.lt.s32.totalorder %v1680, 8
      %vm5569 = vcmp.lt.s32.totalorder %v1681, 8
      %vm5570 = vcmp.lt.s32.totalorder %v1682, 8
      %vm5571 = vcmp.lt.s32.totalorder %v1683, 8
      %vm5572 = vcmp.lt.s32.totalorder %v1684, 8
      %vm5573 = vcmp.lt.s32.totalorder %v1685, 8
      %vm5574 = vcmp.lt.s32.totalorder %v1686, 8
      %vm5575 = vcmp.lt.s32.totalorder %v1687, 8
      %vm5576 = vcmp.lt.s32.totalorder %v1688, 8
      %vm5577 = vcmp.lt.s32.totalorder %v1689, 8
      %vm5578 = vcmp.lt.s32.totalorder %v1690, 8
      %vm5579 = vcmp.lt.s32.totalorder %v1691, 8
      %vm5580 = vcmp.lt.s32.totalorder %v1692, 8
      %vm5581 = vcmp.lt.s32.totalorder %v1693, 8
      %vm5582 = vcmp.lt.s32.totalorder %v1694, 8
      %vm5583 = vcmp.lt.s32.totalorder %v1695, 8
      %vm5584 = vcmp.lt.s32.totalorder %v1696, 8
      %vm5585 = vcmp.lt.s32.totalorder %v1697, 8
      %vm5586 = vcmp.lt.s32.totalorder %v1698, 8
      %vm5587 = vcmp.lt.s32.totalorder %v1699, 8
      %vm5588 = vcmp.lt.s32.totalorder %v1700, 8
      %vm5589 = vcmp.lt.s32.totalorder %v1701, 8
      %vm5590 = vcmp.lt.s32.totalorder %v1702, 8
      %vm5591 = vcmp.lt.s32.totalorder %v1703, 8
      %vm5592 = vcmp.lt.s32.totalorder %v1704, 8
      %vm5593 = vcmp.lt.s32.totalorder %v1705, 8
      %vm5594 = vcmp.lt.s32.totalorder %v1706, 8
      %vm5595 = vcmp.lt.s32.totalorder %v1707, 8
      %vm5596 = vcmp.lt.s32.totalorder %v1708, 8
      %vm5597 = vcmp.lt.s32.totalorder %v1709, 8
      %vm5598 = vcmp.lt.s32.totalorder %v1710, 8
      %vm5599 = vcmp.lt.s32.totalorder %v1711, 8
      %vm5600 = vcmp.lt.s32.totalorder %v1712, 8
      %vm5601 = vcmp.lt.s32.totalorder %v1713, 8
      %vm5602 = vcmp.lt.s32.totalorder %v1714, 8
      %vm5603 = vcmp.lt.s32.totalorder %v1715, 8
      %vm5604 = vcmp.lt.s32.totalorder %v1716, 8
      %vm5605 = vcmp.lt.s32.totalorder %v1717, 8
      %vm5606 = vcmp.lt.s32.totalorder %v1718, 8
      %vm5607 = vcmp.lt.s32.totalorder %v1719, 8
      %vm5608 = vcmp.lt.s32.totalorder %v1720, 8
      %vm5609 = vcmp.lt.s32.totalorder %v1721, 8
      %vm5610 = vcmp.lt.s32.totalorder %v1722, 8
      %vm5611 = vcmp.lt.s32.totalorder %v1723, 8
      %vm5612 = vcmp.lt.s32.totalorder %v1724, 8
      %vm5613 = vcmp.lt.s32.totalorder %v1725, 8
      %vm5614 = vcmp.lt.s32.totalorder %v1726, 8
      %vm5615 = vcmp.lt.s32.totalorder %v1727, 8
      %vm5616 = vcmp.lt.s32.totalorder %v1728, 8
      %vm5617 = vcmp.lt.s32.totalorder %v1729, 8
      %vm5618 = vcmp.lt.s32.totalorder %v1730, 8
      %v5619 = vsel %vm5491, 1, 0
      %v5620 = vsel %vm5492, 1, 0
      %v5621 = vsel %vm5493, 1, 0
      %v5622 = vsel %vm5494, 1, 0
      %v5623 = vsel %vm5495, 1, 0
      %v5624 = vsel %vm5496, 1, 0
      %v5625 = vsel %vm5497, 1, 0
      %v5626 = vsel %vm5498, 1, 0
      %v5627 = vsel %vm5499, 1, 0
      %v5628 = vsel %vm5500, 1, 0
      %v5629 = vsel %vm5501, 1, 0
      %v5630 = vsel %vm5502, 1, 0
      %v5631 = vsel %vm5503, 1, 0
      %v5632 = vsel %vm5504, 1, 0
      %v5633 = vsel %vm5505, 1, 0
      %v5634 = vsel %vm5506, 1, 0
      %v5635 = vsel %vm5507, 1, 0
      %v5636 = vsel %vm5508, 1, 0
      %v5637 = vsel %vm5509, 1, 0
      %v5638 = vsel %vm5510, 1, 0
      %v5639 = vsel %vm5511, 1, 0
      %v5640 = vsel %vm5512, 1, 0
      %v5641 = vsel %vm5513, 1, 0
      %v5642 = vsel %vm5514, 1, 0
      %v5643 = vsel %vm5515, 1, 0
      %v5644 = vsel %vm5516, 1, 0
      %v5645 = vsel %vm5517, 1, 0
      %v5646 = vsel %vm5518, 1, 0
      %v5647 = vsel %vm5519, 1, 0
      %v5648 = vsel %vm5520, 1, 0
      %v5649 = vsel %vm5521, 1, 0
      %v5650 = vsel %vm5522, 1, 0
      %v5651 = vsel %vm5523, 1, 0
      %v5652 = vsel %vm5524, 1, 0
      %v5653 = vsel %vm5525, 1, 0
      %v5654 = vsel %vm5526, 1, 0
      %v5655 = vsel %vm5527, 1, 0
      %v5656 = vsel %vm5528, 1, 0
      %v5657 = vsel %vm5529, 1, 0
      %v5658 = vsel %vm5530, 1, 0
      %v5659 = vsel %vm5531, 1, 0
      %v5660 = vsel %vm5532, 1, 0
      %v5661 = vsel %vm5533, 1, 0
      %v5662 = vsel %vm5534, 1, 0
      %v5663 = vsel %vm5535, 1, 0
      %v5664 = vsel %vm5536, 1, 0
      %v5665 = vsel %vm5537, 1, 0
      %v5666 = vsel %vm5538, 1, 0
      %v5667 = vsel %vm5539, 1, 0
      %v5668 = vsel %vm5540, 1, 0
      %v5669 = vsel %vm5541, 1, 0
      %v5670 = vsel %vm5542, 1, 0
      %v5671 = vsel %vm5543, 1, 0
      %v5672 = vsel %vm5544, 1, 0
      %v5673 = vsel %vm5545, 1, 0
      %v5674 = vsel %vm5546, 1, 0
      %v5675 = vsel %vm5547, 1, 0
      %v5676 = vsel %vm5548, 1, 0
      %v5677 = vsel %vm5549, 1, 0
      %v5678 = vsel %vm5550, 1, 0
      %v5679 = vsel %vm5551, 1, 0
      %v5680 = vsel %vm5552, 1, 0
      %v5681 = vsel %vm5553, 1, 0
      %v5682 = vsel %vm5554, 1, 0
      %v5683 = vsel %vm5555, 1, 0
      %v5684 = vsel %vm5556, 1, 0
      %v5685 = vsel %vm5557, 1, 0
      %v5686 = vsel %vm5558, 1, 0
      %v5687 = vsel %vm5559, 1, 0
      %v5688 = vsel %vm5560, 1, 0
      %v5689 = vsel %vm5561, 1, 0
      %v5690 = vsel %vm5562, 1, 0
      %v5691 = vsel %vm5563, 1, 0
      %v5692 = vsel %vm5564, 1, 0
      %v5693 = vsel %vm5565, 1, 0
      %v5694 = vsel %vm5566, 1, 0
      %v5695 = vsel %vm5567, 1, 0
      %v5696 = vsel %vm5568, 1, 0
      %v5697 = vsel %vm5569, 1, 0
      %v5698 = vsel %vm5570, 1, 0
      %v5699 = vsel %vm5571, 1, 0
      %v5700 = vsel %vm5572, 1, 0
      %v5701 = vsel %vm5573, 1, 0
      %v5702 = vsel %vm5574, 1, 0
      %v5703 = vsel %vm5575, 1, 0
      %v5704 = vsel %vm5576, 1, 0
      %v5705 = vsel %vm5577, 1, 0
      %v5706 = vsel %vm5578, 1, 0
      %v5707 = vsel %vm5579, 1, 0
      %v5708 = vsel %vm5580, 1, 0
      %v5709 = vsel %vm5581, 1, 0
      %v5710 = vsel %vm5582, 1, 0
      %v5711 = vsel %vm5583, 1, 0
      %v5712 = vsel %vm5584, 1, 0
      %v5713 = vsel %vm5585, 1, 0
      %v5714 = vsel %vm5586, 1, 0
      %v5715 = vsel %vm5587, 1, 0
      %v5716 = vsel %vm5588, 1, 0
      %v5717 = vsel %vm5589, 1, 0
      %v5718 = vsel %vm5590, 1, 0
      %v5719 = vsel %vm5591, 1, 0
      %v5720 = vsel %vm5592, 1, 0
      %v5721 = vsel %vm5593, 1, 0
      %v5722 = vsel %vm5594, 1, 0
      %v5723 = vsel %vm5595, 1, 0
      %v5724 = vsel %vm5596, 1, 0
      %v5725 = vsel %vm5597, 1, 0
      %v5726 = vsel %vm5598, 1, 0
      %v5727 = vsel %vm5599, 1, 0
      %v5728 = vsel %vm5600, 1, 0
      %v5729 = vsel %vm5601, 1, 0
      %v5730 = vsel %vm5602, 1, 0
      %v5731 = vsel %vm5603, 1, 0
      %v5732 = vsel %vm5604, 1, 0
      %v5733 = vsel %vm5605, 1, 0
      %v5734 = vsel %vm5606, 1, 0
      %v5735 = vsel %vm5607, 1, 0
      %v5736 = vsel %vm5608, 1, 0
      %v5737 = vsel %vm5609, 1, 0
      %v5738 = vsel %vm5610, 1, 0
      %v5739 = vsel %vm5611, 1, 0
      %v5740 = vsel %vm5612, 1, 0
      %v5741 = vsel %vm5613, 1, 0
      %v5742 = vsel %vm5614, 1, 0
      %v5743 = vsel %vm5615, 1, 0
      %v5744 = vsel %vm5616, 1, 0
      %v5745 = vsel %vm5617, 1, 0
      %v5746 = vsel %vm5618, 1, 0
      %vm5747 = vcmp.eq.s32.totalorder %v5619, 1
      %vm5748 = vcmp.eq.s32.totalorder %v5620, 1
      %vm5749 = vcmp.eq.s32.totalorder %v5621, 1
      %vm5750 = vcmp.eq.s32.totalorder %v5622, 1
      %vm5751 = vcmp.eq.s32.totalorder %v5623, 1
      %vm5752 = vcmp.eq.s32.totalorder %v5624, 1
      %vm5753 = vcmp.eq.s32.totalorder %v5625, 1
      %vm5754 = vcmp.eq.s32.totalorder %v5626, 1
      %vm5755 = vcmp.eq.s32.totalorder %v5627, 1
      %vm5756 = vcmp.eq.s32.totalorder %v5628, 1
      %vm5757 = vcmp.eq.s32.totalorder %v5629, 1
      %vm5758 = vcmp.eq.s32.totalorder %v5630, 1
      %vm5759 = vcmp.eq.s32.totalorder %v5631, 1
      %vm5760 = vcmp.eq.s32.totalorder %v5632, 1
      %vm5761 = vcmp.eq.s32.totalorder %v5633, 1
      %vm5762 = vcmp.eq.s32.totalorder %v5634, 1
      %vm5763 = vcmp.eq.s32.totalorder %v5635, 1
      %vm5764 = vcmp.eq.s32.totalorder %v5636, 1
      %vm5765 = vcmp.eq.s32.totalorder %v5637, 1
      %vm5766 = vcmp.eq.s32.totalorder %v5638, 1
      %vm5767 = vcmp.eq.s32.totalorder %v5639, 1
      %vm5768 = vcmp.eq.s32.totalorder %v5640, 1
      %vm5769 = vcmp.eq.s32.totalorder %v5641, 1
      %vm5770 = vcmp.eq.s32.totalorder %v5642, 1
      %vm5771 = vcmp.eq.s32.totalorder %v5643, 1
      %vm5772 = vcmp.eq.s32.totalorder %v5644, 1
      %vm5773 = vcmp.eq.s32.totalorder %v5645, 1
      %vm5774 = vcmp.eq.s32.totalorder %v5646, 1
      %vm5775 = vcmp.eq.s32.totalorder %v5647, 1
      %vm5776 = vcmp.eq.s32.totalorder %v5648, 1
      %vm5777 = vcmp.eq.s32.totalorder %v5649, 1
      %vm5778 = vcmp.eq.s32.totalorder %v5650, 1
      %vm5779 = vcmp.eq.s32.totalorder %v5651, 1
      %vm5780 = vcmp.eq.s32.totalorder %v5652, 1
      %vm5781 = vcmp.eq.s32.totalorder %v5653, 1
      %vm5782 = vcmp.eq.s32.totalorder %v5654, 1
      %vm5783 = vcmp.eq.s32.totalorder %v5655, 1
      %vm5784 = vcmp.eq.s32.totalorder %v5656, 1
      %vm5785 = vcmp.eq.s32.totalorder %v5657, 1
      %vm5786 = vcmp.eq.s32.totalorder %v5658, 1
      %vm5787 = vcmp.eq.s32.totalorder %v5659, 1
      %vm5788 = vcmp.eq.s32.totalorder %v5660, 1
      %vm5789 = vcmp.eq.s32.totalorder %v5661, 1
      %vm5790 = vcmp.eq.s32.totalorder %v5662, 1
      %vm5791 = vcmp.eq.s32.totalorder %v5663, 1
      %vm5792 = vcmp.eq.s32.totalorder %v5664, 1
      %vm5793 = vcmp.eq.s32.totalorder %v5665, 1
      %vm5794 = vcmp.eq.s32.totalorder %v5666, 1
      %vm5795 = vcmp.eq.s32.totalorder %v5667, 1
      %vm5796 = vcmp.eq.s32.totalorder %v5668, 1
      %vm5797 = vcmp.eq.s32.totalorder %v5669, 1
      %vm5798 = vcmp.eq.s32.totalorder %v5670, 1
      %vm5799 = vcmp.eq.s32.totalorder %v5671, 1
      %vm5800 = vcmp.eq.s32.totalorder %v5672, 1
      %vm5801 = vcmp.eq.s32.totalorder %v5673, 1
      %vm5802 = vcmp.eq.s32.totalorder %v5674, 1
      %vm5803 = vcmp.eq.s32.totalorder %v5675, 1
      %vm5804 = vcmp.eq.s32.totalorder %v5676, 1
      %vm5805 = vcmp.eq.s32.totalorder %v5677, 1
      %vm5806 = vcmp.eq.s32.totalorder %v5678, 1
      %vm5807 = vcmp.eq.s32.totalorder %v5679, 1
      %vm5808 = vcmp.eq.s32.totalorder %v5680, 1
      %vm5809 = vcmp.eq.s32.totalorder %v5681, 1
      %vm5810 = vcmp.eq.s32.totalorder %v5682, 1
      %vm5811 = vcmp.eq.s32.totalorder %v5683, 1
      %vm5812 = vcmp.eq.s32.totalorder %v5684, 1
      %vm5813 = vcmp.eq.s32.totalorder %v5685, 1
      %vm5814 = vcmp.eq.s32.totalorder %v5686, 1
      %vm5815 = vcmp.eq.s32.totalorder %v5687, 1
      %vm5816 = vcmp.eq.s32.totalorder %v5688, 1
      %vm5817 = vcmp.eq.s32.totalorder %v5689, 1
      %vm5818 = vcmp.eq.s32.totalorder %v5690, 1
      %vm5819 = vcmp.eq.s32.totalorder %v5691, 1
      %vm5820 = vcmp.eq.s32.totalorder %v5692, 1
      %vm5821 = vcmp.eq.s32.totalorder %v5693, 1
      %vm5822 = vcmp.eq.s32.totalorder %v5694, 1
      %vm5823 = vcmp.eq.s32.totalorder %v5695, 1
      %vm5824 = vcmp.eq.s32.totalorder %v5696, 1
      %vm5825 = vcmp.eq.s32.totalorder %v5697, 1
      %vm5826 = vcmp.eq.s32.totalorder %v5698, 1
      %vm5827 = vcmp.eq.s32.totalorder %v5699, 1
      %vm5828 = vcmp.eq.s32.totalorder %v5700, 1
      %vm5829 = vcmp.eq.s32.totalorder %v5701, 1
      %vm5830 = vcmp.eq.s32.totalorder %v5702, 1
      %vm5831 = vcmp.eq.s32.totalorder %v5703, 1
      %vm5832 = vcmp.eq.s32.totalorder %v5704, 1
      %vm5833 = vcmp.eq.s32.totalorder %v5705, 1
      %vm5834 = vcmp.eq.s32.totalorder %v5706, 1
      %vm5835 = vcmp.eq.s32.totalorder %v5707, 1
      %vm5836 = vcmp.eq.s32.totalorder %v5708, 1
      %vm5837 = vcmp.eq.s32.totalorder %v5709, 1
      %vm5838 = vcmp.eq.s32.totalorder %v5710, 1
      %vm5839 = vcmp.eq.s32.totalorder %v5711, 1
      %vm5840 = vcmp.eq.s32.totalorder %v5712, 1
      %vm5841 = vcmp.eq.s32.totalorder %v5713, 1
      %vm5842 = vcmp.eq.s32.totalorder %v5714, 1
      %vm5843 = vcmp.eq.s32.totalorder %v5715, 1
      %vm5844 = vcmp.eq.s32.totalorder %v5716, 1
      %vm5845 = vcmp.eq.s32.totalorder %v5717, 1
      %vm5846 = vcmp.eq.s32.totalorder %v5718, 1
      %vm5847 = vcmp.eq.s32.totalorder %v5719, 1
      %vm5848 = vcmp.eq.s32.totalorder %v5720, 1
      %vm5849 = vcmp.eq.s32.totalorder %v5721, 1
      %vm5850 = vcmp.eq.s32.totalorder %v5722, 1
      %vm5851 = vcmp.eq.s32.totalorder %v5723, 1
      %vm5852 = vcmp.eq.s32.totalorder %v5724, 1
      %vm5853 = vcmp.eq.s32.totalorder %v5725, 1
      %vm5854 = vcmp.eq.s32.totalorder %v5726, 1
      %vm5855 = vcmp.eq.s32.totalorder %v5727, 1
      %vm5856 = vcmp.eq.s32.totalorder %v5728, 1
      %vm5857 = vcmp.eq.s32.totalorder %v5729, 1
      %vm5858 = vcmp.eq.s32.totalorder %v5730, 1
      %vm5859 = vcmp.eq.s32.totalorder %v5731, 1
      %vm5860 = vcmp.eq.s32.totalorder %v5732, 1
      %vm5861 = vcmp.eq.s32.totalorder %v5733, 1
      %vm5862 = vcmp.eq.s32.totalorder %v5734, 1
      %vm5863 = vcmp.eq.s32.totalorder %v5735, 1
      %vm5864 = vcmp.eq.s32.totalorder %v5736, 1
      %vm5865 = vcmp.eq.s32.totalorder %v5737, 1
      %vm5866 = vcmp.eq.s32.totalorder %v5738, 1
      %vm5867 = vcmp.eq.s32.totalorder %v5739, 1
      %vm5868 = vcmp.eq.s32.totalorder %v5740, 1
      %vm5869 = vcmp.eq.s32.totalorder %v5741, 1
      %vm5870 = vcmp.eq.s32.totalorder %v5742, 1
      %vm5871 = vcmp.eq.s32.totalorder %v5743, 1
      %vm5872 = vcmp.eq.s32.totalorder %v5744, 1
      %vm5873 = vcmp.eq.s32.totalorder %v5745, 1
      %vm5874 = vcmp.eq.s32.totalorder %v5746, 1
      %v5875 = vsel %vm5747, %v3613, %v4981
      %v5876 = vsel %vm5748, %v3616, %v4984
      %v5877 = vsel %vm5749, %v3621, %v4989
      %v5878 = vsel %vm5750, %v3624, %v4992
      %v5879 = vsel %vm5751, %v3629, %v4997
      %v5880 = vsel %vm5752, %v3632, %v5000
      %v5881 = vsel %vm5753, %v3637, %v5005
      %v5882 = vsel %vm5754, %v3640, %v5008
      %v5883 = vsel %vm5755, %v3645, %v5013
      %v5884 = vsel %vm5756, %v3648, %v5016
      %v5885 = vsel %vm5757, %v3653, %v5021
      %v5886 = vsel %vm5758, %v3656, %v5024
      %v5887 = vsel %vm5759, %v3661, %v5029
      %v5888 = vsel %vm5760, %v3664, %v5032
      %v5889 = vsel %vm5761, %v3669, %v5037
      %v5890 = vsel %vm5762, %v3672, %v5040
      %v5891 = vsel %vm5763, %v3677, %v5045
      %v5892 = vsel %vm5764, %v3680, %v5048
      %v5893 = vsel %vm5765, %v3685, %v5053
      %v5894 = vsel %vm5766, %v3688, %v5056
      %v5895 = vsel %vm5767, %v3693, %v5061
      %v5896 = vsel %vm5768, %v3696, %v5064
      %v5897 = vsel %vm5769, %v3701, %v5069
      %v5898 = vsel %vm5770, %v3704, %v5072
      %v5899 = vsel %vm5771, %v3709, %v5077
      %v5900 = vsel %vm5772, %v3712, %v5080
      %v5901 = vsel %vm5773, %v3717, %v5085
      %v5902 = vsel %vm5774, %v3720, %v5088
      %v5903 = vsel %vm5775, %v3725, %v5093
      %v5904 = vsel %vm5776, %v3728, %v5096
      %v5905 = vsel %vm5777, %v3733, %v5101
      %v5906 = vsel %vm5778, %v3736, %v5104
      %v5907 = vsel %vm5779, %v3741, %v5109
      %v5908 = vsel %vm5780, %v3744, %v5112
      %v5909 = vsel %vm5781, %v3749, %v5117
      %v5910 = vsel %vm5782, %v3752, %v5120
      %v5911 = vsel %vm5783, %v3757, %v5125
      %v5912 = vsel %vm5784, %v3760, %v5128
      %v5913 = vsel %vm5785, %v3765, %v5133
      %v5914 = vsel %vm5786, %v3768, %v5136
      %v5915 = vsel %vm5787, %v3773, %v5141
      %v5916 = vsel %vm5788, %v3776, %v5144
      %v5917 = vsel %vm5789, %v3781, %v5149
      %v5918 = vsel %vm5790, %v3784, %v5152
      %v5919 = vsel %vm5791, %v3789, %v5157
      %v5920 = vsel %vm5792, %v3792, %v5160
      %v5921 = vsel %vm5793, %v3797, %v5165
      %v5922 = vsel %vm5794, %v3800, %v5168
      %v5923 = vsel %vm5795, %v3805, %v5173
      %v5924 = vsel %vm5796, %v3808, %v5176
      %v5925 = vsel %vm5797, %v3813, %v5181
      %v5926 = vsel %vm5798, %v3816, %v5184
      %v5927 = vsel %vm5799, %v3821, %v5189
      %v5928 = vsel %vm5800, %v3824, %v5192
      %v5929 = vsel %vm5801, %v3829, %v5197
      %v5930 = vsel %vm5802, %v3832, %v5200
      %v5931 = vsel %vm5803, %v3837, %v5205
      %v5932 = vsel %vm5804, %v3840, %v5208
      %v5933 = vsel %vm5805, %v3845, %v5213
      %v5934 = vsel %vm5806, %v3848, %v5216
      %v5935 = vsel %vm5807, %v3853, %v5221
      %v5936 = vsel %vm5808, %v3856, %v5224
      %v5937 = vsel %vm5809, %v3861, %v5229
      %v5938 = vsel %vm5810, %v3864, %v5232
      %v5939 = vsel %vm5811, %v3869, %v5237
      %v5940 = vsel %vm5812, %v3872, %v5240
      %v5941 = vsel %vm5813, %v3877, %v5245
      %v5942 = vsel %vm5814, %v3880, %v5248
      %v5943 = vsel %vm5815, %v3885, %v5253
      %v5944 = vsel %vm5816, %v3888, %v5256
      %v5945 = vsel %vm5817, %v3893, %v5261
      %v5946 = vsel %vm5818, %v3896, %v5264
      %v5947 = vsel %vm5819, %v3901, %v5269
      %v5948 = vsel %vm5820, %v3904, %v5272
      %v5949 = vsel %vm5821, %v3909, %v5277
      %v5950 = vsel %vm5822, %v3912, %v5280
      %v5951 = vsel %vm5823, %v3917, %v5285
      %v5952 = vsel %vm5824, %v3920, %v5288
      %v5953 = vsel %vm5825, %v3925, %v5293
      %v5954 = vsel %vm5826, %v3928, %v5296
      %v5955 = vsel %vm5827, %v3933, %v5301
      %v5956 = vsel %vm5828, %v3936, %v5304
      %v5957 = vsel %vm5829, %v3941, %v5309
      %v5958 = vsel %vm5830, %v3944, %v5312
      %v5959 = vsel %vm5831, %v3949, %v5317
      %v5960 = vsel %vm5832, %v3952, %v5320
      %v5961 = vsel %vm5833, %v3957, %v5325
      %v5962 = vsel %vm5834, %v3960, %v5328
      %v5963 = vsel %vm5835, %v3965, %v5333
      %v5964 = vsel %vm5836, %v3968, %v5336
      %v5965 = vsel %vm5837, %v3973, %v5341
      %v5966 = vsel %vm5838, %v3976, %v5344
      %v5967 = vsel %vm5839, %v3981, %v5349
      %v5968 = vsel %vm5840, %v3984, %v5352
      %v5969 = vsel %vm5841, %v3989, %v5357
      %v5970 = vsel %vm5842, %v3992, %v5360
      %v5971 = vsel %vm5843, %v3997, %v5365
      %v5972 = vsel %vm5844, %v4000, %v5368
      %v5973 = vsel %vm5845, %v4005, %v5373
      %v5974 = vsel %vm5846, %v4008, %v5376
      %v5975 = vsel %vm5847, %v4013, %v5381
      %v5976 = vsel %vm5848, %v4016, %v5384
      %v5977 = vsel %vm5849, %v4021, %v5389
      %v5978 = vsel %vm5850, %v4024, %v5392
      %v5979 = vsel %vm5851, %v4029, %v5397
      %v5980 = vsel %vm5852, %v4032, %v5400
      %v5981 = vsel %vm5853, %v4037, %v5405
      %v5982 = vsel %vm5854, %v4040, %v5408
      %v5983 = vsel %vm5855, %v4045, %v5413
      %v5984 = vsel %vm5856, %v4048, %v5416
      %v5985 = vsel %vm5857, %v4053, %v5421
      %v5986 = vsel %vm5858, %v4056, %v5424
      %v5987 = vsel %vm5859, %v4061, %v5429
      %v5988 = vsel %vm5860, %v4064, %v5432
      %v5989 = vsel %vm5861, %v4069, %v5437
      %v5990 = vsel %vm5862, %v4072, %v5440
      %v5991 = vsel %vm5863, %v4077, %v5445
      %v5992 = vsel %vm5864, %v4080, %v5448
      %v5993 = vsel %vm5865, %v4085, %v5453
      %v5994 = vsel %vm5866, %v4088, %v5456
      %v5995 = vsel %vm5867, %v4093, %v5461
      %v5996 = vsel %vm5868, %v4096, %v5464
      %v5997 = vsel %vm5869, %v4101, %v5469
      %v5998 = vsel %vm5870, %v4104, %v5472
      %v5999 = vsel %vm5871, %v4109, %v5477
      %v6000 = vsel %vm5872, %v4112, %v5480
      %v6001 = vsel %vm5873, %v4117, %v5485
      %v6002 = vsel %vm5874, %v4120, %v5488
      %v6003 = vpack.c.bf16 %v5876, %v5875
      %v6004 = vpack.c.bf16 %v5878, %v5877
      %v6005 = vpack.c.bf16 %v5880, %v5879
      %v6006 = vpack.c.bf16 %v5882, %v5881
      %v6007 = vpack.c.bf16 %v5884, %v5883
      %v6008 = vpack.c.bf16 %v5886, %v5885
      %v6009 = vpack.c.bf16 %v5888, %v5887
      %v6010 = vpack.c.bf16 %v5890, %v5889
      %v6011 = vpack.c.bf16 %v5892, %v5891
      %v6012 = vpack.c.bf16 %v5894, %v5893
      %v6013 = vpack.c.bf16 %v5896, %v5895
      %v6014 = vpack.c.bf16 %v5898, %v5897
      %v6015 = vpack.c.bf16 %v5900, %v5899
      %v6016 = vpack.c.bf16 %v5902, %v5901
      %v6017 = vpack.c.bf16 %v5904, %v5903
      %v6018 = vpack.c.bf16 %v5906, %v5905
      %v6019 = vpack.c.bf16 %v5908, %v5907
      %v6020 = vpack.c.bf16 %v5910, %v5909
      %v6021 = vpack.c.bf16 %v5912, %v5911
      %v6022 = vpack.c.bf16 %v5914, %v5913
      %v6023 = vpack.c.bf16 %v5916, %v5915
      %v6024 = vpack.c.bf16 %v5918, %v5917
      %v6025 = vpack.c.bf16 %v5920, %v5919
      %v6026 = vpack.c.bf16 %v5922, %v5921
      %v6027 = vpack.c.bf16 %v5924, %v5923
      %v6028 = vpack.c.bf16 %v5926, %v5925
      %v6029 = vpack.c.bf16 %v5928, %v5927
      %v6030 = vpack.c.bf16 %v5930, %v5929
      %v6031 = vpack.c.bf16 %v5932, %v5931
      %v6032 = vpack.c.bf16 %v5934, %v5933
      %v6033 = vpack.c.bf16 %v5936, %v5935
      %v6034 = vpack.c.bf16 %v5938, %v5937
      %v6035 = vpack.c.bf16 %v5940, %v5939
      %v6036 = vpack.c.bf16 %v5942, %v5941
      %v6037 = vpack.c.bf16 %v5944, %v5943
      %v6038 = vpack.c.bf16 %v5946, %v5945
      %v6039 = vpack.c.bf16 %v5948, %v5947
      %v6040 = vpack.c.bf16 %v5950, %v5949
      %v6041 = vpack.c.bf16 %v5952, %v5951
      %v6042 = vpack.c.bf16 %v5954, %v5953
      %v6043 = vpack.c.bf16 %v5956, %v5955
      %v6044 = vpack.c.bf16 %v5958, %v5957
      %v6045 = vpack.c.bf16 %v5960, %v5959
      %v6046 = vpack.c.bf16 %v5962, %v5961
      %v6047 = vpack.c.bf16 %v5964, %v5963
      %v6048 = vpack.c.bf16 %v5966, %v5965
      %v6049 = vpack.c.bf16 %v5968, %v5967
      %v6050 = vpack.c.bf16 %v5970, %v5969
      %v6051 = vpack.c.bf16 %v5972, %v5971
      %v6052 = vpack.c.bf16 %v5974, %v5973
      %v6053 = vpack.c.bf16 %v5976, %v5975
      %v6054 = vpack.c.bf16 %v5978, %v5977
      %v6055 = vpack.c.bf16 %v5980, %v5979
      %v6056 = vpack.c.bf16 %v5982, %v5981
      %v6057 = vpack.c.bf16 %v5984, %v5983
      %v6058 = vpack.c.bf16 %v5986, %v5985
      %v6059 = vpack.c.bf16 %v5988, %v5987
      %v6060 = vpack.c.bf16 %v5990, %v5989
      %v6061 = vpack.c.bf16 %v5992, %v5991
      %v6062 = vpack.c.bf16 %v5994, %v5993
      %v6063 = vpack.c.bf16 %v5996, %v5995
      %v6064 = vpack.c.bf16 %v5998, %v5997
      %v6065 = vpack.c.bf16 %v6000, %v5999
      %v6066 = vpack.c.bf16 %v6002, %v6001
      %v6067 = vld [vmem:[%s9] sm:$0xf]
      %v6068 = vld [vmem:[%s9 + $0x4] sm:$0xf]
      %v6069 = vld [vmem:[%s9 + $0x8] sm:$0xf]
      %v6070 = vld [vmem:[%s9 + $0xc] sm:$0xf]
      %v6071 = vld [vmem:[%s9 + $0x10] sm:$0xf]
      %v6072 = vld [vmem:[%s9 + $0x14] sm:$0xf]
      %v6073 = vld [vmem:[%s9 + $0x18] sm:$0xf]
      %v6074 = vld [vmem:[%s9 + $0x1c] sm:$0xf]
      %v6075 = vld [vmem:[%s9 + $0x20] sm:$0xf]
      %v6076 = vld [vmem:[%s9 + $0x24] sm:$0xf]
      %v6077 = vld [vmem:[%s9 + $0x28] sm:$0xf]
      %v6078 = vld [vmem:[%s9 + $0x2c] sm:$0xf]
      %v6079 = vld [vmem:[%s9 + $0x30] sm:$0xf]
      %v6080 = vld [vmem:[%s9 + $0x34] sm:$0xf]
      %v6081 = vld [vmem:[%s9 + $0x38] sm:$0xf]
      %v6082 = vld [vmem:[%s9 + $0x3c] sm:$0xf]
      %v6083 = vld [vmem:[%s10] sm:$0x1]
      %v6085 = vlaneseq
      %v6086 = vshrl.u32 %v6085, 7
      %v6087 = vsub.s32 0, %v6086
      %v6088 = vrot.slane %v6083, %v6087
      %v6106 = vunpack.c.l.b16 %v6067
      %v6107 = vunpack.c.l.b16 %v6068
      %v6108 = vunpack.c.l.b16 %v6069
      %v6109 = vunpack.c.l.b16 %v6070
      %v6110 = vunpack.c.l.b16 %v6071
      %v6111 = vunpack.c.l.b16 %v6072
      %v6112 = vunpack.c.l.b16 %v6073
      %v6113 = vunpack.c.l.b16 %v6074
      %v6114 = vunpack.c.l.b16 %v6075
      %v6115 = vunpack.c.l.b16 %v6076
      %v6116 = vunpack.c.l.b16 %v6077
      %v6117 = vunpack.c.l.b16 %v6078
      %v6118 = vunpack.c.l.b16 %v6079
      %v6119 = vunpack.c.l.b16 %v6080
      %v6120 = vunpack.c.l.b16 %v6081
      %v6121 = vunpack.c.l.b16 %v6082
      %v6122 = vpack.c.b16 %v6107, %v6106
      %v6123 = vpack.c.b16 %v6109, %v6108
      %v6124 = vpack.c.b16 %v6111, %v6110
      %v6125 = vpack.c.b16 %v6113, %v6112
      %v6126 = vpack.c.b16 %v6115, %v6114
      %v6127 = vpack.c.b16 %v6117, %v6116
      %v6128 = vpack.c.b16 %v6119, %v6118
      %v6129 = vpack.c.b16 %v6121, %v6120
      %6138 = vmatprep.subr.bf16.mxu0 0
      %6139 = vmatpush1.bf16.msra.mxu0 %v6129
      %6140 = vmatprep.subr.bf16.mxu0 0
      %6141 = vmatpush1.bf16.msra.mxu0 %v6128
      %6142 = vmatprep.subr.bf16.mxu0 0
      %6143 = vmatpush1.bf16.msra.mxu0 %v6127
      %6144 = vmatprep.subr.bf16.mxu0 0
      %6145 = vmatpush1.bf16.msra.mxu0 %v6126
      %6146 = vmatprep.subr.bf16.mxu0 0
      %6147 = vmatpush1.bf16.msra.mxu0 %v6125
      %6148 = vmatprep.subr.bf16.mxu0 0
      %6149 = vmatpush1.bf16.msra.mxu0 %v6124
      %6150 = vmatprep.subr.bf16.mxu0 0
      %6151 = vmatpush1.bf16.msra.mxu0 %v6123
      %6152 = vmatprep.subr.bf16.mxu0 0
      %6153 = vmatpush1.bf16.msra.mxu0 %v6122
      %6154 = vmatprep.subr.bf16.mxu0 0
      %6155 = vmatpush2.bf16.msra.mxu0 0
      %6156 = vmatprep.subr.bf16.mxu0 0
      %6157 = vmatpush2.bf16.msra.mxu0 0
      %6158 = vmatprep.subr.bf16.mxu0 0
      %6159 = vmatpush2.bf16.msra.mxu0 0
      %6160 = vmatprep.subr.bf16.mxu0 0
      %6161 = vmatpush2.bf16.msra.mxu0 0
      %6162 = vmatprep.subr.bf16.mxu0 0
      %6163 = vmatpush2.bf16.msra.mxu0 0
      %6164 = vmatprep.subr.bf16.mxu0 0
      %6165 = vmatpush2.bf16.msra.mxu0 0
      %6166 = vmatprep.subr.bf16.mxu0 0
      %6167 = vmatpush2.bf16.msra.mxu0 0
      %6168 = vmatprep.subr.bf16.mxu0 0
      %6169 = vmatpush2.bf16.msra.mxu0 0
      %6170 = vmatprep.mubr.bf16.mxu0 0
      %6171 = vmatmul.mubr.bf16.gmra.mxu0 %v6003
      %v6172 = vpop.f32.mrf.mxu0
      %v6173 = vadd.f32 %v6088, %v6172
      %v6174 = vpop.f32.mrf.mxu0
      %v6175 = vpop.f32.mrf.mxu0
      %v6176 = vadd.f32 %v6088, %v6175
      %v6177 = vpop.f32.mrf.mxu0
      %6178 = vmatprep.mubr.bf16.mxu0 0
      %6179 = vmatmul.mubr.bf16.gmra.mxu0 %v6004
      %v6180 = vpop.f32.mrf.mxu0
      %v6181 = vadd.f32 %v6088, %v6180
      %v6182 = vpop.f32.mrf.mxu0
      %v6183 = vpop.f32.mrf.mxu0
      %v6184 = vadd.f32 %v6088, %v6183
      %v6185 = vpop.f32.mrf.mxu0
      %6186 = vmatprep.mubr.bf16.mxu0 0
      %6187 = vmatmul.mubr.bf16.gmra.mxu0 %v6005
      %v6188 = vpop.f32.mrf.mxu0
      %v6189 = vadd.f32 %v6088, %v6188
      %v6190 = vpop.f32.mrf.mxu0
      %v6191 = vpop.f32.mrf.mxu0
      %v6192 = vadd.f32 %v6088, %v6191
      %v6193 = vpop.f32.mrf.mxu0
      %6194 = vmatprep.mubr.bf16.mxu0 0
      %6195 = vmatmul.mubr.bf16.gmra.mxu0 %v6006
      %v6196 = vpop.f32.mrf.mxu0
      %v6197 = vadd.f32 %v6088, %v6196
      %v6198 = vpop.f32.mrf.mxu0
      %v6199 = vpop.f32.mrf.mxu0
      %v6200 = vadd.f32 %v6088, %v6199
      %v6201 = vpop.f32.mrf.mxu0
      %6202 = vmatprep.mubr.bf16.mxu0 0
      %6203 = vmatmul.mubr.bf16.gmra.mxu0 %v6007
      %v6204 = vpop.f32.mrf.mxu0
      %v6205 = vadd.f32 %v6088, %v6204
      %v6206 = vpop.f32.mrf.mxu0
      %v6207 = vpop.f32.mrf.mxu0
      %v6208 = vadd.f32 %v6088, %v6207
      %v6209 = vpop.f32.mrf.mxu0
      %6210 = vmatprep.mubr.bf16.mxu0 0
      %6211 = vmatmul.mubr.bf16.gmra.mxu0 %v6008
      %v6212 = vpop.f32.mrf.mxu0
      %v6213 = vadd.f32 %v6088, %v6212
      %v6214 = vpop.f32.mrf.mxu0
      %v6215 = vpop.f32.mrf.mxu0
      %v6216 = vadd.f32 %v6088, %v6215
      %v6217 = vpop.f32.mrf.mxu0
      %6218 = vmatprep.mubr.bf16.mxu0 0
      %6219 = vmatmul.mubr.bf16.gmra.mxu0 %v6009
      %v6220 = vpop.f32.mrf.mxu0
      %v6221 = vadd.f32 %v6088, %v6220
      %v6222 = vpop.f32.mrf.mxu0
      %v6223 = vpop.f32.mrf.mxu0
      %v6224 = vadd.f32 %v6088, %v6223
      %v6225 = vpop.f32.mrf.mxu0
      %6226 = vmatprep.mubr.bf16.mxu0 0
      %6227 = vmatmul.mubr.bf16.gmra.mxu0 %v6010
      %v6228 = vpop.f32.mrf.mxu0
      %v6229 = vadd.f32 %v6088, %v6228
      %v6230 = vpop.f32.mrf.mxu0
      %v6231 = vpop.f32.mrf.mxu0
      %v6232 = vadd.f32 %v6088, %v6231
      %v6233 = vpop.f32.mrf.mxu0
      %6234 = vmatprep.mubr.bf16.mxu0 0
      %6235 = vmatmul.mubr.bf16.gmra.mxu0 %v6011
      %v6236 = vpop.f32.mrf.mxu0
      %v6237 = vadd.f32 %v6088, %v6236
      %v6238 = vpop.f32.mrf.mxu0
      %v6239 = vpop.f32.mrf.mxu0
      %v6240 = vadd.f32 %v6088, %v6239
      %v6241 = vpop.f32.mrf.mxu0
      %6242 = vmatprep.mubr.bf16.mxu0 0
      %6243 = vmatmul.mubr.bf16.gmra.mxu0 %v6012
      %v6244 = vpop.f32.mrf.mxu0
      %v6245 = vadd.f32 %v6088, %v6244
      %v6246 = vpop.f32.mrf.mxu0
      %v6247 = vpop.f32.mrf.mxu0
      %v6248 = vadd.f32 %v6088, %v6247
      %v6249 = vpop.f32.mrf.mxu0
      %6250 = vmatprep.mubr.bf16.mxu0 0
      %6251 = vmatmul.mubr.bf16.gmra.mxu0 %v6013
      %v6252 = vpop.f32.mrf.mxu0
      %v6253 = vadd.f32 %v6088, %v6252
      %v6254 = vpop.f32.mrf.mxu0
      %v6255 = vpop.f32.mrf.mxu0
      %v6256 = vadd.f32 %v6088, %v6255
      %v6257 = vpop.f32.mrf.mxu0
      %6258 = vmatprep.mubr.bf16.mxu0 0
      %6259 = vmatmul.mubr.bf16.gmra.mxu0 %v6014
      %v6260 = vpop.f32.mrf.mxu0
      %v6261 = vadd.f32 %v6088, %v6260
      %v6262 = vpop.f32.mrf.mxu0
      %v6263 = vpop.f32.mrf.mxu0
      %v6264 = vadd.f32 %v6088, %v6263
      %v6265 = vpop.f32.mrf.mxu0
      %6266 = vmatprep.mubr.bf16.mxu0 0
      %6267 = vmatmul.mubr.bf16.gmra.mxu0 %v6015
      %v6268 = vpop.f32.mrf.mxu0
      %v6269 = vadd.f32 %v6088, %v6268
      %v6270 = vpop.f32.mrf.mxu0
      %v6271 = vpop.f32.mrf.mxu0
      %v6272 = vadd.f32 %v6088, %v6271
      %v6273 = vpop.f32.mrf.mxu0
      %6274 = vmatprep.mubr.bf16.mxu0 0
      %6275 = vmatmul.mubr.bf16.gmra.mxu0 %v6016
      %v6276 = vpop.f32.mrf.mxu0
      %v6277 = vadd.f32 %v6088, %v6276
      %v6278 = vpop.f32.mrf.mxu0
      %v6279 = vpop.f32.mrf.mxu0
      %v6280 = vadd.f32 %v6088, %v6279
      %v6281 = vpop.f32.mrf.mxu0
      %6282 = vmatprep.mubr.bf16.mxu0 0
      %6283 = vmatmul.mubr.bf16.gmra.mxu0 %v6017
      %v6284 = vpop.f32.mrf.mxu0
      %v6285 = vadd.f32 %v6088, %v6284
      %v6286 = vpop.f32.mrf.mxu0
      %v6287 = vpop.f32.mrf.mxu0
      %v6288 = vadd.f32 %v6088, %v6287
      %v6289 = vpop.f32.mrf.mxu0
      %6290 = vmatprep.mubr.bf16.mxu0 0
      %6291 = vmatmul.mubr.bf16.gmra.mxu0 %v6018
      %v6292 = vpop.f32.mrf.mxu0
      %v6293 = vadd.f32 %v6088, %v6292
      %v6294 = vpop.f32.mrf.mxu0
      %v6295 = vpop.f32.mrf.mxu0
      %v6296 = vadd.f32 %v6088, %v6295
      %v6297 = vpop.f32.mrf.mxu0
      %6298 = vmatprep.mubr.bf16.mxu0 0
      %6299 = vmatmul.mubr.bf16.gmra.mxu0 %v6019
      %v6300 = vpop.f32.mrf.mxu0
      %v6301 = vadd.f32 %v6088, %v6300
      %v6302 = vpop.f32.mrf.mxu0
      %v6303 = vpop.f32.mrf.mxu0
      %v6304 = vadd.f32 %v6088, %v6303
      %v6305 = vpop.f32.mrf.mxu0
      %6306 = vmatprep.mubr.bf16.mxu0 0
      %6307 = vmatmul.mubr.bf16.gmra.mxu0 %v6020
      %v6308 = vpop.f32.mrf.mxu0
      %v6309 = vadd.f32 %v6088, %v6308
      %v6310 = vpop.f32.mrf.mxu0
      %v6311 = vpop.f32.mrf.mxu0
      %v6312 = vadd.f32 %v6088, %v6311
      %v6313 = vpop.f32.mrf.mxu0
      %6314 = vmatprep.mubr.bf16.mxu0 0
      %6315 = vmatmul.mubr.bf16.gmra.mxu0 %v6021
      %v6316 = vpop.f32.mrf.mxu0
      %v6317 = vadd.f32 %v6088, %v6316
      %v6318 = vpop.f32.mrf.mxu0
      %v6319 = vpop.f32.mrf.mxu0
      %v6320 = vadd.f32 %v6088, %v6319
      %v6321 = vpop.f32.mrf.mxu0
      %6322 = vmatprep.mubr.bf16.mxu0 0
      %6323 = vmatmul.mubr.bf16.gmra.mxu0 %v6022
      %v6324 = vpop.f32.mrf.mxu0
      %v6325 = vadd.f32 %v6088, %v6324
      %v6326 = vpop.f32.mrf.mxu0
      %v6327 = vpop.f32.mrf.mxu0
      %v6328 = vadd.f32 %v6088, %v6327
      %v6329 = vpop.f32.mrf.mxu0
      %6330 = vmatprep.mubr.bf16.mxu0 0
      %6331 = vmatmul.mubr.bf16.gmra.mxu0 %v6023
      %v6332 = vpop.f32.mrf.mxu0
      %v6333 = vadd.f32 %v6088, %v6332
      %v6334 = vpop.f32.mrf.mxu0
      %v6335 = vpop.f32.mrf.mxu0
      %v6336 = vadd.f32 %v6088, %v6335
      %v6337 = vpop.f32.mrf.mxu0
      %6338 = vmatprep.mubr.bf16.mxu0 0
      %6339 = vmatmul.mubr.bf16.gmra.mxu0 %v6024
      %v6340 = vpop.f32.mrf.mxu0
      %v6341 = vadd.f32 %v6088, %v6340
      %v6342 = vpop.f32.mrf.mxu0
      %v6343 = vpop.f32.mrf.mxu0
      %v6344 = vadd.f32 %v6088, %v6343
      %v6345 = vpop.f32.mrf.mxu0
      %6346 = vmatprep.mubr.bf16.mxu0 0
      %6347 = vmatmul.mubr.bf16.gmra.mxu0 %v6025
      %v6348 = vpop.f32.mrf.mxu0
      %v6349 = vadd.f32 %v6088, %v6348
      %v6350 = vpop.f32.mrf.mxu0
      %v6351 = vpop.f32.mrf.mxu0
      %v6352 = vadd.f32 %v6088, %v6351
      %v6353 = vpop.f32.mrf.mxu0
      %6354 = vmatprep.mubr.bf16.mxu0 0
      %6355 = vmatmul.mubr.bf16.gmra.mxu0 %v6026
      %v6356 = vpop.f32.mrf.mxu0
      %v6357 = vadd.f32 %v6088, %v6356
      %v6358 = vpop.f32.mrf.mxu0
      %v6359 = vpop.f32.mrf.mxu0
      %v6360 = vadd.f32 %v6088, %v6359
      %v6361 = vpop.f32.mrf.mxu0
      %6362 = vmatprep.mubr.bf16.mxu0 0
      %6363 = vmatmul.mubr.bf16.gmra.mxu0 %v6027
      %v6364 = vpop.f32.mrf.mxu0
      %v6365 = vadd.f32 %v6088, %v6364
      %v6366 = vpop.f32.mrf.mxu0
      %v6367 = vpop.f32.mrf.mxu0
      %v6368 = vadd.f32 %v6088, %v6367
      %v6369 = vpop.f32.mrf.mxu0
      %6370 = vmatprep.mubr.bf16.mxu0 0
      %6371 = vmatmul.mubr.bf16.gmra.mxu0 %v6028
      %v6372 = vpop.f32.mrf.mxu0
      %v6373 = vadd.f32 %v6088, %v6372
      %v6374 = vpop.f32.mrf.mxu0
      %v6375 = vpop.f32.mrf.mxu0
      %v6376 = vadd.f32 %v6088, %v6375
      %v6377 = vpop.f32.mrf.mxu0
      %6378 = vmatprep.mubr.bf16.mxu0 0
      %6379 = vmatmul.mubr.bf16.gmra.mxu0 %v6029
      %v6380 = vpop.f32.mrf.mxu0
      %v6381 = vadd.f32 %v6088, %v6380
      %v6382 = vpop.f32.mrf.mxu0
      %v6383 = vpop.f32.mrf.mxu0
      %v6384 = vadd.f32 %v6088, %v6383
      %v6385 = vpop.f32.mrf.mxu0
      %6386 = vmatprep.mubr.bf16.mxu0 0
      %6387 = vmatmul.mubr.bf16.gmra.mxu0 %v6030
      %v6388 = vpop.f32.mrf.mxu0
      %v6389 = vadd.f32 %v6088, %v6388
      %v6390 = vpop.f32.mrf.mxu0
      %v6391 = vpop.f32.mrf.mxu0
      %v6392 = vadd.f32 %v6088, %v6391
      %v6393 = vpop.f32.mrf.mxu0
      %6394 = vmatprep.mubr.bf16.mxu0 0
      %6395 = vmatmul.mubr.bf16.gmra.mxu0 %v6031
      %v6396 = vpop.f32.mrf.mxu0
      %v6397 = vadd.f32 %v6088, %v6396
      %v6398 = vpop.f32.mrf.mxu0
      %v6399 = vpop.f32.mrf.mxu0
      %v6400 = vadd.f32 %v6088, %v6399
      %v6401 = vpop.f32.mrf.mxu0
      %6402 = vmatprep.mubr.bf16.mxu0 0
      %6403 = vmatmul.mubr.bf16.gmra.mxu0 %v6032
      %v6404 = vpop.f32.mrf.mxu0
      %v6405 = vadd.f32 %v6088, %v6404
      %v6406 = vpop.f32.mrf.mxu0
      %v6407 = vpop.f32.mrf.mxu0
      %v6408 = vadd.f32 %v6088, %v6407
      %v6409 = vpop.f32.mrf.mxu0
      %6410 = vmatprep.mubr.bf16.mxu0 0
      %6411 = vmatmul.mubr.bf16.gmra.mxu0 %v6033
      %v6412 = vpop.f32.mrf.mxu0
      %v6413 = vadd.f32 %v6088, %v6412
      %v6414 = vpop.f32.mrf.mxu0
      %v6415 = vpop.f32.mrf.mxu0
      %v6416 = vadd.f32 %v6088, %v6415
      %v6417 = vpop.f32.mrf.mxu0
      %6418 = vmatprep.mubr.bf16.mxu0 0
      %6419 = vmatmul.mubr.bf16.gmra.mxu0 %v6034
      %v6420 = vpop.f32.mrf.mxu0
      %v6421 = vadd.f32 %v6088, %v6420
      %v6422 = vpop.f32.mrf.mxu0
      %v6423 = vpop.f32.mrf.mxu0
      %v6424 = vadd.f32 %v6088, %v6423
      %v6425 = vpop.f32.mrf.mxu0
      %6426 = vmatprep.mubr.bf16.mxu0 0
      %6427 = vmatmul.mubr.bf16.gmra.mxu0 %v6035
      %v6428 = vpop.f32.mrf.mxu0
      %v6429 = vadd.f32 %v6088, %v6428
      %v6430 = vpop.f32.mrf.mxu0
      %v6431 = vpop.f32.mrf.mxu0
      %v6432 = vadd.f32 %v6088, %v6431
      %v6433 = vpop.f32.mrf.mxu0
      %6434 = vmatprep.mubr.bf16.mxu0 0
      %6435 = vmatmul.mubr.bf16.gmra.mxu0 %v6036
      %v6436 = vpop.f32.mrf.mxu0
      %v6437 = vadd.f32 %v6088, %v6436
      %v6438 = vpop.f32.mrf.mxu0
      %v6439 = vpop.f32.mrf.mxu0
      %v6440 = vadd.f32 %v6088, %v6439
      %v6441 = vpop.f32.mrf.mxu0
      %6442 = vmatprep.mubr.bf16.mxu0 0
      %6443 = vmatmul.mubr.bf16.gmra.mxu0 %v6037
      %v6444 = vpop.f32.mrf.mxu0
      %v6445 = vadd.f32 %v6088, %v6444
      %v6446 = vpop.f32.mrf.mxu0
      %v6447 = vpop.f32.mrf.mxu0
      %v6448 = vadd.f32 %v6088, %v6447
      %v6449 = vpop.f32.mrf.mxu0
      %6450 = vmatprep.mubr.bf16.mxu0 0
      %6451 = vmatmul.mubr.bf16.gmra.mxu0 %v6038
      %v6452 = vpop.f32.mrf.mxu0
      %v6453 = vadd.f32 %v6088, %v6452
      %v6454 = vpop.f32.mrf.mxu0
      %v6455 = vpop.f32.mrf.mxu0
      %v6456 = vadd.f32 %v6088, %v6455
      %v6457 = vpop.f32.mrf.mxu0
      %6458 = vmatprep.mubr.bf16.mxu0 0
      %6459 = vmatmul.mubr.bf16.gmra.mxu0 %v6039
      %v6460 = vpop.f32.mrf.mxu0
      %v6461 = vadd.f32 %v6088, %v6460
      %v6462 = vpop.f32.mrf.mxu0
      %v6463 = vpop.f32.mrf.mxu0
      %v6464 = vadd.f32 %v6088, %v6463
      %v6465 = vpop.f32.mrf.mxu0
      %6466 = vmatprep.mubr.bf16.mxu0 0
      %6467 = vmatmul.mubr.bf16.gmra.mxu0 %v6040
      %v6468 = vpop.f32.mrf.mxu0
      %v6469 = vadd.f32 %v6088, %v6468
      %v6470 = vpop.f32.mrf.mxu0
      %v6471 = vpop.f32.mrf.mxu0
      %v6472 = vadd.f32 %v6088, %v6471
      %v6473 = vpop.f32.mrf.mxu0
      %6474 = vmatprep.mubr.bf16.mxu0 0
      %6475 = vmatmul.mubr.bf16.gmra.mxu0 %v6041
      %v6476 = vpop.f32.mrf.mxu0
      %v6477 = vadd.f32 %v6088, %v6476
      %v6478 = vpop.f32.mrf.mxu0
      %v6479 = vpop.f32.mrf.mxu0
      %v6480 = vadd.f32 %v6088, %v6479
      %v6481 = vpop.f32.mrf.mxu0
      %6482 = vmatprep.mubr.bf16.mxu0 0
      %6483 = vmatmul.mubr.bf16.gmra.mxu0 %v6042
      %v6484 = vpop.f32.mrf.mxu0
      %v6485 = vadd.f32 %v6088, %v6484
      %v6486 = vpop.f32.mrf.mxu0
      %v6487 = vpop.f32.mrf.mxu0
      %v6488 = vadd.f32 %v6088, %v6487
      %v6489 = vpop.f32.mrf.mxu0
      %6490 = vmatprep.mubr.bf16.mxu0 0
      %6491 = vmatmul.mubr.bf16.gmra.mxu0 %v6043
      %v6492 = vpop.f32.mrf.mxu0
      %v6493 = vadd.f32 %v6088, %v6492
      %v6494 = vpop.f32.mrf.mxu0
      %v6495 = vpop.f32.mrf.mxu0
      %v6496 = vadd.f32 %v6088, %v6495
      %v6497 = vpop.f32.mrf.mxu0
      %6498 = vmatprep.mubr.bf16.mxu0 0
      %6499 = vmatmul.mubr.bf16.gmra.mxu0 %v6044
      %v6500 = vpop.f32.mrf.mxu0
      %v6501 = vadd.f32 %v6088, %v6500
      %v6502 = vpop.f32.mrf.mxu0
      %v6503 = vpop.f32.mrf.mxu0
      %v6504 = vadd.f32 %v6088, %v6503
      %v6505 = vpop.f32.mrf.mxu0
      %6506 = vmatprep.mubr.bf16.mxu0 0
      %6507 = vmatmul.mubr.bf16.gmra.mxu0 %v6045
      %v6508 = vpop.f32.mrf.mxu0
      %v6509 = vadd.f32 %v6088, %v6508
      %v6510 = vpop.f32.mrf.mxu0
      %v6511 = vpop.f32.mrf.mxu0
      %v6512 = vadd.f32 %v6088, %v6511
      %v6513 = vpop.f32.mrf.mxu0
      %6514 = vmatprep.mubr.bf16.mxu0 0
      %6515 = vmatmul.mubr.bf16.gmra.mxu0 %v6046
      %v6516 = vpop.f32.mrf.mxu0
      %v6517 = vadd.f32 %v6088, %v6516
      %v6518 = vpop.f32.mrf.mxu0
      %v6519 = vpop.f32.mrf.mxu0
      %v6520 = vadd.f32 %v6088, %v6519
      %v6521 = vpop.f32.mrf.mxu0
      %6522 = vmatprep.mubr.bf16.mxu0 0
      %6523 = vmatmul.mubr.bf16.gmra.mxu0 %v6047
      %v6524 = vpop.f32.mrf.mxu0
      %v6525 = vadd.f32 %v6088, %v6524
      %v6526 = vpop.f32.mrf.mxu0
      %v6527 = vpop.f32.mrf.mxu0
      %v6528 = vadd.f32 %v6088, %v6527
      %v6529 = vpop.f32.mrf.mxu0
      %6530 = vmatprep.mubr.bf16.mxu0 0
      %6531 = vmatmul.mubr.bf16.gmra.mxu0 %v6048
      %v6532 = vpop.f32.mrf.mxu0
      %v6533 = vadd.f32 %v6088, %v6532
      %v6534 = vpop.f32.mrf.mxu0
      %v6535 = vpop.f32.mrf.mxu0
      %v6536 = vadd.f32 %v6088, %v6535
      %v6537 = vpop.f32.mrf.mxu0
      %6538 = vmatprep.mubr.bf16.mxu0 0
      %6539 = vmatmul.mubr.bf16.gmra.mxu0 %v6049
      %v6540 = vpop.f32.mrf.mxu0
      %v6541 = vadd.f32 %v6088, %v6540
      %v6542 = vpop.f32.mrf.mxu0
      %v6543 = vpop.f32.mrf.mxu0
      %v6544 = vadd.f32 %v6088, %v6543
      %v6545 = vpop.f32.mrf.mxu0
      %6546 = vmatprep.mubr.bf16.mxu0 0
      %6547 = vmatmul.mubr.bf16.gmra.mxu0 %v6050
      %v6548 = vpop.f32.mrf.mxu0
      %v6549 = vadd.f32 %v6088, %v6548
      %v6550 = vpop.f32.mrf.mxu0
      %v6551 = vpop.f32.mrf.mxu0
      %v6552 = vadd.f32 %v6088, %v6551
      %v6553 = vpop.f32.mrf.mxu0
      %6554 = vmatprep.mubr.bf16.mxu0 0
      %6555 = vmatmul.mubr.bf16.gmra.mxu0 %v6051
      %v6556 = vpop.f32.mrf.mxu0
      %v6557 = vadd.f32 %v6088, %v6556
      %v6558 = vpop.f32.mrf.mxu0
      %v6559 = vpop.f32.mrf.mxu0
      %v6560 = vadd.f32 %v6088, %v6559
      %v6561 = vpop.f32.mrf.mxu0
      %6562 = vmatprep.mubr.bf16.mxu0 0
      %6563 = vmatmul.mubr.bf16.gmra.mxu0 %v6052
      %v6564 = vpop.f32.mrf.mxu0
      %v6565 = vadd.f32 %v6088, %v6564
      %v6566 = vpop.f32.mrf.mxu0
      %v6567 = vpop.f32.mrf.mxu0
      %v6568 = vadd.f32 %v6088, %v6567
      %v6569 = vpop.f32.mrf.mxu0
      %6570 = vmatprep.mubr.bf16.mxu0 0
      %6571 = vmatmul.mubr.bf16.gmra.mxu0 %v6053
      %v6572 = vpop.f32.mrf.mxu0
      %v6573 = vadd.f32 %v6088, %v6572
      %v6574 = vpop.f32.mrf.mxu0
      %v6575 = vpop.f32.mrf.mxu0
      %v6576 = vadd.f32 %v6088, %v6575
      %v6577 = vpop.f32.mrf.mxu0
      %6578 = vmatprep.mubr.bf16.mxu0 0
      %6579 = vmatmul.mubr.bf16.gmra.mxu0 %v6054
      %v6580 = vpop.f32.mrf.mxu0
      %v6581 = vadd.f32 %v6088, %v6580
      %v6582 = vpop.f32.mrf.mxu0
      %v6583 = vpop.f32.mrf.mxu0
      %v6584 = vadd.f32 %v6088, %v6583
      %v6585 = vpop.f32.mrf.mxu0
      %6586 = vmatprep.mubr.bf16.mxu0 0
      %6587 = vmatmul.mubr.bf16.gmra.mxu0 %v6055
      %v6588 = vpop.f32.mrf.mxu0
      %v6589 = vadd.f32 %v6088, %v6588
      %v6590 = vpop.f32.mrf.mxu0
      %v6591 = vpop.f32.mrf.mxu0
      %v6592 = vadd.f32 %v6088, %v6591
      %v6593 = vpop.f32.mrf.mxu0
      %6594 = vmatprep.mubr.bf16.mxu0 0
      %6595 = vmatmul.mubr.bf16.gmra.mxu0 %v6056
      %v6596 = vpop.f32.mrf.mxu0
      %v6597 = vadd.f32 %v6088, %v6596
      %v6598 = vpop.f32.mrf.mxu0
      %v6599 = vpop.f32.mrf.mxu0
      %v6600 = vadd.f32 %v6088, %v6599
      %v6601 = vpop.f32.mrf.mxu0
      %6602 = vmatprep.mubr.bf16.mxu0 0
      %6603 = vmatmul.mubr.bf16.gmra.mxu0 %v6057
      %v6604 = vpop.f32.mrf.mxu0
      %v6605 = vadd.f32 %v6088, %v6604
      %v6606 = vpop.f32.mrf.mxu0
      %v6607 = vpop.f32.mrf.mxu0
      %v6608 = vadd.f32 %v6088, %v6607
      %v6609 = vpop.f32.mrf.mxu0
      %6610 = vmatprep.mubr.bf16.mxu0 0
      %6611 = vmatmul.mubr.bf16.gmra.mxu0 %v6058
      %v6612 = vpop.f32.mrf.mxu0
      %v6613 = vadd.f32 %v6088, %v6612
      %v6614 = vpop.f32.mrf.mxu0
      %v6615 = vpop.f32.mrf.mxu0
      %v6616 = vadd.f32 %v6088, %v6615
      %v6617 = vpop.f32.mrf.mxu0
      %6618 = vmatprep.mubr.bf16.mxu0 0
      %6619 = vmatmul.mubr.bf16.gmra.mxu0 %v6059
      %v6620 = vpop.f32.mrf.mxu0
      %v6621 = vadd.f32 %v6088, %v6620
      %v6622 = vpop.f32.mrf.mxu0
      %v6623 = vpop.f32.mrf.mxu0
      %v6624 = vadd.f32 %v6088, %v6623
      %v6625 = vpop.f32.mrf.mxu0
      %6626 = vmatprep.mubr.bf16.mxu0 0
      %6627 = vmatmul.mubr.bf16.gmra.mxu0 %v6060
      %v6628 = vpop.f32.mrf.mxu0
      %v6629 = vadd.f32 %v6088, %v6628
      %v6630 = vpop.f32.mrf.mxu0
      %v6631 = vpop.f32.mrf.mxu0
      %v6632 = vadd.f32 %v6088, %v6631
      %v6633 = vpop.f32.mrf.mxu0
      %6634 = vmatprep.mubr.bf16.mxu0 0
      %6635 = vmatmul.mubr.bf16.gmra.mxu0 %v6061
      %v6636 = vpop.f32.mrf.mxu0
      %v6637 = vadd.f32 %v6088, %v6636
      %v6638 = vpop.f32.mrf.mxu0
      %v6639 = vpop.f32.mrf.mxu0
      %v6640 = vadd.f32 %v6088, %v6639
      %v6641 = vpop.f32.mrf.mxu0
      %6642 = vmatprep.mubr.bf16.mxu0 0
      %6643 = vmatmul.mubr.bf16.gmra.mxu0 %v6062
      %v6644 = vpop.f32.mrf.mxu0
      %v6645 = vadd.f32 %v6088, %v6644
      %v6646 = vpop.f32.mrf.mxu0
      %v6647 = vpop.f32.mrf.mxu0
      %v6648 = vadd.f32 %v6088, %v6647
      %v6649 = vpop.f32.mrf.mxu0
      %6650 = vmatprep.mubr.bf16.mxu0 0
      %6651 = vmatmul.mubr.bf16.gmra.mxu0 %v6063
      %v6652 = vpop.f32.mrf.mxu0
      %v6653 = vadd.f32 %v6088, %v6652
      %v6654 = vpop.f32.mrf.mxu0
      %v6655 = vpop.f32.mrf.mxu0
      %v6656 = vadd.f32 %v6088, %v6655
      %v6657 = vpop.f32.mrf.mxu0
      %6658 = vmatprep.mubr.bf16.mxu0 0
      %6659 = vmatmul.mubr.bf16.gmra.mxu0 %v6064
      %v6660 = vpop.f32.mrf.mxu0
      %v6661 = vadd.f32 %v6088, %v6660
      %v6662 = vpop.f32.mrf.mxu0
      %v6663 = vpop.f32.mrf.mxu0
      %v6664 = vadd.f32 %v6088, %v6663
      %v6665 = vpop.f32.mrf.mxu0
      %6666 = vmatprep.mubr.bf16.mxu0 0
      %6667 = vmatmul.mubr.bf16.gmra.mxu0 %v6065
      %v6668 = vpop.f32.mrf.mxu0
      %v6669 = vadd.f32 %v6088, %v6668
      %v6670 = vpop.f32.mrf.mxu0
      %v6671 = vpop.f32.mrf.mxu0
      %v6672 = vadd.f32 %v6088, %v6671
      %v6673 = vpop.f32.mrf.mxu0
      %6674 = vmatprep.mubr.bf16.mxu0 0
      %6675 = vmatmul.mubr.bf16.gmra.mxu0 %v6066
      %v6676 = vpop.f32.mrf.mxu0
      %v6677 = vadd.f32 %v6088, %v6676
      %v6678 = vpop.f32.mrf.mxu0
      %v6679 = vpop.f32.mrf.mxu0
      %v6680 = vadd.f32 %v6088, %v6679
      %v6681 = vpop.f32.mrf.mxu0
      %6682 = vdwg.mxu0
      %v6683 = vmax.f32 %v6173, 0.0
      %v6684 = vmax.f32 %v6176, 0.0
      %v6685 = vmax.f32 %v6181, 0.0
      %v6686 = vmax.f32 %v6184, 0.0
      %v6687 = vmax.f32 %v6189, 0.0
      %v6688 = vmax.f32 %v6192, 0.0
      %v6689 = vmax.f32 %v6197, 0.0
      %v6690 = vmax.f32 %v6200, 0.0
      %v6691 = vmax.f32 %v6205, 0.0
      %v6692 = vmax.f32 %v6208, 0.0
      %v6693 = vmax.f32 %v6213, 0.0
      %v6694 = vmax.f32 %v6216, 0.0
      %v6695 = vmax.f32 %v6221, 0.0
      %v6696 = vmax.f32 %v6224, 0.0
      %v6697 = vmax.f32 %v6229, 0.0
      %v6698 = vmax.f32 %v6232, 0.0
      %v6699 = vmax.f32 %v6237, 0.0
      %v6700 = vmax.f32 %v6240, 0.0
      %v6701 = vmax.f32 %v6245, 0.0
      %v6702 = vmax.f32 %v6248, 0.0
      %v6703 = vmax.f32 %v6253, 0.0
      %v6704 = vmax.f32 %v6256, 0.0
      %v6705 = vmax.f32 %v6261, 0.0
      %v6706 = vmax.f32 %v6264, 0.0
      %v6707 = vmax.f32 %v6269, 0.0
      %v6708 = vmax.f32 %v6272, 0.0
      %v6709 = vmax.f32 %v6277, 0.0
      %v6710 = vmax.f32 %v6280, 0.0
      %v6711 = vmax.f32 %v6285, 0.0
      %v6712 = vmax.f32 %v6288, 0.0
      %v6713 = vmax.f32 %v6293, 0.0
      %v6714 = vmax.f32 %v6296, 0.0
      %v6715 = vmax.f32 %v6301, 0.0
      %v6716 = vmax.f32 %v6304, 0.0
      %v6717 = vmax.f32 %v6309, 0.0
      %v6718 = vmax.f32 %v6312, 0.0
      %v6719 = vmax.f32 %v6317, 0.0
      %v6720 = vmax.f32 %v6320, 0.0
      %v6721 = vmax.f32 %v6325, 0.0
      %v6722 = vmax.f32 %v6328, 0.0
      %v6723 = vmax.f32 %v6333, 0.0
      %v6724 = vmax.f32 %v6336, 0.0
      %v6725 = vmax.f32 %v6341, 0.0
      %v6726 = vmax.f32 %v6344, 0.0
      %v6727 = vmax.f32 %v6349, 0.0
      %v6728 = vmax.f32 %v6352, 0.0
      %v6729 = vmax.f32 %v6357, 0.0
      %v6730 = vmax.f32 %v6360, 0.0
      %v6731 = vmax.f32 %v6365, 0.0
      %v6732 = vmax.f32 %v6368, 0.0
      %v6733 = vmax.f32 %v6373, 0.0
      %v6734 = vmax.f32 %v6376, 0.0
      %v6735 = vmax.f32 %v6381, 0.0
      %v6736 = vmax.f32 %v6384, 0.0
      %v6737 = vmax.f32 %v6389, 0.0
      %v6738 = vmax.f32 %v6392, 0.0
      %v6739 = vmax.f32 %v6397, 0.0
      %v6740 = vmax.f32 %v6400, 0.0
      %v6741 = vmax.f32 %v6405, 0.0
      %v6742 = vmax.f32 %v6408, 0.0
      %v6743 = vmax.f32 %v6413, 0.0
      %v6744 = vmax.f32 %v6416, 0.0
      %v6745 = vmax.f32 %v6421, 0.0
      %v6746 = vmax.f32 %v6424, 0.0
      %v6747 = vmax.f32 %v6429, 0.0
      %v6748 = vmax.f32 %v6432, 0.0
      %v6749 = vmax.f32 %v6437, 0.0
      %v6750 = vmax.f32 %v6440, 0.0
      %v6751 = vmax.f32 %v6445, 0.0
      %v6752 = vmax.f32 %v6448, 0.0
      %v6753 = vmax.f32 %v6453, 0.0
      %v6754 = vmax.f32 %v6456, 0.0
      %v6755 = vmax.f32 %v6461, 0.0
      %v6756 = vmax.f32 %v6464, 0.0
      %v6757 = vmax.f32 %v6469, 0.0
      %v6758 = vmax.f32 %v6472, 0.0
      %v6759 = vmax.f32 %v6477, 0.0
      %v6760 = vmax.f32 %v6480, 0.0
      %v6761 = vmax.f32 %v6485, 0.0
      %v6762 = vmax.f32 %v6488, 0.0
      %v6763 = vmax.f32 %v6493, 0.0
      %v6764 = vmax.f32 %v6496, 0.0
      %v6765 = vmax.f32 %v6501, 0.0
      %v6766 = vmax.f32 %v6504, 0.0
      %v6767 = vmax.f32 %v6509, 0.0
      %v6768 = vmax.f32 %v6512, 0.0
      %v6769 = vmax.f32 %v6517, 0.0
      %v6770 = vmax.f32 %v6520, 0.0
      %v6771 = vmax.f32 %v6525, 0.0
      %v6772 = vmax.f32 %v6528, 0.0
      %v6773 = vmax.f32 %v6533, 0.0
      %v6774 = vmax.f32 %v6536, 0.0
      %v6775 = vmax.f32 %v6541, 0.0
      %v6776 = vmax.f32 %v6544, 0.0
      %v6777 = vmax.f32 %v6549, 0.0
      %v6778 = vmax.f32 %v6552, 0.0
      %v6779 = vmax.f32 %v6557, 0.0
      %v6780 = vmax.f32 %v6560, 0.0
      %v6781 = vmax.f32 %v6565, 0.0
      %v6782 = vmax.f32 %v6568, 0.0
      %v6783 = vmax.f32 %v6573, 0.0
      %v6784 = vmax.f32 %v6576, 0.0
      %v6785 = vmax.f32 %v6581, 0.0
      %v6786 = vmax.f32 %v6584, 0.0
      %v6787 = vmax.f32 %v6589, 0.0
      %v6788 = vmax.f32 %v6592, 0.0
      %v6789 = vmax.f32 %v6597, 0.0
      %v6790 = vmax.f32 %v6600, 0.0
      %v6791 = vmax.f32 %v6605, 0.0
      %v6792 = vmax.f32 %v6608, 0.0
      %v6793 = vmax.f32 %v6613, 0.0
      %v6794 = vmax.f32 %v6616, 0.0
      %v6795 = vmax.f32 %v6621, 0.0
      %v6796 = vmax.f32 %v6624, 0.0
      %v6797 = vmax.f32 %v6629, 0.0
      %v6798 = vmax.f32 %v6632, 0.0
      %v6799 = vmax.f32 %v6637, 0.0
      %v6800 = vmax.f32 %v6640, 0.0
      %v6801 = vmax.f32 %v6645, 0.0
      %v6802 = vmax.f32 %v6648, 0.0
      %v6803 = vmax.f32 %v6653, 0.0
      %v6804 = vmax.f32 %v6656, 0.0
      %v6805 = vmax.f32 %v6661, 0.0
      %v6806 = vmax.f32 %v6664, 0.0
      %v6807 = vmax.f32 %v6669, 0.0
      %v6808 = vmax.f32 %v6672, 0.0
      %v6809 = vmax.f32 %v6677, 0.0
      %v6810 = vmax.f32 %v6680, 0.0
      %v6811 = vpack.c.bf16 %v6684, %v6683
      %v6812 = vpack.c.bf16 %v6686, %v6685
      %v6813 = vpack.c.bf16 %v6688, %v6687
      %v6814 = vpack.c.bf16 %v6690, %v6689
      %v6815 = vpack.c.bf16 %v6692, %v6691
      %v6816 = vpack.c.bf16 %v6694, %v6693
      %v6817 = vpack.c.bf16 %v6696, %v6695
      %v6818 = vpack.c.bf16 %v6698, %v6697
      %v6819 = vpack.c.bf16 %v6700, %v6699
      %v6820 = vpack.c.bf16 %v6702, %v6701
      %v6821 = vpack.c.bf16 %v6704, %v6703
      %v6822 = vpack.c.bf16 %v6706, %v6705
      %v6823 = vpack.c.bf16 %v6708, %v6707
      %v6824 = vpack.c.bf16 %v6710, %v6709
      %v6825 = vpack.c.bf16 %v6712, %v6711
      %v6826 = vpack.c.bf16 %v6714, %v6713
      %v6827 = vpack.c.bf16 %v6716, %v6715
      %v6828 = vpack.c.bf16 %v6718, %v6717
      %v6829 = vpack.c.bf16 %v6720, %v6719
      %v6830 = vpack.c.bf16 %v6722, %v6721
      %v6831 = vpack.c.bf16 %v6724, %v6723
      %v6832 = vpack.c.bf16 %v6726, %v6725
      %v6833 = vpack.c.bf16 %v6728, %v6727
      %v6834 = vpack.c.bf16 %v6730, %v6729
      %v6835 = vpack.c.bf16 %v6732, %v6731
      %v6836 = vpack.c.bf16 %v6734, %v6733
      %v6837 = vpack.c.bf16 %v6736, %v6735
      %v6838 = vpack.c.bf16 %v6738, %v6737
      %v6839 = vpack.c.bf16 %v6740, %v6739
      %v6840 = vpack.c.bf16 %v6742, %v6741
      %v6841 = vpack.c.bf16 %v6744, %v6743
      %v6842 = vpack.c.bf16 %v6746, %v6745
      %v6843 = vpack.c.bf16 %v6748, %v6747
      %v6844 = vpack.c.bf16 %v6750, %v6749
      %v6845 = vpack.c.bf16 %v6752, %v6751
      %v6846 = vpack.c.bf16 %v6754, %v6753
      %v6847 = vpack.c.bf16 %v6756, %v6755
      %v6848 = vpack.c.bf16 %v6758, %v6757
      %v6849 = vpack.c.bf16 %v6760, %v6759
      %v6850 = vpack.c.bf16 %v6762, %v6761
      %v6851 = vpack.c.bf16 %v6764, %v6763
      %v6852 = vpack.c.bf16 %v6766, %v6765
      %v6853 = vpack.c.bf16 %v6768, %v6767
      %v6854 = vpack.c.bf16 %v6770, %v6769
      %v6855 = vpack.c.bf16 %v6772, %v6771
      %v6856 = vpack.c.bf16 %v6774, %v6773
      %v6857 = vpack.c.bf16 %v6776, %v6775
      %v6858 = vpack.c.bf16 %v6778, %v6777
      %v6859 = vpack.c.bf16 %v6780, %v6779
      %v6860 = vpack.c.bf16 %v6782, %v6781
      %v6861 = vpack.c.bf16 %v6784, %v6783
      %v6862 = vpack.c.bf16 %v6786, %v6785
      %v6863 = vpack.c.bf16 %v6788, %v6787
      %v6864 = vpack.c.bf16 %v6790, %v6789
      %v6865 = vpack.c.bf16 %v6792, %v6791
      %v6866 = vpack.c.bf16 %v6794, %v6793
      %v6867 = vpack.c.bf16 %v6796, %v6795
      %v6868 = vpack.c.bf16 %v6798, %v6797
      %v6869 = vpack.c.bf16 %v6800, %v6799
      %v6870 = vpack.c.bf16 %v6802, %v6801
      %v6871 = vpack.c.bf16 %v6804, %v6803
      %v6872 = vpack.c.bf16 %v6806, %v6805
      %v6873 = vpack.c.bf16 %v6808, %v6807
      %v6874 = vpack.c.bf16 %v6810, %v6809
      %v6875 = vld [vmem:[%s11] sm:$0xf]
      %v6876 = vld [vmem:[%s11 + $0x4] sm:$0xf]
      %v6877 = vld [vmem:[%s11 + $0x8] sm:$0xf]
      %v6878 = vld [vmem:[%s11 + $0xc] sm:$0xf]
      %v6879 = vld [vmem:[%s11 + $0x10] sm:$0xf]
      %v6880 = vld [vmem:[%s11 + $0x14] sm:$0xf]
      %v6881 = vld [vmem:[%s11 + $0x18] sm:$0xf]
      %v6882 = vld [vmem:[%s11 + $0x1c] sm:$0xf]
      %v6883 = vld [vmem:[%s11 + $0x20] sm:$0xf]
      %v6884 = vld [vmem:[%s11 + $0x24] sm:$0xf]
      %v6885 = vld [vmem:[%s11 + $0x28] sm:$0xf]
      %v6886 = vld [vmem:[%s11 + $0x2c] sm:$0xf]
      %v6887 = vld [vmem:[%s11 + $0x30] sm:$0xf]
      %v6888 = vld [vmem:[%s11 + $0x34] sm:$0xf]
      %v6889 = vld [vmem:[%s11 + $0x38] sm:$0xf]
      %v6890 = vld [vmem:[%s11 + $0x3c] sm:$0xf]
      %v6891 = vld [vmem:[%s12] sm:$0x1]
      %v6893 = vlaneseq
      %v6894 = vshrl.u32 %v6893, 7
      %v6895 = vsub.s32 0, %v6894
      %v6896 = vrot.slane %v6891, %v6895
      %v6914 = vunpack.c.l.b16 %v6875
      %v6915 = vunpack.c.l.b16 %v6876
      %v6916 = vunpack.c.l.b16 %v6877
      %v6917 = vunpack.c.l.b16 %v6878
      %v6918 = vunpack.c.l.b16 %v6879
      %v6919 = vunpack.c.l.b16 %v6880
      %v6920 = vunpack.c.l.b16 %v6881
      %v6921 = vunpack.c.l.b16 %v6882
      %v6922 = vunpack.c.l.b16 %v6883
      %v6923 = vunpack.c.l.b16 %v6884
      %v6924 = vunpack.c.l.b16 %v6885
      %v6925 = vunpack.c.l.b16 %v6886
      %v6926 = vunpack.c.l.b16 %v6887
      %v6927 = vunpack.c.l.b16 %v6888
      %v6928 = vunpack.c.l.b16 %v6889
      %v6929 = vunpack.c.l.b16 %v6890
      %v6930 = vpack.c.b16 %v6915, %v6914
      %v6931 = vpack.c.b16 %v6917, %v6916
      %v6932 = vpack.c.b16 %v6919, %v6918
      %v6933 = vpack.c.b16 %v6921, %v6920
      %v6934 = vpack.c.b16 %v6923, %v6922
      %v6935 = vpack.c.b16 %v6925, %v6924
      %v6936 = vpack.c.b16 %v6927, %v6926
      %v6937 = vpack.c.b16 %v6929, %v6928
      %6946 = vmatprep.subr.bf16.mxu0 0
      %6947 = vmatpush1.bf16.msra.mxu0 %v6937
      %6948 = vmatprep.subr.bf16.mxu0 0
      %6949 = vmatpush1.bf16.msra.mxu0 %v6936
      %6950 = vmatprep.subr.bf16.mxu0 0
      %6951 = vmatpush1.bf16.msra.mxu0 %v6935
      %6952 = vmatprep.subr.bf16.mxu0 0
      %6953 = vmatpush1.bf16.msra.mxu0 %v6934
      %6954 = vmatprep.subr.bf16.mxu0 0
      %6955 = vmatpush1.bf16.msra.mxu0 %v6933
      %6956 = vmatprep.subr.bf16.mxu0 0
      %6957 = vmatpush1.bf16.msra.mxu0 %v6932
      %6958 = vmatprep.subr.bf16.mxu0 0
      %6959 = vmatpush1.bf16.msra.mxu0 %v6931
      %6960 = vmatprep.subr.bf16.mxu0 0
      %6961 = vmatpush1.bf16.msra.mxu0 %v6930
      %6962 = vmatprep.subr.bf16.mxu0 0
      %6963 = vmatpush2.bf16.msra.mxu0 0
      %6964 = vmatprep.subr.bf16.mxu0 0
      %6965 = vmatpush2.bf16.msra.mxu0 0
      %6966 = vmatprep.subr.bf16.mxu0 0
      %6967 = vmatpush2.bf16.msra.mxu0 0
      %6968 = vmatprep.subr.bf16.mxu0 0
      %6969 = vmatpush2.bf16.msra.mxu0 0
      %6970 = vmatprep.subr.bf16.mxu0 0
      %6971 = vmatpush2.bf16.msra.mxu0 0
      %6972 = vmatprep.subr.bf16.mxu0 0
      %6973 = vmatpush2.bf16.msra.mxu0 0
      %6974 = vmatprep.subr.bf16.mxu0 0
      %6975 = vmatpush2.bf16.msra.mxu0 0
      %6976 = vmatprep.subr.bf16.mxu0 0
      %6977 = vmatpush2.bf16.msra.mxu0 0
      %6978 = vmatprep.mubr.bf16.mxu0 0
      %6979 = vmatmul.mubr.bf16.gmra.mxu0 %v6811
      %v6980 = vpop.f32.mrf.mxu0
      %v6981 = vadd.f32 %v6896, %v6980
      %v6982 = vpop.f32.mrf.mxu0
      %v6983 = vpop.f32.mrf.mxu0
      %v6984 = vadd.f32 %v6896, %v6983
      %v6985 = vpop.f32.mrf.mxu0
      %6986 = vmatprep.mubr.bf16.mxu0 0
      %6987 = vmatmul.mubr.bf16.gmra.mxu0 %v6812
      %v6988 = vpop.f32.mrf.mxu0
      %v6989 = vadd.f32 %v6896, %v6988
      %v6990 = vpop.f32.mrf.mxu0
      %v6991 = vpop.f32.mrf.mxu0
      %v6992 = vadd.f32 %v6896, %v6991
      %v6993 = vpop.f32.mrf.mxu0
      %6994 = vmatprep.mubr.bf16.mxu0 0
      %6995 = vmatmul.mubr.bf16.gmra.mxu0 %v6813
      %v6996 = vpop.f32.mrf.mxu0
      %v6997 = vadd.f32 %v6896, %v6996
      %v6998 = vpop.f32.mrf.mxu0
      %v6999 = vpop.f32.mrf.mxu0
      %v7000 = vadd.f32 %v6896, %v6999
      %v7001 = vpop.f32.mrf.mxu0
      %7002 = vmatprep.mubr.bf16.mxu0 0
      %7003 = vmatmul.mubr.bf16.gmra.mxu0 %v6814
      %v7004 = vpop.f32.mrf.mxu0
      %v7005 = vadd.f32 %v6896, %v7004
      %v7006 = vpop.f32.mrf.mxu0
      %v7007 = vpop.f32.mrf.mxu0
      %v7008 = vadd.f32 %v6896, %v7007
      %v7009 = vpop.f32.mrf.mxu0
      %7010 = vmatprep.mubr.bf16.mxu0 0
      %7011 = vmatmul.mubr.bf16.gmra.mxu0 %v6815
      %v7012 = vpop.f32.mrf.mxu0
      %v7013 = vadd.f32 %v6896, %v7012
      %v7014 = vpop.f32.mrf.mxu0
      %v7015 = vpop.f32.mrf.mxu0
      %v7016 = vadd.f32 %v6896, %v7015
      %v7017 = vpop.f32.mrf.mxu0
      %7018 = vmatprep.mubr.bf16.mxu0 0
      %7019 = vmatmul.mubr.bf16.gmra.mxu0 %v6816
      %v7020 = vpop.f32.mrf.mxu0
      %v7021 = vadd.f32 %v6896, %v7020
      %v7022 = vpop.f32.mrf.mxu0
      %v7023 = vpop.f32.mrf.mxu0
      %v7024 = vadd.f32 %v6896, %v7023
      %v7025 = vpop.f32.mrf.mxu0
      %7026 = vmatprep.mubr.bf16.mxu0 0
      %7027 = vmatmul.mubr.bf16.gmra.mxu0 %v6817
      %v7028 = vpop.f32.mrf.mxu0
      %v7029 = vadd.f32 %v6896, %v7028
      %v7030 = vpop.f32.mrf.mxu0
      %v7031 = vpop.f32.mrf.mxu0
      %v7032 = vadd.f32 %v6896, %v7031
      %v7033 = vpop.f32.mrf.mxu0
      %7034 = vmatprep.mubr.bf16.mxu0 0
      %7035 = vmatmul.mubr.bf16.gmra.mxu0 %v6818
      %v7036 = vpop.f32.mrf.mxu0
      %v7037 = vadd.f32 %v6896, %v7036
      %v7038 = vpop.f32.mrf.mxu0
      %v7039 = vpop.f32.mrf.mxu0
      %v7040 = vadd.f32 %v6896, %v7039
      %v7041 = vpop.f32.mrf.mxu0
      %7042 = vmatprep.mubr.bf16.mxu0 0
      %7043 = vmatmul.mubr.bf16.gmra.mxu0 %v6819
      %v7044 = vpop.f32.mrf.mxu0
      %v7045 = vadd.f32 %v6896, %v7044
      %v7046 = vpop.f32.mrf.mxu0
      %v7047 = vpop.f32.mrf.mxu0
      %v7048 = vadd.f32 %v6896, %v7047
      %v7049 = vpop.f32.mrf.mxu0
      %7050 = vmatprep.mubr.bf16.mxu0 0
      %7051 = vmatmul.mubr.bf16.gmra.mxu0 %v6820
      %v7052 = vpop.f32.mrf.mxu0
      %v7053 = vadd.f32 %v6896, %v7052
      %v7054 = vpop.f32.mrf.mxu0
      %v7055 = vpop.f32.mrf.mxu0
      %v7056 = vadd.f32 %v6896, %v7055
      %v7057 = vpop.f32.mrf.mxu0
      %7058 = vmatprep.mubr.bf16.mxu0 0
      %7059 = vmatmul.mubr.bf16.gmra.mxu0 %v6821
      %v7060 = vpop.f32.mrf.mxu0
      %v7061 = vadd.f32 %v6896, %v7060
      %v7062 = vpop.f32.mrf.mxu0
      %v7063 = vpop.f32.mrf.mxu0
      %v7064 = vadd.f32 %v6896, %v7063
      %v7065 = vpop.f32.mrf.mxu0
      %7066 = vmatprep.mubr.bf16.mxu0 0
      %7067 = vmatmul.mubr.bf16.gmra.mxu0 %v6822
      %v7068 = vpop.f32.mrf.mxu0
      %v7069 = vadd.f32 %v6896, %v7068
      %v7070 = vpop.f32.mrf.mxu0
      %v7071 = vpop.f32.mrf.mxu0
      %v7072 = vadd.f32 %v6896, %v7071
      %v7073 = vpop.f32.mrf.mxu0
      %7074 = vmatprep.mubr.bf16.mxu0 0
      %7075 = vmatmul.mubr.bf16.gmra.mxu0 %v6823
      %v7076 = vpop.f32.mrf.mxu0
      %v7077 = vadd.f32 %v6896, %v7076
      %v7078 = vpop.f32.mrf.mxu0
      %v7079 = vpop.f32.mrf.mxu0
      %v7080 = vadd.f32 %v6896, %v7079
      %v7081 = vpop.f32.mrf.mxu0
      %7082 = vmatprep.mubr.bf16.mxu0 0
      %7083 = vmatmul.mubr.bf16.gmra.mxu0 %v6824
      %v7084 = vpop.f32.mrf.mxu0
      %v7085 = vadd.f32 %v6896, %v7084
      %v7086 = vpop.f32.mrf.mxu0
      %v7087 = vpop.f32.mrf.mxu0
      %v7088 = vadd.f32 %v6896, %v7087
      %v7089 = vpop.f32.mrf.mxu0
      %7090 = vmatprep.mubr.bf16.mxu0 0
      %7091 = vmatmul.mubr.bf16.gmra.mxu0 %v6825
      %v7092 = vpop.f32.mrf.mxu0
      %v7093 = vadd.f32 %v6896, %v7092
      %v7094 = vpop.f32.mrf.mxu0
      %v7095 = vpop.f32.mrf.mxu0
      %v7096 = vadd.f32 %v6896, %v7095
      %v7097 = vpop.f32.mrf.mxu0
      %7098 = vmatprep.mubr.bf16.mxu0 0
      %7099 = vmatmul.mubr.bf16.gmra.mxu0 %v6826
      %v7100 = vpop.f32.mrf.mxu0
      %v7101 = vadd.f32 %v6896, %v7100
      %v7102 = vpop.f32.mrf.mxu0
      %v7103 = vpop.f32.mrf.mxu0
      %v7104 = vadd.f32 %v6896, %v7103
      %v7105 = vpop.f32.mrf.mxu0
      %7106 = vmatprep.mubr.bf16.mxu0 0
      %7107 = vmatmul.mubr.bf16.gmra.mxu0 %v6827
      %v7108 = vpop.f32.mrf.mxu0
      %v7109 = vadd.f32 %v6896, %v7108
      %v7110 = vpop.f32.mrf.mxu0
      %v7111 = vpop.f32.mrf.mxu0
      %v7112 = vadd.f32 %v6896, %v7111
      %v7113 = vpop.f32.mrf.mxu0
      %7114 = vmatprep.mubr.bf16.mxu0 0
      %7115 = vmatmul.mubr.bf16.gmra.mxu0 %v6828
      %v7116 = vpop.f32.mrf.mxu0
      %v7117 = vadd.f32 %v6896, %v7116
      %v7118 = vpop.f32.mrf.mxu0
      %v7119 = vpop.f32.mrf.mxu0
      %v7120 = vadd.f32 %v6896, %v7119
      %v7121 = vpop.f32.mrf.mxu0
      %7122 = vmatprep.mubr.bf16.mxu0 0
      %7123 = vmatmul.mubr.bf16.gmra.mxu0 %v6829
      %v7124 = vpop.f32.mrf.mxu0
      %v7125 = vadd.f32 %v6896, %v7124
      %v7126 = vpop.f32.mrf.mxu0
      %v7127 = vpop.f32.mrf.mxu0
      %v7128 = vadd.f32 %v6896, %v7127
      %v7129 = vpop.f32.mrf.mxu0
      %7130 = vmatprep.mubr.bf16.mxu0 0
      %7131 = vmatmul.mubr.bf16.gmra.mxu0 %v6830
      %v7132 = vpop.f32.mrf.mxu0
      %v7133 = vadd.f32 %v6896, %v7132
      %v7134 = vpop.f32.mrf.mxu0
      %v7135 = vpop.f32.mrf.mxu0
      %v7136 = vadd.f32 %v6896, %v7135
      %v7137 = vpop.f32.mrf.mxu0
      %7138 = vmatprep.mubr.bf16.mxu0 0
      %7139 = vmatmul.mubr.bf16.gmra.mxu0 %v6831
      %v7140 = vpop.f32.mrf.mxu0
      %v7141 = vadd.f32 %v6896, %v7140
      %v7142 = vpop.f32.mrf.mxu0
      %v7143 = vpop.f32.mrf.mxu0
      %v7144 = vadd.f32 %v6896, %v7143
      %v7145 = vpop.f32.mrf.mxu0
      %7146 = vmatprep.mubr.bf16.mxu0 0
      %7147 = vmatmul.mubr.bf16.gmra.mxu0 %v6832
      %v7148 = vpop.f32.mrf.mxu0
      %v7149 = vadd.f32 %v6896, %v7148
      %v7150 = vpop.f32.mrf.mxu0
      %v7151 = vpop.f32.mrf.mxu0
      %v7152 = vadd.f32 %v6896, %v7151
      %v7153 = vpop.f32.mrf.mxu0
      %7154 = vmatprep.mubr.bf16.mxu0 0
      %7155 = vmatmul.mubr.bf16.gmra.mxu0 %v6833
      %v7156 = vpop.f32.mrf.mxu0
      %v7157 = vadd.f32 %v6896, %v7156
      %v7158 = vpop.f32.mrf.mxu0
      %v7159 = vpop.f32.mrf.mxu0
      %v7160 = vadd.f32 %v6896, %v7159
      %v7161 = vpop.f32.mrf.mxu0
      %7162 = vmatprep.mubr.bf16.mxu0 0
      %7163 = vmatmul.mubr.bf16.gmra.mxu0 %v6834
      %v7164 = vpop.f32.mrf.mxu0
      %v7165 = vadd.f32 %v6896, %v7164
      %v7166 = vpop.f32.mrf.mxu0
      %v7167 = vpop.f32.mrf.mxu0
      %v7168 = vadd.f32 %v6896, %v7167
      %v7169 = vpop.f32.mrf.mxu0
      %7170 = vmatprep.mubr.bf16.mxu0 0
      %7171 = vmatmul.mubr.bf16.gmra.mxu0 %v6835
      %v7172 = vpop.f32.mrf.mxu0
      %v7173 = vadd.f32 %v6896, %v7172
      %v7174 = vpop.f32.mrf.mxu0
      %v7175 = vpop.f32.mrf.mxu0
      %v7176 = vadd.f32 %v6896, %v7175
      %v7177 = vpop.f32.mrf.mxu0
      %7178 = vmatprep.mubr.bf16.mxu0 0
      %7179 = vmatmul.mubr.bf16.gmra.mxu0 %v6836
      %v7180 = vpop.f32.mrf.mxu0
      %v7181 = vadd.f32 %v6896, %v7180
      %v7182 = vpop.f32.mrf.mxu0
      %v7183 = vpop.f32.mrf.mxu0
      %v7184 = vadd.f32 %v6896, %v7183
      %v7185 = vpop.f32.mrf.mxu0
      %7186 = vmatprep.mubr.bf16.mxu0 0
      %7187 = vmatmul.mubr.bf16.gmra.mxu0 %v6837
      %v7188 = vpop.f32.mrf.mxu0
      %v7189 = vadd.f32 %v6896, %v7188
      %v7190 = vpop.f32.mrf.mxu0
      %v7191 = vpop.f32.mrf.mxu0
      %v7192 = vadd.f32 %v6896, %v7191
      %v7193 = vpop.f32.mrf.mxu0
      %7194 = vmatprep.mubr.bf16.mxu0 0
      %7195 = vmatmul.mubr.bf16.gmra.mxu0 %v6838
      %v7196 = vpop.f32.mrf.mxu0
      %v7197 = vadd.f32 %v6896, %v7196
      %v7198 = vpop.f32.mrf.mxu0
      %v7199 = vpop.f32.mrf.mxu0
      %v7200 = vadd.f32 %v6896, %v7199
      %v7201 = vpop.f32.mrf.mxu0
      %7202 = vmatprep.mubr.bf16.mxu0 0
      %7203 = vmatmul.mubr.bf16.gmra.mxu0 %v6839
      %v7204 = vpop.f32.mrf.mxu0
      %v7205 = vadd.f32 %v6896, %v7204
      %v7206 = vpop.f32.mrf.mxu0
      %v7207 = vpop.f32.mrf.mxu0
      %v7208 = vadd.f32 %v6896, %v7207
      %v7209 = vpop.f32.mrf.mxu0
      %7210 = vmatprep.mubr.bf16.mxu0 0
      %7211 = vmatmul.mubr.bf16.gmra.mxu0 %v6840
      %v7212 = vpop.f32.mrf.mxu0
      %v7213 = vadd.f32 %v6896, %v7212
      %v7214 = vpop.f32.mrf.mxu0
      %v7215 = vpop.f32.mrf.mxu0
      %v7216 = vadd.f32 %v6896, %v7215
      %v7217 = vpop.f32.mrf.mxu0
      %7218 = vmatprep.mubr.bf16.mxu0 0
      %7219 = vmatmul.mubr.bf16.gmra.mxu0 %v6841
      %v7220 = vpop.f32.mrf.mxu0
      %v7221 = vadd.f32 %v6896, %v7220
      %v7222 = vpop.f32.mrf.mxu0
      %v7223 = vpop.f32.mrf.mxu0
      %v7224 = vadd.f32 %v6896, %v7223
      %v7225 = vpop.f32.mrf.mxu0
      %7226 = vmatprep.mubr.bf16.mxu0 0
      %7227 = vmatmul.mubr.bf16.gmra.mxu0 %v6842
      %v7228 = vpop.f32.mrf.mxu0
      %v7229 = vadd.f32 %v6896, %v7228
      %v7230 = vpop.f32.mrf.mxu0
      %v7231 = vpop.f32.mrf.mxu0
      %v7232 = vadd.f32 %v6896, %v7231
      %v7233 = vpop.f32.mrf.mxu0
      %7234 = vmatprep.mubr.bf16.mxu0 0
      %7235 = vmatmul.mubr.bf16.gmra.mxu0 %v6843
      %v7236 = vpop.f32.mrf.mxu0
      %v7237 = vadd.f32 %v6896, %v7236
      %v7238 = vpop.f32.mrf.mxu0
      %v7239 = vpop.f32.mrf.mxu0
      %v7240 = vadd.f32 %v6896, %v7239
      %v7241 = vpop.f32.mrf.mxu0
      %7242 = vmatprep.mubr.bf16.mxu0 0
      %7243 = vmatmul.mubr.bf16.gmra.mxu0 %v6844
      %v7244 = vpop.f32.mrf.mxu0
      %v7245 = vadd.f32 %v6896, %v7244
      %v7246 = vpop.f32.mrf.mxu0
      %v7247 = vpop.f32.mrf.mxu0
      %v7248 = vadd.f32 %v6896, %v7247
      %v7249 = vpop.f32.mrf.mxu0
      %7250 = vmatprep.mubr.bf16.mxu0 0
      %7251 = vmatmul.mubr.bf16.gmra.mxu0 %v6845
      %v7252 = vpop.f32.mrf.mxu0
      %v7253 = vadd.f32 %v6896, %v7252
      %v7254 = vpop.f32.mrf.mxu0
      %v7255 = vpop.f32.mrf.mxu0
      %v7256 = vadd.f32 %v6896, %v7255
      %v7257 = vpop.f32.mrf.mxu0
      %7258 = vmatprep.mubr.bf16.mxu0 0
      %7259 = vmatmul.mubr.bf16.gmra.mxu0 %v6846
      %v7260 = vpop.f32.mrf.mxu0
      %v7261 = vadd.f32 %v6896, %v7260
      %v7262 = vpop.f32.mrf.mxu0
      %v7263 = vpop.f32.mrf.mxu0
      %v7264 = vadd.f32 %v6896, %v7263
      %v7265 = vpop.f32.mrf.mxu0
      %7266 = vmatprep.mubr.bf16.mxu0 0
      %7267 = vmatmul.mubr.bf16.gmra.mxu0 %v6847
      %v7268 = vpop.f32.mrf.mxu0
      %v7269 = vadd.f32 %v6896, %v7268
      %v7270 = vpop.f32.mrf.mxu0
      %v7271 = vpop.f32.mrf.mxu0
      %v7272 = vadd.f32 %v6896, %v7271
      %v7273 = vpop.f32.mrf.mxu0
      %7274 = vmatprep.mubr.bf16.mxu0 0
      %7275 = vmatmul.mubr.bf16.gmra.mxu0 %v6848
      %v7276 = vpop.f32.mrf.mxu0
      %v7277 = vadd.f32 %v6896, %v7276
      %v7278 = vpop.f32.mrf.mxu0
      %v7279 = vpop.f32.mrf.mxu0
      %v7280 = vadd.f32 %v6896, %v7279
      %v7281 = vpop.f32.mrf.mxu0
      %7282 = vmatprep.mubr.bf16.mxu0 0
      %7283 = vmatmul.mubr.bf16.gmra.mxu0 %v6849
      %v7284 = vpop.f32.mrf.mxu0
      %v7285 = vadd.f32 %v6896, %v7284
      %v7286 = vpop.f32.mrf.mxu0
      %v7287 = vpop.f32.mrf.mxu0
      %v7288 = vadd.f32 %v6896, %v7287
      %v7289 = vpop.f32.mrf.mxu0
      %7290 = vmatprep.mubr.bf16.mxu0 0
      %7291 = vmatmul.mubr.bf16.gmra.mxu0 %v6850
      %v7292 = vpop.f32.mrf.mxu0
      %v7293 = vadd.f32 %v6896, %v7292
      %v7294 = vpop.f32.mrf.mxu0
      %v7295 = vpop.f32.mrf.mxu0
      %v7296 = vadd.f32 %v6896, %v7295
      %v7297 = vpop.f32.mrf.mxu0
      %7298 = vmatprep.mubr.bf16.mxu0 0
      %7299 = vmatmul.mubr.bf16.gmra.mxu0 %v6851
      %v7300 = vpop.f32.mrf.mxu0
      %v7301 = vadd.f32 %v6896, %v7300
      %v7302 = vpop.f32.mrf.mxu0
      %v7303 = vpop.f32.mrf.mxu0
      %v7304 = vadd.f32 %v6896, %v7303
      %v7305 = vpop.f32.mrf.mxu0
      %7306 = vmatprep.mubr.bf16.mxu0 0
      %7307 = vmatmul.mubr.bf16.gmra.mxu0 %v6852
      %v7308 = vpop.f32.mrf.mxu0
      %v7309 = vadd.f32 %v6896, %v7308
      %v7310 = vpop.f32.mrf.mxu0
      %v7311 = vpop.f32.mrf.mxu0
      %v7312 = vadd.f32 %v6896, %v7311
      %v7313 = vpop.f32.mrf.mxu0
      %7314 = vmatprep.mubr.bf16.mxu0 0
      %7315 = vmatmul.mubr.bf16.gmra.mxu0 %v6853
      %v7316 = vpop.f32.mrf.mxu0
      %v7317 = vadd.f32 %v6896, %v7316
      %v7318 = vpop.f32.mrf.mxu0
      %v7319 = vpop.f32.mrf.mxu0
      %v7320 = vadd.f32 %v6896, %v7319
      %v7321 = vpop.f32.mrf.mxu0
      %7322 = vmatprep.mubr.bf16.mxu0 0
      %7323 = vmatmul.mubr.bf16.gmra.mxu0 %v6854
      %v7324 = vpop.f32.mrf.mxu0
      %v7325 = vadd.f32 %v6896, %v7324
      %v7326 = vpop.f32.mrf.mxu0
      %v7327 = vpop.f32.mrf.mxu0
      %v7328 = vadd.f32 %v6896, %v7327
      %v7329 = vpop.f32.mrf.mxu0
      %7330 = vmatprep.mubr.bf16.mxu0 0
      %7331 = vmatmul.mubr.bf16.gmra.mxu0 %v6855
      %v7332 = vpop.f32.mrf.mxu0
      %v7333 = vadd.f32 %v6896, %v7332
      %v7334 = vpop.f32.mrf.mxu0
      %v7335 = vpop.f32.mrf.mxu0
      %v7336 = vadd.f32 %v6896, %v7335
      %v7337 = vpop.f32.mrf.mxu0
      %7338 = vmatprep.mubr.bf16.mxu0 0
      %7339 = vmatmul.mubr.bf16.gmra.mxu0 %v6856
      %v7340 = vpop.f32.mrf.mxu0
      %v7341 = vadd.f32 %v6896, %v7340
      %v7342 = vpop.f32.mrf.mxu0
      %v7343 = vpop.f32.mrf.mxu0
      %v7344 = vadd.f32 %v6896, %v7343
      %v7345 = vpop.f32.mrf.mxu0
      %7346 = vmatprep.mubr.bf16.mxu0 0
      %7347 = vmatmul.mubr.bf16.gmra.mxu0 %v6857
      %v7348 = vpop.f32.mrf.mxu0
      %v7349 = vadd.f32 %v6896, %v7348
      %v7350 = vpop.f32.mrf.mxu0
      %v7351 = vpop.f32.mrf.mxu0
      %v7352 = vadd.f32 %v6896, %v7351
      %v7353 = vpop.f32.mrf.mxu0
      %7354 = vmatprep.mubr.bf16.mxu0 0
      %7355 = vmatmul.mubr.bf16.gmra.mxu0 %v6858
      %v7356 = vpop.f32.mrf.mxu0
      %v7357 = vadd.f32 %v6896, %v7356
      %v7358 = vpop.f32.mrf.mxu0
      %v7359 = vpop.f32.mrf.mxu0
      %v7360 = vadd.f32 %v6896, %v7359
      %v7361 = vpop.f32.mrf.mxu0
      %7362 = vmatprep.mubr.bf16.mxu0 0
      %7363 = vmatmul.mubr.bf16.gmra.mxu0 %v6859
      %v7364 = vpop.f32.mrf.mxu0
      %v7365 = vadd.f32 %v6896, %v7364
      %v7366 = vpop.f32.mrf.mxu0
      %v7367 = vpop.f32.mrf.mxu0
      %v7368 = vadd.f32 %v6896, %v7367
      %v7369 = vpop.f32.mrf.mxu0
      %7370 = vmatprep.mubr.bf16.mxu0 0
      %7371 = vmatmul.mubr.bf16.gmra.mxu0 %v6860
      %v7372 = vpop.f32.mrf.mxu0
      %v7373 = vadd.f32 %v6896, %v7372
      %v7374 = vpop.f32.mrf.mxu0
      %v7375 = vpop.f32.mrf.mxu0
      %v7376 = vadd.f32 %v6896, %v7375
      %v7377 = vpop.f32.mrf.mxu0
      %7378 = vmatprep.mubr.bf16.mxu0 0
      %7379 = vmatmul.mubr.bf16.gmra.mxu0 %v6861
      %v7380 = vpop.f32.mrf.mxu0
      %v7381 = vadd.f32 %v6896, %v7380
      %v7382 = vpop.f32.mrf.mxu0
      %v7383 = vpop.f32.mrf.mxu0
      %v7384 = vadd.f32 %v6896, %v7383
      %v7385 = vpop.f32.mrf.mxu0
      %7386 = vmatprep.mubr.bf16.mxu0 0
      %7387 = vmatmul.mubr.bf16.gmra.mxu0 %v6862
      %v7388 = vpop.f32.mrf.mxu0
      %v7389 = vadd.f32 %v6896, %v7388
      %v7390 = vpop.f32.mrf.mxu0
      %v7391 = vpop.f32.mrf.mxu0
      %v7392 = vadd.f32 %v6896, %v7391
      %v7393 = vpop.f32.mrf.mxu0
      %7394 = vmatprep.mubr.bf16.mxu0 0
      %7395 = vmatmul.mubr.bf16.gmra.mxu0 %v6863
      %v7396 = vpop.f32.mrf.mxu0
      %v7397 = vadd.f32 %v6896, %v7396
      %v7398 = vpop.f32.mrf.mxu0
      %v7399 = vpop.f32.mrf.mxu0
      %v7400 = vadd.f32 %v6896, %v7399
      %v7401 = vpop.f32.mrf.mxu0
      %7402 = vmatprep.mubr.bf16.mxu0 0
      %7403 = vmatmul.mubr.bf16.gmra.mxu0 %v6864
      %v7404 = vpop.f32.mrf.mxu0
      %v7405 = vadd.f32 %v6896, %v7404
      %v7406 = vpop.f32.mrf.mxu0
      %v7407 = vpop.f32.mrf.mxu0
      %v7408 = vadd.f32 %v6896, %v7407
      %v7409 = vpop.f32.mrf.mxu0
      %7410 = vmatprep.mubr.bf16.mxu0 0
      %7411 = vmatmul.mubr.bf16.gmra.mxu0 %v6865
      %v7412 = vpop.f32.mrf.mxu0
      %v7413 = vadd.f32 %v6896, %v7412
      %v7414 = vpop.f32.mrf.mxu0
      %v7415 = vpop.f32.mrf.mxu0
      %v7416 = vadd.f32 %v6896, %v7415
      %v7417 = vpop.f32.mrf.mxu0
      %7418 = vmatprep.mubr.bf16.mxu0 0
      %7419 = vmatmul.mubr.bf16.gmra.mxu0 %v6866
      %v7420 = vpop.f32.mrf.mxu0
      %v7421 = vadd.f32 %v6896, %v7420
      %v7422 = vpop.f32.mrf.mxu0
      %v7423 = vpop.f32.mrf.mxu0
      %v7424 = vadd.f32 %v6896, %v7423
      %v7425 = vpop.f32.mrf.mxu0
      %7426 = vmatprep.mubr.bf16.mxu0 0
      %7427 = vmatmul.mubr.bf16.gmra.mxu0 %v6867
      %v7428 = vpop.f32.mrf.mxu0
      %v7429 = vadd.f32 %v6896, %v7428
      %v7430 = vpop.f32.mrf.mxu0
      %v7431 = vpop.f32.mrf.mxu0
      %v7432 = vadd.f32 %v6896, %v7431
      %v7433 = vpop.f32.mrf.mxu0
      %7434 = vmatprep.mubr.bf16.mxu0 0
      %7435 = vmatmul.mubr.bf16.gmra.mxu0 %v6868
      %v7436 = vpop.f32.mrf.mxu0
      %v7437 = vadd.f32 %v6896, %v7436
      %v7438 = vpop.f32.mrf.mxu0
      %v7439 = vpop.f32.mrf.mxu0
      %v7440 = vadd.f32 %v6896, %v7439
      %v7441 = vpop.f32.mrf.mxu0
      %7442 = vmatprep.mubr.bf16.mxu0 0
      %7443 = vmatmul.mubr.bf16.gmra.mxu0 %v6869
      %v7444 = vpop.f32.mrf.mxu0
      %v7445 = vadd.f32 %v6896, %v7444
      %v7446 = vpop.f32.mrf.mxu0
      %v7447 = vpop.f32.mrf.mxu0
      %v7448 = vadd.f32 %v6896, %v7447
      %v7449 = vpop.f32.mrf.mxu0
      %7450 = vmatprep.mubr.bf16.mxu0 0
      %7451 = vmatmul.mubr.bf16.gmra.mxu0 %v6870
      %v7452 = vpop.f32.mrf.mxu0
      %v7453 = vadd.f32 %v6896, %v7452
      %v7454 = vpop.f32.mrf.mxu0
      %v7455 = vpop.f32.mrf.mxu0
      %v7456 = vadd.f32 %v6896, %v7455
      %v7457 = vpop.f32.mrf.mxu0
      %7458 = vmatprep.mubr.bf16.mxu0 0
      %7459 = vmatmul.mubr.bf16.gmra.mxu0 %v6871
      %v7460 = vpop.f32.mrf.mxu0
      %v7461 = vadd.f32 %v6896, %v7460
      %v7462 = vpop.f32.mrf.mxu0
      %v7463 = vpop.f32.mrf.mxu0
      %v7464 = vadd.f32 %v6896, %v7463
      %v7465 = vpop.f32.mrf.mxu0
      %7466 = vmatprep.mubr.bf16.mxu0 0
      %7467 = vmatmul.mubr.bf16.gmra.mxu0 %v6872
      %v7468 = vpop.f32.mrf.mxu0
      %v7469 = vadd.f32 %v6896, %v7468
      %v7470 = vpop.f32.mrf.mxu0
      %v7471 = vpop.f32.mrf.mxu0
      %v7472 = vadd.f32 %v6896, %v7471
      %v7473 = vpop.f32.mrf.mxu0
      %7474 = vmatprep.mubr.bf16.mxu0 0
      %7475 = vmatmul.mubr.bf16.gmra.mxu0 %v6873
      %v7476 = vpop.f32.mrf.mxu0
      %v7477 = vadd.f32 %v6896, %v7476
      %v7478 = vpop.f32.mrf.mxu0
      %v7479 = vpop.f32.mrf.mxu0
      %v7480 = vadd.f32 %v6896, %v7479
      %v7481 = vpop.f32.mrf.mxu0
      %7482 = vmatprep.mubr.bf16.mxu0 0
      %7483 = vmatmul.mubr.bf16.gmra.mxu0 %v6874
      %v7484 = vpop.f32.mrf.mxu0
      %v7485 = vadd.f32 %v6896, %v7484
      %v7486 = vpop.f32.mrf.mxu0
      %v7487 = vpop.f32.mrf.mxu0
      %v7488 = vadd.f32 %v6896, %v7487
      %v7489 = vpop.f32.mrf.mxu0
      %7490 = vdwg.mxu0
      %v7491 = vmul.f32 %v6981, %v2115
      %v7492 = vmul.f32 %v6984, %v2116
      %v7493 = vmul.f32 %v6989, %v2117
      %v7494 = vmul.f32 %v6992, %v2118
      %v7495 = vmul.f32 %v6997, %v2119
      %v7496 = vmul.f32 %v7000, %v2120
      %v7497 = vmul.f32 %v7005, %v2121
      %v7498 = vmul.f32 %v7008, %v2122
      %v7499 = vmul.f32 %v7013, %v2123
      %v7500 = vmul.f32 %v7016, %v2124
      %v7501 = vmul.f32 %v7021, %v2125
      %v7502 = vmul.f32 %v7024, %v2126
      %v7503 = vmul.f32 %v7029, %v2127
      %v7504 = vmul.f32 %v7032, %v2128
      %v7505 = vmul.f32 %v7037, %v2129
      %v7506 = vmul.f32 %v7040, %v2130
      %v7507 = vmul.f32 %v7045, %v2131
      %v7508 = vmul.f32 %v7048, %v2132
      %v7509 = vmul.f32 %v7053, %v2133
      %v7510 = vmul.f32 %v7056, %v2134
      %v7511 = vmul.f32 %v7061, %v2135
      %v7512 = vmul.f32 %v7064, %v2136
      %v7513 = vmul.f32 %v7069, %v2137
      %v7514 = vmul.f32 %v7072, %v2138
      %v7515 = vmul.f32 %v7077, %v2139
      %v7516 = vmul.f32 %v7080, %v2140
      %v7517 = vmul.f32 %v7085, %v2141
      %v7518 = vmul.f32 %v7088, %v2142
      %v7519 = vmul.f32 %v7093, %v2143
      %v7520 = vmul.f32 %v7096, %v2144
      %v7521 = vmul.f32 %v7101, %v2145
      %v7522 = vmul.f32 %v7104, %v2146
      %v7523 = vmul.f32 %v7109, %v2147
      %v7524 = vmul.f32 %v7112, %v2148
      %v7525 = vmul.f32 %v7117, %v2149
      %v7526 = vmul.f32 %v7120, %v2150
      %v7527 = vmul.f32 %v7125, %v2151
      %v7528 = vmul.f32 %v7128, %v2152
      %v7529 = vmul.f32 %v7133, %v2153
      %v7530 = vmul.f32 %v7136, %v2154
      %v7531 = vmul.f32 %v7141, %v2155
      %v7532 = vmul.f32 %v7144, %v2156
      %v7533 = vmul.f32 %v7149, %v2157
      %v7534 = vmul.f32 %v7152, %v2158
      %v7535 = vmul.f32 %v7157, %v2159
      %v7536 = vmul.f32 %v7160, %v2160
      %v7537 = vmul.f32 %v7165, %v2161
      %v7538 = vmul.f32 %v7168, %v2162
      %v7539 = vmul.f32 %v7173, %v2163
      %v7540 = vmul.f32 %v7176, %v2164
      %v7541 = vmul.f32 %v7181, %v2165
      %v7542 = vmul.f32 %v7184, %v2166
      %v7543 = vmul.f32 %v7189, %v2167
      %v7544 = vmul.f32 %v7192, %v2168
      %v7545 = vmul.f32 %v7197, %v2169
      %v7546 = vmul.f32 %v7200, %v2170
      %v7547 = vmul.f32 %v7205, %v2171
      %v7548 = vmul.f32 %v7208, %v2172
      %v7549 = vmul.f32 %v7213, %v2173
      %v7550 = vmul.f32 %v7216, %v2174
      %v7551 = vmul.f32 %v7221, %v2175
      %v7552 = vmul.f32 %v7224, %v2176
      %v7553 = vmul.f32 %v7229, %v2177
      %v7554 = vmul.f32 %v7232, %v2178
      %v7555 = vmul.f32 %v7237, %v2179
      %v7556 = vmul.f32 %v7240, %v2180
      %v7557 = vmul.f32 %v7245, %v2181
      %v7558 = vmul.f32 %v7248, %v2182
      %v7559 = vmul.f32 %v7253, %v2183
      %v7560 = vmul.f32 %v7256, %v2184
      %v7561 = vmul.f32 %v7261, %v2185
      %v7562 = vmul.f32 %v7264, %v2186
      %v7563 = vmul.f32 %v7269, %v2187
      %v7564 = vmul.f32 %v7272, %v2188
      %v7565 = vmul.f32 %v7277, %v2189
      %v7566 = vmul.f32 %v7280, %v2190
      %v7567 = vmul.f32 %v7285, %v2191
      %v7568 = vmul.f32 %v7288, %v2192
      %v7569 = vmul.f32 %v7293, %v2193
      %v7570 = vmul.f32 %v7296, %v2194
      %v7571 = vmul.f32 %v7301, %v2195
      %v7572 = vmul.f32 %v7304, %v2196
      %v7573 = vmul.f32 %v7309, %v2197
      %v7574 = vmul.f32 %v7312, %v2198
      %v7575 = vmul.f32 %v7317, %v2199
      %v7576 = vmul.f32 %v7320, %v2200
      %v7577 = vmul.f32 %v7325, %v2201
      %v7578 = vmul.f32 %v7328, %v2202
      %v7579 = vmul.f32 %v7333, %v2203
      %v7580 = vmul.f32 %v7336, %v2204
      %v7581 = vmul.f32 %v7341, %v2205
      %v7582 = vmul.f32 %v7344, %v2206
      %v7583 = vmul.f32 %v7349, %v2207
      %v7584 = vmul.f32 %v7352, %v2208
      %v7585 = vmul.f32 %v7357, %v2209
      %v7586 = vmul.f32 %v7360, %v2210
      %v7587 = vmul.f32 %v7365, %v2211
      %v7588 = vmul.f32 %v7368, %v2212
      %v7589 = vmul.f32 %v7373, %v2213
      %v7590 = vmul.f32 %v7376, %v2214
      %v7591 = vmul.f32 %v7381, %v2215
      %v7592 = vmul.f32 %v7384, %v2216
      %v7593 = vmul.f32 %v7389, %v2217
      %v7594 = vmul.f32 %v7392, %v2218
      %v7595 = vmul.f32 %v7397, %v2219
      %v7596 = vmul.f32 %v7400, %v2220
      %v7597 = vmul.f32 %v7405, %v2221
      %v7598 = vmul.f32 %v7408, %v2222
      %v7599 = vmul.f32 %v7413, %v2223
      %v7600 = vmul.f32 %v7416, %v2224
      %v7601 = vmul.f32 %v7421, %v2225
      %v7602 = vmul.f32 %v7424, %v2226
      %v7603 = vmul.f32 %v7429, %v2227
      %v7604 = vmul.f32 %v7432, %v2228
      %v7605 = vmul.f32 %v7437, %v2229
      %v7606 = vmul.f32 %v7440, %v2230
      %v7607 = vmul.f32 %v7445, %v2231
      %v7608 = vmul.f32 %v7448, %v2232
      %v7609 = vmul.f32 %v7453, %v2233
      %v7610 = vmul.f32 %v7456, %v2234
      %v7611 = vmul.f32 %v7461, %v2235
      %v7612 = vmul.f32 %v7464, %v2236
      %v7613 = vmul.f32 %v7469, %v2237
      %v7614 = vmul.f32 %v7472, %v2238
      %v7615 = vmul.f32 %v7477, %v2239
      %v7616 = vmul.f32 %v7480, %v2240
      %v7617 = vmul.f32 %v7485, %v2241
      %v7618 = vmul.f32 %v7488, %v2242
      %v7619 = vpack.c.bf16 %v7492, %v7491
      %v7620 = vpack.c.bf16 %v7494, %v7493
      %v7621 = vpack.c.bf16 %v7496, %v7495
      %v7622 = vpack.c.bf16 %v7498, %v7497
      %v7623 = vpack.c.bf16 %v7500, %v7499
      %v7624 = vpack.c.bf16 %v7502, %v7501
      %v7625 = vpack.c.bf16 %v7504, %v7503
      %v7626 = vpack.c.bf16 %v7506, %v7505
      %v7627 = vpack.c.bf16 %v7508, %v7507
      %v7628 = vpack.c.bf16 %v7510, %v7509
      %v7629 = vpack.c.bf16 %v7512, %v7511
      %v7630 = vpack.c.bf16 %v7514, %v7513
      %v7631 = vpack.c.bf16 %v7516, %v7515
      %v7632 = vpack.c.bf16 %v7518, %v7517
      %v7633 = vpack.c.bf16 %v7520, %v7519
      %v7634 = vpack.c.bf16 %v7522, %v7521
      %v7635 = vpack.c.bf16 %v7524, %v7523
      %v7636 = vpack.c.bf16 %v7526, %v7525
      %v7637 = vpack.c.bf16 %v7528, %v7527
      %v7638 = vpack.c.bf16 %v7530, %v7529
      %v7639 = vpack.c.bf16 %v7532, %v7531
      %v7640 = vpack.c.bf16 %v7534, %v7533
      %v7641 = vpack.c.bf16 %v7536, %v7535
      %v7642 = vpack.c.bf16 %v7538, %v7537
      %v7643 = vpack.c.bf16 %v7540, %v7539
      %v7644 = vpack.c.bf16 %v7542, %v7541
      %v7645 = vpack.c.bf16 %v7544, %v7543
      %v7646 = vpack.c.bf16 %v7546, %v7545
      %v7647 = vpack.c.bf16 %v7548, %v7547
      %v7648 = vpack.c.bf16 %v7550, %v7549
      %v7649 = vpack.c.bf16 %v7552, %v7551
      %v7650 = vpack.c.bf16 %v7554, %v7553
      %v7651 = vpack.c.bf16 %v7556, %v7555
      %v7652 = vpack.c.bf16 %v7558, %v7557
      %v7653 = vpack.c.bf16 %v7560, %v7559
      %v7654 = vpack.c.bf16 %v7562, %v7561
      %v7655 = vpack.c.bf16 %v7564, %v7563
      %v7656 = vpack.c.bf16 %v7566, %v7565
      %v7657 = vpack.c.bf16 %v7568, %v7567
      %v7658 = vpack.c.bf16 %v7570, %v7569
      %v7659 = vpack.c.bf16 %v7572, %v7571
      %v7660 = vpack.c.bf16 %v7574, %v7573
      %v7661 = vpack.c.bf16 %v7576, %v7575
      %v7662 = vpack.c.bf16 %v7578, %v7577
      %v7663 = vpack.c.bf16 %v7580, %v7579
      %v7664 = vpack.c.bf16 %v7582, %v7581
      %v7665 = vpack.c.bf16 %v7584, %v7583
      %v7666 = vpack.c.bf16 %v7586, %v7585
      %v7667 = vpack.c.bf16 %v7588, %v7587
      %v7668 = vpack.c.bf16 %v7590, %v7589
      %v7669 = vpack.c.bf16 %v7592, %v7591
      %v7670 = vpack.c.bf16 %v7594, %v7593
      %v7671 = vpack.c.bf16 %v7596, %v7595
      %v7672 = vpack.c.bf16 %v7598, %v7597
      %v7673 = vpack.c.bf16 %v7600, %v7599
      %v7674 = vpack.c.bf16 %v7602, %v7601
      %v7675 = vpack.c.bf16 %v7604, %v7603
      %v7676 = vpack.c.bf16 %v7606, %v7605
      %v7677 = vpack.c.bf16 %v7608, %v7607
      %v7678 = vpack.c.bf16 %v7610, %v7609
      %v7679 = vpack.c.bf16 %v7612, %v7611
      %v7680 = vpack.c.bf16 %v7614, %v7613
      %v7681 = vpack.c.bf16 %v7616, %v7615
      %v7682 = vpack.c.bf16 %v7618, %v7617
      %v7747 = vunpack.c.l.b16 %v7619
      %v7748 = vunpack.c.h.b16 %v7619
      %v7749 = vunpack.c.l.b16 %v7620
      %v7750 = vunpack.c.h.b16 %v7620
      %v7751 = vunpack.c.l.b16 %v7621
      %v7752 = vunpack.c.h.b16 %v7621
      %v7753 = vunpack.c.l.b16 %v7622
      %v7754 = vunpack.c.h.b16 %v7622
      %v7755 = vunpack.c.l.b16 %v7623
      %v7756 = vunpack.c.h.b16 %v7623
      %v7757 = vunpack.c.l.b16 %v7624
      %v7758 = vunpack.c.h.b16 %v7624
      %v7759 = vunpack.c.l.b16 %v7625
      %v7760 = vunpack.c.h.b16 %v7625
      %v7761 = vunpack.c.l.b16 %v7626
      %v7762 = vunpack.c.h.b16 %v7626
      %v7763 = vunpack.c.l.b16 %v7627
      %v7764 = vunpack.c.h.b16 %v7627
      %v7765 = vunpack.c.l.b16 %v7628
      %v7766 = vunpack.c.h.b16 %v7628
      %v7767 = vunpack.c.l.b16 %v7629
      %v7768 = vunpack.c.h.b16 %v7629
      %v7769 = vunpack.c.l.b16 %v7630
      %v7770 = vunpack.c.h.b16 %v7630
      %v7771 = vunpack.c.l.b16 %v7631
      %v7772 = vunpack.c.h.b16 %v7631
      %v7773 = vunpack.c.l.b16 %v7632
      %v7774 = vunpack.c.h.b16 %v7632
      %v7775 = vunpack.c.l.b16 %v7633
      %v7776 = vunpack.c.h.b16 %v7633
      %v7777 = vunpack.c.l.b16 %v7634
      %v7778 = vunpack.c.h.b16 %v7634
      %v7779 = vunpack.c.l.b16 %v7635
      %v7780 = vunpack.c.h.b16 %v7635
      %v7781 = vunpack.c.l.b16 %v7636
      %v7782 = vunpack.c.h.b16 %v7636
      %v7783 = vunpack.c.l.b16 %v7637
      %v7784 = vunpack.c.h.b16 %v7637
      %v7785 = vunpack.c.l.b16 %v7638
      %v7786 = vunpack.c.h.b16 %v7638
      %v7787 = vunpack.c.l.b16 %v7639
      %v7788 = vunpack.c.h.b16 %v7639
      %v7789 = vunpack.c.l.b16 %v7640
      %v7790 = vunpack.c.h.b16 %v7640
      %v7791 = vunpack.c.l.b16 %v7641
      %v7792 = vunpack.c.h.b16 %v7641
      %v7793 = vunpack.c.l.b16 %v7642
      %v7794 = vunpack.c.h.b16 %v7642
      %v7795 = vunpack.c.l.b16 %v7643
      %v7796 = vunpack.c.h.b16 %v7643
      %v7797 = vunpack.c.l.b16 %v7644
      %v7798 = vunpack.c.h.b16 %v7644
      %v7799 = vunpack.c.l.b16 %v7645
      %v7800 = vunpack.c.h.b16 %v7645
      %v7801 = vunpack.c.l.b16 %v7646
      %v7802 = vunpack.c.h.b16 %v7646
      %v7803 = vunpack.c.l.b16 %v7647
      %v7804 = vunpack.c.h.b16 %v7647
      %v7805 = vunpack.c.l.b16 %v7648
      %v7806 = vunpack.c.h.b16 %v7648
      %v7807 = vunpack.c.l.b16 %v7649
      %v7808 = vunpack.c.h.b16 %v7649
      %v7809 = vunpack.c.l.b16 %v7650
      %v7810 = vunpack.c.h.b16 %v7650
      %v7811 = vunpack.c.l.b16 %v7651
      %v7812 = vunpack.c.h.b16 %v7651
      %v7813 = vunpack.c.l.b16 %v7652
      %v7814 = vunpack.c.h.b16 %v7652
      %v7815 = vunpack.c.l.b16 %v7653
      %v7816 = vunpack.c.h.b16 %v7653
      %v7817 = vunpack.c.l.b16 %v7654
      %v7818 = vunpack.c.h.b16 %v7654
      %v7819 = vunpack.c.l.b16 %v7655
      %v7820 = vunpack.c.h.b16 %v7655
      %v7821 = vunpack.c.l.b16 %v7656
      %v7822 = vunpack.c.h.b16 %v7656
      %v7823 = vunpack.c.l.b16 %v7657
      %v7824 = vunpack.c.h.b16 %v7657
      %v7825 = vunpack.c.l.b16 %v7658
      %v7826 = vunpack.c.h.b16 %v7658
      %v7827 = vunpack.c.l.b16 %v7659
      %v7828 = vunpack.c.h.b16 %v7659
      %v7829 = vunpack.c.l.b16 %v7660
      %v7830 = vunpack.c.h.b16 %v7660
      %v7831 = vunpack.c.l.b16 %v7661
      %v7832 = vunpack.c.h.b16 %v7661
      %v7833 = vunpack.c.l.b16 %v7662
      %v7834 = vunpack.c.h.b16 %v7662
      %v7835 = vunpack.c.l.b16 %v7663
      %v7836 = vunpack.c.h.b16 %v7663
      %v7837 = vunpack.c.l.b16 %v7664
      %v7838 = vunpack.c.h.b16 %v7664
      %v7839 = vunpack.c.l.b16 %v7665
      %v7840 = vunpack.c.h.b16 %v7665
      %v7841 = vunpack.c.l.b16 %v7666
      %v7842 = vunpack.c.h.b16 %v7666
      %v7843 = vunpack.c.l.b16 %v7667
      %v7844 = vunpack.c.h.b16 %v7667
      %v7845 = vunpack.c.l.b16 %v7668
      %v7846 = vunpack.c.h.b16 %v7668
      %v7847 = vunpack.c.l.b16 %v7669
      %v7848 = vunpack.c.h.b16 %v7669
      %v7849 = vunpack.c.l.b16 %v7670
      %v7850 = vunpack.c.h.b16 %v7670
      %v7851 = vunpack.c.l.b16 %v7671
      %v7852 = vunpack.c.h.b16 %v7671
      %v7853 = vunpack.c.l.b16 %v7672
      %v7854 = vunpack.c.h.b16 %v7672
      %v7855 = vunpack.c.l.b16 %v7673
      %v7856 = vunpack.c.h.b16 %v7673
      %v7857 = vunpack.c.l.b16 %v7674
      %v7858 = vunpack.c.h.b16 %v7674
      %v7859 = vunpack.c.l.b16 %v7675
      %v7860 = vunpack.c.h.b16 %v7675
      %v7861 = vunpack.c.l.b16 %v7676
      %v7862 = vunpack.c.h.b16 %v7676
      %v7863 = vunpack.c.l.b16 %v7677
      %v7864 = vunpack.c.h.b16 %v7677
      %v7865 = vunpack.c.l.b16 %v7678
      %v7866 = vunpack.c.h.b16 %v7678
      %v7867 = vunpack.c.l.b16 %v7679
      %v7868 = vunpack.c.h.b16 %v7679
      %v7869 = vunpack.c.l.b16 %v7680
      %v7870 = vunpack.c.h.b16 %v7680
      %v7871 = vunpack.c.l.b16 %v7681
      %v7872 = vunpack.c.h.b16 %v7681
      %v7873 = vunpack.c.l.b16 %v7682
      %v7874 = vunpack.c.h.b16 %v7682
      %v7875 = vpack.c.b16 %v7747, %v7747
      %v7876 = vpack.c.b16 %v7748, %v7748
      %v7877 = vpack.c.b16 %v7749, %v7749
      %v7878 = vpack.c.b16 %v7750, %v7750
      %v7879 = vpack.c.b16 %v7751, %v7751
      %v7880 = vpack.c.b16 %v7752, %v7752
      %v7881 = vpack.c.b16 %v7753, %v7753
      %v7882 = vpack.c.b16 %v7754, %v7754
      %v7883 = vpack.c.b16 %v7755, %v7755
      %v7884 = vpack.c.b16 %v7756, %v7756
      %v7885 = vpack.c.b16 %v7757, %v7757
      %v7886 = vpack.c.b16 %v7758, %v7758
      %v7887 = vpack.c.b16 %v7759, %v7759
      %v7888 = vpack.c.b16 %v7760, %v7760
      %v7889 = vpack.c.b16 %v7761, %v7761
      %v7890 = vpack.c.b16 %v7762, %v7762
      %v7891 = vpack.c.b16 %v7763, %v7763
      %v7892 = vpack.c.b16 %v7764, %v7764
      %v7893 = vpack.c.b16 %v7765, %v7765
      %v7894 = vpack.c.b16 %v7766, %v7766
      %v7895 = vpack.c.b16 %v7767, %v7767
      %v7896 = vpack.c.b16 %v7768, %v7768
      %v7897 = vpack.c.b16 %v7769, %v7769
      %v7898 = vpack.c.b16 %v7770, %v7770
      %v7899 = vpack.c.b16 %v7771, %v7771
      %v7900 = vpack.c.b16 %v7772, %v7772
      %v7901 = vpack.c.b16 %v7773, %v7773
      %v7902 = vpack.c.b16 %v7774, %v7774
      %v7903 = vpack.c.b16 %v7775, %v7775
      %v7904 = vpack.c.b16 %v7776, %v7776
      %v7905 = vpack.c.b16 %v7777, %v7777
      %v7906 = vpack.c.b16 %v7778, %v7778
      %v7907 = vpack.c.b16 %v7779, %v7779
      %v7908 = vpack.c.b16 %v7780, %v7780
      %v7909 = vpack.c.b16 %v7781, %v7781
      %v7910 = vpack.c.b16 %v7782, %v7782
      %v7911 = vpack.c.b16 %v7783, %v7783
      %v7912 = vpack.c.b16 %v7784, %v7784
      %v7913 = vpack.c.b16 %v7785, %v7785
      %v7914 = vpack.c.b16 %v7786, %v7786
      %v7915 = vpack.c.b16 %v7787, %v7787
      %v7916 = vpack.c.b16 %v7788, %v7788
      %v7917 = vpack.c.b16 %v7789, %v7789
      %v7918 = vpack.c.b16 %v7790, %v7790
      %v7919 = vpack.c.b16 %v7791, %v7791
      %v7920 = vpack.c.b16 %v7792, %v7792
      %v7921 = vpack.c.b16 %v7793, %v7793
      %v7922 = vpack.c.b16 %v7794, %v7794
      %v7923 = vpack.c.b16 %v7795, %v7795
      %v7924 = vpack.c.b16 %v7796, %v7796
      %v7925 = vpack.c.b16 %v7797, %v7797
      %v7926 = vpack.c.b16 %v7798, %v7798
      %v7927 = vpack.c.b16 %v7799, %v7799
      %v7928 = vpack.c.b16 %v7800, %v7800
      %v7929 = vpack.c.b16 %v7801, %v7801
      %v7930 = vpack.c.b16 %v7802, %v7802
      %v7931 = vpack.c.b16 %v7803, %v7803
      %v7932 = vpack.c.b16 %v7804, %v7804
      %v7933 = vpack.c.b16 %v7805, %v7805
      %v7934 = vpack.c.b16 %v7806, %v7806
      %v7935 = vpack.c.b16 %v7807, %v7807
      %v7936 = vpack.c.b16 %v7808, %v7808
      %v7937 = vpack.c.b16 %v7809, %v7809
      %v7938 = vpack.c.b16 %v7810, %v7810
      %v7939 = vpack.c.b16 %v7811, %v7811
      %v7940 = vpack.c.b16 %v7812, %v7812
      %v7941 = vpack.c.b16 %v7813, %v7813
      %v7942 = vpack.c.b16 %v7814, %v7814
      %v7943 = vpack.c.b16 %v7815, %v7815
      %v7944 = vpack.c.b16 %v7816, %v7816
      %v7945 = vpack.c.b16 %v7817, %v7817
      %v7946 = vpack.c.b16 %v7818, %v7818
      %v7947 = vpack.c.b16 %v7819, %v7819
      %v7948 = vpack.c.b16 %v7820, %v7820
      %v7949 = vpack.c.b16 %v7821, %v7821
      %v7950 = vpack.c.b16 %v7822, %v7822
      %v7951 = vpack.c.b16 %v7823, %v7823
      %v7952 = vpack.c.b16 %v7824, %v7824
      %v7953 = vpack.c.b16 %v7825, %v7825
      %v7954 = vpack.c.b16 %v7826, %v7826
      %v7955 = vpack.c.b16 %v7827, %v7827
      %v7956 = vpack.c.b16 %v7828, %v7828
      %v7957 = vpack.c.b16 %v7829, %v7829
      %v7958 = vpack.c.b16 %v7830, %v7830
      %v7959 = vpack.c.b16 %v7831, %v7831
      %v7960 = vpack.c.b16 %v7832, %v7832
      %v7961 = vpack.c.b16 %v7833, %v7833
      %v7962 = vpack.c.b16 %v7834, %v7834
      %v7963 = vpack.c.b16 %v7835, %v7835
      %v7964 = vpack.c.b16 %v7836, %v7836
      %v7965 = vpack.c.b16 %v7837, %v7837
      %v7966 = vpack.c.b16 %v7838, %v7838
      %v7967 = vpack.c.b16 %v7839, %v7839
      %v7968 = vpack.c.b16 %v7840, %v7840
      %v7969 = vpack.c.b16 %v7841, %v7841
      %v7970 = vpack.c.b16 %v7842, %v7842
      %v7971 = vpack.c.b16 %v7843, %v7843
      %v7972 = vpack.c.b16 %v7844, %v7844
      %v7973 = vpack.c.b16 %v7845, %v7845
      %v7974 = vpack.c.b16 %v7846, %v7846
      %v7975 = vpack.c.b16 %v7847, %v7847
      %v7976 = vpack.c.b16 %v7848, %v7848
      %v7977 = vpack.c.b16 %v7849, %v7849
      %v7978 = vpack.c.b16 %v7850, %v7850
      %v7979 = vpack.c.b16 %v7851, %v7851
      %v7980 = vpack.c.b16 %v7852, %v7852
      %v7981 = vpack.c.b16 %v7853, %v7853
      %v7982 = vpack.c.b16 %v7854, %v7854
      %v7983 = vpack.c.b16 %v7855, %v7855
      %v7984 = vpack.c.b16 %v7856, %v7856
      %v7985 = vpack.c.b16 %v7857, %v7857
      %v7986 = vpack.c.b16 %v7858, %v7858
      %v7987 = vpack.c.b16 %v7859, %v7859
      %v7988 = vpack.c.b16 %v7860, %v7860
      %v7989 = vpack.c.b16 %v7861, %v7861
      %v7990 = vpack.c.b16 %v7862, %v7862
      %v7991 = vpack.c.b16 %v7863, %v7863
      %v7992 = vpack.c.b16 %v7864, %v7864
      %v7993 = vpack.c.b16 %v7865, %v7865
      %v7994 = vpack.c.b16 %v7866, %v7866
      %v7995 = vpack.c.b16 %v7867, %v7867
      %v7996 = vpack.c.b16 %v7868, %v7868
      %v7997 = vpack.c.b16 %v7869, %v7869
      %v7998 = vpack.c.b16 %v7870, %v7870
      %v7999 = vpack.c.b16 %v7871, %v7871
      %v8000 = vpack.c.b16 %v7872, %v7872
      %v8001 = vpack.c.b16 %v7873, %v7873
      %v8002 = vpack.c.b16 %v7874, %v7874
      %8131 = vst [vmem:[%s556] sm:$0xf] %v7875
      %8132 = vst [vmem:[%s556 + $0x4] sm:$0xf] %v7876
      %8133 = vst [vmem:[%s556 + $0x8] sm:$0xf] %v7877
      %8134 = vst [vmem:[%s556 + $0xc] sm:$0xf] %v7878
      %8135 = vst [vmem:[%s556 + $0x10] sm:$0xf] %v7879
      %8136 = vst [vmem:[%s556 + $0x14] sm:$0xf] %v7880
      %8137 = vst [vmem:[%s556 + $0x18] sm:$0xf] %v7881
      %8138 = vst [vmem:[%s556 + $0x1c] sm:$0xf] %v7882
      %8139 = vst [vmem:[%s556 + $0x20] sm:$0xf] %v7883
      %8140 = vst [vmem:[%s556 + $0x24] sm:$0xf] %v7884
      %8141 = vst [vmem:[%s556 + $0x28] sm:$0xf] %v7885
      %8142 = vst [vmem:[%s556 + $0x2c] sm:$0xf] %v7886
      %8143 = vst [vmem:[%s556 + $0x30] sm:$0xf] %v7887
      %8144 = vst [vmem:[%s556 + $0x34] sm:$0xf] %v7888
      %8145 = vst [vmem:[%s556 + $0x38] sm:$0xf] %v7889
      %8146 = vst [vmem:[%s556 + $0x3c] sm:$0xf] %v7890
      %8147 = vst [vmem:[%s556 + $0x40] sm:$0xf] %v7891
      %8148 = vst [vmem:[%s556 + $0x44] sm:$0xf] %v7892
      %8149 = vst [vmem:[%s556 + $0x48] sm:$0xf] %v7893
      %8150 = vst [vmem:[%s556 + $0x4c] sm:$0xf] %v7894
      %8151 = vst [vmem:[%s556 + $0x50] sm:$0xf] %v7895
      %8152 = vst [vmem:[%s556 + $0x54] sm:$0xf] %v7896
      %8153 = vst [vmem:[%s556 + $0x58] sm:$0xf] %v7897
      %8154 = vst [vmem:[%s556 + $0x5c] sm:$0xf] %v7898
      %8155 = vst [vmem:[%s556 + $0x60] sm:$0xf] %v7899
      %8156 = vst [vmem:[%s556 + $0x64] sm:$0xf] %v7900
      %8157 = vst [vmem:[%s556 + $0x68] sm:$0xf] %v7901
      %8158 = vst [vmem:[%s556 + $0x6c] sm:$0xf] %v7902
      %8159 = vst [vmem:[%s556 + $0x70] sm:$0xf] %v7903
      %8160 = vst [vmem:[%s556 + $0x74] sm:$0xf] %v7904
      %8161 = vst [vmem:[%s556 + $0x78] sm:$0xf] %v7905
      %8162 = vst [vmem:[%s556 + $0x7c] sm:$0xf] %v7906
      %8163 = vst [vmem:[%s556 + $0x80] sm:$0xf] %v7907
      %8164 = vst [vmem:[%s556 + $0x84] sm:$0xf] %v7908
      %8165 = vst [vmem:[%s556 + $0x88] sm:$0xf] %v7909
      %8166 = vst [vmem:[%s556 + $0x8c] sm:$0xf] %v7910
      %8167 = vst [vmem:[%s556 + $0x90] sm:$0xf] %v7911
      %8168 = vst [vmem:[%s556 + $0x94] sm:$0xf] %v7912
      %8169 = vst [vmem:[%s556 + $0x98] sm:$0xf] %v7913
      %8170 = vst [vmem:[%s556 + $0x9c] sm:$0xf] %v7914
      %8171 = vst [vmem:[%s556 + $0xa0] sm:$0xf] %v7915
      %8172 = vst [vmem:[%s556 + $0xa4] sm:$0xf] %v7916
      %8173 = vst [vmem:[%s556 + $0xa8] sm:$0xf] %v7917
      %8174 = vst [vmem:[%s556 + $0xac] sm:$0xf] %v7918
      %8175 = vst [vmem:[%s556 + $0xb0] sm:$0xf] %v7919
      %8176 = vst [vmem:[%s556 + $0xb4] sm:$0xf] %v7920
      %8177 = vst [vmem:[%s556 + $0xb8] sm:$0xf] %v7921
      %8178 = vst [vmem:[%s556 + $0xbc] sm:$0xf] %v7922
      %8179 = vst [vmem:[%s556 + $0xc0] sm:$0xf] %v7923
      %8180 = vst [vmem:[%s556 + $0xc4] sm:$0xf] %v7924
      %8181 = vst [vmem:[%s556 + $0xc8] sm:$0xf] %v7925
      %8182 = vst [vmem:[%s556 + $0xcc] sm:$0xf] %v7926
      %8183 = vst [vmem:[%s556 + $0xd0] sm:$0xf] %v7927
      %8184 = vst [vmem:[%s556 + $0xd4] sm:$0xf] %v7928
      %8185 = vst [vmem:[%s556 + $0xd8] sm:$0xf] %v7929
      %8186 = vst [vmem:[%s556 + $0xdc] sm:$0xf] %v7930
      %8187 = vst [vmem:[%s556 + $0xe0] sm:$0xf] %v7931
      %8188 = vst [vmem:[%s556 + $0xe4] sm:$0xf] %v7932
      %8189 = vst [vmem:[%s556 + $0xe8] sm:$0xf] %v7933
      %8190 = vst [vmem:[%s556 + $0xec] sm:$0xf] %v7934
      %8191 = vst [vmem:[%s556 + $0xf0] sm:$0xf] %v7935
      %8192 = vst [vmem:[%s556 + $0xf4] sm:$0xf] %v7936
      %8193 = vst [vmem:[%s556 + $0xf8] sm:$0xf] %v7937
      %8194 = vst [vmem:[%s556 + $0xfc] sm:$0xf] %v7938
      %8195 = vst [vmem:[%s556 + $0x100] sm:$0xf] %v7939
      %8196 = vst [vmem:[%s556 + $0x104] sm:$0xf] %v7940
      %8197 = vst [vmem:[%s556 + $0x108] sm:$0xf] %v7941
      %8198 = vst [vmem:[%s556 + $0x10c] sm:$0xf] %v7942
      %8199 = vst [vmem:[%s556 + $0x110] sm:$0xf] %v7943
      %8200 = vst [vmem:[%s556 + $0x114] sm:$0xf] %v7944
      %8201 = vst [vmem:[%s556 + $0x118] sm:$0xf] %v7945
      %8202 = vst [vmem:[%s556 + $0x11c] sm:$0xf] %v7946
      %8203 = vst [vmem:[%s556 + $0x120] sm:$0xf] %v7947
      %8204 = vst [vmem:[%s556 + $0x124] sm:$0xf] %v7948
      %8205 = vst [vmem:[%s556 + $0x128] sm:$0xf] %v7949
      %8206 = vst [vmem:[%s556 + $0x12c] sm:$0xf] %v7950
      %8207 = vst [vmem:[%s556 + $0x130] sm:$0xf] %v7951
      %8208 = vst [vmem:[%s556 + $0x134] sm:$0xf] %v7952
      %8209 = vst [vmem:[%s556 + $0x138] sm:$0xf] %v7953
      %8210 = vst [vmem:[%s556 + $0x13c] sm:$0xf] %v7954
      %8211 = vst [vmem:[%s556 + $0x140] sm:$0xf] %v7955
      %8212 = vst [vmem:[%s556 + $0x144] sm:$0xf] %v7956
      %8213 = vst [vmem:[%s556 + $0x148] sm:$0xf] %v7957
      %8214 = vst [vmem:[%s556 + $0x14c] sm:$0xf] %v7958
      %8215 = vst [vmem:[%s556 + $0x150] sm:$0xf] %v7959
      %8216 = vst [vmem:[%s556 + $0x154] sm:$0xf] %v7960
      %8217 = vst [vmem:[%s556 + $0x158] sm:$0xf] %v7961
      %8218 = vst [vmem:[%s556 + $0x15c] sm:$0xf] %v7962
      %8219 = vst [vmem:[%s556 + $0x160] sm:$0xf] %v7963
      %8220 = vst [vmem:[%s556 + $0x164] sm:$0xf] %v7964
      %8221 = vst [vmem:[%s556 + $0x168] sm:$0xf] %v7965
      %8222 = vst [vmem:[%s556 + $0x16c] sm:$0xf] %v7966
      %8223 = vst [vmem:[%s556 + $0x170] sm:$0xf] %v7967
      %8224 = vst [vmem:[%s556 + $0x174] sm:$0xf] %v7968
      %8225 = vst [vmem:[%s556 + $0x178] sm:$0xf] %v7969
      %8226 = vst [vmem:[%s556 + $0x17c] sm:$0xf] %v7970
      %8227 = vst [vmem:[%s556 + $0x180] sm:$0xf] %v7971
      %8228 = vst [vmem:[%s556 + $0x184] sm:$0xf] %v7972
      %8229 = vst [vmem:[%s556 + $0x188] sm:$0xf] %v7973
      %8230 = vst [vmem:[%s556 + $0x18c] sm:$0xf] %v7974
      %8231 = vst [vmem:[%s556 + $0x190] sm:$0xf] %v7975
      %8232 = vst [vmem:[%s556 + $0x194] sm:$0xf] %v7976
      %8233 = vst [vmem:[%s556 + $0x198] sm:$0xf] %v7977
      %8234 = vst [vmem:[%s556 + $0x19c] sm:$0xf] %v7978
      %8235 = vst [vmem:[%s556 + $0x1a0] sm:$0xf] %v7979
      %8236 = vst [vmem:[%s556 + $0x1a4] sm:$0xf] %v7980
      %8237 = vst [vmem:[%s556 + $0x1a8] sm:$0xf] %v7981
      %8238 = vst [vmem:[%s556 + $0x1ac] sm:$0xf] %v7982
      %8239 = vst [vmem:[%s556 + $0x1b0] sm:$0xf] %v7983
      %8240 = vst [vmem:[%s556 + $0x1b4] sm:$0xf] %v7984
      %8241 = vst [vmem:[%s556 + $0x1b8] sm:$0xf] %v7985
      %8242 = vst [vmem:[%s556 + $0x1bc] sm:$0xf] %v7986
      %8243 = vst [vmem:[%s556 + $0x1c0] sm:$0xf] %v7987
      %8244 = vst [vmem:[%s556 + $0x1c4] sm:$0xf] %v7988
      %8245 = vst [vmem:[%s556 + $0x1c8] sm:$0xf] %v7989
      %8246 = vst [vmem:[%s556 + $0x1cc] sm:$0xf] %v7990
      %8247 = vst [vmem:[%s556 + $0x1d0] sm:$0xf] %v7991
      %8248 = vst [vmem:[%s556 + $0x1d4] sm:$0xf] %v7992
      %8249 = vst [vmem:[%s556 + $0x1d8] sm:$0xf] %v7993
      %8250 = vst [vmem:[%s556 + $0x1dc] sm:$0xf] %v7994
      %8251 = vst [vmem:[%s556 + $0x1e0] sm:$0xf] %v7995
      %8252 = vst [vmem:[%s556 + $0x1e4] sm:$0xf] %v7996
      %8253 = vst [vmem:[%s556 + $0x1e8] sm:$0xf] %v7997
      %8254 = vst [vmem:[%s556 + $0x1ec] sm:$0xf] %v7998
      %8255 = vst [vmem:[%s556 + $0x1f0] sm:$0xf] %v7999
      %8256 = vst [vmem:[%s556 + $0x1f4] sm:$0xf] %v8000
      %8257 = vst [vmem:[%s556 + $0x1f8] sm:$0xf] %v8001
      %8258 = vst [vmem:[%s556 + $0x1fc] sm:$0xf] %v8002
      %vm8259 = vcmask 7168
      %8260 = vst.msk [vmem:[%s566] sm:$0xff] %vm8259, %v2115
      %8261 = vst.msk [vmem:[%s566 + $0x8] sm:$0xff] %vm8259, %v2116
      %8262 = vst.msk [vmem:[%s566 + $0x10] sm:$0xff] %vm8259, %v2117
      %8263 = vst.msk [vmem:[%s566 + $0x18] sm:$0xff] %vm8259, %v2118
      %8264 = vst.msk [vmem:[%s566 + $0x20] sm:$0xff] %vm8259, %v2119
      %8265 = vst.msk [vmem:[%s566 + $0x28] sm:$0xff] %vm8259, %v2120
      %8266 = vst.msk [vmem:[%s566 + $0x30] sm:$0xff] %vm8259, %v2121
      %8267 = vst.msk [vmem:[%s566 + $0x38] sm:$0xff] %vm8259, %v2122
      %8268 = vst.msk [vmem:[%s566 + $0x40] sm:$0xff] %vm8259, %v2123
      %8269 = vst.msk [vmem:[%s566 + $0x48] sm:$0xff] %vm8259, %v2124
      %8270 = vst.msk [vmem:[%s566 + $0x50] sm:$0xff] %vm8259, %v2125
      %8271 = vst.msk [vmem:[%s566 + $0x58] sm:$0xff] %vm8259, %v2126
      %8272 = vst.msk [vmem:[%s566 + $0x60] sm:$0xff] %vm8259, %v2127
      %8273 = vst.msk [vmem:[%s566 + $0x68] sm:$0xff] %vm8259, %v2128
      %8274 = vst.msk [vmem:[%s566 + $0x70] sm:$0xff] %vm8259, %v2129
      %8275 = vst.msk [vmem:[%s566 + $0x78] sm:$0xff] %vm8259, %v2130
      %8276 = vst.msk [vmem:[%s566 + $0x80] sm:$0xff] %vm8259, %v2131
      %8277 = vst.msk [vmem:[%s566 + $0x88] sm:$0xff] %vm8259, %v2132
      %8278 = vst.msk [vmem:[%s566 + $0x90] sm:$0xff] %vm8259, %v2133
      %8279 = vst.msk [vmem:[%s566 + $0x98] sm:$0xff] %vm8259, %v2134
      %8280 = vst.msk [vmem:[%s566 + $0xa0] sm:$0xff] %vm8259, %v2135
      %8281 = vst.msk [vmem:[%s566 + $0xa8] sm:$0xff] %vm8259, %v2136
      %8282 = vst.msk [vmem:[%s566 + $0xb0] sm:$0xff] %vm8259, %v2137
      %8283 = vst.msk [vmem:[%s566 + $0xb8] sm:$0xff] %vm8259, %v2138
      %8284 = vst.msk [vmem:[%s566 + $0xc0] sm:$0xff] %vm8259, %v2139
      %8285 = vst.msk [vmem:[%s566 + $0xc8] sm:$0xff] %vm8259, %v2140
      %8286 = vst.msk [vmem:[%s566 + $0xd0] sm:$0xff] %vm8259, %v2141
      %8287 = vst.msk [vmem:[%s566 + $0xd8] sm:$0xff] %vm8259, %v2142
      %8288 = vst.msk [vmem:[%s566 + $0xe0] sm:$0xff] %vm8259, %v2143
      %8289 = vst.msk [vmem:[%s566 + $0xe8] sm:$0xff] %vm8259, %v2144
      %8290 = vst.msk [vmem:[%s566 + $0xf0] sm:$0xff] %vm8259, %v2145
      %8291 = vst.msk [vmem:[%s566 + $0xf8] sm:$0xff] %vm8259, %v2146
      %8292 = vst.msk [vmem:[%s566 + $0x100] sm:$0xff] %vm8259, %v2147
      %8293 = vst.msk [vmem:[%s566 + $0x108] sm:$0xff] %vm8259, %v2148
      %8294 = vst.msk [vmem:[%s566 + $0x110] sm:$0xff] %vm8259, %v2149
      %8295 = vst.msk [vmem:[%s566 + $0x118] sm:$0xff] %vm8259, %v2150
      %8296 = vst.msk [vmem:[%s566 + $0x120] sm:$0xff] %vm8259, %v2151
      %8297 = vst.msk [vmem:[%s566 + $0x128] sm:$0xff] %vm8259, %v2152
      %8298 = vst.msk [vmem:[%s566 + $0x130] sm:$0xff] %vm8259, %v2153
      %8299 = vst.msk [vmem:[%s566 + $0x138] sm:$0xff] %vm8259, %v2154
      %8300 = vst.msk [vmem:[%s566 + $0x140] sm:$0xff] %vm8259, %v2155
      %8301 = vst.msk [vmem:[%s566 + $0x148] sm:$0xff] %vm8259, %v2156
      %8302 = vst.msk [vmem:[%s566 + $0x150] sm:$0xff] %vm8259, %v2157
      %8303 = vst.msk [vmem:[%s566 + $0x158] sm:$0xff] %vm8259, %v2158
      %8304 = vst.msk [vmem:[%s566 + $0x160] sm:$0xff] %vm8259, %v2159
      %8305 = vst.msk [vmem:[%s566 + $0x168] sm:$0xff] %vm8259, %v2160
      %8306 = vst.msk [vmem:[%s566 + $0x170] sm:$0xff] %vm8259, %v2161
      %8307 = vst.msk [vmem:[%s566 + $0x178] sm:$0xff] %vm8259, %v2162
      %8308 = vst.msk [vmem:[%s566 + $0x180] sm:$0xff] %vm8259, %v2163
      %8309 = vst.msk [vmem:[%s566 + $0x188] sm:$0xff] %vm8259, %v2164
      %8310 = vst.msk [vmem:[%s566 + $0x190] sm:$0xff] %vm8259, %v2165
      %8311 = vst.msk [vmem:[%s566 + $0x198] sm:$0xff] %vm8259, %v2166
      %8312 = vst.msk [vmem:[%s566 + $0x1a0] sm:$0xff] %vm8259, %v2167
      %8313 = vst.msk [vmem:[%s566 + $0x1a8] sm:$0xff] %vm8259, %v2168
      %8314 = vst.msk [vmem:[%s566 + $0x1b0] sm:$0xff] %vm8259, %v2169
      %8315 = vst.msk [vmem:[%s566 + $0x1b8] sm:$0xff] %vm8259, %v2170
      %8316 = vst.msk [vmem:[%s566 + $0x1c0] sm:$0xff] %vm8259, %v2171
      %8317 = vst.msk [vmem:[%s566 + $0x1c8] sm:$0xff] %vm8259, %v2172
      %8318 = vst.msk [vmem:[%s566 + $0x1d0] sm:$0xff] %vm8259, %v2173
      %8319 = vst.msk [vmem:[%s566 + $0x1d8] sm:$0xff] %vm8259, %v2174
      %8320 = vst.msk [vmem:[%s566 + $0x1e0] sm:$0xff] %vm8259, %v2175
      %8321 = vst.msk [vmem:[%s566 + $0x1e8] sm:$0xff] %vm8259, %v2176
      %8322 = vst.msk [vmem:[%s566 + $0x1f0] sm:$0xff] %vm8259, %v2177
      %8323 = vst.msk [vmem:[%s566 + $0x1f8] sm:$0xff] %vm8259, %v2178
      %8324 = vst.msk [vmem:[%s566 + $0x200] sm:$0xff] %vm8259, %v2179
      %8325 = vst.msk [vmem:[%s566 + $0x208] sm:$0xff] %vm8259, %v2180
      %8326 = vst.msk [vmem:[%s566 + $0x210] sm:$0xff] %vm8259, %v2181
      %8327 = vst.msk [vmem:[%s566 + $0x218] sm:$0xff] %vm8259, %v2182
      %8328 = vst.msk [vmem:[%s566 + $0x220] sm:$0xff] %vm8259, %v2183
      %8329 = vst.msk [vmem:[%s566 + $0x228] sm:$0xff] %vm8259, %v2184
      %8330 = vst.msk [vmem:[%s566 + $0x230] sm:$0xff] %vm8259, %v2185
      %8331 = vst.msk [vmem:[%s566 + $0x238] sm:$0xff] %vm8259, %v2186
      %8332 = vst.msk [vmem:[%s566 + $0x240] sm:$0xff] %vm8259, %v2187
      %8333 = vst.msk [vmem:[%s566 + $0x248] sm:$0xff] %vm8259, %v2188
      %8334 = vst.msk [vmem:[%s566 + $0x250] sm:$0xff] %vm8259, %v2189
      %8335 = vst.msk [vmem:[%s566 + $0x258] sm:$0xff] %vm8259, %v2190
      %8336 = vst.msk [vmem:[%s566 + $0x260] sm:$0xff] %vm8259, %v2191
      %8337 = vst.msk [vmem:[%s566 + $0x268] sm:$0xff] %vm8259, %v2192
      %8338 = vst.msk [vmem:[%s566 + $0x270] sm:$0xff] %vm8259, %v2193
      %8339 = vst.msk [vmem:[%s566 + $0x278] sm:$0xff] %vm8259, %v2194
      %8340 = vst.msk [vmem:[%s566 + $0x280] sm:$0xff] %vm8259, %v2195
      %8341 = vst.msk [vmem:[%s566 + $0x288] sm:$0xff] %vm8259, %v2196
      %8342 = vst.msk [vmem:[%s566 + $0x290] sm:$0xff] %vm8259, %v2197
      %8343 = vst.msk [vmem:[%s566 + $0x298] sm:$0xff] %vm8259, %v2198
      %8344 = vst.msk [vmem:[%s566 + $0x2a0] sm:$0xff] %vm8259, %v2199
      %8345 = vst.msk [vmem:[%s566 + $0x2a8] sm:$0xff] %vm8259, %v2200
      %8346 = vst.msk [vmem:[%s566 + $0x2b0] sm:$0xff] %vm8259, %v2201
      %8347 = vst.msk [vmem:[%s566 + $0x2b8] sm:$0xff] %vm8259, %v2202
      %8348 = vst.msk [vmem:[%s566 + $0x2c0] sm:$0xff] %vm8259, %v2203
      %8349 = vst.msk [vmem:[%s566 + $0x2c8] sm:$0xff] %vm8259, %v2204
      %8350 = vst.msk [vmem:[%s566 + $0x2d0] sm:$0xff] %vm8259, %v2205
      %8351 = vst.msk [vmem:[%s566 + $0x2d8] sm:$0xff] %vm8259, %v2206
      %8352 = vst.msk [vmem:[%s566 + $0x2e0] sm:$0xff] %vm8259, %v2207
      %8353 = vst.msk [vmem:[%s566 + $0x2e8] sm:$0xff] %vm8259, %v2208
      %8354 = vst.msk [vmem:[%s566 + $0x2f0] sm:$0xff] %vm8259, %v2209
      %8355 = vst.msk [vmem:[%s566 + $0x2f8] sm:$0xff] %vm8259, %v2210
      %8356 = vst.msk [vmem:[%s566 + $0x300] sm:$0xff] %vm8259, %v2211
      %8357 = vst.msk [vmem:[%s566 + $0x308] sm:$0xff] %vm8259, %v2212
      %8358 = vst.msk [vmem:[%s566 + $0x310] sm:$0xff] %vm8259, %v2213
      %8359 = vst.msk [vmem:[%s566 + $0x318] sm:$0xff] %vm8259, %v2214
      %8360 = vst.msk [vmem:[%s566 + $0x320] sm:$0xff] %vm8259, %v2215
      %8361 = vst.msk [vmem:[%s566 + $0x328] sm:$0xff] %vm8259, %v2216
      %8362 = vst.msk [vmem:[%s566 + $0x330] sm:$0xff] %vm8259, %v2217
      %8363 = vst.msk [vmem:[%s566 + $0x338] sm:$0xff] %vm8259, %v2218
      %8364 = vst.msk [vmem:[%s566 + $0x340] sm:$0xff] %vm8259, %v2219
      %8365 = vst.msk [vmem:[%s566 + $0x348] sm:$0xff] %vm8259, %v2220
      %8366 = vst.msk [vmem:[%s566 + $0x350] sm:$0xff] %vm8259, %v2221
      %8367 = vst.msk [vmem:[%s566 + $0x358] sm:$0xff] %vm8259, %v2222
      %8368 = vst.msk [vmem:[%s566 + $0x360] sm:$0xff] %vm8259, %v2223
      %8369 = vst.msk [vmem:[%s566 + $0x368] sm:$0xff] %vm8259, %v2224
      %8370 = vst.msk [vmem:[%s566 + $0x370] sm:$0xff] %vm8259, %v2225
      %8371 = vst.msk [vmem:[%s566 + $0x378] sm:$0xff] %vm8259, %v2226
      %8372 = vst.msk [vmem:[%s566 + $0x380] sm:$0xff] %vm8259, %v2227
      %8373 = vst.msk [vmem:[%s566 + $0x388] sm:$0xff] %vm8259, %v2228
      %8374 = vst.msk [vmem:[%s566 + $0x390] sm:$0xff] %vm8259, %v2229
      %8375 = vst.msk [vmem:[%s566 + $0x398] sm:$0xff] %vm8259, %v2230
      %8376 = vst.msk [vmem:[%s566 + $0x3a0] sm:$0xff] %vm8259, %v2231
      %8377 = vst.msk [vmem:[%s566 + $0x3a8] sm:$0xff] %vm8259, %v2232
      %8378 = vst.msk [vmem:[%s566 + $0x3b0] sm:$0xff] %vm8259, %v2233
      %8379 = vst.msk [vmem:[%s566 + $0x3b8] sm:$0xff] %vm8259, %v2234
      %8380 = vst.msk [vmem:[%s566 + $0x3c0] sm:$0xff] %vm8259, %v2235
      %8381 = vst.msk [vmem:[%s566 + $0x3c8] sm:$0xff] %vm8259, %v2236
      %8382 = vst.msk [vmem:[%s566 + $0x3d0] sm:$0xff] %vm8259, %v2237
      %8383 = vst.msk [vmem:[%s566 + $0x3d8] sm:$0xff] %vm8259, %v2238
      %8384 = vst.msk [vmem:[%s566 + $0x3e0] sm:$0xff] %vm8259, %v2239
      %8385 = vst.msk [vmem:[%s566 + $0x3e8] sm:$0xff] %vm8259, %v2240
      %8386 = vst.msk [vmem:[%s566 + $0x3f0] sm:$0xff] %vm8259, %v2241
      %8387 = vst.msk [vmem:[%s566 + $0x3f8] sm:$0xff] %vm8259, %v2242
      %v8388 = vadd.f32 %v7491, %v7492
      %v8389 = vadd.f32 %v8388, %v7493
      %v8390 = vadd.f32 %v8389, %v7494
      %v8391 = vadd.f32 %v8390, %v7495
      %v8392 = vadd.f32 %v8391, %v7496
      %v8393 = vadd.f32 %v8392, %v7497
      %v8394 = vadd.f32 %v8393, %v7498
      %v8395 = vadd.f32 %v8394, %v7499
      %v8396 = vadd.f32 %v8395, %v7500
      %v8397 = vadd.f32 %v8396, %v7501
      %v8398 = vadd.f32 %v8397, %v7502
      %v8399 = vadd.f32 %v8398, %v7503
      %v8400 = vadd.f32 %v8399, %v7504
      %v8401 = vadd.f32 %v8400, %v7505
      %v8402 = vadd.f32 %v8401, %v7506
      %v8403 = vadd.f32 %v8402, %v7507
      %v8404 = vadd.f32 %v8403, %v7508
      %v8405 = vadd.f32 %v8404, %v7509
      %v8406 = vadd.f32 %v8405, %v7510
      %v8407 = vadd.f32 %v8406, %v7511
      %v8408 = vadd.f32 %v8407, %v7512
      %v8409 = vadd.f32 %v8408, %v7513
      %v8410 = vadd.f32 %v8409, %v7514
      %v8411 = vadd.f32 %v8410, %v7515
      %v8412 = vadd.f32 %v8411, %v7516
      %v8413 = vadd.f32 %v8412, %v7517
      %v8414 = vadd.f32 %v8413, %v7518
      %v8415 = vadd.f32 %v8414, %v7519
      %v8416 = vadd.f32 %v8415, %v7520
      %v8417 = vadd.f32 %v8416, %v7521
      %v8418 = vadd.f32 %v8417, %v7522
      %v8419 = vadd.f32 %v8418, %v7523
      %v8420 = vadd.f32 %v8419, %v7524
      %v8421 = vadd.f32 %v8420, %v7525
      %v8422 = vadd.f32 %v8421, %v7526
      %v8423 = vadd.f32 %v8422, %v7527
      %v8424 = vadd.f32 %v8423, %v7528
      %v8425 = vadd.f32 %v8424, %v7529
      %v8426 = vadd.f32 %v8425, %v7530
      %v8427 = vadd.f32 %v8426, %v7531
      %v8428 = vadd.f32 %v8427, %v7532
      %v8429 = vadd.f32 %v8428, %v7533
      %v8430 = vadd.f32 %v8429, %v7534
      %v8431 = vadd.f32 %v8430, %v7535
      %v8432 = vadd.f32 %v8431, %v7536
      %v8433 = vadd.f32 %v8432, %v7537
      %v8434 = vadd.f32 %v8433, %v7538
      %v8435 = vadd.f32 %v8434, %v7539
      %v8436 = vadd.f32 %v8435, %v7540
      %v8437 = vadd.f32 %v8436, %v7541
      %v8438 = vadd.f32 %v8437, %v7542
      %v8439 = vadd.f32 %v8438, %v7543
      %v8440 = vadd.f32 %v8439, %v7544
      %v8441 = vadd.f32 %v8440, %v7545
      %v8442 = vadd.f32 %v8441, %v7546
      %v8443 = vadd.f32 %v8442, %v7547
      %v8444 = vadd.f32 %v8443, %v7548
      %v8445 = vadd.f32 %v8444, %v7549
      %v8446 = vadd.f32 %v8445, %v7550
      %v8447 = vadd.f32 %v8446, %v7551
      %v8448 = vadd.f32 %v8447, %v7552
      %v8449 = vadd.f32 %v8448, %v7553
      %v8450 = vadd.f32 %v8449, %v7554
      %v8451 = vadd.f32 %v8450, %v7555
      %v8452 = vadd.f32 %v8451, %v7556
      %v8453 = vadd.f32 %v8452, %v7557
      %v8454 = vadd.f32 %v8453, %v7558
      %v8455 = vadd.f32 %v8454, %v7559
      %v8456 = vadd.f32 %v8455, %v7560
      %v8457 = vadd.f32 %v8456, %v7561
      %v8458 = vadd.f32 %v8457, %v7562
      %v8459 = vadd.f32 %v8458, %v7563
      %v8460 = vadd.f32 %v8459, %v7564
      %v8461 = vadd.f32 %v8460, %v7565
      %v8462 = vadd.f32 %v8461, %v7566
      %v8463 = vadd.f32 %v8462, %v7567
      %v8464 = vadd.f32 %v8463, %v7568
      %v8465 = vadd.f32 %v8464, %v7569
      %v8466 = vadd.f32 %v8465, %v7570
      %v8467 = vadd.f32 %v8466, %v7571
      %v8468 = vadd.f32 %v8467, %v7572
      %v8469 = vadd.f32 %v8468, %v7573
      %v8470 = vadd.f32 %v8469, %v7574
      %v8471 = vadd.f32 %v8470, %v7575
      %v8472 = vadd.f32 %v8471, %v7576
      %v8473 = vadd.f32 %v8472, %v7577
      %v8474 = vadd.f32 %v8473, %v7578
      %v8475 = vadd.f32 %v8474, %v7579
      %v8476 = vadd.f32 %v8475, %v7580
      %v8477 = vadd.f32 %v8476, %v7581
      %v8478 = vadd.f32 %v8477, %v7582
      %v8479 = vadd.f32 %v8478, %v7583
      %v8480 = vadd.f32 %v8479, %v7584
      %v8481 = vadd.f32 %v8480, %v7585
      %v8482 = vadd.f32 %v8481, %v7586
      %v8483 = vadd.f32 %v8482, %v7587
      %v8484 = vadd.f32 %v8483, %v7588
      %v8485 = vadd.f32 %v8484, %v7589
      %v8486 = vadd.f32 %v8485, %v7590
      %v8487 = vadd.f32 %v8486, %v7591
      %v8488 = vadd.f32 %v8487, %v7592
      %v8489 = vadd.f32 %v8488, %v7593
      %v8490 = vadd.f32 %v8489, %v7594
      %v8491 = vadd.f32 %v8490, %v7595
      %v8492 = vadd.f32 %v8491, %v7596
      %v8493 = vadd.f32 %v8492, %v7597
      %v8494 = vadd.f32 %v8493, %v7598
      %v8495 = vadd.f32 %v8494, %v7599
      %v8496 = vadd.f32 %v8495, %v7600
      %v8497 = vadd.f32 %v8496, %v7601
      %v8498 = vadd.f32 %v8497, %v7602
      %v8499 = vadd.f32 %v8498, %v7603
      %v8500 = vadd.f32 %v8499, %v7604
      %v8501 = vadd.f32 %v8500, %v7605
      %v8502 = vadd.f32 %v8501, %v7606
      %v8503 = vadd.f32 %v8502, %v7607
      %v8504 = vadd.f32 %v8503, %v7608
      %v8505 = vadd.f32 %v8504, %v7609
      %v8506 = vadd.f32 %v8505, %v7610
      %v8507 = vadd.f32 %v8506, %v7611
      %v8508 = vadd.f32 %v8507, %v7612
      %v8509 = vadd.f32 %v8508, %v7613
      %v8510 = vadd.f32 %v8509, %v7614
      %v8511 = vadd.f32 %v8510, %v7615
      %v8512 = vadd.f32 %v8511, %v7616
      %v8513 = vadd.f32 %v8512, %v7617
      %v8514 = vadd.f32 %v8513, %v7618
      %v8515 = vrot.slane %v8514, 4
      %v8516 = vadd.f32 %v8514, %v8515
      %v8517 = vrot.slane %v8516, 2
      %v8518 = vadd.f32 %v8516, %v8517
      %v8519 = vrot.slane %v8518, 1
      %v8520 = vadd.f32 %v8518, %v8519
      %8521 = vst [vmem:[%s573] sm:$0x1] %v8520
      %s8522 = smul.u32 128, %s32
      %p8523 = scmp.lt.s32.totalorder %s31, 1
      %s8524 = scalar_select %p8523, %s31, 1
      %p8525 = scmp.lt.s32.totalorder %s8522, 127
      %s8526 = scalar_select %p8525, %s8522, 127
      %s8527 = smul.addr %s8524, 128
      %s8528 = sadd.s32 %s8526, %s8527
      %s8529 = smul.addr %s8528, 4
      %s8530 = scalar_lea.vmem %s13, %s8529
      %s8531 = smul.u32 128, %s32
      %p8532 = scmp.lt.s32.totalorder %s31, 1
      %s8533 = scalar_select %p8532, %s31, 1
      %p8534 = scmp.lt.s32.totalorder %s8531, 127
      %s8535 = scalar_select %p8534, %s8531, 127
      %s8536 = smul.addr %s8533, 128
      %s8537 = sadd.s32 %s8535, %s8536
      %s8538 = smul.addr %s8537, 8
      %s8539 = scalar_lea.vmem %s14, %s8538
      %p8540 = scmp.lt.s32.totalorder %s31, 1
      %s8541 = scalar_select %p8540, %s31, 1
      %p8542 = scmp.lt.s32.totalorder %s32, 0
      %s8543 = scalar_select %p8542, %s32, 0
      %s8544 = sadd.s32 %s8543, %s8541
      %s8545 = scalar_lea.vmem %s15, %s8544
      // Predicated region
      $region73: #{scene_encoder_forward.1} parent=71 // pred_check
        %p8546 = pneg %p339
      $region74: #{scene_encoder_forward.1} parent=71 // pred_check_branch
        %8548 = sbr.rel (%p8546) target = $region76
      $region75: #{scene_encoder_forward.1} parent=71 // pred_region
        %s8549 = smul.u32 128, %s32
      $region76: #{scene_encoder_forward.1} parent=71 // pred_fallthru
        _
      // Predicated region
      $region77: #{scene_encoder_forward.1} parent=71 // pred_check
        %p8550 = pneg %p367
      $region78: #{scene_encoder_forward.1} parent=71 // pred_check_branch
        %8552 = sbr.rel (%p8550) target = $region80
      $region79: #{scene_encoder_forward.1} parent=71 // pred_region
        %s8553 = smul.u32 128, %s32
      $region80: #{scene_encoder_forward.1} parent=71 // pred_fallthru
        _
      // Predicated region
      $region81: #{scene_encoder_forward.1} parent=71 // pred_check
        %p8554 = pneg %p395
      $region82: #{scene_encoder_forward.1} parent=71 // pred_check_branch
        %8556 = sbr.rel (%p8554) target = $region84
      $region83: #{scene_encoder_forward.1} parent=71 // pred_region
        _
      $region84: #{scene_encoder_forward.1} parent=71 // pred_fallthru
        _
    $region72: #{scene_encoder_forward.1} parent=5 // pred_fallthru
      _
    %p8557 = scmp.le.s32.totalorder 2, %s22
    // Predicated region
    $region85: #{scene_encoder_forward.1} parent=5 // pred_check
      %p8558 = pneg %p8557
    $region86: #{scene_encoder_forward.1} parent=5 // pred_check_branch
      %8560 = sbr.rel (%p8558) target = $region88
    $region87: #{scene_encoder_forward.1} parent=5 // pred_region
      %s8561 = ssub.s32 %s22, 2
      // Predicated region
      $region89: #{scene_encoder_forward.1} parent=87 // pred_check
        %p8562 = pneg %p345
      $region90: #{scene_encoder_forward.1} parent=87 // pred_check_branch
        %8564 = sbr.rel (%p8562) target = $region92
      $region91: #{scene_encoder_forward.1} parent=87 // pred_region
        %s8565 = smul.u32 128, %s34
        %p8566 = scmp.lt.s32.totalorder %s33, 1
        %s8567 = scalar_select %p8566, %s33, 1
        %p8568 = scmp.lt.s32.totalorder %s8565, 127
        %s8569 = scalar_select %p8568, %s8565, 127
        %s8570 = smul.addr %s8567, 128
        %s8571 = sadd.s32 %s8569, %s8570
        %s8572 = smul.addr %s8571, 4
        %s8573 = scalar_lea.vmem %s13, %s8572
      $region92: #{scene_encoder_forward.1} parent=87 // pred_fallthru
        _
      // Predicated region
      $region93: #{scene_encoder_forward.1} parent=87 // pred_check
        %p8574 = pneg %p373
      $region94: #{scene_encoder_forward.1} parent=87 // pred_check_branch
        %8576 = sbr.rel (%p8574) target = $region96
      $region95: #{scene_encoder_forward.1} parent=87 // pred_region
        %s8577 = smul.u32 128, %s34
        %p8578 = scmp.lt.s32.totalorder %s33, 1
        %s8579 = scalar_select %p8578, %s33, 1
        %p8580 = scmp.lt.s32.totalorder %s8577, 127
        %s8581 = scalar_select %p8580, %s8577, 127
        %s8582 = smul.addr %s8579, 128
        %s8583 = sadd.s32 %s8581, %s8582
        %s8584 = smul.addr %s8583, 8
        %s8585 = scalar_lea.vmem %s14, %s8584
      $region96: #{scene_encoder_forward.1} parent=87 // pred_fallthru
        _
      // Predicated region
      $region97: #{scene_encoder_forward.1} parent=87 // pred_check
        %p8586 = pneg %p401
      $region98: #{scene_encoder_forward.1} parent=87 // pred_check_branch
        %8588 = sbr.rel (%p8586) target = $region100
      $region99: #{scene_encoder_forward.1} parent=87 // pred_region
        %p8589 = scmp.lt.s32.totalorder %s33, 1
        %s8590 = scalar_select %p8589, %s33, 1
        %p8591 = scmp.lt.s32.totalorder %s34, 0
        %s8592 = scalar_select %p8591, %s34, 0
        %s8593 = sadd.s32 %s8592, %s8590
        %s8594 = scalar_lea.vmem %s15, %s8593
      $region100: #{scene_encoder_forward.1} parent=87 // pred_fallthru
        _
    $region88: #{scene_encoder_forward.1} parent=5 // pred_fallthru
      _
  $region6: #{scene_encoder_forward.1} parent=0 // loop_footer
    %s26 = sadd.s32 1, %s22
  $region7: #{scene_encoder_forward.1} parent=0 // loop_footer_branch
    %21 = sbr.rel target = $region3
  $region8: #{scene_encoder_forward.1} parent=0 // loop_exit
    _

</llo_original>
